<compile_context>
chip_gen: v7x
topology: tpu7x:2x2x1
jax: 0.10.0
libtpu: 0.0.40
codegen_flags: <defaults>
</compile_context>

<pallas_src>
import math
from functools import partial

import jax
import jax.numpy as jnp
from jax import lax
from jax.experimental import pallas as pl
from jax.experimental.pallas import tpu as pltpu

# Explicit scoped-VMEM limit (safe on v5e/v6e/v7x at these sizes; re-budget at prod sizes).
VMEM_LIMIT = 32 * 1024 * 1024


def _round_up(x, m):
    return (x + m - 1) // m * m


# --------------------------------------------------------------------------------------
# Kernel 1: conv (+bias+ReLU) — padded image in, three per-dy accumulating matmuls,
#           overlapping-row gather done in VMEM, lane-dense output (N = W*c_feat)
# --------------------------------------------------------------------------------------
def _conv_kernel(x_ref, w_ref, b_ref, o_ref):
    # x_ref: (tf, Hpad, K0)  bf16  padded image rows, (c, w)-flattened, zero-padded to K0
    # w_ref: (3, K0, N)      bf16  one dense matrix per dy row-offset of the 3x3 kernel
    # b_ref: (1, N)          f32
    # o_ref: (tf, H, N)      bf16  N = W * c_feat  (lane-dense)
    tf, out_h, n_out = o_ref.shape
    k0 = x_ref.shape[-1]
    acc = jnp.dot(x_ref[:, 0:out_h, :].reshape(tf * out_h, k0), w_ref[0],
                  preferred_element_type=jnp.float32)
    for dy in (1, 2):
        acc += jnp.dot(x_ref[:, dy:dy + out_h, :].reshape(tf * out_h, k0), w_ref[dy],
                       preferred_element_type=jnp.float32)
    o_ref[...] = jnp.maximum(acc + b_ref[...], 0.0).reshape(tf, out_h, n_out).astype(o_ref.dtype)


def conv_frames_pallas(x_img, conv_w, conv_b, out_h):
    # x_img: (n_frames, Hpad, K0) bf16 ; conv_w: (3, K0, N) bf16 ; conv_b: (1, N) f32
    n_frames, hpad, k0 = x_img.shape
    n_out = conv_w.shape[-1]
    tf = 1                                   # frames per grid step, capped by a VMEM byte budget
    for cand in (16, 8, 4, 2):
        if n_frames % cand == 0 and cand * hpad * k0 * 2 <= 4 * 1024 * 1024:
            tf = cand
            break
    return pl.pallas_call(
        _conv_kernel,
        out_shape=jax.ShapeDtypeStruct((n_frames, out_h, n_out), jnp.bfloat16),
        grid_spec=pltpu.PrefetchScalarGridSpec(
            num_scalar_prefetch=0,
            grid=(n_frames // tf,),
            in_specs=[
                pl.BlockSpec((tf, hpad, k0), lambda i: (i, 0, 0)),
                pl.BlockSpec((3, k0, n_out), lambda i: (0, 0, 0)),
                pl.BlockSpec((1, n_out), lambda i: (0, 0)),
            ],
            out_specs=pl.BlockSpec((tf, out_h, n_out), lambda i: (i, 0, 0)),
        ),
        compiler_params=pltpu.CompilerParams(
            dimension_semantics=("parallel",), vmem_limit_bytes=VMEM_LIMIT),
    )(x_img, conv_w, conv_b)


# --------------------------------------------------------------------------------------
# Kernel 2: hoisted layer-0 input projection  gates_in = feats @ W_ih0 + b0
#           K-tiled accumulator, N tiled as a parallel axis; runs at M = T*B (no batch pad)
#           and emits bf16 to halve the HBM round trip into the recurrence kernel.
# --------------------------------------------------------------------------------------
def _in_proj_kernel(x_ref, w_ref, b_ref, o_ref, acc_ref):
    @pl.when(pl.program_id(1) == 0)
    def _():
        acc_ref[...] = jnp.zeros_like(acc_ref)

    acc_ref[...] += jnp.dot(x_ref[...], w_ref[...], preferred_element_type=jnp.float32)

    @pl.when(pl.program_id(1) == pl.num_programs(1) - 1)
    def _():
        o_ref[...] = (acc_ref[...] + b_ref[...]).astype(o_ref.dtype)


def input_proj_pallas(x, w, b, tk=1024, tn=512):
    M, K = x.shape
    N = w.shape[1]
    tk = min(tk, K)
    tn = min(tn, N)
    assert K % tk == 0 and N % tn == 0 and M % 8 == 0
    return pl.pallas_call(
        _in_proj_kernel,
        out_shape=jax.ShapeDtypeStruct((M, N), jnp.bfloat16),
        grid_spec=pltpu.PrefetchScalarGridSpec(
            num_scalar_prefetch=0,
            grid=(N // tn, K // tk),
            in_specs=[
                pl.BlockSpec((M, tk), lambda j, k: (0, k)),
                pl.BlockSpec((tk, tn), lambda j, k: (k, j)),
                pl.BlockSpec((1, tn), lambda j, k: (0, j)),
            ],
            out_specs=pl.BlockSpec((M, tn), lambda j, k: (0, j)),
            scratch_shapes=[pltpu.VMEM((M, tn), jnp.float32)],
        ),
        compiler_params=pltpu.CompilerParams(
            dimension_semantics=("parallel", "arbitrary"),
            vmem_limit_bytes=VMEM_LIMIT),
    )(x, w, b)


# --------------------------------------------------------------------------------------
# Kernel 3: wavefront-pipelined 3-layer LSTM recurrence + FC head in ONE pallas_call
#           (grid=(1,)).  Layer l processes time t = s - l at wavefront step s, so the three
#           layers' matmuls and EUP gate math interleave; h/c/y states live in vregs, no big
#           VMEM scratch buffers remain.
# --------------------------------------------------------------------------------------
def _lstm_stack_fc_kernel(gin0_ref, h0_ref, c0_ref, whh0_ref, wcat_ref, brest_ref,
                          w1_ref, b1_ref, w2_ref, b2_ref, out_ref):
    T = gin0_ref.shape[0]
    L, Bp, Hh = h0_ref.shape

    def gate_math(g, c_prev):
        # Gate-column order i|f|o|g (permuted from PyTorch's i|f|g|o at param-build time):
        # one sigmoid over a contiguous (Bp, 3H) slab + one tanh slab, lane-aligned slices.
        s = jax.nn.sigmoid(g[:, :3 * Hh])
        g_g = jnp.tanh(g[:, 3 * Hh:])
        i_g = s[:, 0 * Hh:1 * Hh]
        f_g = s[:, 1 * Hh:2 * Hh]
        o_g = s[:, 2 * Hh:3 * Hh]
        c_new = f_g * c_prev + i_g * g_g
        h_new = o_g * jnp.tanh(c_new)
        return h_new, c_new

    n_steps = T + L - 1

    def body(s, carry):
        hs, cs, ys = carry                 # ys[l] = layer l's output at its last active time
        new_h, new_c, new_y = [], [], []
        for l in range(L):
            t_l = s - l
            active = jnp.logical_and(t_l >= 0, t_l < T)
            if l == 0:
                # layer 0: input gates precomputed (feats @ W_ih0 + b0), only W_hh here.
                t_idx = jnp.clip(t_l, 0, T - 1)
                g = gin0_ref[t_idx].astype(jnp.float32) + jnp.dot(
                    hs[0].astype(jnp.bfloat16), whh0_ref[...],
                    preferred_element_type=jnp.float32)
            else:
                # layers >= 1: fused [W_ih ; W_hh] matmul on [y_{l-1}, h_l].
                xin = jnp.concatenate(
                    [ys[l - 1].astype(jnp.bfloat16), hs[l].astype(jnp.bfloat16)], axis=-1)
                g = jnp.dot(xin, wcat_ref[l - 1],
                            preferred_element_type=jnp.float32) + brest_ref[l - 1]
            h_new, c_new = gate_math(g, cs[l])
            new_h.append(jnp.where(active, h_new, hs[l]))
            new_c.append(jnp.where(active, c_new, cs[l]))
            new_y.append(jnp.where(active, h_new, ys[l]))
        return tuple(new_h), tuple(new_c), tuple(new_y)

    h_init = tuple(h0_ref[l] for l in range(L))
    c_init = tuple(c0_ref[l] for l in range(L))
    y_init = tuple(jnp.zeros((Bp, Hh), jnp.float32) for _ in range(L))

    # Cap the unroll: full unroll only for short sequences; rolled otherwise.
    hs, _, _ = lax.fori_loop(0, n_steps, body, (h_init, c_init, y_init),
                             unroll=(n_steps <= 16))

    # ---- FC head on last timestep of last layer (dropout = identity, eval mode) ----
    z = jnp.maximum(
        jnp.dot(hs[L - 1], w1_ref[...], preferred_element_type=jnp.float32) + b1_ref[...], 0.0)
    out_ref[...] = jnp.dot(z, w2_ref[...], preferred_element_type=jnp.float32) + b2_ref[...]


def lstm_stack_fc_pallas(gin0, h0, c0, w_hh0, w_cat, b_rest, fc_w1, fc_b1, fc_w2, fc_b2):
    Bp = gin0.shape[1]

    def full(shape):
        return pl.BlockSpec(tuple(shape), lambda i, _s=len(shape): (0,) * _s)

    args = (gin0, h0, c0, w_hh0, w_cat, b_rest, fc_w1, fc_b1, fc_w2, fc_b2)
    return pl.pallas_call(
        _lstm_stack_fc_kernel,
        out_shape=jax.ShapeDtypeStruct((Bp, 1), jnp.float32),
        grid_spec=pltpu.PrefetchScalarGridSpec(
            num_scalar_prefetch=0,
            grid=(1,),
            in_specs=[full(a.shape) for a in args],
            out_specs=full((Bp, 1)),
        ),
        compiler_params=pltpu.CompilerParams(
            dimension_semantics=("arbitrary",), vmem_limit_bytes=VMEM_LIMIT),
    )(*args)


# --------------------------------------------------------------------------------------
# Glue: conv weight construction, parameter construction, full forward
# --------------------------------------------------------------------------------------
def build_conv_weight(key, c_in, c_feat, img_w, k0):
    """3x3 padded conv as 3 per-dy dense matmuls: weight (3, K0, W*c_feat).

    Row index = (c_in, w_padded) flattened (matches the image row layout in the kernel);
    only the 3 of W+2 positions per output column are nonzero (structural dx sparsity).
    TODO(synk): for a real backbone, split dx into shifted-LHS accumulating matmuls too, so
                the MXU does not burn ~(W+2)/3 x the needed FLOPs / weight bytes.
    """
    base = jax.random.normal(key, (c_feat, c_in, 3, 3), jnp.float32) * 0.05  # (cout,cin,dy,dx)
    wp = img_w + 2
    wmat = jnp.zeros((3, c_in, wp, img_w, c_feat), jnp.float32)
    kt = base.transpose(2, 1, 3, 0)                                          # (dy,cin,dx,cout)
    for w in range(img_w):
        for dx in range(3):
            wmat = wmat.at[:, :, w + dx, w, :].set(kt[:, :, dx, :])
    wmat = wmat.reshape(3, c_in * wp, img_w * c_feat)
    wmat = jnp.pad(wmat, ((0, 0), (0, k0 - c_in * wp), (0, 0)))   # pad K to a 128 multiple
    return wmat


def make_params(key, c_in, c_feat, img_w, feat_dim, h_size, n_layers, conv_k0):
    assert n_layers >= 2
    kconv, kih0, kb0a, kb0b, kfc1, kfc2, krest = jax.random.split(key, 7)
    k_init = 1.0 / math.sqrt(h_size)
    u = lambda k, shape: jax.random.uniform(k, shape, jnp.float32, -k_init, k_init)

    p = {}
    # conv stand-in: Conv2d(c_in, c_feat, 3, padding=1) as 3 per-dy matmuls (bf16 for MXU)
    p["conv_w"] = build_conv_weight(kconv, c_in, c_feat, img_w, conv_k0).astype(jnp.bfloat16)
    p["conv_b"] = jnp.zeros((1, img_w * c_feat), jnp.float32)

    # LSTM weights, gate-column order i|f|o|g (permuted from PyTorch's i|f|g|o so the three
    # sigmoid gates form one contiguous slab).  Weights are generated directly in this order,
    # so all of W_ih0 / W_cat / W_hh0 and both bias sets are consistent by construction.
    p["w_ih0"] = u(kih0, (feat_dim, 4 * h_size)).astype(jnp.bfloat16)
    p["b0"] = u(kb0a, (1, 4 * h_size)) + u(kb0b, (1, 4 * h_size))      # b_ih + b_hh
    kr = jax.random.split(krest, n_layers * 4)
    p["w_hh0"] = u(kr[0], (h_size, 4 * h_size)).astype(jnp.bfloat16)
    w_cat, b_rest = [], []
    for l in range(1, n_layers):
        k1, k2, k3, k4 = kr[4 * l: 4 * l + 4]
        # fused [W_ih_l ; W_hh_l] along K so each wavefront step is one matmul per layer
        w_cat.append(jnp.concatenate([u(k2, (h_size, 4 * h_size)),
                                      u(k1, (h_size, 4 * h_size))], axis=0))
        b_rest.append(u(k3, (1, 4 * h_size)) + u(k4, (1, 4 * h_size)))
    p["w_cat"] = jnp.stack(w_cat).astype(jnp.bfloat16)                  # (L-1, 2H, 4H)
    p["b_rest"] = jnp.stack(b_rest)                                     # (L-1, 1, 4H) f32

    # FC head: Linear(h, h//2) -> ReLU -> (Dropout = identity in eval) -> Linear(h//2, 1)
    p["fc_w1"] = jax.random.normal(kfc1, (h_size, h_size // 2), jnp.float32) * 0.1
    p["fc_b1"] = jnp.zeros((1, h_size // 2), jnp.float32)
    p["fc_w2"] = jax.random.normal(kfc2, (h_size // 2, 1), jnp.float32) * 0.1
    p["fc_b2"] = jnp.zeros((1, 1), jnp.float32)
    return p


def dense_lstm_forward(x, params, state, h_size, n_layers, c_feat, b_pad=8):
    # x: (B, C, T, H, W)
    B, C, T, H, W = x.shape
    feat_dim = c_feat * H * W
    n_frames = T * B

    # ---- per-timestep conv feature extractor ----
    # Layout (T, B, H, C, W): each (frame, row) carries a contiguous (C, W+2) slab, the kernel
    # gathers the 3 overlapping dy rows in VMEM (no 3x im2row HBM materialization), and the
    # contraction dim is zero-padded to a 128 multiple.
    hpad = _round_up(H + 2, 8)
    k0 = _round_up(C * (W + 2), 128)
    imgs = x.transpose(2, 0, 3, 1, 4).reshape(n_frames, H, C, W)
    imgs = jnp.pad(imgs, ((0, 0), (1, hpad - H - 1), (0, 0), (1, 1)))
    x2 = imgs.reshape(n_frames, hpad, C * (W + 2))
    x2 = jnp.pad(x2, ((0, 0), (0, 0), (0, k0 - C * (W + 2)))).astype(jnp.bfloat16)

    feat_rows = conv_frames_pallas(x2, params["conv_w"], params["conv_b"], H)  # (T*B, H, W*cf)
    feats = feat_rows.reshape(n_frames, feat_dim)     # (h, w, c)-major flatten: pure reshape

    # ---- layer-0 input projection hoisted out of the recurrence, at M = T*B (no batch pad) ----
    gin0 = input_proj_pallas(feats, params["w_ih0"], params["b0"])       # (T*B, 4H) bf16
    gin0 = gin0.reshape(T, B, 4 * h_size)

    # ---- pad only the small recurrence operands so f32 sublanes / MXU M-dim are filled ----
    Bp = max(B, b_pad)
    h0, c0 = state                                                       # (L, B, h_size) each
    gin0 = jnp.pad(gin0, ((0, 0), (0, Bp - B), (0, 0)))
    h0 = jnp.pad(h0, ((0, 0), (0, Bp - B), (0, 0)))
    c0 = jnp.pad(c0, ((0, 0), (0, Bp - B), (0, 0)))

    # ---- wavefront-pipelined 3-layer recurrence + FC head, all VMEM/vreg-resident ----
    logit = lstm_stack_fc_pallas(gin0, h0, c0, params["w_hh0"], params["w_cat"],
                                 params["b_rest"], params["fc_w1"], params["fc_b1"],
                                 params["fc_w2"], params["fc_b2"])
    return logit[:B]                                                     # (B, 1)


if __name__ == "__main__":
    B, C, T, H, W = 2, 4, 8, 16, 16
    C_FEAT = 8
    FEAT_DIM = C_FEAT * H * W            # 2048  (stand-in for the original 23040)
    H_SIZE = 128                         # scaled-down, lane-aligned h_size (original 512)
    N_LAYERS = 3

    key = jax.random.PRNGKey(0)
    k_x, k_p, k_h, k_c = jax.random.split(key, 4)

    x = jax.random.normal(k_x, (B, C, T, H, W), jnp.float32)
    conv_k0 = _round_up(C * (W + 2), 128)
    params = make_params(k_p, C, C_FEAT, W, FEAT_DIM, H_SIZE, N_LAYERS, conv_k0)

    # _init_state: normal(0.0, 0.01) for both h0 and c0
    h0 = jax.random.normal(k_h, (N_LAYERS, B, H_SIZE), jnp.float32) * 0.01
    c0 = jax.random.normal(k_c, (N_LAYERS, B, H_SIZE), jnp.float32) * 0.01

    fwd = jax.jit(partial(dense_lstm_forward, h_size=H_SIZE, n_layers=N_LAYERS, c_feat=C_FEAT))
    logit = fwd(x, params, (h0, c0))
    jax.block_until_ready(logit)
    assert logit.shape == (B, 1) and logit.dtype == jnp.float32
    print("KERNEL_OK")
</pallas_src>

<mosaic_0001>
module attributes {stable_mosaic.version = 11 : i64} {
  func.func @_conv_kernel(%arg0: i32, %arg1: memref<16x24x128xbf16, #tpu.memory_space<vmem>>, %arg2: memref<3x128x128xbf16, #tpu.memory_space<vmem>>, %arg3: memref<1x128xf32, #tpu.memory_space<vmem>>, %arg4: memref<16x16x128xbf16, #tpu.memory_space<vmem>>) attributes {dimension_semantics = [#tpu.dimension_semantics<parallel>], iteration_bounds = array<i64: 1>, scalar_prefetch = 0 : i64, scratch_operands = 0 : i64, tpu.core_type = #tpu.core_type<tc>, window_params = [{transform_indices = @transform_0, window_bounds = array<i64: 16, 24, 128>}, {pipeline_mode = #tpu.pipeline_mode<synchronous>, transform_indices = @transform_1, window_bounds = array<i64: 3, 128, 128>}, {pipeline_mode = #tpu.pipeline_mode<synchronous>, transform_indices = @transform_2, window_bounds = array<i64: 1, 128>}, {transform_indices = @transform_3, window_bounds = array<i64: 16, 16, 128>}]} {
    %c0 = arith.constant 0 : index
    %c0_0 = arith.constant 0 : index
    %c0_1 = arith.constant 0 : index
    %0 = vector.load %arg1[%c0, %c0_0, %c0_1] : memref<16x24x128xbf16, #tpu.memory_space<vmem>>, vector<16x16x128xbf16>
    %1 = vector.shape_cast %0 : vector<16x16x128xbf16> to vector<256x128xbf16>
    %c0_2 = arith.constant 0 : index
    %c0_3 = arith.constant 0 : index
    %c0_4 = arith.constant 0 : index
    %2 = vector.load %arg2[%c0_2, %c0_3, %c0_4] : memref<3x128x128xbf16, #tpu.memory_space<vmem>>, vector<1x128x128xbf16>
    %3 = vector.shape_cast %2 : vector<1x128x128xbf16> to vector<128x128xbf16>
    %cst = arith.constant dense<0.000000e+00> : vector<256x128xf32>
    %4 = tpu.matmul %1, %3, %cst {dimension_numbers = #tpu.dot_dimension_numbers<[1], [0], [0], [1], [0, 0, 1, 1], [], []>} : vector<256x128xbf16>, vector<128x128xbf16>, vector<256x128xf32> -> vector<256x128xf32>
    %c0_5 = arith.constant 0 : index
    %c1 = arith.constant 1 : index
    %c0_6 = arith.constant 0 : index
    %5 = vector.load %arg1[%c0_5, %c1, %c0_6] : memref<16x24x128xbf16, #tpu.memory_space<vmem>>, vector<16x16x128xbf16>
    %6 = vector.shape_cast %5 : vector<16x16x128xbf16> to vector<256x128xbf16>
    %c1_7 = arith.constant 1 : index
    %c0_8 = arith.constant 0 : index
    %c0_9 = arith.constant 0 : index
    %7 = vector.load %arg2[%c1_7, %c0_8, %c0_9] : memref<3x128x128xbf16, #tpu.memory_space<vmem>>, vector<1x128x128xbf16>
    %8 = vector.shape_cast %7 : vector<1x128x128xbf16> to vector<128x128xbf16>
    %cst_10 = arith.constant dense<0.000000e+00> : vector<256x128xf32>
    %9 = tpu.matmul %6, %8, %cst_10 {dimension_numbers = #tpu.dot_dimension_numbers<[1], [0], [0], [1], [0, 0, 1, 1], [], []>} : vector<256x128xbf16>, vector<128x128xbf16>, vector<256x128xf32> -> vector<256x128xf32>
    %10 = arith.addf %4, %9 : vector<256x128xf32>
    %c0_11 = arith.constant 0 : index
    %c2 = arith.constant 2 : index
    %c0_12 = arith.constant 0 : index
    %11 = vector.load %arg1[%c0_11, %c2, %c0_12] : memref<16x24x128xbf16, #tpu.memory_space<vmem>>, vector<16x16x128xbf16>
    %12 = vector.shape_cast %11 : vector<16x16x128xbf16> to vector<256x128xbf16>
    %c2_13 = arith.constant 2 : index
    %c0_14 = arith.constant 0 : index
    %c0_15 = arith.constant 0 : index
    %13 = vector.load %arg2[%c2_13, %c0_14, %c0_15] : memref<3x128x128xbf16, #tpu.memory_space<vmem>>, vector<1x128x128xbf16>
    %14 = vector.shape_cast %13 : vector<1x128x128xbf16> to vector<128x128xbf16>
    %cst_16 = arith.constant dense<0.000000e+00> : vector<256x128xf32>
    %15 = tpu.matmul %12, %14, %cst_16 {dimension_numbers = #tpu.dot_dimension_numbers<[1], [0], [0], [1], [0, 0, 1, 1], [], []>} : vector<256x128xbf16>, vector<128x128xbf16>, vector<256x128xf32> -> vector<256x128xf32>
    %16 = arith.addf %10, %15 : vector<256x128xf32>
    %c0_17 = arith.constant 0 : index
    %c0_18 = arith.constant 0 : index
    %17 = vector.load %arg3[%c0_17, %c0_18] : memref<1x128xf32, #tpu.memory_space<vmem>>, vector<1x128xf32>
    %18 = vector.broadcast %17 : vector<1x128xf32> to vector<256x128xf32>
    %19 = arith.addf %16, %18 : vector<256x128xf32>
    %cst_19 = arith.constant 0.000000e+00 : f32
    %20 = vector.broadcast %cst_19 : f32 to vector<256x128xf32>
    %21 = arith.maximumf %19, %20 : vector<256x128xf32>
    %22 = vector.shape_cast %21 : vector<256x128xf32> to vector<16x16x128xf32>
    %23 = arith.truncf %22 : vector<16x16x128xf32> to vector<16x16x128xbf16>
    %c0_20 = arith.constant 0 : index
    %c0_21 = arith.constant 0 : index
    %c0_22 = arith.constant 0 : index
    %24 = vector.load %arg4[%c0_20, %c0_21, %c0_22] : memref<16x16x128xbf16, #tpu.memory_space<vmem>>, vector<16x16x128xbf16>
    tpu.vector_store %arg4[%c0_20, %c0_21, %c0_22], %23 {strides = array<i32>} : memref<16x16x128xbf16, #tpu.memory_space<vmem>>, vector<16x16x128xbf16>,
    return
  }
  func.func @transform_0(%arg0: i32) -> (i32, i32, i32) {
    %c0_i32 = arith.constant 0 : i32
    %c0_i32_0 = arith.constant 0 : i32
    %c0_i32_1 = arith.constant 0 : i32
    return %arg0, %c0_i32, %c0_i32_0 : i32, i32, i32
  }
  func.func @transform_1(%arg0: i32) -> (i32, i32, i32) {
    %c0_i32 = arith.constant 0 : i32
    %c0_i32_0 = arith.constant 0 : i32
    %c0_i32_1 = arith.constant 0 : i32
    %c0_i32_2 = arith.constant 0 : i32
    return %c0_i32, %c0_i32_0, %c0_i32_1 : i32, i32, i32
  }
  func.func @transform_2(%arg0: i32) -> (i32, i32) {
    %c0_i32 = arith.constant 0 : i32
    %c0_i32_0 = arith.constant 0 : i32
    %c0_i32_1 = arith.constant 0 : i32
    return %c0_i32, %c0_i32_0 : i32, i32
  }
  func.func @transform_3(%arg0: i32) -> (i32, i32, i32) {
    %c0_i32 = arith.constant 0 : i32
    %c0_i32_0 = arith.constant 0 : i32
    %c0_i32_1 = arith.constant 0 : i32
    return %arg0, %c0_i32, %c0_i32_0 : i32, i32, i32
  }
}

module attributes {stable_mosaic.version = 11 : i64} {
  func.func @_in_proj_kernel(%arg0: i32, %arg1: i32, %arg2: memref<16x1024xbf16, #tpu.memory_space<vmem>>, %arg3: memref<1024x512xbf16, #tpu.memory_space<vmem>>, %arg4: memref<1x512xf32, #tpu.memory_space<vmem>>, %arg5: memref<16x512xbf16, #tpu.memory_space<vmem>>, %arg6: memref<16x512xf32, #tpu.memory_space<vmem>>) attributes {dimension_semantics = [#tpu.dimension_semantics<parallel>, #tpu.dimension_semantics<arbitrary>], iteration_bounds = array<i64: 1, 2>, scalar_prefetch = 0 : i64, scratch_operands = 1 : i64, tpu.core_type = #tpu.core_type<tc>, window_params = [{transform_indices = @transform_0, window_bounds = array<i64: 16, 1024>}, {transform_indices = @transform_1, window_bounds = array<i64: 1024, 512>}, {transform_indices = @transform_2, window_bounds = array<i64: 1, 512>}, {transform_indices = @transform_3, window_bounds = array<i64: 16, 512>}]} {
    %c0_i32 = arith.constant 0 : i32
    %0 = arith.cmpi eq, %arg1, %c0_i32 : i32
    %1 = arith.extui %0 : i1 to i32
    %c0_i32_0 = arith.constant 0 : i32
    %2 = arith.cmpi ne, %1, %c0_i32_0 : i32
    scf.if %2 {
      %cst_9 = arith.constant 0.000000e+00 : f32
      %12 = vector.broadcast %cst_9 : f32 to vector<16x512xf32>
      %c0_10 = arith.constant 0 : index
      %c0_11 = arith.constant 0 : index
      %13 = vector.load %arg6[%c0_10, %c0_11] : memref<16x512xf32, #tpu.memory_space<vmem>>, vector<16x512xf32>
      tpu.vector_store %arg6[%c0_10, %c0_11], %12 {strides = array<i32>} : memref<16x512xf32, #tpu.memory_space<vmem>>, vector<16x512xf32>,
    } else {
    }
    %c0 = arith.constant 0 : index
    %c0_1 = arith.constant 0 : index
    %3 = vector.load %arg6[%c0, %c0_1] : memref<16x512xf32, #tpu.memory_space<vmem>>, vector<16x512xf32>
    %c0_2 = arith.constant 0 : index
    %c0_3 = arith.constant 0 : index
    %4 = vector.load %arg2[%c0_2, %c0_3] : memref<16x1024xbf16, #tpu.memory_space<vmem>>, vector<16x1024xbf16>
    %c0_4 = arith.constant 0 : index
    %c0_5 = arith.constant 0 : index
    %5 = vector.load %arg3[%c0_4, %c0_5] : memref<1024x512xbf16, #tpu.memory_space<vmem>>, vector<1024x512xbf16>
    %cst = arith.constant dense<0.000000e+00> : vector<16x512xf32>
    %6 = tpu.matmul %4, %5, %cst {dimension_numbers = #tpu.dot_dimension_numbers<[1], [0], [0], [1], [0, 0, 1, 1], [], []>} : vector<16x1024xbf16>, vector<1024x512xbf16>, vector<16x512xf32> -> vector<16x512xf32>
    %7 = arith.addf %3, %6 : vector<16x512xf32>
    %c0_6 = arith.constant 0 : index
    %c0_7 = arith.constant 0 : index
    %8 = vector.load %arg6[%c0_6, %c0_7] : memref<16x512xf32, #tpu.memory_space<vmem>>, vector<16x512xf32>
    tpu.vector_store %arg6[%c0_6, %c0_7], %7 {strides = array<i32>} : memref<16x512xf32, #tpu.memory_space<vmem>>, vector<16x512xf32>,
    %c1_i32 = arith.constant 1 : i32
    %9 = arith.cmpi eq, %arg1, %c1_i32 : i32
    %10 = arith.extui %9 : i1 to i32
    %c0_i32_8 = arith.constant 0 : i32
    %11 = arith.cmpi ne, %10, %c0_i32_8 : i32
    scf.if %11 {
      %c0_9 = arith.constant 0 : index
      %c0_10 = arith.constant 0 : index
      %12 = vector.load %arg6[%c0_9, %c0_10] : memref<16x512xf32, #tpu.memory_space<vmem>>, vector<16x512xf32>
      %c0_11 = arith.constant 0 : index
      %c0_12 = arith.constant 0 : index
      %13 = vector.load %arg4[%c0_11, %c0_12] : memref<1x512xf32, #tpu.memory_space<vmem>>, vector<1x512xf32>
      %14 = vector.broadcast %13 : vector<1x512xf32> to vector<16x512xf32>
      %15 = arith.addf %12, %14 : vector<16x512xf32>
      %16 = arith.truncf %15 : vector<16x512xf32> to vector<16x512xbf16>
      %c0_13 = arith.constant 0 : index
      %c0_14 = arith.constant 0 : index
      %17 = vector.load %arg5[%c0_13, %c0_14] : memref<16x512xbf16, #tpu.memory_space<vmem>>, vector<16x512xbf16>
      tpu.vector_store %arg5[%c0_13, %c0_14], %16 {strides = array<i32>} : memref<16x512xbf16, #tpu.memory_space<vmem>>, vector<16x512xbf16>,
    } else {
    }
    return
  }
  func.func @transform_0(%arg0: i32, %arg1: i32) -> (i32, i32) {
    %c0_i32 = arith.constant 0 : i32
    %c0_i32_0 = arith.constant 0 : i32
    return %c0_i32, %arg1 : i32, i32
  }
  func.func @transform_1(%arg0: i32, %arg1: i32) -> (i32, i32) {
    %c0_i32 = arith.constant 0 : i32
    return %arg1, %arg0 : i32, i32
  }
  func.func @transform_2(%arg0: i32, %arg1: i32) -> (i32, i32) {
    %c0_i32 = arith.constant 0 : i32
    %c0_i32_0 = arith.constant 0 : i32
    return %c0_i32, %arg0 : i32, i32
  }
  func.func @transform_3(%arg0: i32, %arg1: i32) -> (i32, i32) {
    %c0_i32 = arith.constant 0 : i32
    %c0_i32_0 = arith.constant 0 : i32
    return %c0_i32, %arg0 : i32, i32
  }
}

module attributes {stable_mosaic.version = 11 : i64} {
  func.func @_lstm_stack_fc_kernel(%arg0: i32, %arg1: memref<8x8x512xbf16, #tpu.memory_space<vmem>>, %arg2: memref<3x8x128xf32, #tpu.memory_space<vmem>>, %arg3: memref<3x8x128xf32, #tpu.memory_space<vmem>>, %arg4: memref<128x512xbf16, #tpu.memory_space<vmem>>, %arg5: memref<2x256x512xbf16, #tpu.memory_space<vmem>>, %arg6: memref<2x1x512xf32, #tpu.memory_space<vmem>>, %arg7: memref<128x64xf32, #tpu.memory_space<vmem>>, %arg8: memref<1x64xf32, #tpu.memory_space<vmem>>, %arg9: memref<64x1xf32, #tpu.memory_space<vmem>>, %arg10: memref<1x1xf32, #tpu.memory_space<vmem>>, %arg11: memref<8x1xf32, #tpu.memory_space<vmem>>) attributes {dimension_semantics = [#tpu.dimension_semantics<arbitrary>], iteration_bounds = array<i64: 1>, scalar_prefetch = 0 : i64, scratch_operands = 0 : i64, tpu.core_type = #tpu.core_type<tc>, window_params = [{pipeline_mode = #tpu.pipeline_mode<synchronous>, transform_indices = @transform_0, window_bounds = array<i64: 8, 8, 512>}, {pipeline_mode = #tpu.pipeline_mode<synchronous>, transform_indices = @transform_1, window_bounds = array<i64: 3, 8, 128>}, {pipeline_mode = #tpu.pipeline_mode<synchronous>, transform_indices = @transform_2, window_bounds = array<i64: 3, 8, 128>}, {pipeline_mode = #tpu.pipeline_mode<synchronous>, transform_indices = @transform_3, window_bounds = array<i64: 128, 512>}, {pipeline_mode = #tpu.pipeline_mode<synchronous>, transform_indices = @transform_4, window_bounds = array<i64: 2, 256, 512>}, {pipeline_mode = #tpu.pipeline_mode<synchronous>, transform_indices = @transform_5, window_bounds = array<i64: 2, 1, 512>}, {pipeline_mode = #tpu.pipeline_mode<synchronous>, transform_indices = @transform_6, window_bounds = array<i64: 128, 64>}, {pipeline_mode = #tpu.pipeline_mode<synchronous>, transform_indices = @transform_7, window_bounds = array<i64: 1, 64>}, {pipeline_mode = #tpu.pipeline_mode<synchronous>, transform_indices = @transform_8, window_bounds = array<i64: 64, 1>}, {pipeline_mode = #tpu.pipeline_mode<synchronous>, transform_indices = @transform_9, window_bounds = array<i64: 1, 1>}, {pipeline_mode = #tpu.pipeline_mode<synchronous>, transform_indices = @transform_10, window_bounds = array<i64: 8, 1>}]} {
    %c0 = arith.constant 0 : index
    %c0_0 = arith.constant 0 : index
    %c0_1 = arith.constant 0 : index
    %0 = vector.load %arg2[%c0, %c0_0, %c0_1] : memref<3x8x128xf32, #tpu.memory_space<vmem>>, vector<1x8x128xf32>
    %1 = vector.shape_cast %0 : vector<1x8x128xf32> to vector<8x128xf32>
    %c1 = arith.constant 1 : index
    %c0_2 = arith.constant 0 : index
    %c0_3 = arith.constant 0 : index
    %2 = vector.load %arg2[%c1, %c0_2, %c0_3] : memref<3x8x128xf32, #tpu.memory_space<vmem>>, vector<1x8x128xf32>
    %3 = vector.shape_cast %2 : vector<1x8x128xf32> to vector<8x128xf32>
    %c2 = arith.constant 2 : index
    %c0_4 = arith.constant 0 : index
    %c0_5 = arith.constant 0 : index
    %4 = vector.load %arg2[%c2, %c0_4, %c0_5] : memref<3x8x128xf32, #tpu.memory_space<vmem>>, vector<1x8x128xf32>
    %5 = vector.shape_cast %4 : vector<1x8x128xf32> to vector<8x128xf32>
    %c0_6 = arith.constant 0 : index
    %c0_7 = arith.constant 0 : index
    %c0_8 = arith.constant 0 : index
    %6 = vector.load %arg3[%c0_6, %c0_7, %c0_8] : memref<3x8x128xf32, #tpu.memory_space<vmem>>, vector<1x8x128xf32>
    %7 = vector.shape_cast %6 : vector<1x8x128xf32> to vector<8x128xf32>
    %c1_9 = arith.constant 1 : index
    %c0_10 = arith.constant 0 : index
    %c0_11 = arith.constant 0 : index
    %8 = vector.load %arg3[%c1_9, %c0_10, %c0_11] : memref<3x8x128xf32, #tpu.memory_space<vmem>>, vector<1x8x128xf32>
    %9 = vector.shape_cast %8 : vector<1x8x128xf32> to vector<8x128xf32>
    %c2_12 = arith.constant 2 : index
    %c0_13 = arith.constant 0 : index
    %c0_14 = arith.constant 0 : index
    %10 = vector.load %arg3[%c2_12, %c0_13, %c0_14] : memref<3x8x128xf32, #tpu.memory_space<vmem>>, vector<1x8x128xf32>
    %11 = vector.shape_cast %10 : vector<1x8x128xf32> to vector<8x128xf32>
    %cst = arith.constant 0.000000e+00 : f32
    %12 = vector.broadcast %cst : f32 to vector<8x128xf32>
    %cst_15 = arith.constant 0.000000e+00 : f32
    %13 = vector.broadcast %cst_15 : f32 to vector<8x128xf32>
    %c0_i32 = arith.constant 0 : i32
    %c0_i32_16 = arith.constant 0 : i32
    %14 = arith.subi %c0_i32, %c0_i32_16 : i32
    %c0_i32_17 = arith.constant 0 : i32
    %15 = arith.cmpi sge, %14, %c0_i32_17 : i32
    %c8_i32 = arith.constant 8 : i32
    %16 = arith.cmpi slt, %14, %c8_i32 : i32
    %17 = arith.andi %15, %16 : i1
    %c0_i32_18 = arith.constant 0 : i32
    %c7_i32 = arith.constant 7 : i32
    %18 = arith.maxsi %c0_i32_18, %14 : i32
    %19 = arith.minsi %c7_i32, %18 : i32
    %20 = arith.index_cast %19 : i32 to index
    %c0_19 = arith.constant 0 : index
    %c0_20 = arith.constant 0 : index
    %21 = vector.load %arg1[%20, %c0_19, %c0_20] : memref<8x8x512xbf16, #tpu.memory_space<vmem>>, vector<1x8x512xbf16>
    %22 = vector.shape_cast %21 : vector<1x8x512xbf16> to vector<8x512xbf16>
    %23 = arith.extf %22 : vector<8x512xbf16> to vector<8x512xf32>
    %24 = arith.truncf %1 : vector<8x128xf32> to vector<8x128xbf16>
    %c0_21 = arith.constant 0 : index
    %c0_22 = arith.constant 0 : index
    %25 = vector.load %arg4[%c0_21, %c0_22] : memref<128x512xbf16, #tpu.memory_space<vmem>>, vector<128x512xbf16>
    %cst_23 = arith.constant dense<0.000000e+00> : vector<8x512xf32>
    %26 = tpu.matmul %24, %25, %cst_23 {dimension_numbers = #tpu.dot_dimension_numbers<[1], [0], [0], [1], [0, 0, 1, 1], [], []>} : vector<8x128xbf16>, vector<128x512xbf16>, vector<8x512xf32> -> vector<8x512xf32>
    %27 = arith.addf %23, %26 : vector<8x512xf32>
    %28 = vector.extract_strided_slice %27 {offsets = [0, 0], sizes = [8, 384], strides = [1, 1]} : vector<8x512xf32> to vector<8x384xf32>
    %29 = arith.negf %28 : vector<8x384xf32>
    %30 = math.exp %29 : vector<8x384xf32>
    %cst_24 = arith.constant 1.000000e+00 : f32
    %31 = vector.broadcast %cst_24 : f32 to vector<8x384xf32>
    %32 = arith.addf %31, %30 : vector<8x384xf32>
    %33 = arith.divf %31, %32 : vector<8x384xf32>
    %34 = vector.extract_strided_slice %27 {offsets = [0, 384], sizes = [8, 128], strides = [1, 1]} : vector<8x512xf32> to vector<8x128xf32>
    %35 = math.tanh %34 : vector<8x128xf32>
    %36 = vector.extract_strided_slice %33 {offsets = [0, 0], sizes = [8, 128], strides = [1, 1]} : vector<8x384xf32> to vector<8x128xf32>
    %37 = vector.extract_strided_slice %33 {offsets = [0, 128], sizes = [8, 128], strides = [1, 1]} : vector<8x384xf32> to vector<8x128xf32>
    %38 = vector.extract_strided_slice %33 {offsets = [0, 256], sizes = [8, 128], strides = [1, 1]} : vector<8x384xf32> to vector<8x128xf32>
    %39 = arith.mulf %37, %7 : vector<8x128xf32>
    %40 = arith.mulf %36, %35 : vector<8x128xf32>
    %41 = arith.addf %39, %40 : vector<8x128xf32>
    %42 = math.tanh %41 : vector<8x128xf32>
    %43 = arith.mulf %38, %42 : vector<8x128xf32>
    %44 = arith.select %17, %43, %1 : vector<8x128xf32>
    %45 = arith.select %17, %41, %7 : vector<8x128xf32>
    %46 = arith.select %17, %43, %12 : vector<8x128xf32>
    %c1_i32 = arith.constant 1 : i32
    %47 = arith.subi %c0_i32, %c1_i32 : i32
    %c0_i32_25 = arith.constant 0 : i32
    %48 = arith.cmpi sge, %47, %c0_i32_25 : i32
    %c8_i32_26 = arith.constant 8 : i32
    %49 = arith.cmpi slt, %47, %c8_i32_26 : i32
    %50 = arith.andi %48, %49 : i1
    %51 = arith.truncf %12 : vector<8x128xf32> to vector<8x128xbf16>
    %52 = arith.truncf %3 : vector<8x128xf32> to vector<8x128xbf16>
    %53 = tpu.concatenate %51, %52 in 1 : vector<8x128xbf16>, vector<8x128xbf16> -> vector<8x256xbf16>
    %c0_27 = arith.constant 0 : index
    %c0_28 = arith.constant 0 : index
    %c0_29 = arith.constant 0 : index
    %54 = vector.load %arg5[%c0_27, %c0_28, %c0_29] : memref<2x256x512xbf16, #tpu.memory_space<vmem>>, vector<1x256x512xbf16>
    %55 = vector.shape_cast %54 : vector<1x256x512xbf16> to vector<256x512xbf16>
    %cst_30 = arith.constant dense<0.000000e+00> : vector<8x512xf32>
    %56 = tpu.matmul %53, %55, %cst_30 {dimension_numbers = #tpu.dot_dimension_numbers<[1], [0], [0], [1], [0, 0, 1, 1], [], []>} : vector<8x256xbf16>, vector<256x512xbf16>, vector<8x512xf32> -> vector<8x512xf32>
    %c0_31 = arith.constant 0 : index
    %c0_32 = arith.constant 0 : index
    %c0_33 = arith.constant 0 : index
    %57 = vector.load %arg6[%c0_31, %c0_32, %c0_33] : memref<2x1x512xf32, #tpu.memory_space<vmem>>, vector<1x1x512xf32>
    %58 = vector.shape_cast %57 : vector<1x1x512xf32> to vector<1x512xf32>
    %59 = vector.broadcast %58 : vector<1x512xf32> to vector<8x512xf32>
    %60 = arith.addf %56, %59 : vector<8x512xf32>
    %61 = vector.extract_strided_slice %60 {offsets = [0, 0], sizes = [8, 384], strides = [1, 1]} : vector<8x512xf32> to vector<8x384xf32>
    %62 = arith.negf %61 : vector<8x384xf32>
    %63 = math.exp %62 : vector<8x384xf32>
    %cst_34 = arith.constant 1.000000e+00 : f32
    %64 = vector.broadcast %cst_34 : f32 to vector<8x384xf32>
    %65 = arith.addf %64, %63 : vector<8x384xf32>
    %66 = arith.divf %64, %65 : vector<8x384xf32>
    %67 = vector.extract_strided_slice %60 {offsets = [0, 384], sizes = [8, 128], strides = [1, 1]} : vector<8x512xf32> to vector<8x128xf32>
    %68 = math.tanh %67 : vector<8x128xf32>
    %69 = vector.extract_strided_slice %66 {offsets = [0, 0], sizes = [8, 128], strides = [1, 1]} : vector<8x384xf32> to vector<8x128xf32>
    %70 = vector.extract_strided_slice %66 {offsets = [0, 128], sizes = [8, 128], strides = [1, 1]} : vector<8x384xf32> to vector<8x128xf32>
    %71 = vector.extract_strided_slice %66 {offsets = [0, 256], sizes = [8, 128], strides = [1, 1]} : vector<8x384xf32> to vector<8x128xf32>
    %72 = arith.mulf %70, %9 : vector<8x128xf32>
    %73 = arith.mulf %69, %68 : vector<8x128xf32>
    %74 = arith.addf %72, %73 : vector<8x128xf32>
    %75 = math.tanh %74 : vector<8x128xf32>
    %76 = arith.mulf %71, %75 : vector<8x128xf32>
    %77 = arith.select %50, %76, %3 : vector<8x128xf32>
    %78 = arith.select %50, %74, %9 : vector<8x128xf32>
    %79 = arith.select %50, %76, %13 : vector<8x128xf32>
    %c2_i32 = arith.constant 2 : i32
    %80 = arith.subi %c0_i32, %c2_i32 : i32
    %c0_i32_35 = arith.constant 0 : i32
    %81 = arith.cmpi sge, %80, %c0_i32_35 : i32
    %c8_i32_36 = arith.constant 8 : i32
    %82 = arith.cmpi slt, %80, %c8_i32_36 : i32
    %83 = arith.andi %81, %82 : i1
    %84 = arith.truncf %13 : vector<8x128xf32> to vector<8x128xbf16>
    %85 = arith.truncf %5 : vector<8x128xf32> to vector<8x128xbf16>
    %86 = tpu.concatenate %84, %85 in 1 : vector<8x128xbf16>, vector<8x128xbf16> -> vector<8x256xbf16>
    %c1_37 = arith.constant 1 : index
    %c0_38 = arith.constant 0 : index
    %c0_39 = arith.constant 0 : index
    %87 = vector.load %arg5[%c1_37, %c0_38, %c0_39] : memref<2x256x512xbf16, #tpu.memory_space<vmem>>, vector<1x256x512xbf16>
    %88 = vector.shape_cast %87 : vector<1x256x512xbf16> to vector<256x512xbf16>
    %cst_40 = arith.constant dense<0.000000e+00> : vector<8x512xf32>
    %89 = tpu.matmul %86, %88, %cst_40 {dimension_numbers = #tpu.dot_dimension_numbers<[1], [0], [0], [1], [0, 0, 1, 1], [], []>} : vector<8x256xbf16>, vector<256x512xbf16>, vector<8x512xf32> -> vector<8x512xf32>
    %c1_41 = arith.constant 1 : index
    %c0_42 = arith.constant 0 : index
    %c0_43 = arith.constant 0 : index
    %90 = vector.load %arg6[%c1_41, %c0_42, %c0_43] : memref<2x1x512xf32, #tpu.memory_space<vmem>>, vector<1x1x512xf32>
    %91 = vector.shape_cast %90 : vector<1x1x512xf32> to vector<1x512xf32>
    %92 = vector.broadcast %91 : vector<1x512xf32> to vector<8x512xf32>
    %93 = arith.addf %89, %92 : vector<8x512xf32>
    %94 = vector.extract_strided_slice %93 {offsets = [0, 0], sizes = [8, 384], strides = [1, 1]} : vector<8x512xf32> to vector<8x384xf32>
    %95 = arith.negf %94 : vector<8x384xf32>
    %96 = math.exp %95 : vector<8x384xf32>
    %cst_44 = arith.constant 1.000000e+00 : f32
    %97 = vector.broadcast %cst_44 : f32 to vector<8x384xf32>
    %98 = arith.addf %97, %96 : vector<8x384xf32>
    %99 = arith.divf %97, %98 : vector<8x384xf32>
    %100 = vector.extract_strided_slice %93 {offsets = [0, 384], sizes = [8, 128], strides = [1, 1]} : vector<8x512xf32> to vector<8x128xf32>
    %101 = math.tanh %100 : vector<8x128xf32>
    %102 = vector.extract_strided_slice %99 {offsets = [0, 0], sizes = [8, 128], strides = [1, 1]} : vector<8x384xf32> to vector<8x128xf32>
    %103 = vector.extract_strided_slice %99 {offsets = [0, 128], sizes = [8, 128], strides = [1, 1]} : vector<8x384xf32> to vector<8x128xf32>
    %104 = vector.extract_strided_slice %99 {offsets = [0, 256], sizes = [8, 128], strides = [1, 1]} : vector<8x384xf32> to vector<8x128xf32>
    %105 = arith.mulf %103, %11 : vector<8x128xf32>
    %106 = arith.mulf %102, %101 : vector<8x128xf32>
    %107 = arith.addf %105, %106 : vector<8x128xf32>
    %108 = math.tanh %107 : vector<8x128xf32>
    %109 = arith.mulf %104, %108 : vector<8x128xf32>
    %110 = arith.select %83, %109, %5 : vector<8x128xf32>
    %111 = arith.select %83, %107, %11 : vector<8x128xf32>
    %c1_i32_45 = arith.constant 1 : i32
    %c0_i32_46 = arith.constant 0 : i32
    %112 = arith.subi %c1_i32_45, %c0_i32_46 : i32
    %c0_i32_47 = arith.constant 0 : i32
    %113 = arith.cmpi sge, %112, %c0_i32_47 : i32
    %c8_i32_48 = arith.constant 8 : i32
    %114 = arith.cmpi slt, %112, %c8_i32_48 : i32
    %115 = arith.andi %113, %114 : i1
    %c0_i32_49 = arith.constant 0 : i32
    %c7_i32_50 = arith.constant 7 : i32
    %116 = arith.maxsi %c0_i32_49, %112 : i32
    %117 = arith.minsi %c7_i32_50, %116 : i32
    %118 = arith.index_cast %117 : i32 to index
    %c0_51 = arith.constant 0 : index
    %c0_52 = arith.constant 0 : index
    %119 = vector.load %arg1[%118, %c0_51, %c0_52] : memref<8x8x512xbf16, #tpu.memory_space<vmem>>, vector<1x8x512xbf16>
    %120 = vector.shape_cast %119 : vector<1x8x512xbf16> to vector<8x512xbf16>
    %121 = arith.extf %120 : vector<8x512xbf16> to vector<8x512xf32>
    %122 = arith.truncf %44 : vector<8x128xf32> to vector<8x128xbf16>
    %c0_53 = arith.constant 0 : index
    %c0_54 = arith.constant 0 : index
    %123 = vector.load %arg4[%c0_53, %c0_54] : memref<128x512xbf16, #tpu.memory_space<vmem>>, vector<128x512xbf16>
    %cst_55 = arith.constant dense<0.000000e+00> : vector<8x512xf32>
    %124 = tpu.matmul %122, %123, %cst_55 {dimension_numbers = #tpu.dot_dimension_numbers<[1], [0], [0], [1], [0, 0, 1, 1], [], []>} : vector<8x128xbf16>, vector<128x512xbf16>, vector<8x512xf32> -> vector<8x512xf32>
    %125 = arith.addf %121, %124 : vector<8x512xf32>
    %126 = vector.extract_strided_slice %125 {offsets = [0, 0], sizes = [8, 384], strides = [1, 1]} : vector<8x512xf32> to vector<8x384xf32>
    %127 = arith.negf %126 : vector<8x384xf32>
    %128 = math.exp %127 : vector<8x384xf32>
    %cst_56 = arith.constant 1.000000e+00 : f32
    %129 = vector.broadcast %cst_56 : f32 to vector<8x384xf32>
    %130 = arith.addf %129, %128 : vector<8x384xf32>
    %131 = arith.divf %129, %130 : vector<8x384xf32>
    %132 = vector.extract_strided_slice %125 {offsets = [0, 384], sizes = [8, 128], strides = [1, 1]} : vector<8x512xf32> to vector<8x128xf32>
    %133 = math.tanh %132 : vector<8x128xf32>
    %134 = vector.extract_strided_slice %131 {offsets = [0, 0], sizes = [8, 128], strides = [1, 1]} : vector<8x384xf32> to vector<8x128xf32>
    %135 = vector.extract_strided_slice %131 {offsets = [0, 128], sizes = [8, 128], strides = [1, 1]} : vector<8x384xf32> to vector<8x128xf32>
    %136 = vector.extract_strided_slice %131 {offsets = [0, 256], sizes = [8, 128], strides = [1, 1]} : vector<8x384xf32> to vector<8x128xf32>
    %137 = arith.mulf %135, %45 : vector<8x128xf32>
    %138 = arith.mulf %134, %133 : vector<8x128xf32>
    %139 = arith.addf %137, %138 : vector<8x128xf32>
    %140 = math.tanh %139 : vector<8x128xf32>
    %141 = arith.mulf %136, %140 : vector<8x128xf32>
    %142 = arith.select %115, %141, %44 : vector<8x128xf32>
    %143 = arith.select %115, %139, %45 : vector<8x128xf32>
    %144 = arith.select %115, %141, %46 : vector<8x128xf32>
    %c1_i32_57 = arith.constant 1 : i32
    %145 = arith.subi %c1_i32_45, %c1_i32_57 : i32
    %c0_i32_58 = arith.constant 0 : i32
    %146 = arith.cmpi sge, %145, %c0_i32_58 : i32
    %c8_i32_59 = arith.constant 8 : i32
    %147 = arith.cmpi slt, %145, %c8_i32_59 : i32
    %148 = arith.andi %146, %147 : i1
    %149 = arith.truncf %46 : vector<8x128xf32> to vector<8x128xbf16>
    %150 = arith.truncf %77 : vector<8x128xf32> to vector<8x128xbf16>
    %151 = tpu.concatenate %149, %150 in 1 : vector<8x128xbf16>, vector<8x128xbf16> -> vector<8x256xbf16>
    %c0_60 = arith.constant 0 : index
    %c0_61 = arith.constant 0 : index
    %c0_62 = arith.constant 0 : index
    %152 = vector.load %arg5[%c0_60, %c0_61, %c0_62] : memref<2x256x512xbf16, #tpu.memory_space<vmem>>, vector<1x256x512xbf16>
    %153 = vector.shape_cast %152 : vector<1x256x512xbf16> to vector<256x512xbf16>
    %cst_63 = arith.constant dense<0.000000e+00> : vector<8x512xf32>
    %154 = tpu.matmul %151, %153, %cst_63 {dimension_numbers = #tpu.dot_dimension_numbers<[1], [0], [0], [1], [0, 0, 1, 1], [], []>} : vector<8x256xbf16>, vector<256x512xbf16>, vector<8x512xf32> -> vector<8x512xf32>
    %c0_64 = arith.constant 0 : index
    %c0_65 = arith.constant 0 : index
    %c0_66 = arith.constant 0 : index
    %155 = vector.load %arg6[%c0_64, %c0_65, %c0_66] : memref<2x1x512xf32, #tpu.memory_space<vmem>>, vector<1x1x512xf32>
    %156 = vector.shape_cast %155 : vector<1x1x512xf32> to vector<1x512xf32>
    %157 = vector.broadcast %156 : vector<1x512xf32> to vector<8x512xf32>
    %158 = arith.addf %154, %157 : vector<8x512xf32>
    %159 = vector.extract_strided_slice %158 {offsets = [0, 0], sizes = [8, 384], strides = [1, 1]} : vector<8x512xf32> to vector<8x384xf32>
    %160 = arith.negf %159 : vector<8x384xf32>
    %161 = math.exp %160 : vector<8x384xf32>
    %cst_67 = arith.constant 1.000000e+00 : f32
    %162 = vector.broadcast %cst_67 : f32 to vector<8x384xf32>
    %163 = arith.addf %162, %161 : vector<8x384xf32>
    %164 = arith.divf %162, %163 : vector<8x384xf32>
    %165 = vector.extract_strided_slice %158 {offsets = [0, 384], sizes = [8, 128], strides = [1, 1]} : vector<8x512xf32> to vector<8x128xf32>
    %166 = math.tanh %165 : vector<8x128xf32>
    %167 = vector.extract_strided_slice %164 {offsets = [0, 0], sizes = [8, 128], strides = [1, 1]} : vector<8x384xf32> to vector<8x128xf32>
    %168 = vector.extract_strided_slice %164 {offsets = [0, 128], sizes = [8, 128], strides = [1, 1]} : vector<8x384xf32> to vector<8x128xf32>
    %169 = vector.extract_strided_slice %164 {offsets = [0, 256], sizes = [8, 128], strides = [1, 1]} : vector<8x384xf32> to vector<8x128xf32>
    %170 = arith.mulf %168, %78 : vector<8x128xf32>
    %171 = arith.mulf %167, %166 : vector<8x128xf32>
    %172 = arith.addf %170, %171 : vector<8x128xf32>
    %173 = math.tanh %172 : vector<8x128xf32>
    %174 = arith.mulf %169, %173 : vector<8x128xf32>
    %175 = arith.select %148, %174, %77 : vector<8x128xf32>
    %176 = arith.select %148, %172, %78 : vector<8x128xf32>
    %177 = arith.select %148, %174, %79 : vector<8x128xf32>
    %c2_i32_68 = arith.constant 2 : i32
    %178 = arith.subi %c1_i32_45, %c2_i32_68 : i32
    %c0_i32_69 = arith.constant 0 : i32
    %179 = arith.cmpi sge, %178, %c0_i32_69 : i32
    %c8_i32_70 = arith.constant 8 : i32
    %180 = arith.cmpi slt, %178, %c8_i32_70 : i32
    %181 = arith.andi %179, %180 : i1
    %182 = arith.truncf %79 : vector<8x128xf32> to vector<8x128xbf16>
    %183 = arith.truncf %110 : vector<8x128xf32> to vector<8x128xbf16>
    %184 = tpu.concatenate %182, %183 in 1 : vector<8x128xbf16>, vector<8x128xbf16> -> vector<8x256xbf16>
    %c1_71 = arith.constant 1 : index
    %c0_72 = arith.constant 0 : index
    %c0_73 = arith.constant 0 : index
    %185 = vector.load %arg5[%c1_71, %c0_72, %c0_73] : memref<2x256x512xbf16, #tpu.memory_space<vmem>>, vector<1x256x512xbf16>
    %186 = vector.shape_cast %185 : vector<1x256x512xbf16> to vector<256x512xbf16>
    %cst_74 = arith.constant dense<0.000000e+00> : vector<8x512xf32>
    %187 = tpu.matmul %184, %186, %cst_74 {dimension_numbers = #tpu.dot_dimension_numbers<[1], [0], [0], [1], [0, 0, 1, 1], [], []>} : vector<8x256xbf16>, vector<256x512xbf16>, vector<8x512xf32> -> vector<8x512xf32>
    %c1_75 = arith.constant 1 : index
    %c0_76 = arith.constant 0 : index
    %c0_77 = arith.constant 0 : index
    %188 = vector.load %arg6[%c1_75, %c0_76, %c0_77] : memref<2x1x512xf32, #tpu.memory_space<vmem>>, vector<1x1x512xf32>
    %189 = vector.shape_cast %188 : vector<1x1x512xf32> to vector<1x512xf32>
    %190 = vector.broadcast %189 : vector<1x512xf32> to vector<8x512xf32>
    %191 = arith.addf %187, %190 : vector<8x512xf32>
    %192 = vector.extract_strided_slice %191 {offsets = [0, 0], sizes = [8, 384], strides = [1, 1]} : vector<8x512xf32> to vector<8x384xf32>
    %193 = arith.negf %192 : vector<8x384xf32>
    %194 = math.exp %193 : vector<8x384xf32>
    %cst_78 = arith.constant 1.000000e+00 : f32
    %195 = vector.broadcast %cst_78 : f32 to vector<8x384xf32>
    %196 = arith.addf %195, %194 : vector<8x384xf32>
    %197 = arith.divf %195, %196 : vector<8x384xf32>
    %198 = vector.extract_strided_slice %191 {offsets = [0, 384], sizes = [8, 128], strides = [1, 1]} : vector<8x512xf32> to vector<8x128xf32>
    %199 = math.tanh %198 : vector<8x128xf32>
    %200 = vector.extract_strided_slice %197 {offsets = [0, 0], sizes = [8, 128], strides = [1, 1]} : vector<8x384xf32> to vector<8x128xf32>
    %201 = vector.extract_strided_slice %197 {offsets = [0, 128], sizes = [8, 128], strides = [1, 1]} : vector<8x384xf32> to vector<8x128xf32>
    %202 = vector.extract_strided_slice %197 {offsets = [0, 256], sizes = [8, 128], strides = [1, 1]} : vector<8x384xf32> to vector<8x128xf32>
    %203 = arith.mulf %201, %111 : vector<8x128xf32>
    %204 = arith.mulf %200, %199 : vector<8x128xf32>
    %205 = arith.addf %203, %204 : vector<8x128xf32>
    %206 = math.tanh %205 : vector<8x128xf32>
    %207 = arith.mulf %202, %206 : vector<8x128xf32>
    %208 = arith.select %181, %207, %110 : vector<8x128xf32>
    %209 = arith.select %181, %205, %111 : vector<8x128xf32>
    %c2_i32_79 = arith.constant 2 : i32
    %c0_i32_80 = arith.constant 0 : i32
    %210 = arith.subi %c2_i32_79, %c0_i32_80 : i32
    %c0_i32_81 = arith.constant 0 : i32
    %211 = arith.cmpi sge, %210, %c0_i32_81 : i32
    %c8_i32_82 = arith.constant 8 : i32
    %212 = arith.cmpi slt, %210, %c8_i32_82 : i32
    %213 = arith.andi %211, %212 : i1
    %c0_i32_83 = arith.constant 0 : i32
    %c7_i32_84 = arith.constant 7 : i32
    %214 = arith.maxsi %c0_i32_83, %210 : i32
    %215 = arith.minsi %c7_i32_84, %214 : i32
    %216 = arith.index_cast %215 : i32 to index
    %c0_85 = arith.constant 0 : index
    %c0_86 = arith.constant 0 : index
    %217 = vector.load %arg1[%216, %c0_85, %c0_86] : memref<8x8x512xbf16, #tpu.memory_space<vmem>>, vector<1x8x512xbf16>
    %218 = vector.shape_cast %217 : vector<1x8x512xbf16> to vector<8x512xbf16>
    %219 = arith.extf %218 : vector<8x512xbf16> to vector<8x512xf32>
    %220 = arith.truncf %142 : vector<8x128xf32> to vector<8x128xbf16>
    %c0_87 = arith.constant 0 : index
    %c0_88 = arith.constant 0 : index
    %221 = vector.load %arg4[%c0_87, %c0_88] : memref<128x512xbf16, #tpu.memory_space<vmem>>, vector<128x512xbf16>
    %cst_89 = arith.constant dense<0.000000e+00> : vector<8x512xf32>
    %222 = tpu.matmul %220, %221, %cst_89 {dimension_numbers = #tpu.dot_dimension_numbers<[1], [0], [0], [1], [0, 0, 1, 1], [], []>} : vector<8x128xbf16>, vector<128x512xbf16>, vector<8x512xf32> -> vector<8x512xf32>
    %223 = arith.addf %219, %222 : vector<8x512xf32>
    %224 = vector.extract_strided_slice %223 {offsets = [0, 0], sizes = [8, 384], strides = [1, 1]} : vector<8x512xf32> to vector<8x384xf32>
    %225 = arith.negf %224 : vector<8x384xf32>
    %226 = math.exp %225 : vector<8x384xf32>
    %cst_90 = arith.constant 1.000000e+00 : f32
    %227 = vector.broadcast %cst_90 : f32 to vector<8x384xf32>
    %228 = arith.addf %227, %226 : vector<8x384xf32>
    %229 = arith.divf %227, %228 : vector<8x384xf32>
    %230 = vector.extract_strided_slice %223 {offsets = [0, 384], sizes = [8, 128], strides = [1, 1]} : vector<8x512xf32> to vector<8x128xf32>
    %231 = math.tanh %230 : vector<8x128xf32>
    %232 = vector.extract_strided_slice %229 {offsets = [0, 0], sizes = [8, 128], strides = [1, 1]} : vector<8x384xf32> to vector<8x128xf32>
    %233 = vector.extract_strided_slice %229 {offsets = [0, 128], sizes = [8, 128], strides = [1, 1]} : vector<8x384xf32> to vector<8x128xf32>
    %234 = vector.extract_strided_slice %229 {offsets = [0, 256], sizes = [8, 128], strides = [1, 1]} : vector<8x384xf32> to vector<8x128xf32>
    %235 = arith.mulf %233, %143 : vector<8x128xf32>
    %236 = arith.mulf %232, %231 : vector<8x128xf32>
    %237 = arith.addf %235, %236 : vector<8x128xf32>
    %238 = math.tanh %237 : vector<8x128xf32>
    %239 = arith.mulf %234, %238 : vector<8x128xf32>
    %240 = arith.select %213, %239, %142 : vector<8x128xf32>
    %241 = arith.select %213, %237, %143 : vector<8x128xf32>
    %242 = arith.select %213, %239, %144 : vector<8x128xf32>
    %c1_i32_91 = arith.constant 1 : i32
    %243 = arith.subi %c2_i32_79, %c1_i32_91 : i32
    %c0_i32_92 = arith.constant 0 : i32
    %244 = arith.cmpi sge, %243, %c0_i32_92 : i32
    %c8_i32_93 = arith.constant 8 : i32
    %245 = arith.cmpi slt, %243, %c8_i32_93 : i32
    %246 = arith.andi %244, %245 : i1
    %247 = arith.truncf %144 : vector<8x128xf32> to vector<8x128xbf16>
    %248 = arith.truncf %175 : vector<8x128xf32> to vector<8x128xbf16>
    %249 = tpu.concatenate %247, %248 in 1 : vector<8x128xbf16>, vector<8x128xbf16> -> vector<8x256xbf16>
    %c0_94 = arith.constant 0 : index
    %c0_95 = arith.constant 0 : index
    %c0_96 = arith.constant 0 : index
    %250 = vector.load %arg5[%c0_94, %c0_95, %c0_96] : memref<2x256x512xbf16, #tpu.memory_space<vmem>>, vector<1x256x512xbf16>
    %251 = vector.shape_cast %250 : vector<1x256x512xbf16> to vector<256x512xbf16>
    %cst_97 = arith.constant dense<0.000000e+00> : vector<8x512xf32>
    %252 = tpu.matmul %249, %251, %cst_97 {dimension_numbers = #tpu.dot_dimension_numbers<[1], [0], [0], [1], [0, 0, 1, 1], [], []>} : vector<8x256xbf16>, vector<256x512xbf16>, vector<8x512xf32> -> vector<8x512xf32>
    %c0_98 = arith.constant 0 : index
    %c0_99 = arith.constant 0 : index
    %c0_100 = arith.constant 0 : index
    %253 = vector.load %arg6[%c0_98, %c0_99, %c0_100] : memref<2x1x512xf32, #tpu.memory_space<vmem>>, vector<1x1x512xf32>
    %254 = vector.shape_cast %253 : vector<1x1x512xf32> to vector<1x512xf32>
    %255 = vector.broadcast %254 : vector<1x512xf32> to vector<8x512xf32>
    %256 = arith.addf %252, %255 : vector<8x512xf32>
    %257 = vector.extract_strided_slice %256 {offsets = [0, 0], sizes = [8, 384], strides = [1, 1]} : vector<8x512xf32> to vector<8x384xf32>
    %258 = arith.negf %257 : vector<8x384xf32>
    %259 = math.exp %258 : vector<8x384xf32>
    %cst_101 = arith.constant 1.000000e+00 : f32
    %260 = vector.broadcast %cst_101 : f32 to vector<8x384xf32>
    %261 = arith.addf %260, %259 : vector<8x384xf32>
    %262 = arith.divf %260, %261 : vector<8x384xf32>
    %263 = vector.extract_strided_slice %256 {offsets = [0, 384], sizes = [8, 128], strides = [1, 1]} : vector<8x512xf32> to vector<8x128xf32>
    %264 = math.tanh %263 : vector<8x128xf32>
    %265 = vector.extract_strided_slice %262 {offsets = [0, 0], sizes = [8, 128], strides = [1, 1]} : vector<8x384xf32> to vector<8x128xf32>
    %266 = vector.extract_strided_slice %262 {offsets = [0, 128], sizes = [8, 128], strides = [1, 1]} : vector<8x384xf32> to vector<8x128xf32>
    %267 = vector.extract_strided_slice %262 {offsets = [0, 256], sizes = [8, 128], strides = [1, 1]} : vector<8x384xf32> to vector<8x128xf32>
    %268 = arith.mulf %266, %176 : vector<8x128xf32>
    %269 = arith.mulf %265, %264 : vector<8x128xf32>
    %270 = arith.addf %268, %269 : vector<8x128xf32>
    %271 = math.tanh %270 : vector<8x128xf32>
    %272 = arith.mulf %267, %271 : vector<8x128xf32>
    %273 = arith.select %246, %272, %175 : vector<8x128xf32>
    %274 = arith.select %246, %270, %176 : vector<8x128xf32>
    %275 = arith.select %246, %272, %177 : vector<8x128xf32>
    %c2_i32_102 = arith.constant 2 : i32
    %276 = arith.subi %c2_i32_79, %c2_i32_102 : i32
    %c0_i32_103 = arith.constant 0 : i32
    %277 = arith.cmpi sge, %276, %c0_i32_103 : i32
    %c8_i32_104 = arith.constant 8 : i32
    %278 = arith.cmpi slt, %276, %c8_i32_104 : i32
    %279 = arith.andi %277, %278 : i1
    %280 = arith.truncf %177 : vector<8x128xf32> to vector<8x128xbf16>
    %281 = arith.truncf %208 : vector<8x128xf32> to vector<8x128xbf16>
    %282 = tpu.concatenate %280, %281 in 1 : vector<8x128xbf16>, vector<8x128xbf16> -> vector<8x256xbf16>
    %c1_105 = arith.constant 1 : index
    %c0_106 = arith.constant 0 : index
    %c0_107 = arith.constant 0 : index
    %283 = vector.load %arg5[%c1_105, %c0_106, %c0_107] : memref<2x256x512xbf16, #tpu.memory_space<vmem>>, vector<1x256x512xbf16>
    %284 = vector.shape_cast %283 : vector<1x256x512xbf16> to vector<256x512xbf16>
    %cst_108 = arith.constant dense<0.000000e+00> : vector<8x512xf32>
    %285 = tpu.matmul %282, %284, %cst_108 {dimension_numbers = #tpu.dot_dimension_numbers<[1], [0], [0], [1], [0, 0, 1, 1], [], []>} : vector<8x256xbf16>, vector<256x512xbf16>, vector<8x512xf32> -> vector<8x512xf32>
    %c1_109 = arith.constant 1 : index
    %c0_110 = arith.constant 0 : index
    %c0_111 = arith.constant 0 : index
    %286 = vector.load %arg6[%c1_109, %c0_110, %c0_111] : memref<2x1x512xf32, #tpu.memory_space<vmem>>, vector<1x1x512xf32>
    %287 = vector.shape_cast %286 : vector<1x1x512xf32> to vector<1x512xf32>
    %288 = vector.broadcast %287 : vector<1x512xf32> to vector<8x512xf32>
    %289 = arith.addf %285, %288 : vector<8x512xf32>
    %290 = vector.extract_strided_slice %289 {offsets = [0, 0], sizes = [8, 384], strides = [1, 1]} : vector<8x512xf32> to vector<8x384xf32>
    %291 = arith.negf %290 : vector<8x384xf32>
    %292 = math.exp %291 : vector<8x384xf32>
    %cst_112 = arith.constant 1.000000e+00 : f32
    %293 = vector.broadcast %cst_112 : f32 to vector<8x384xf32>
    %294 = arith.addf %293, %292 : vector<8x384xf32>
    %295 = arith.divf %293, %294 : vector<8x384xf32>
    %296 = vector.extract_strided_slice %289 {offsets = [0, 384], sizes = [8, 128], strides = [1, 1]} : vector<8x512xf32> to vector<8x128xf32>
    %297 = math.tanh %296 : vector<8x128xf32>
    %298 = vector.extract_strided_slice %295 {offsets = [0, 0], sizes = [8, 128], strides = [1, 1]} : vector<8x384xf32> to vector<8x128xf32>
    %299 = vector.extract_strided_slice %295 {offsets = [0, 128], sizes = [8, 128], strides = [1, 1]} : vector<8x384xf32> to vector<8x128xf32>
    %300 = vector.extract_strided_slice %295 {offsets = [0, 256], sizes = [8, 128], strides = [1, 1]} : vector<8x384xf32> to vector<8x128xf32>
    %301 = arith.mulf %299, %209 : vector<8x128xf32>
    %302 = arith.mulf %298, %297 : vector<8x128xf32>
    %303 = arith.addf %301, %302 : vector<8x128xf32>
    %304 = math.tanh %303 : vector<8x128xf32>
    %305 = arith.mulf %300, %304 : vector<8x128xf32>
    %306 = arith.select %279, %305, %208 : vector<8x128xf32>
    %307 = arith.select %279, %303, %209 : vector<8x128xf32>
    %c3_i32 = arith.constant 3 : i32
    %c0_i32_113 = arith.constant 0 : i32
    %308 = arith.subi %c3_i32, %c0_i32_113 : i32
    %c0_i32_114 = arith.constant 0 : i32
    %309 = arith.cmpi sge, %308, %c0_i32_114 : i32
    %c8_i32_115 = arith.constant 8 : i32
    %310 = arith.cmpi slt, %308, %c8_i32_115 : i32
    %311 = arith.andi %309, %310 : i1
    %c0_i32_116 = arith.constant 0 : i32
    %c7_i32_117 = arith.constant 7 : i32
    %312 = arith.maxsi %c0_i32_116, %308 : i32
    %313 = arith.minsi %c7_i32_117, %312 : i32
    %314 = arith.index_cast %313 : i32 to index
    %c0_118 = arith.constant 0 : index
    %c0_119 = arith.constant 0 : index
    %315 = vector.load %arg1[%314, %c0_118, %c0_119] : memref<8x8x512xbf16, #tpu.memory_space<vmem>>, vector<1x8x512xbf16>
    %316 = vector.shape_cast %315 : vector<1x8x512xbf16> to vector<8x512xbf16>
    %317 = arith.extf %316 : vector<8x512xbf16> to vector<8x512xf32>
    %318 = arith.truncf %240 : vector<8x128xf32> to vector<8x128xbf16>
    %c0_120 = arith.constant 0 : index
    %c0_121 = arith.constant 0 : index
    %319 = vector.load %arg4[%c0_120, %c0_121] : memref<128x512xbf16, #tpu.memory_space<vmem>>, vector<128x512xbf16>
    %cst_122 = arith.constant dense<0.000000e+00> : vector<8x512xf32>
    %320 = tpu.matmul %318, %319, %cst_122 {dimension_numbers = #tpu.dot_dimension_numbers<[1], [0], [0], [1], [0, 0, 1, 1], [], []>} : vector<8x128xbf16>, vector<128x512xbf16>, vector<8x512xf32> -> vector<8x512xf32>
    %321 = arith.addf %317, %320 : vector<8x512xf32>
    %322 = vector.extract_strided_slice %321 {offsets = [0, 0], sizes = [8, 384], strides = [1, 1]} : vector<8x512xf32> to vector<8x384xf32>
    %323 = arith.negf %322 : vector<8x384xf32>
    %324 = math.exp %323 : vector<8x384xf32>
    %cst_123 = arith.constant 1.000000e+00 : f32
    %325 = vector.broadcast %cst_123 : f32 to vector<8x384xf32>
    %326 = arith.addf %325, %324 : vector<8x384xf32>
    %327 = arith.divf %325, %326 : vector<8x384xf32>
    %328 = vector.extract_strided_slice %321 {offsets = [0, 384], sizes = [8, 128], strides = [1, 1]} : vector<8x512xf32> to vector<8x128xf32>
    %329 = math.tanh %328 : vector<8x128xf32>
    %330 = vector.extract_strided_slice %327 {offsets = [0, 0], sizes = [8, 128], strides = [1, 1]} : vector<8x384xf32> to vector<8x128xf32>
    %331 = vector.extract_strided_slice %327 {offsets = [0, 128], sizes = [8, 128], strides = [1, 1]} : vector<8x384xf32> to vector<8x128xf32>
    %332 = vector.extract_strided_slice %327 {offsets = [0, 256], sizes = [8, 128], strides = [1, 1]} : vector<8x384xf32> to vector<8x128xf32>
    %333 = arith.mulf %331, %241 : vector<8x128xf32>
    %334 = arith.mulf %330, %329 : vector<8x128xf32>
    %335 = arith.addf %333, %334 : vector<8x128xf32>
    %336 = math.tanh %335 : vector<8x128xf32>
    %337 = arith.mulf %332, %336 : vector<8x128xf32>
    %338 = arith.select %311, %337, %240 : vector<8x128xf32>
    %339 = arith.select %311, %335, %241 : vector<8x128xf32>
    %340 = arith.select %311, %337, %242 : vector<8x128xf32>
    %c1_i32_124 = arith.constant 1 : i32
    %341 = arith.subi %c3_i32, %c1_i32_124 : i32
    %c0_i32_125 = arith.constant 0 : i32
    %342 = arith.cmpi sge, %341, %c0_i32_125 : i32
    %c8_i32_126 = arith.constant 8 : i32
    %343 = arith.cmpi slt, %341, %c8_i32_126 : i32
    %344 = arith.andi %342, %343 : i1
    %345 = arith.truncf %242 : vector<8x128xf32> to vector<8x128xbf16>
    %346 = arith.truncf %273 : vector<8x128xf32> to vector<8x128xbf16>
    %347 = tpu.concatenate %345, %346 in 1 : vector<8x128xbf16>, vector<8x128xbf16> -> vector<8x256xbf16>
    %c0_127 = arith.constant 0 : index
    %c0_128 = arith.constant 0 : index
    %c0_129 = arith.constant 0 : index
    %348 = vector.load %arg5[%c0_127, %c0_128, %c0_129] : memref<2x256x512xbf16, #tpu.memory_space<vmem>>, vector<1x256x512xbf16>
    %349 = vector.shape_cast %348 : vector<1x256x512xbf16> to vector<256x512xbf16>
    %cst_130 = arith.constant dense<0.000000e+00> : vector<8x512xf32>
    %350 = tpu.matmul %347, %349, %cst_130 {dimension_numbers = #tpu.dot_dimension_numbers<[1], [0], [0], [1], [0, 0, 1, 1], [], []>} : vector<8x256xbf16>, vector<256x512xbf16>, vector<8x512xf32> -> vector<8x512xf32>
    %c0_131 = arith.constant 0 : index
    %c0_132 = arith.constant 0 : index
    %c0_133 = arith.constant 0 : index
    %351 = vector.load %arg6[%c0_131, %c0_132, %c0_133] : memref<2x1x512xf32, #tpu.memory_space<vmem>>, vector<1x1x512xf32>
    %352 = vector.shape_cast %351 : vector<1x1x512xf32> to vector<1x512xf32>
    %353 = vector.broadcast %352 : vector<1x512xf32> to vector<8x512xf32>
    %354 = arith.addf %350, %353 : vector<8x512xf32>
    %355 = vector.extract_strided_slice %354 {offsets = [0, 0], sizes = [8, 384], strides = [1, 1]} : vector<8x512xf32> to vector<8x384xf32>
    %356 = arith.negf %355 : vector<8x384xf32>
    %357 = math.exp %356 : vector<8x384xf32>
    %cst_134 = arith.constant 1.000000e+00 : f32
    %358 = vector.broadcast %cst_134 : f32 to vector<8x384xf32>
    %359 = arith.addf %358, %357 : vector<8x384xf32>
    %360 = arith.divf %358, %359 : vector<8x384xf32>
    %361 = vector.extract_strided_slice %354 {offsets = [0, 384], sizes = [8, 128], strides = [1, 1]} : vector<8x512xf32> to vector<8x128xf32>
    %362 = math.tanh %361 : vector<8x128xf32>
    %363 = vector.extract_strided_slice %360 {offsets = [0, 0], sizes = [8, 128], strides = [1, 1]} : vector<8x384xf32> to vector<8x128xf32>
    %364 = vector.extract_strided_slice %360 {offsets = [0, 128], sizes = [8, 128], strides = [1, 1]} : vector<8x384xf32> to vector<8x128xf32>
    %365 = vector.extract_strided_slice %360 {offsets = [0, 256], sizes = [8, 128], strides = [1, 1]} : vector<8x384xf32> to vector<8x128xf32>
    %366 = arith.mulf %364, %274 : vector<8x128xf32>
    %367 = arith.mulf %363, %362 : vector<8x128xf32>
    %368 = arith.addf %366, %367 : vector<8x128xf32>
    %369 = math.tanh %368 : vector<8x128xf32>
    %370 = arith.mulf %365, %369 : vector<8x128xf32>
    %371 = arith.select %344, %370, %273 : vector<8x128xf32>
    %372 = arith.select %344, %368, %274 : vector<8x128xf32>
    %373 = arith.select %344, %370, %275 : vector<8x128xf32>
    %c2_i32_135 = arith.constant 2 : i32
    %374 = arith.subi %c3_i32, %c2_i32_135 : i32
    %c0_i32_136 = arith.constant 0 : i32
    %375 = arith.cmpi sge, %374, %c0_i32_136 : i32
    %c8_i32_137 = arith.constant 8 : i32
    %376 = arith.cmpi slt, %374, %c8_i32_137 : i32
    %377 = arith.andi %375, %376 : i1
    %378 = arith.truncf %275 : vector<8x128xf32> to vector<8x128xbf16>
    %379 = arith.truncf %306 : vector<8x128xf32> to vector<8x128xbf16>
    %380 = tpu.concatenate %378, %379 in 1 : vector<8x128xbf16>, vector<8x128xbf16> -> vector<8x256xbf16>
    %c1_138 = arith.constant 1 : index
    %c0_139 = arith.constant 0 : index
    %c0_140 = arith.constant 0 : index
    %381 = vector.load %arg5[%c1_138, %c0_139, %c0_140] : memref<2x256x512xbf16, #tpu.memory_space<vmem>>, vector<1x256x512xbf16>
    %382 = vector.shape_cast %381 : vector<1x256x512xbf16> to vector<256x512xbf16>
    %cst_141 = arith.constant dense<0.000000e+00> : vector<8x512xf32>
    %383 = tpu.matmul %380, %382, %cst_141 {dimension_numbers = #tpu.dot_dimension_numbers<[1], [0], [0], [1], [0, 0, 1, 1], [], []>} : vector<8x256xbf16>, vector<256x512xbf16>, vector<8x512xf32> -> vector<8x512xf32>
    %c1_142 = arith.constant 1 : index
    %c0_143 = arith.constant 0 : index
    %c0_144 = arith.constant 0 : index
    %384 = vector.load %arg6[%c1_142, %c0_143, %c0_144] : memref<2x1x512xf32, #tpu.memory_space<vmem>>, vector<1x1x512xf32>
    %385 = vector.shape_cast %384 : vector<1x1x512xf32> to vector<1x512xf32>
    %386 = vector.broadcast %385 : vector<1x512xf32> to vector<8x512xf32>
    %387 = arith.addf %383, %386 : vector<8x512xf32>
    %388 = vector.extract_strided_slice %387 {offsets = [0, 0], sizes = [8, 384], strides = [1, 1]} : vector<8x512xf32> to vector<8x384xf32>
    %389 = arith.negf %388 : vector<8x384xf32>
    %390 = math.exp %389 : vector<8x384xf32>
    %cst_145 = arith.constant 1.000000e+00 : f32
    %391 = vector.broadcast %cst_145 : f32 to vector<8x384xf32>
    %392 = arith.addf %391, %390 : vector<8x384xf32>
    %393 = arith.divf %391, %392 : vector<8x384xf32>
    %394 = vector.extract_strided_slice %387 {offsets = [0, 384], sizes = [8, 128], strides = [1, 1]} : vector<8x512xf32> to vector<8x128xf32>
    %395 = math.tanh %394 : vector<8x128xf32>
    %396 = vector.extract_strided_slice %393 {offsets = [0, 0], sizes = [8, 128], strides = [1, 1]} : vector<8x384xf32> to vector<8x128xf32>
    %397 = vector.extract_strided_slice %393 {offsets = [0, 128], sizes = [8, 128], strides = [1, 1]} : vector<8x384xf32> to vector<8x128xf32>
    %398 = vector.extract_strided_slice %393 {offsets = [0, 256], sizes = [8, 128], strides = [1, 1]} : vector<8x384xf32> to vector<8x128xf32>
    %399 = arith.mulf %397, %307 : vector<8x128xf32>
    %400 = arith.mulf %396, %395 : vector<8x128xf32>
    %401 = arith.addf %399, %400 : vector<8x128xf32>
    %402 = math.tanh %401 : vector<8x128xf32>
    %403 = arith.mulf %398, %402 : vector<8x128xf32>
    %404 = arith.select %377, %403, %306 : vector<8x128xf32>
    %405 = arith.select %377, %401, %307 : vector<8x128xf32>
    %c4_i32 = arith.constant 4 : i32
    %c0_i32_146 = arith.constant 0 : i32
    %406 = arith.subi %c4_i32, %c0_i32_146 : i32
    %c0_i32_147 = arith.constant 0 : i32
    %407 = arith.cmpi sge, %406, %c0_i32_147 : i32
    %c8_i32_148 = arith.constant 8 : i32
    %408 = arith.cmpi slt, %406, %c8_i32_148 : i32
    %409 = arith.andi %407, %408 : i1
    %c0_i32_149 = arith.constant 0 : i32
    %c7_i32_150 = arith.constant 7 : i32
    %410 = arith.maxsi %c0_i32_149, %406 : i32
    %411 = arith.minsi %c7_i32_150, %410 : i32
    %412 = arith.index_cast %411 : i32 to index
    %c0_151 = arith.constant 0 : index
    %c0_152 = arith.constant 0 : index
    %413 = vector.load %arg1[%412, %c0_151, %c0_152] : memref<8x8x512xbf16, #tpu.memory_space<vmem>>, vector<1x8x512xbf16>
    %414 = vector.shape_cast %413 : vector<1x8x512xbf16> to vector<8x512xbf16>
    %415 = arith.extf %414 : vector<8x512xbf16> to vector<8x512xf32>
    %416 = arith.truncf %338 : vector<8x128xf32> to vector<8x128xbf16>
    %c0_153 = arith.constant 0 : index
    %c0_154 = arith.constant 0 : index
    %417 = vector.load %arg4[%c0_153, %c0_154] : memref<128x512xbf16, #tpu.memory_space<vmem>>, vector<128x512xbf16>
    %cst_155 = arith.constant dense<0.000000e+00> : vector<8x512xf32>
    %418 = tpu.matmul %416, %417, %cst_155 {dimension_numbers = #tpu.dot_dimension_numbers<[1], [0], [0], [1], [0, 0, 1, 1], [], []>} : vector<8x128xbf16>, vector<128x512xbf16>, vector<8x512xf32> -> vector<8x512xf32>
    %419 = arith.addf %415, %418 : vector<8x512xf32>
    %420 = vector.extract_strided_slice %419 {offsets = [0, 0], sizes = [8, 384], strides = [1, 1]} : vector<8x512xf32> to vector<8x384xf32>
    %421 = arith.negf %420 : vector<8x384xf32>
    %422 = math.exp %421 : vector<8x384xf32>
    %cst_156 = arith.constant 1.000000e+00 : f32
    %423 = vector.broadcast %cst_156 : f32 to vector<8x384xf32>
    %424 = arith.addf %423, %422 : vector<8x384xf32>
    %425 = arith.divf %423, %424 : vector<8x384xf32>
    %426 = vector.extract_strided_slice %419 {offsets = [0, 384], sizes = [8, 128], strides = [1, 1]} : vector<8x512xf32> to vector<8x128xf32>
    %427 = math.tanh %426 : vector<8x128xf32>
    %428 = vector.extract_strided_slice %425 {offsets = [0, 0], sizes = [8, 128], strides = [1, 1]} : vector<8x384xf32> to vector<8x128xf32>
    %429 = vector.extract_strided_slice %425 {offsets = [0, 128], sizes = [8, 128], strides = [1, 1]} : vector<8x384xf32> to vector<8x128xf32>
    %430 = vector.extract_strided_slice %425 {offsets = [0, 256], sizes = [8, 128], strides = [1, 1]} : vector<8x384xf32> to vector<8x128xf32>
    %431 = arith.mulf %429, %339 : vector<8x128xf32>
    %432 = arith.mulf %428, %427 : vector<8x128xf32>
    %433 = arith.addf %431, %432 : vector<8x128xf32>
    %434 = math.tanh %433 : vector<8x128xf32>
    %435 = arith.mulf %430, %434 : vector<8x128xf32>
    %436 = arith.select %409, %435, %338 : vector<8x128xf32>
    %437 = arith.select %409, %433, %339 : vector<8x128xf32>
    %438 = arith.select %409, %435, %340 : vector<8x128xf32>
    %c1_i32_157 = arith.constant 1 : i32
    %439 = arith.subi %c4_i32, %c1_i32_157 : i32
    %c0_i32_158 = arith.constant 0 : i32
    %440 = arith.cmpi sge, %439, %c0_i32_158 : i32
    %c8_i32_159 = arith.constant 8 : i32
    %441 = arith.cmpi slt, %439, %c8_i32_159 : i32
    %442 = arith.andi %440, %441 : i1
    %443 = arith.truncf %340 : vector<8x128xf32> to vector<8x128xbf16>
    %444 = arith.truncf %371 : vector<8x128xf32> to vector<8x128xbf16>
    %445 = tpu.concatenate %443, %444 in 1 : vector<8x128xbf16>, vector<8x128xbf16> -> vector<8x256xbf16>
    %c0_160 = arith.constant 0 : index
    %c0_161 = arith.constant 0 : index
    %c0_162 = arith.constant 0 : index
    %446 = vector.load %arg5[%c0_160, %c0_161, %c0_162] : memref<2x256x512xbf16, #tpu.memory_space<vmem>>, vector<1x256x512xbf16>
    %447 = vector.shape_cast %446 : vector<1x256x512xbf16> to vector<256x512xbf16>
    %cst_163 = arith.constant dense<0.000000e+00> : vector<8x512xf32>
    %448 = tpu.matmul %445, %447, %cst_163 {dimension_numbers = #tpu.dot_dimension_numbers<[1], [0], [0], [1], [0, 0, 1, 1], [], []>} : vector<8x256xbf16>, vector<256x512xbf16>, vector<8x512xf32> -> vector<8x512xf32>
    %c0_164 = arith.constant 0 : index
    %c0_165 = arith.constant 0 : index
    %c0_166 = arith.constant 0 : index
    %449 = vector.load %arg6[%c0_164, %c0_165, %c0_166] : memref<2x1x512xf32, #tpu.memory_space<vmem>>, vector<1x1x512xf32>
    %450 = vector.shape_cast %449 : vector<1x1x512xf32> to vector<1x512xf32>
    %451 = vector.broadcast %450 : vector<1x512xf32> to vector<8x512xf32>
    %452 = arith.addf %448, %451 : vector<8x512xf32>
    %453 = vector.extract_strided_slice %452 {offsets = [0, 0], sizes = [8, 384], strides = [1, 1]} : vector<8x512xf32> to vector<8x384xf32>
    %454 = arith.negf %453 : vector<8x384xf32>
    %455 = math.exp %454 : vector<8x384xf32>
    %cst_167 = arith.constant 1.000000e+00 : f32
    %456 = vector.broadcast %cst_167 : f32 to vector<8x384xf32>
    %457 = arith.addf %456, %455 : vector<8x384xf32>
    %458 = arith.divf %456, %457 : vector<8x384xf32>
    %459 = vector.extract_strided_slice %452 {offsets = [0, 384], sizes = [8, 128], strides = [1, 1]} : vector<8x512xf32> to vector<8x128xf32>
    %460 = math.tanh %459 : vector<8x128xf32>
    %461 = vector.extract_strided_slice %458 {offsets = [0, 0], sizes = [8, 128], strides = [1, 1]} : vector<8x384xf32> to vector<8x128xf32>
    %462 = vector.extract_strided_slice %458 {offsets = [0, 128], sizes = [8, 128], strides = [1, 1]} : vector<8x384xf32> to vector<8x128xf32>
    %463 = vector.extract_strided_slice %458 {offsets = [0, 256], sizes = [8, 128], strides = [1, 1]} : vector<8x384xf32> to vector<8x128xf32>
    %464 = arith.mulf %462, %372 : vector<8x128xf32>
    %465 = arith.mulf %461, %460 : vector<8x128xf32>
    %466 = arith.addf %464, %465 : vector<8x128xf32>
    %467 = math.tanh %466 : vector<8x128xf32>
    %468 = arith.mulf %463, %467 : vector<8x128xf32>
    %469 = arith.select %442, %468, %371 : vector<8x128xf32>
    %470 = arith.select %442, %466, %372 : vector<8x128xf32>
    %471 = arith.select %442, %468, %373 : vector<8x128xf32>
    %c2_i32_168 = arith.constant 2 : i32
    %472 = arith.subi %c4_i32, %c2_i32_168 : i32
    %c0_i32_169 = arith.constant 0 : i32
    %473 = arith.cmpi sge, %472, %c0_i32_169 : i32
    %c8_i32_170 = arith.constant 8 : i32
    %474 = arith.cmpi slt, %472, %c8_i32_170 : i32
    %475 = arith.andi %473, %474 : i1
    %476 = arith.truncf %373 : vector<8x128xf32> to vector<8x128xbf16>
    %477 = arith.truncf %404 : vector<8x128xf32> to vector<8x128xbf16>
    %478 = tpu.concatenate %476, %477 in 1 : vector<8x128xbf16>, vector<8x128xbf16> -> vector<8x256xbf16>
    %c1_171 = arith.constant 1 : index
    %c0_172 = arith.constant 0 : index
    %c0_173 = arith.constant 0 : index
    %479 = vector.load %arg5[%c1_171, %c0_172, %c0_173] : memref<2x256x512xbf16, #tpu.memory_space<vmem>>, vector<1x256x512xbf16>
    %480 = vector.shape_cast %479 : vector<1x256x512xbf16> to vector<256x512xbf16>
    %cst_174 = arith.constant dense<0.000000e+00> : vector<8x512xf32>
    %481 = tpu.matmul %478, %480, %cst_174 {dimension_numbers = #tpu.dot_dimension_numbers<[1], [0], [0], [1], [0, 0, 1, 1], [], []>} : vector<8x256xbf16>, vector<256x512xbf16>, vector<8x512xf32> -> vector<8x512xf32>
    %c1_175 = arith.constant 1 : index
    %c0_176 = arith.constant 0 : index
    %c0_177 = arith.constant 0 : index
    %482 = vector.load %arg6[%c1_175, %c0_176, %c0_177] : memref<2x1x512xf32, #tpu.memory_space<vmem>>, vector<1x1x512xf32>
    %483 = vector.shape_cast %482 : vector<1x1x512xf32> to vector<1x512xf32>
    %484 = vector.broadcast %483 : vector<1x512xf32> to vector<8x512xf32>
    %485 = arith.addf %481, %484 : vector<8x512xf32>
    %486 = vector.extract_strided_slice %485 {offsets = [0, 0], sizes = [8, 384], strides = [1, 1]} : vector<8x512xf32> to vector<8x384xf32>
    %487 = arith.negf %486 : vector<8x384xf32>
    %488 = math.exp %487 : vector<8x384xf32>
    %cst_178 = arith.constant 1.000000e+00 : f32
    %489 = vector.broadcast %cst_178 : f32 to vector<8x384xf32>
    %490 = arith.addf %489, %488 : vector<8x384xf32>
    %491 = arith.divf %489, %490 : vector<8x384xf32>
    %492 = vector.extract_strided_slice %485 {offsets = [0, 384], sizes = [8, 128], strides = [1, 1]} : vector<8x512xf32> to vector<8x128xf32>
    %493 = math.tanh %492 : vector<8x128xf32>
    %494 = vector.extract_strided_slice %491 {offsets = [0, 0], sizes = [8, 128], strides = [1, 1]} : vector<8x384xf32> to vector<8x128xf32>
    %495 = vector.extract_strided_slice %491 {offsets = [0, 128], sizes = [8, 128], strides = [1, 1]} : vector<8x384xf32> to vector<8x128xf32>
    %496 = vector.extract_strided_slice %491 {offsets = [0, 256], sizes = [8, 128], strides = [1, 1]} : vector<8x384xf32> to vector<8x128xf32>
    %497 = arith.mulf %495, %405 : vector<8x128xf32>
    %498 = arith.mulf %494, %493 : vector<8x128xf32>
    %499 = arith.addf %497, %498 : vector<8x128xf32>
    %500 = math.tanh %499 : vector<8x128xf32>
    %501 = arith.mulf %496, %500 : vector<8x128xf32>
    %502 = arith.select %475, %501, %404 : vector<8x128xf32>
    %503 = arith.select %475, %499, %405 : vector<8x128xf32>
    %c5_i32 = arith.constant 5 : i32
    %c0_i32_179 = arith.constant 0 : i32
    %504 = arith.subi %c5_i32, %c0_i32_179 : i32
    %c0_i32_180 = arith.constant 0 : i32
    %505 = arith.cmpi sge, %504, %c0_i32_180 : i32
    %c8_i32_181 = arith.constant 8 : i32
    %506 = arith.cmpi slt, %504, %c8_i32_181 : i32
    %507 = arith.andi %505, %506 : i1
    %c0_i32_182 = arith.constant 0 : i32
    %c7_i32_183 = arith.constant 7 : i32
    %508 = arith.maxsi %c0_i32_182, %504 : i32
    %509 = arith.minsi %c7_i32_183, %508 : i32
    %510 = arith.index_cast %509 : i32 to index
    %c0_184 = arith.constant 0 : index
    %c0_185 = arith.constant 0 : index
    %511 = vector.load %arg1[%510, %c0_184, %c0_185] : memref<8x8x512xbf16, #tpu.memory_space<vmem>>, vector<1x8x512xbf16>
    %512 = vector.shape_cast %511 : vector<1x8x512xbf16> to vector<8x512xbf16>
    %513 = arith.extf %512 : vector<8x512xbf16> to vector<8x512xf32>
    %514 = arith.truncf %436 : vector<8x128xf32> to vector<8x128xbf16>
    %c0_186 = arith.constant 0 : index
    %c0_187 = arith.constant 0 : index
    %515 = vector.load %arg4[%c0_186, %c0_187] : memref<128x512xbf16, #tpu.memory_space<vmem>>, vector<128x512xbf16>
    %cst_188 = arith.constant dense<0.000000e+00> : vector<8x512xf32>
    %516 = tpu.matmul %514, %515, %cst_188 {dimension_numbers = #tpu.dot_dimension_numbers<[1], [0], [0], [1], [0, 0, 1, 1], [], []>} : vector<8x128xbf16>, vector<128x512xbf16>, vector<8x512xf32> -> vector<8x512xf32>
    %517 = arith.addf %513, %516 : vector<8x512xf32>
    %518 = vector.extract_strided_slice %517 {offsets = [0, 0], sizes = [8, 384], strides = [1, 1]} : vector<8x512xf32> to vector<8x384xf32>
    %519 = arith.negf %518 : vector<8x384xf32>
    %520 = math.exp %519 : vector<8x384xf32>
    %cst_189 = arith.constant 1.000000e+00 : f32
    %521 = vector.broadcast %cst_189 : f32 to vector<8x384xf32>
    %522 = arith.addf %521, %520 : vector<8x384xf32>
    %523 = arith.divf %521, %522 : vector<8x384xf32>
    %524 = vector.extract_strided_slice %517 {offsets = [0, 384], sizes = [8, 128], strides = [1, 1]} : vector<8x512xf32> to vector<8x128xf32>
    %525 = math.tanh %524 : vector<8x128xf32>
    %526 = vector.extract_strided_slice %523 {offsets = [0, 0], sizes = [8, 128], strides = [1, 1]} : vector<8x384xf32> to vector<8x128xf32>
    %527 = vector.extract_strided_slice %523 {offsets = [0, 128], sizes = [8, 128], strides = [1, 1]} : vector<8x384xf32> to vector<8x128xf32>
    %528 = vector.extract_strided_slice %523 {offsets = [0, 256], sizes = [8, 128], strides = [1, 1]} : vector<8x384xf32> to vector<8x128xf32>
    %529 = arith.mulf %527, %437 : vector<8x128xf32>
    %530 = arith.mulf %526, %525 : vector<8x128xf32>
    %531 = arith.addf %529, %530 : vector<8x128xf32>
    %532 = math.tanh %531 : vector<8x128xf32>
    %533 = arith.mulf %528, %532 : vector<8x128xf32>
    %534 = arith.select %507, %533, %436 : vector<8x128xf32>
    %535 = arith.select %507, %531, %437 : vector<8x128xf32>
    %536 = arith.select %507, %533, %438 : vector<8x128xf32>
    %c1_i32_190 = arith.constant 1 : i32
    %537 = arith.subi %c5_i32, %c1_i32_190 : i32
    %c0_i32_191 = arith.constant 0 : i32
    %538 = arith.cmpi sge, %537, %c0_i32_191 : i32
    %c8_i32_192 = arith.constant 8 : i32
    %539 = arith.cmpi slt, %537, %c8_i32_192 : i32
    %540 = arith.andi %538, %539 : i1
    %541 = arith.truncf %438 : vector<8x128xf32> to vector<8x128xbf16>
    %542 = arith.truncf %469 : vector<8x128xf32> to vector<8x128xbf16>
    %543 = tpu.concatenate %541, %542 in 1 : vector<8x128xbf16>, vector<8x128xbf16> -> vector<8x256xbf16>
    %c0_193 = arith.constant 0 : index
    %c0_194 = arith.constant 0 : index
    %c0_195 = arith.constant 0 : index
    %544 = vector.load %arg5[%c0_193, %c0_194, %c0_195] : memref<2x256x512xbf16, #tpu.memory_space<vmem>>, vector<1x256x512xbf16>
    %545 = vector.shape_cast %544 : vector<1x256x512xbf16> to vector<256x512xbf16>
    %cst_196 = arith.constant dense<0.000000e+00> : vector<8x512xf32>
    %546 = tpu.matmul %543, %545, %cst_196 {dimension_numbers = #tpu.dot_dimension_numbers<[1], [0], [0], [1], [0, 0, 1, 1], [], []>} : vector<8x256xbf16>, vector<256x512xbf16>, vector<8x512xf32> -> vector<8x512xf32>
    %c0_197 = arith.constant 0 : index
    %c0_198 = arith.constant 0 : index
    %c0_199 = arith.constant 0 : index
    %547 = vector.load %arg6[%c0_197, %c0_198, %c0_199] : memref<2x1x512xf32, #tpu.memory_space<vmem>>, vector<1x1x512xf32>
    %548 = vector.shape_cast %547 : vector<1x1x512xf32> to vector<1x512xf32>
    %549 = vector.broadcast %548 : vector<1x512xf32> to vector<8x512xf32>
    %550 = arith.addf %546, %549 : vector<8x512xf32>
    %551 = vector.extract_strided_slice %550 {offsets = [0, 0], sizes = [8, 384], strides = [1, 1]} : vector<8x512xf32> to vector<8x384xf32>
    %552 = arith.negf %551 : vector<8x384xf32>
    %553 = math.exp %552 : vector<8x384xf32>
    %cst_200 = arith.constant 1.000000e+00 : f32
    %554 = vector.broadcast %cst_200 : f32 to vector<8x384xf32>
    %555 = arith.addf %554, %553 : vector<8x384xf32>
    %556 = arith.divf %554, %555 : vector<8x384xf32>
    %557 = vector.extract_strided_slice %550 {offsets = [0, 384], sizes = [8, 128], strides = [1, 1]} : vector<8x512xf32> to vector<8x128xf32>
    %558 = math.tanh %557 : vector<8x128xf32>
    %559 = vector.extract_strided_slice %556 {offsets = [0, 0], sizes = [8, 128], strides = [1, 1]} : vector<8x384xf32> to vector<8x128xf32>
    %560 = vector.extract_strided_slice %556 {offsets = [0, 128], sizes = [8, 128], strides = [1, 1]} : vector<8x384xf32> to vector<8x128xf32>
    %561 = vector.extract_strided_slice %556 {offsets = [0, 256], sizes = [8, 128], strides = [1, 1]} : vector<8x384xf32> to vector<8x128xf32>
    %562 = arith.mulf %560, %470 : vector<8x128xf32>
    %563 = arith.mulf %559, %558 : vector<8x128xf32>
    %564 = arith.addf %562, %563 : vector<8x128xf32>
    %565 = math.tanh %564 : vector<8x128xf32>
    %566 = arith.mulf %561, %565 : vector<8x128xf32>
    %567 = arith.select %540, %566, %469 : vector<8x128xf32>
    %568 = arith.select %540, %564, %470 : vector<8x128xf32>
    %569 = arith.select %540, %566, %471 : vector<8x128xf32>
    %c2_i32_201 = arith.constant 2 : i32
    %570 = arith.subi %c5_i32, %c2_i32_201 : i32
    %c0_i32_202 = arith.constant 0 : i32
    %571 = arith.cmpi sge, %570, %c0_i32_202 : i32
    %c8_i32_203 = arith.constant 8 : i32
    %572 = arith.cmpi slt, %570, %c8_i32_203 : i32
    %573 = arith.andi %571, %572 : i1
    %574 = arith.truncf %471 : vector<8x128xf32> to vector<8x128xbf16>
    %575 = arith.truncf %502 : vector<8x128xf32> to vector<8x128xbf16>
    %576 = tpu.concatenate %574, %575 in 1 : vector<8x128xbf16>, vector<8x128xbf16> -> vector<8x256xbf16>
    %c1_204 = arith.constant 1 : index
    %c0_205 = arith.constant 0 : index
    %c0_206 = arith.constant 0 : index
    %577 = vector.load %arg5[%c1_204, %c0_205, %c0_206] : memref<2x256x512xbf16, #tpu.memory_space<vmem>>, vector<1x256x512xbf16>
    %578 = vector.shape_cast %577 : vector<1x256x512xbf16> to vector<256x512xbf16>
    %cst_207 = arith.constant dense<0.000000e+00> : vector<8x512xf32>
    %579 = tpu.matmul %576, %578, %cst_207 {dimension_numbers = #tpu.dot_dimension_numbers<[1], [0], [0], [1], [0, 0, 1, 1], [], []>} : vector<8x256xbf16>, vector<256x512xbf16>, vector<8x512xf32> -> vector<8x512xf32>
    %c1_208 = arith.constant 1 : index
    %c0_209 = arith.constant 0 : index
    %c0_210 = arith.constant 0 : index
    %580 = vector.load %arg6[%c1_208, %c0_209, %c0_210] : memref<2x1x512xf32, #tpu.memory_space<vmem>>, vector<1x1x512xf32>
    %581 = vector.shape_cast %580 : vector<1x1x512xf32> to vector<1x512xf32>
    %582 = vector.broadcast %581 : vector<1x512xf32> to vector<8x512xf32>
    %583 = arith.addf %579, %582 : vector<8x512xf32>
    %584 = vector.extract_strided_slice %583 {offsets = [0, 0], sizes = [8, 384], strides = [1, 1]} : vector<8x512xf32> to vector<8x384xf32>
    %585 = arith.negf %584 : vector<8x384xf32>
    %586 = math.exp %585 : vector<8x384xf32>
    %cst_211 = arith.constant 1.000000e+00 : f32
    %587 = vector.broadcast %cst_211 : f32 to vector<8x384xf32>
    %588 = arith.addf %587, %586 : vector<8x384xf32>
    %589 = arith.divf %587, %588 : vector<8x384xf32>
    %590 = vector.extract_strided_slice %583 {offsets = [0, 384], sizes = [8, 128], strides = [1, 1]} : vector<8x512xf32> to vector<8x128xf32>
    %591 = math.tanh %590 : vector<8x128xf32>
    %592 = vector.extract_strided_slice %589 {offsets = [0, 0], sizes = [8, 128], strides = [1, 1]} : vector<8x384xf32> to vector<8x128xf32>
    %593 = vector.extract_strided_slice %589 {offsets = [0, 128], sizes = [8, 128], strides = [1, 1]} : vector<8x384xf32> to vector<8x128xf32>
    %594 = vector.extract_strided_slice %589 {offsets = [0, 256], sizes = [8, 128], strides = [1, 1]} : vector<8x384xf32> to vector<8x128xf32>
    %595 = arith.mulf %593, %503 : vector<8x128xf32>
    %596 = arith.mulf %592, %591 : vector<8x128xf32>
    %597 = arith.addf %595, %596 : vector<8x128xf32>
    %598 = math.tanh %597 : vector<8x128xf32>
    %599 = arith.mulf %594, %598 : vector<8x128xf32>
    %600 = arith.select %573, %599, %502 : vector<8x128xf32>
    %601 = arith.select %573, %597, %503 : vector<8x128xf32>
    %c6_i32 = arith.constant 6 : i32
    %c0_i32_212 = arith.constant 0 : i32
    %602 = arith.subi %c6_i32, %c0_i32_212 : i32
    %c0_i32_213 = arith.constant 0 : i32
    %603 = arith.cmpi sge, %602, %c0_i32_213 : i32
    %c8_i32_214 = arith.constant 8 : i32
    %604 = arith.cmpi slt, %602, %c8_i32_214 : i32
    %605 = arith.andi %603, %604 : i1
    %c0_i32_215 = arith.constant 0 : i32
    %c7_i32_216 = arith.constant 7 : i32
    %606 = arith.maxsi %c0_i32_215, %602 : i32
    %607 = arith.minsi %c7_i32_216, %606 : i32
    %608 = arith.index_cast %607 : i32 to index
    %c0_217 = arith.constant 0 : index
    %c0_218 = arith.constant 0 : index
    %609 = vector.load %arg1[%608, %c0_217, %c0_218] : memref<8x8x512xbf16, #tpu.memory_space<vmem>>, vector<1x8x512xbf16>
    %610 = vector.shape_cast %609 : vector<1x8x512xbf16> to vector<8x512xbf16>
    %611 = arith.extf %610 : vector<8x512xbf16> to vector<8x512xf32>
    %612 = arith.truncf %534 : vector<8x128xf32> to vector<8x128xbf16>
    %c0_219 = arith.constant 0 : index
    %c0_220 = arith.constant 0 : index
    %613 = vector.load %arg4[%c0_219, %c0_220] : memref<128x512xbf16, #tpu.memory_space<vmem>>, vector<128x512xbf16>
    %cst_221 = arith.constant dense<0.000000e+00> : vector<8x512xf32>
    %614 = tpu.matmul %612, %613, %cst_221 {dimension_numbers = #tpu.dot_dimension_numbers<[1], [0], [0], [1], [0, 0, 1, 1], [], []>} : vector<8x128xbf16>, vector<128x512xbf16>, vector<8x512xf32> -> vector<8x512xf32>
    %615 = arith.addf %611, %614 : vector<8x512xf32>
    %616 = vector.extract_strided_slice %615 {offsets = [0, 0], sizes = [8, 384], strides = [1, 1]} : vector<8x512xf32> to vector<8x384xf32>
    %617 = arith.negf %616 : vector<8x384xf32>
    %618 = math.exp %617 : vector<8x384xf32>
    %cst_222 = arith.constant 1.000000e+00 : f32
    %619 = vector.broadcast %cst_222 : f32 to vector<8x384xf32>
    %620 = arith.addf %619, %618 : vector<8x384xf32>
    %621 = arith.divf %619, %620 : vector<8x384xf32>
    %622 = vector.extract_strided_slice %615 {offsets = [0, 384], sizes = [8, 128], strides = [1, 1]} : vector<8x512xf32> to vector<8x128xf32>
    %623 = math.tanh %622 : vector<8x128xf32>
    %624 = vector.extract_strided_slice %621 {offsets = [0, 0], sizes = [8, 128], strides = [1, 1]} : vector<8x384xf32> to vector<8x128xf32>
    %625 = vector.extract_strided_slice %621 {offsets = [0, 128], sizes = [8, 128], strides = [1, 1]} : vector<8x384xf32> to vector<8x128xf32>
    %626 = vector.extract_strided_slice %621 {offsets = [0, 256], sizes = [8, 128], strides = [1, 1]} : vector<8x384xf32> to vector<8x128xf32>
    %627 = arith.mulf %625, %535 : vector<8x128xf32>
    %628 = arith.mulf %624, %623 : vector<8x128xf32>
    %629 = arith.addf %627, %628 : vector<8x128xf32>
    %630 = math.tanh %629 : vector<8x128xf32>
    %631 = arith.mulf %626, %630 : vector<8x128xf32>
    %632 = arith.select %605, %631, %534 : vector<8x128xf32>
    %633 = arith.select %605, %629, %535 : vector<8x128xf32>
    %634 = arith.select %605, %631, %536 : vector<8x128xf32>
    %c1_i32_223 = arith.constant 1 : i32
    %635 = arith.subi %c6_i32, %c1_i32_223 : i32
    %c0_i32_224 = arith.constant 0 : i32
    %636 = arith.cmpi sge, %635, %c0_i32_224 : i32
    %c8_i32_225 = arith.constant 8 : i32
    %637 = arith.cmpi slt, %635, %c8_i32_225 : i32
    %638 = arith.andi %636, %637 : i1
    %639 = arith.truncf %536 : vector<8x128xf32> to vector<8x128xbf16>
    %640 = arith.truncf %567 : vector<8x128xf32> to vector<8x128xbf16>
    %641 = tpu.concatenate %639, %640 in 1 : vector<8x128xbf16>, vector<8x128xbf16> -> vector<8x256xbf16>
    %c0_226 = arith.constant 0 : index
    %c0_227 = arith.constant 0 : index
    %c0_228 = arith.constant 0 : index
    %642 = vector.load %arg5[%c0_226, %c0_227, %c0_228] : memref<2x256x512xbf16, #tpu.memory_space<vmem>>, vector<1x256x512xbf16>
    %643 = vector.shape_cast %642 : vector<1x256x512xbf16> to vector<256x512xbf16>
    %cst_229 = arith.constant dense<0.000000e+00> : vector<8x512xf32>
    %644 = tpu.matmul %641, %643, %cst_229 {dimension_numbers = #tpu.dot_dimension_numbers<[1], [0], [0], [1], [0, 0, 1, 1], [], []>} : vector<8x256xbf16>, vector<256x512xbf16>, vector<8x512xf32> -> vector<8x512xf32>
    %c0_230 = arith.constant 0 : index
    %c0_231 = arith.constant 0 : index
    %c0_232 = arith.constant 0 : index
    %645 = vector.load %arg6[%c0_230, %c0_231, %c0_232] : memref<2x1x512xf32, #tpu.memory_space<vmem>>, vector<1x1x512xf32>
    %646 = vector.shape_cast %645 : vector<1x1x512xf32> to vector<1x512xf32>
    %647 = vector.broadcast %646 : vector<1x512xf32> to vector<8x512xf32>
    %648 = arith.addf %644, %647 : vector<8x512xf32>
    %649 = vector.extract_strided_slice %648 {offsets = [0, 0], sizes = [8, 384], strides = [1, 1]} : vector<8x512xf32> to vector<8x384xf32>
    %650 = arith.negf %649 : vector<8x384xf32>
    %651 = math.exp %650 : vector<8x384xf32>
    %cst_233 = arith.constant 1.000000e+00 : f32
    %652 = vector.broadcast %cst_233 : f32 to vector<8x384xf32>
    %653 = arith.addf %652, %651 : vector<8x384xf32>
    %654 = arith.divf %652, %653 : vector<8x384xf32>
    %655 = vector.extract_strided_slice %648 {offsets = [0, 384], sizes = [8, 128], strides = [1, 1]} : vector<8x512xf32> to vector<8x128xf32>
    %656 = math.tanh %655 : vector<8x128xf32>
    %657 = vector.extract_strided_slice %654 {offsets = [0, 0], sizes = [8, 128], strides = [1, 1]} : vector<8x384xf32> to vector<8x128xf32>
    %658 = vector.extract_strided_slice %654 {offsets = [0, 128], sizes = [8, 128], strides = [1, 1]} : vector<8x384xf32> to vector<8x128xf32>
    %659 = vector.extract_strided_slice %654 {offsets = [0, 256], sizes = [8, 128], strides = [1, 1]} : vector<8x384xf32> to vector<8x128xf32>
    %660 = arith.mulf %658, %568 : vector<8x128xf32>
    %661 = arith.mulf %657, %656 : vector<8x128xf32>
    %662 = arith.addf %660, %661 : vector<8x128xf32>
    %663 = math.tanh %662 : vector<8x128xf32>
    %664 = arith.mulf %659, %663 : vector<8x128xf32>
    %665 = arith.select %638, %664, %567 : vector<8x128xf32>
    %666 = arith.select %638, %662, %568 : vector<8x128xf32>
    %667 = arith.select %638, %664, %569 : vector<8x128xf32>
    %c2_i32_234 = arith.constant 2 : i32
    %668 = arith.subi %c6_i32, %c2_i32_234 : i32
    %c0_i32_235 = arith.constant 0 : i32
    %669 = arith.cmpi sge, %668, %c0_i32_235 : i32
    %c8_i32_236 = arith.constant 8 : i32
    %670 = arith.cmpi slt, %668, %c8_i32_236 : i32
    %671 = arith.andi %669, %670 : i1
    %672 = arith.truncf %569 : vector<8x128xf32> to vector<8x128xbf16>
    %673 = arith.truncf %600 : vector<8x128xf32> to vector<8x128xbf16>
    %674 = tpu.concatenate %672, %673 in 1 : vector<8x128xbf16>, vector<8x128xbf16> -> vector<8x256xbf16>
    %c1_237 = arith.constant 1 : index
    %c0_238 = arith.constant 0 : index
    %c0_239 = arith.constant 0 : index
    %675 = vector.load %arg5[%c1_237, %c0_238, %c0_239] : memref<2x256x512xbf16, #tpu.memory_space<vmem>>, vector<1x256x512xbf16>
    %676 = vector.shape_cast %675 : vector<1x256x512xbf16> to vector<256x512xbf16>
    %cst_240 = arith.constant dense<0.000000e+00> : vector<8x512xf32>
    %677 = tpu.matmul %674, %676, %cst_240 {dimension_numbers = #tpu.dot_dimension_numbers<[1], [0], [0], [1], [0, 0, 1, 1], [], []>} : vector<8x256xbf16>, vector<256x512xbf16>, vector<8x512xf32> -> vector<8x512xf32>
    %c1_241 = arith.constant 1 : index
    %c0_242 = arith.constant 0 : index
    %c0_243 = arith.constant 0 : index
    %678 = vector.load %arg6[%c1_241, %c0_242, %c0_243] : memref<2x1x512xf32, #tpu.memory_space<vmem>>, vector<1x1x512xf32>
    %679 = vector.shape_cast %678 : vector<1x1x512xf32> to vector<1x512xf32>
    %680 = vector.broadcast %679 : vector<1x512xf32> to vector<8x512xf32>
    %681 = arith.addf %677, %680 : vector<8x512xf32>
    %682 = vector.extract_strided_slice %681 {offsets = [0, 0], sizes = [8, 384], strides = [1, 1]} : vector<8x512xf32> to vector<8x384xf32>
    %683 = arith.negf %682 : vector<8x384xf32>
    %684 = math.exp %683 : vector<8x384xf32>
    %cst_244 = arith.constant 1.000000e+00 : f32
    %685 = vector.broadcast %cst_244 : f32 to vector<8x384xf32>
    %686 = arith.addf %685, %684 : vector<8x384xf32>
    %687 = arith.divf %685, %686 : vector<8x384xf32>
    %688 = vector.extract_strided_slice %681 {offsets = [0, 384], sizes = [8, 128], strides = [1, 1]} : vector<8x512xf32> to vector<8x128xf32>
    %689 = math.tanh %688 : vector<8x128xf32>
    %690 = vector.extract_strided_slice %687 {offsets = [0, 0], sizes = [8, 128], strides = [1, 1]} : vector<8x384xf32> to vector<8x128xf32>
    %691 = vector.extract_strided_slice %687 {offsets = [0, 128], sizes = [8, 128], strides = [1, 1]} : vector<8x384xf32> to vector<8x128xf32>
    %692 = vector.extract_strided_slice %687 {offsets = [0, 256], sizes = [8, 128], strides = [1, 1]} : vector<8x384xf32> to vector<8x128xf32>
    %693 = arith.mulf %691, %601 : vector<8x128xf32>
    %694 = arith.mulf %690, %689 : vector<8x128xf32>
    %695 = arith.addf %693, %694 : vector<8x128xf32>
    %696 = math.tanh %695 : vector<8x128xf32>
    %697 = arith.mulf %692, %696 : vector<8x128xf32>
    %698 = arith.select %671, %697, %600 : vector<8x128xf32>
    %699 = arith.select %671, %695, %601 : vector<8x128xf32>
    %c7_i32_245 = arith.constant 7 : i32
    %c0_i32_246 = arith.constant 0 : i32
    %700 = arith.subi %c7_i32_245, %c0_i32_246 : i32
    %c0_i32_247 = arith.constant 0 : i32
    %701 = arith.cmpi sge, %700, %c0_i32_247 : i32
    %c8_i32_248 = arith.constant 8 : i32
    %702 = arith.cmpi slt, %700, %c8_i32_248 : i32
    %703 = arith.andi %701, %702 : i1
    %c0_i32_249 = arith.constant 0 : i32
    %c7_i32_250 = arith.constant 7 : i32
    %704 = arith.maxsi %c0_i32_249, %700 : i32
    %705 = arith.minsi %c7_i32_250, %704 : i32
    %706 = arith.index_cast %705 : i32 to index
    %c0_251 = arith.constant 0 : index
    %c0_252 = arith.constant 0 : index
    %707 = vector.load %arg1[%706, %c0_251, %c0_252] : memref<8x8x512xbf16, #tpu.memory_space<vmem>>, vector<1x8x512xbf16>
    %708 = vector.shape_cast %707 : vector<1x8x512xbf16> to vector<8x512xbf16>
    %709 = arith.extf %708 : vector<8x512xbf16> to vector<8x512xf32>
    %710 = arith.truncf %632 : vector<8x128xf32> to vector<8x128xbf16>
    %c0_253 = arith.constant 0 : index
    %c0_254 = arith.constant 0 : index
    %711 = vector.load %arg4[%c0_253, %c0_254] : memref<128x512xbf16, #tpu.memory_space<vmem>>, vector<128x512xbf16>
    %cst_255 = arith.constant dense<0.000000e+00> : vector<8x512xf32>
    %712 = tpu.matmul %710, %711, %cst_255 {dimension_numbers = #tpu.dot_dimension_numbers<[1], [0], [0], [1], [0, 0, 1, 1], [], []>} : vector<8x128xbf16>, vector<128x512xbf16>, vector<8x512xf32> -> vector<8x512xf32>
    %713 = arith.addf %709, %712 : vector<8x512xf32>
    %714 = vector.extract_strided_slice %713 {offsets = [0, 0], sizes = [8, 384], strides = [1, 1]} : vector<8x512xf32> to vector<8x384xf32>
    %715 = arith.negf %714 : vector<8x384xf32>
    %716 = math.exp %715 : vector<8x384xf32>
    %cst_256 = arith.constant 1.000000e+00 : f32
    %717 = vector.broadcast %cst_256 : f32 to vector<8x384xf32>
    %718 = arith.addf %717, %716 : vector<8x384xf32>
    %719 = arith.divf %717, %718 : vector<8x384xf32>
    %720 = vector.extract_strided_slice %713 {offsets = [0, 384], sizes = [8, 128], strides = [1, 1]} : vector<8x512xf32> to vector<8x128xf32>
    %721 = math.tanh %720 : vector<8x128xf32>
    %722 = vector.extract_strided_slice %719 {offsets = [0, 0], sizes = [8, 128], strides = [1, 1]} : vector<8x384xf32> to vector<8x128xf32>
    %723 = vector.extract_strided_slice %719 {offsets = [0, 128], sizes = [8, 128], strides = [1, 1]} : vector<8x384xf32> to vector<8x128xf32>
    %724 = vector.extract_strided_slice %719 {offsets = [0, 256], sizes = [8, 128], strides = [1, 1]} : vector<8x384xf32> to vector<8x128xf32>
    %725 = arith.mulf %723, %633 : vector<8x128xf32>
    %726 = arith.mulf %722, %721 : vector<8x128xf32>
    %727 = arith.addf %725, %726 : vector<8x128xf32>
    %728 = math.tanh %727 : vector<8x128xf32>
    %729 = arith.mulf %724, %728 : vector<8x128xf32>
    %730 = arith.select %703, %729, %632 : vector<8x128xf32>
    %731 = arith.select %703, %727, %633 : vector<8x128xf32>
    %732 = arith.select %703, %729, %634 : vector<8x128xf32>
    %c1_i32_257 = arith.constant 1 : i32
    %733 = arith.subi %c7_i32_245, %c1_i32_257 : i32
    %c0_i32_258 = arith.constant 0 : i32
    %734 = arith.cmpi sge, %733, %c0_i32_258 : i32
    %c8_i32_259 = arith.constant 8 : i32
    %735 = arith.cmpi slt, %733, %c8_i32_259 : i32
    %736 = arith.andi %734, %735 : i1
    %737 = arith.truncf %634 : vector<8x128xf32> to vector<8x128xbf16>
    %738 = arith.truncf %665 : vector<8x128xf32> to vector<8x128xbf16>
    %739 = tpu.concatenate %737, %738 in 1 : vector<8x128xbf16>, vector<8x128xbf16> -> vector<8x256xbf16>
    %c0_260 = arith.constant 0 : index
    %c0_261 = arith.constant 0 : index
    %c0_262 = arith.constant 0 : index
    %740 = vector.load %arg5[%c0_260, %c0_261, %c0_262] : memref<2x256x512xbf16, #tpu.memory_space<vmem>>, vector<1x256x512xbf16>
    %741 = vector.shape_cast %740 : vector<1x256x512xbf16> to vector<256x512xbf16>
    %cst_263 = arith.constant dense<0.000000e+00> : vector<8x512xf32>
    %742 = tpu.matmul %739, %741, %cst_263 {dimension_numbers = #tpu.dot_dimension_numbers<[1], [0], [0], [1], [0, 0, 1, 1], [], []>} : vector<8x256xbf16>, vector<256x512xbf16>, vector<8x512xf32> -> vector<8x512xf32>
    %c0_264 = arith.constant 0 : index
    %c0_265 = arith.constant 0 : index
    %c0_266 = arith.constant 0 : index
    %743 = vector.load %arg6[%c0_264, %c0_265, %c0_266] : memref<2x1x512xf32, #tpu.memory_space<vmem>>, vector<1x1x512xf32>
    %744 = vector.shape_cast %743 : vector<1x1x512xf32> to vector<1x512xf32>
    %745 = vector.broadcast %744 : vector<1x512xf32> to vector<8x512xf32>
    %746 = arith.addf %742, %745 : vector<8x512xf32>
    %747 = vector.extract_strided_slice %746 {offsets = [0, 0], sizes = [8, 384], strides = [1, 1]} : vector<8x512xf32> to vector<8x384xf32>
    %748 = arith.negf %747 : vector<8x384xf32>
    %749 = math.exp %748 : vector<8x384xf32>
    %cst_267 = arith.constant 1.000000e+00 : f32
    %750 = vector.broadcast %cst_267 : f32 to vector<8x384xf32>
    %751 = arith.addf %750, %749 : vector<8x384xf32>
    %752 = arith.divf %750, %751 : vector<8x384xf32>
    %753 = vector.extract_strided_slice %746 {offsets = [0, 384], sizes = [8, 128], strides = [1, 1]} : vector<8x512xf32> to vector<8x128xf32>
    %754 = math.tanh %753 : vector<8x128xf32>
    %755 = vector.extract_strided_slice %752 {offsets = [0, 0], sizes = [8, 128], strides = [1, 1]} : vector<8x384xf32> to vector<8x128xf32>
    %756 = vector.extract_strided_slice %752 {offsets = [0, 128], sizes = [8, 128], strides = [1, 1]} : vector<8x384xf32> to vector<8x128xf32>
    %757 = vector.extract_strided_slice %752 {offsets = [0, 256], sizes = [8, 128], strides = [1, 1]} : vector<8x384xf32> to vector<8x128xf32>
    %758 = arith.mulf %756, %666 : vector<8x128xf32>
    %759 = arith.mulf %755, %754 : vector<8x128xf32>
    %760 = arith.addf %758, %759 : vector<8x128xf32>
    %761 = math.tanh %760 : vector<8x128xf32>
    %762 = arith.mulf %757, %761 : vector<8x128xf32>
    %763 = arith.select %736, %762, %665 : vector<8x128xf32>
    %764 = arith.select %736, %760, %666 : vector<8x128xf32>
    %765 = arith.select %736, %762, %667 : vector<8x128xf32>
    %c2_i32_268 = arith.constant 2 : i32
    %766 = arith.subi %c7_i32_245, %c2_i32_268 : i32
    %c0_i32_269 = arith.constant 0 : i32
    %767 = arith.cmpi sge, %766, %c0_i32_269 : i32
    %c8_i32_270 = arith.constant 8 : i32
    %768 = arith.cmpi slt, %766, %c8_i32_270 : i32
    %769 = arith.andi %767, %768 : i1
    %770 = arith.truncf %667 : vector<8x128xf32> to vector<8x128xbf16>
    %771 = arith.truncf %698 : vector<8x128xf32> to vector<8x128xbf16>
    %772 = tpu.concatenate %770, %771 in 1 : vector<8x128xbf16>, vector<8x128xbf16> -> vector<8x256xbf16>
    %c1_271 = arith.constant 1 : index
    %c0_272 = arith.constant 0 : index
    %c0_273 = arith.constant 0 : index
    %773 = vector.load %arg5[%c1_271, %c0_272, %c0_273] : memref<2x256x512xbf16, #tpu.memory_space<vmem>>, vector<1x256x512xbf16>
    %774 = vector.shape_cast %773 : vector<1x256x512xbf16> to vector<256x512xbf16>
    %cst_274 = arith.constant dense<0.000000e+00> : vector<8x512xf32>
    %775 = tpu.matmul %772, %774, %cst_274 {dimension_numbers = #tpu.dot_dimension_numbers<[1], [0], [0], [1], [0, 0, 1, 1], [], []>} : vector<8x256xbf16>, vector<256x512xbf16>, vector<8x512xf32> -> vector<8x512xf32>
    %c1_275 = arith.constant 1 : index
    %c0_276 = arith.constant 0 : index
    %c0_277 = arith.constant 0 : index
    %776 = vector.load %arg6[%c1_275, %c0_276, %c0_277] : memref<2x1x512xf32, #tpu.memory_space<vmem>>, vector<1x1x512xf32>
    %777 = vector.shape_cast %776 : vector<1x1x512xf32> to vector<1x512xf32>
    %778 = vector.broadcast %777 : vector<1x512xf32> to vector<8x512xf32>
    %779 = arith.addf %775, %778 : vector<8x512xf32>
    %780 = vector.extract_strided_slice %779 {offsets = [0, 0], sizes = [8, 384], strides = [1, 1]} : vector<8x512xf32> to vector<8x384xf32>
    %781 = arith.negf %780 : vector<8x384xf32>
    %782 = math.exp %781 : vector<8x384xf32>
    %cst_278 = arith.constant 1.000000e+00 : f32
    %783 = vector.broadcast %cst_278 : f32 to vector<8x384xf32>
    %784 = arith.addf %783, %782 : vector<8x384xf32>
    %785 = arith.divf %783, %784 : vector<8x384xf32>
    %786 = vector.extract_strided_slice %779 {offsets = [0, 384], sizes = [8, 128], strides = [1, 1]} : vector<8x512xf32> to vector<8x128xf32>
    %787 = math.tanh %786 : vector<8x128xf32>
    %788 = vector.extract_strided_slice %785 {offsets = [0, 0], sizes = [8, 128], strides = [1, 1]} : vector<8x384xf32> to vector<8x128xf32>
    %789 = vector.extract_strided_slice %785 {offsets = [0, 128], sizes = [8, 128], strides = [1, 1]} : vector<8x384xf32> to vector<8x128xf32>
    %790 = vector.extract_strided_slice %785 {offsets = [0, 256], sizes = [8, 128], strides = [1, 1]} : vector<8x384xf32> to vector<8x128xf32>
    %791 = arith.mulf %789, %699 : vector<8x128xf32>
    %792 = arith.mulf %788, %787 : vector<8x128xf32>
    %793 = arith.addf %791, %792 : vector<8x128xf32>
    %794 = math.tanh %793 : vector<8x128xf32>
    %795 = arith.mulf %790, %794 : vector<8x128xf32>
    %796 = arith.select %769, %795, %698 : vector<8x128xf32>
    %797 = arith.select %769, %793, %699 : vector<8x128xf32>
    %c8_i32_279 = arith.constant 8 : i32
    %c0_i32_280 = arith.constant 0 : i32
    %798 = arith.subi %c8_i32_279, %c0_i32_280 : i32
    %c0_i32_281 = arith.constant 0 : i32
    %799 = arith.cmpi sge, %798, %c0_i32_281 : i32
    %c8_i32_282 = arith.constant 8 : i32
    %800 = arith.cmpi slt, %798, %c8_i32_282 : i32
    %801 = arith.andi %799, %800 : i1
    %c0_i32_283 = arith.constant 0 : i32
    %c7_i32_284 = arith.constant 7 : i32
    %802 = arith.maxsi %c0_i32_283, %798 : i32
    %803 = arith.minsi %c7_i32_284, %802 : i32
    %804 = arith.index_cast %803 : i32 to index
    %c0_285 = arith.constant 0 : index
    %c0_286 = arith.constant 0 : index
    %805 = vector.load %arg1[%804, %c0_285, %c0_286] : memref<8x8x512xbf16, #tpu.memory_space<vmem>>, vector<1x8x512xbf16>
    %806 = vector.shape_cast %805 : vector<1x8x512xbf16> to vector<8x512xbf16>
    %807 = arith.extf %806 : vector<8x512xbf16> to vector<8x512xf32>
    %808 = arith.truncf %730 : vector<8x128xf32> to vector<8x128xbf16>
    %c0_287 = arith.constant 0 : index
    %c0_288 = arith.constant 0 : index
    %809 = vector.load %arg4[%c0_287, %c0_288] : memref<128x512xbf16, #tpu.memory_space<vmem>>, vector<128x512xbf16>
    %cst_289 = arith.constant dense<0.000000e+00> : vector<8x512xf32>
    %810 = tpu.matmul %808, %809, %cst_289 {dimension_numbers = #tpu.dot_dimension_numbers<[1], [0], [0], [1], [0, 0, 1, 1], [], []>} : vector<8x128xbf16>, vector<128x512xbf16>, vector<8x512xf32> -> vector<8x512xf32>
    %811 = arith.addf %807, %810 : vector<8x512xf32>
    %812 = vector.extract_strided_slice %811 {offsets = [0, 0], sizes = [8, 384], strides = [1, 1]} : vector<8x512xf32> to vector<8x384xf32>
    %813 = arith.negf %812 : vector<8x384xf32>
    %814 = math.exp %813 : vector<8x384xf32>
    %cst_290 = arith.constant 1.000000e+00 : f32
    %815 = vector.broadcast %cst_290 : f32 to vector<8x384xf32>
    %816 = arith.addf %815, %814 : vector<8x384xf32>
    %817 = arith.divf %815, %816 : vector<8x384xf32>
    %818 = vector.extract_strided_slice %811 {offsets = [0, 384], sizes = [8, 128], strides = [1, 1]} : vector<8x512xf32> to vector<8x128xf32>
    %819 = math.tanh %818 : vector<8x128xf32>
    %820 = vector.extract_strided_slice %817 {offsets = [0, 0], sizes = [8, 128], strides = [1, 1]} : vector<8x384xf32> to vector<8x128xf32>
    %821 = vector.extract_strided_slice %817 {offsets = [0, 128], sizes = [8, 128], strides = [1, 1]} : vector<8x384xf32> to vector<8x128xf32>
    %822 = vector.extract_strided_slice %817 {offsets = [0, 256], sizes = [8, 128], strides = [1, 1]} : vector<8x384xf32> to vector<8x128xf32>
    %823 = arith.mulf %821, %731 : vector<8x128xf32>
    %824 = arith.mulf %820, %819 : vector<8x128xf32>
    %825 = arith.addf %823, %824 : vector<8x128xf32>
    %826 = math.tanh %825 : vector<8x128xf32>
    %827 = arith.mulf %822, %826 : vector<8x128xf32>
    %828 = arith.select %801, %827, %730 : vector<8x128xf32>
    %829 = arith.select %801, %825, %731 : vector<8x128xf32>
    %830 = arith.select %801, %827, %732 : vector<8x128xf32>
    %c1_i32_291 = arith.constant 1 : i32
    %831 = arith.subi %c8_i32_279, %c1_i32_291 : i32
    %c0_i32_292 = arith.constant 0 : i32
    %832 = arith.cmpi sge, %831, %c0_i32_292 : i32
    %c8_i32_293 = arith.constant 8 : i32
    %833 = arith.cmpi slt, %831, %c8_i32_293 : i32
    %834 = arith.andi %832, %833 : i1
    %835 = arith.truncf %732 : vector<8x128xf32> to vector<8x128xbf16>
    %836 = arith.truncf %763 : vector<8x128xf32> to vector<8x128xbf16>
    %837 = tpu.concatenate %835, %836 in 1 : vector<8x128xbf16>, vector<8x128xbf16> -> vector<8x256xbf16>
    %c0_294 = arith.constant 0 : index
    %c0_295 = arith.constant 0 : index
    %c0_296 = arith.constant 0 : index
    %838 = vector.load %arg5[%c0_294, %c0_295, %c0_296] : memref<2x256x512xbf16, #tpu.memory_space<vmem>>, vector<1x256x512xbf16>
    %839 = vector.shape_cast %838 : vector<1x256x512xbf16> to vector<256x512xbf16>
    %cst_297 = arith.constant dense<0.000000e+00> : vector<8x512xf32>
    %840 = tpu.matmul %837, %839, %cst_297 {dimension_numbers = #tpu.dot_dimension_numbers<[1], [0], [0], [1], [0, 0, 1, 1], [], []>} : vector<8x256xbf16>, vector<256x512xbf16>, vector<8x512xf32> -> vector<8x512xf32>
    %c0_298 = arith.constant 0 : index
    %c0_299 = arith.constant 0 : index
    %c0_300 = arith.constant 0 : index
    %841 = vector.load %arg6[%c0_298, %c0_299, %c0_300] : memref<2x1x512xf32, #tpu.memory_space<vmem>>, vector<1x1x512xf32>
    %842 = vector.shape_cast %841 : vector<1x1x512xf32> to vector<1x512xf32>
    %843 = vector.broadcast %842 : vector<1x512xf32> to vector<8x512xf32>
    %844 = arith.addf %840, %843 : vector<8x512xf32>
    %845 = vector.extract_strided_slice %844 {offsets = [0, 0], sizes = [8, 384], strides = [1, 1]} : vector<8x512xf32> to vector<8x384xf32>
    %846 = arith.negf %845 : vector<8x384xf32>
    %847 = math.exp %846 : vector<8x384xf32>
    %cst_301 = arith.constant 1.000000e+00 : f32
    %848 = vector.broadcast %cst_301 : f32 to vector<8x384xf32>
    %849 = arith.addf %848, %847 : vector<8x384xf32>
    %850 = arith.divf %848, %849 : vector<8x384xf32>
    %851 = vector.extract_strided_slice %844 {offsets = [0, 384], sizes = [8, 128], strides = [1, 1]} : vector<8x512xf32> to vector<8x128xf32>
    %852 = math.tanh %851 : vector<8x128xf32>
    %853 = vector.extract_strided_slice %850 {offsets = [0, 0], sizes = [8, 128], strides = [1, 1]} : vector<8x384xf32> to vector<8x128xf32>
    %854 = vector.extract_strided_slice %850 {offsets = [0, 128], sizes = [8, 128], strides = [1, 1]} : vector<8x384xf32> to vector<8x128xf32>
    %855 = vector.extract_strided_slice %850 {offsets = [0, 256], sizes = [8, 128], strides = [1, 1]} : vector<8x384xf32> to vector<8x128xf32>
    %856 = arith.mulf %854, %764 : vector<8x128xf32>
    %857 = arith.mulf %853, %852 : vector<8x128xf32>
    %858 = arith.addf %856, %857 : vector<8x128xf32>
    %859 = math.tanh %858 : vector<8x128xf32>
    %860 = arith.mulf %855, %859 : vector<8x128xf32>
    %861 = arith.select %834, %860, %763 : vector<8x128xf32>
    %862 = arith.select %834, %858, %764 : vector<8x128xf32>
    %863 = arith.select %834, %860, %765 : vector<8x128xf32>
    %c2_i32_302 = arith.constant 2 : i32
    %864 = arith.subi %c8_i32_279, %c2_i32_302 : i32
    %c0_i32_303 = arith.constant 0 : i32
    %865 = arith.cmpi sge, %864, %c0_i32_303 : i32
    %c8_i32_304 = arith.constant 8 : i32
    %866 = arith.cmpi slt, %864, %c8_i32_304 : i32
    %867 = arith.andi %865, %866 : i1
    %868 = arith.truncf %765 : vector<8x128xf32> to vector<8x128xbf16>
    %869 = arith.truncf %796 : vector<8x128xf32> to vector<8x128xbf16>
    %870 = tpu.concatenate %868, %869 in 1 : vector<8x128xbf16>, vector<8x128xbf16> -> vector<8x256xbf16>
    %c1_305 = arith.constant 1 : index
    %c0_306 = arith.constant 0 : index
    %c0_307 = arith.constant 0 : index
    %871 = vector.load %arg5[%c1_305, %c0_306, %c0_307] : memref<2x256x512xbf16, #tpu.memory_space<vmem>>, vector<1x256x512xbf16>
    %872 = vector.shape_cast %871 : vector<1x256x512xbf16> to vector<256x512xbf16>
    %cst_308 = arith.constant dense<0.000000e+00> : vector<8x512xf32>
    %873 = tpu.matmul %870, %872, %cst_308 {dimension_numbers = #tpu.dot_dimension_numbers<[1], [0], [0], [1], [0, 0, 1, 1], [], []>} : vector<8x256xbf16>, vector<256x512xbf16>, vector<8x512xf32> -> vector<8x512xf32>
    %c1_309 = arith.constant 1 : index
    %c0_310 = arith.constant 0 : index
    %c0_311 = arith.constant 0 : index
    %874 = vector.load %arg6[%c1_309, %c0_310, %c0_311] : memref<2x1x512xf32, #tpu.memory_space<vmem>>, vector<1x1x512xf32>
    %875 = vector.shape_cast %874 : vector<1x1x512xf32> to vector<1x512xf32>
    %876 = vector.broadcast %875 : vector<1x512xf32> to vector<8x512xf32>
    %877 = arith.addf %873, %876 : vector<8x512xf32>
    %878 = vector.extract_strided_slice %877 {offsets = [0, 0], sizes = [8, 384], strides = [1, 1]} : vector<8x512xf32> to vector<8x384xf32>
    %879 = arith.negf %878 : vector<8x384xf32>
    %880 = math.exp %879 : vector<8x384xf32>
    %cst_312 = arith.constant 1.000000e+00 : f32
    %881 = vector.broadcast %cst_312 : f32 to vector<8x384xf32>
    %882 = arith.addf %881, %880 : vector<8x384xf32>
    %883 = arith.divf %881, %882 : vector<8x384xf32>
    %884 = vector.extract_strided_slice %877 {offsets = [0, 384], sizes = [8, 128], strides = [1, 1]} : vector<8x512xf32> to vector<8x128xf32>
    %885 = math.tanh %884 : vector<8x128xf32>
    %886 = vector.extract_strided_slice %883 {offsets = [0, 0], sizes = [8, 128], strides = [1, 1]} : vector<8x384xf32> to vector<8x128xf32>
    %887 = vector.extract_strided_slice %883 {offsets = [0, 128], sizes = [8, 128], strides = [1, 1]} : vector<8x384xf32> to vector<8x128xf32>
    %888 = vector.extract_strided_slice %883 {offsets = [0, 256], sizes = [8, 128], strides = [1, 1]} : vector<8x384xf32> to vector<8x128xf32>
    %889 = arith.mulf %887, %797 : vector<8x128xf32>
    %890 = arith.mulf %886, %885 : vector<8x128xf32>
    %891 = arith.addf %889, %890 : vector<8x128xf32>
    %892 = math.tanh %891 : vector<8x128xf32>
    %893 = arith.mulf %888, %892 : vector<8x128xf32>
    %894 = arith.select %867, %893, %796 : vector<8x128xf32>
    %895 = arith.select %867, %891, %797 : vector<8x128xf32>
    %c9_i32 = arith.constant 9 : i32
    %c0_i32_313 = arith.constant 0 : i32
    %896 = arith.subi %c9_i32, %c0_i32_313 : i32
    %c0_i32_314 = arith.constant 0 : i32
    %897 = arith.cmpi sge, %896, %c0_i32_314 : i32
    %c8_i32_315 = arith.constant 8 : i32
    %898 = arith.cmpi slt, %896, %c8_i32_315 : i32
    %899 = arith.andi %897, %898 : i1
    %c0_i32_316 = arith.constant 0 : i32
    %c7_i32_317 = arith.constant 7 : i32
    %900 = arith.maxsi %c0_i32_316, %896 : i32
    %901 = arith.minsi %c7_i32_317, %900 : i32
    %902 = arith.index_cast %901 : i32 to index
    %c0_318 = arith.constant 0 : index
    %c0_319 = arith.constant 0 : index
    %903 = vector.load %arg1[%902, %c0_318, %c0_319] : memref<8x8x512xbf16, #tpu.memory_space<vmem>>, vector<1x8x512xbf16>
    %904 = vector.shape_cast %903 : vector<1x8x512xbf16> to vector<8x512xbf16>
    %905 = arith.extf %904 : vector<8x512xbf16> to vector<8x512xf32>
    %906 = arith.truncf %828 : vector<8x128xf32> to vector<8x128xbf16>
    %c0_320 = arith.constant 0 : index
    %c0_321 = arith.constant 0 : index
    %907 = vector.load %arg4[%c0_320, %c0_321] : memref<128x512xbf16, #tpu.memory_space<vmem>>, vector<128x512xbf16>
    %cst_322 = arith.constant dense<0.000000e+00> : vector<8x512xf32>
    %908 = tpu.matmul %906, %907, %cst_322 {dimension_numbers = #tpu.dot_dimension_numbers<[1], [0], [0], [1], [0, 0, 1, 1], [], []>} : vector<8x128xbf16>, vector<128x512xbf16>, vector<8x512xf32> -> vector<8x512xf32>
    %909 = arith.addf %905, %908 : vector<8x512xf32>
    %910 = vector.extract_strided_slice %909 {offsets = [0, 0], sizes = [8, 384], strides = [1, 1]} : vector<8x512xf32> to vector<8x384xf32>
    %911 = arith.negf %910 : vector<8x384xf32>
    %912 = math.exp %911 : vector<8x384xf32>
    %cst_323 = arith.constant 1.000000e+00 : f32
    %913 = vector.broadcast %cst_323 : f32 to vector<8x384xf32>
    %914 = arith.addf %913, %912 : vector<8x384xf32>
    %915 = arith.divf %913, %914 : vector<8x384xf32>
    %916 = vector.extract_strided_slice %909 {offsets = [0, 384], sizes = [8, 128], strides = [1, 1]} : vector<8x512xf32> to vector<8x128xf32>
    %917 = math.tanh %916 : vector<8x128xf32>
    %918 = vector.extract_strided_slice %915 {offsets = [0, 0], sizes = [8, 128], strides = [1, 1]} : vector<8x384xf32> to vector<8x128xf32>
    %919 = vector.extract_strided_slice %915 {offsets = [0, 128], sizes = [8, 128], strides = [1, 1]} : vector<8x384xf32> to vector<8x128xf32>
    %920 = vector.extract_strided_slice %915 {offsets = [0, 256], sizes = [8, 128], strides = [1, 1]} : vector<8x384xf32> to vector<8x128xf32>
    %921 = arith.mulf %919, %829 : vector<8x128xf32>
    %922 = arith.mulf %918, %917 : vector<8x128xf32>
    %923 = arith.addf %921, %922 : vector<8x128xf32>
    %924 = math.tanh %923 : vector<8x128xf32>
    %925 = arith.mulf %920, %924 : vector<8x128xf32>
    %926 = arith.select %899, %925, %828 : vector<8x128xf32>
    %927 = arith.select %899, %923, %829 : vector<8x128xf32>
    %928 = arith.select %899, %925, %830 : vector<8x128xf32>
    %c1_i32_324 = arith.constant 1 : i32
    %929 = arith.subi %c9_i32, %c1_i32_324 : i32
    %c0_i32_325 = arith.constant 0 : i32
    %930 = arith.cmpi sge, %929, %c0_i32_325 : i32
    %c8_i32_326 = arith.constant 8 : i32
    %931 = arith.cmpi slt, %929, %c8_i32_326 : i32
    %932 = arith.andi %930, %931 : i1
    %933 = arith.truncf %830 : vector<8x128xf32> to vector<8x128xbf16>
    %934 = arith.truncf %861 : vector<8x128xf32> to vector<8x128xbf16>
    %935 = tpu.concatenate %933, %934 in 1 : vector<8x128xbf16>, vector<8x128xbf16> -> vector<8x256xbf16>
    %c0_327 = arith.constant 0 : index
    %c0_328 = arith.constant 0 : index
    %c0_329 = arith.constant 0 : index
    %936 = vector.load %arg5[%c0_327, %c0_328, %c0_329] : memref<2x256x512xbf16, #tpu.memory_space<vmem>>, vector<1x256x512xbf16>
    %937 = vector.shape_cast %936 : vector<1x256x512xbf16> to vector<256x512xbf16>
    %cst_330 = arith.constant dense<0.000000e+00> : vector<8x512xf32>
    %938 = tpu.matmul %935, %937, %cst_330 {dimension_numbers = #tpu.dot_dimension_numbers<[1], [0], [0], [1], [0, 0, 1, 1], [], []>} : vector<8x256xbf16>, vector<256x512xbf16>, vector<8x512xf32> -> vector<8x512xf32>
    %c0_331 = arith.constant 0 : index
    %c0_332 = arith.constant 0 : index
    %c0_333 = arith.constant 0 : index
    %939 = vector.load %arg6[%c0_331, %c0_332, %c0_333] : memref<2x1x512xf32, #tpu.memory_space<vmem>>, vector<1x1x512xf32>
    %940 = vector.shape_cast %939 : vector<1x1x512xf32> to vector<1x512xf32>
    %941 = vector.broadcast %940 : vector<1x512xf32> to vector<8x512xf32>
    %942 = arith.addf %938, %941 : vector<8x512xf32>
    %943 = vector.extract_strided_slice %942 {offsets = [0, 0], sizes = [8, 384], strides = [1, 1]} : vector<8x512xf32> to vector<8x384xf32>
    %944 = arith.negf %943 : vector<8x384xf32>
    %945 = math.exp %944 : vector<8x384xf32>
    %cst_334 = arith.constant 1.000000e+00 : f32
    %946 = vector.broadcast %cst_334 : f32 to vector<8x384xf32>
    %947 = arith.addf %946, %945 : vector<8x384xf32>
    %948 = arith.divf %946, %947 : vector<8x384xf32>
    %949 = vector.extract_strided_slice %942 {offsets = [0, 384], sizes = [8, 128], strides = [1, 1]} : vector<8x512xf32> to vector<8x128xf32>
    %950 = math.tanh %949 : vector<8x128xf32>
    %951 = vector.extract_strided_slice %948 {offsets = [0, 0], sizes = [8, 128], strides = [1, 1]} : vector<8x384xf32> to vector<8x128xf32>
    %952 = vector.extract_strided_slice %948 {offsets = [0, 128], sizes = [8, 128], strides = [1, 1]} : vector<8x384xf32> to vector<8x128xf32>
    %953 = vector.extract_strided_slice %948 {offsets = [0, 256], sizes = [8, 128], strides = [1, 1]} : vector<8x384xf32> to vector<8x128xf32>
    %954 = arith.mulf %952, %862 : vector<8x128xf32>
    %955 = arith.mulf %951, %950 : vector<8x128xf32>
    %956 = arith.addf %954, %955 : vector<8x128xf32>
    %957 = math.tanh %956 : vector<8x128xf32>
    %958 = arith.mulf %953, %957 : vector<8x128xf32>
    %959 = arith.select %932, %958, %861 : vector<8x128xf32>
    %960 = arith.select %932, %956, %862 : vector<8x128xf32>
    %961 = arith.select %932, %958, %863 : vector<8x128xf32>
    %c2_i32_335 = arith.constant 2 : i32
    %962 = arith.subi %c9_i32, %c2_i32_335 : i32
    %c0_i32_336 = arith.constant 0 : i32
    %963 = arith.cmpi sge, %962, %c0_i32_336 : i32
    %c8_i32_337 = arith.constant 8 : i32
    %964 = arith.cmpi slt, %962, %c8_i32_337 : i32
    %965 = arith.andi %963, %964 : i1
    %966 = arith.truncf %863 : vector<8x128xf32> to vector<8x128xbf16>
    %967 = arith.truncf %894 : vector<8x128xf32> to vector<8x128xbf16>
    %968 = tpu.concatenate %966, %967 in 1 : vector<8x128xbf16>, vector<8x128xbf16> -> vector<8x256xbf16>
    %c1_338 = arith.constant 1 : index
    %c0_339 = arith.constant 0 : index
    %c0_340 = arith.constant 0 : index
    %969 = vector.load %arg5[%c1_338, %c0_339, %c0_340] : memref<2x256x512xbf16, #tpu.memory_space<vmem>>, vector<1x256x512xbf16>
    %970 = vector.shape_cast %969 : vector<1x256x512xbf16> to vector<256x512xbf16>
    %cst_341 = arith.constant dense<0.000000e+00> : vector<8x512xf32>
    %971 = tpu.matmul %968, %970, %cst_341 {dimension_numbers = #tpu.dot_dimension_numbers<[1], [0], [0], [1], [0, 0, 1, 1], [], []>} : vector<8x256xbf16>, vector<256x512xbf16>, vector<8x512xf32> -> vector<8x512xf32>
    %c1_342 = arith.constant 1 : index
    %c0_343 = arith.constant 0 : index
    %c0_344 = arith.constant 0 : index
    %972 = vector.load %arg6[%c1_342, %c0_343, %c0_344] : memref<2x1x512xf32, #tpu.memory_space<vmem>>, vector<1x1x512xf32>
    %973 = vector.shape_cast %972 : vector<1x1x512xf32> to vector<1x512xf32>
    %974 = vector.broadcast %973 : vector<1x512xf32> to vector<8x512xf32>
    %975 = arith.addf %971, %974 : vector<8x512xf32>
    %976 = vector.extract_strided_slice %975 {offsets = [0, 0], sizes = [8, 384], strides = [1, 1]} : vector<8x512xf32> to vector<8x384xf32>
    %977 = arith.negf %976 : vector<8x384xf32>
    %978 = math.exp %977 : vector<8x384xf32>
    %cst_345 = arith.constant 1.000000e+00 : f32
    %979 = vector.broadcast %cst_345 : f32 to vector<8x384xf32>
    %980 = arith.addf %979, %978 : vector<8x384xf32>
    %981 = arith.divf %979, %980 : vector<8x384xf32>
    %982 = vector.extract_strided_slice %975 {offsets = [0, 384], sizes = [8, 128], strides = [1, 1]} : vector<8x512xf32> to vector<8x128xf32>
    %983 = math.tanh %982 : vector<8x128xf32>
    %984 = vector.extract_strided_slice %981 {offsets = [0, 0], sizes = [8, 128], strides = [1, 1]} : vector<8x384xf32> to vector<8x128xf32>
    %985 = vector.extract_strided_slice %981 {offsets = [0, 128], sizes = [8, 128], strides = [1, 1]} : vector<8x384xf32> to vector<8x128xf32>
    %986 = vector.extract_strided_slice %981 {offsets = [0, 256], sizes = [8, 128], strides = [1, 1]} : vector<8x384xf32> to vector<8x128xf32>
    %987 = arith.mulf %985, %895 : vector<8x128xf32>
    %988 = arith.mulf %984, %983 : vector<8x128xf32>
    %989 = arith.addf %987, %988 : vector<8x128xf32>
    %990 = math.tanh %989 : vector<8x128xf32>
    %991 = arith.mulf %986, %990 : vector<8x128xf32>
    %992 = arith.select %965, %991, %894 : vector<8x128xf32>
    %993 = arith.select %965, %989, %895 : vector<8x128xf32>
    %c10_i32 = arith.constant 10 : i32
    %c0_346 = arith.constant 0 : index
    %c0_347 = arith.constant 0 : index
    %994 = vector.load %arg7[%c0_346, %c0_347] : memref<128x64xf32, #tpu.memory_space<vmem>>, vector<128x64xf32>
    %cst_348 = arith.constant dense<0.000000e+00> : vector<8x64xf32>
    %995 = tpu.matmul %992, %994, %cst_348 {dimension_numbers = #tpu.dot_dimension_numbers<[1], [0], [0], [1], [0, 0, 1, 1], [], []>} : vector<8x128xf32>, vector<128x64xf32>, vector<8x64xf32> -> vector<8x64xf32>
    %c0_349 = arith.constant 0 : index
    %c0_350 = arith.constant 0 : index
    %996 = vector.load %arg8[%c0_349, %c0_350] : memref<1x64xf32, #tpu.memory_space<vmem>>, vector<1x64xf32>
    %997 = vector.broadcast %996 : vector<1x64xf32> to vector<8x64xf32>
    %998 = arith.addf %995, %997 : vector<8x64xf32>
    %cst_351 = arith.constant 0.000000e+00 : f32
    %999 = vector.broadcast %cst_351 : f32 to vector<8x64xf32>
    %1000 = arith.maximumf %998, %999 : vector<8x64xf32>
    %c0_352 = arith.constant 0 : index
    %c0_353 = arith.constant 0 : index
    %1001 = vector.load %arg9[%c0_352, %c0_353] : memref<64x1xf32, #tpu.memory_space<vmem>>, vector<64x1xf32>
    %cst_354 = arith.constant dense<0.000000e+00> : vector<8x1xf32>
    %1002 = tpu.matmul %1000, %1001, %cst_354 {dimension_numbers = #tpu.dot_dimension_numbers<[1], [0], [0], [1], [0, 0, 1, 1], [], []>} : vector<8x64xf32>, vector<64x1xf32>, vector<8x1xf32> -> vector<8x1xf32>
    %c0_355 = arith.constant 0 : index
    %c0_356 = arith.constant 0 : index
    %1003 = vector.load %arg10[%c0_355, %c0_356] : memref<1x1xf32, #tpu.memory_space<vmem>>, vector<1x1xf32>
    %1004 = vector.broadcast %1003 : vector<1x1xf32> to vector<8x1xf32>
    %1005 = arith.addf %1002, %1004 : vector<8x1xf32>
    %c0_357 = arith.constant 0 : index
    %c0_358 = arith.constant 0 : index
    %1006 = vector.load %arg11[%c0_357, %c0_358] : memref<8x1xf32, #tpu.memory_space<vmem>>, vector<8x1xf32>
    tpu.vector_store %arg11[%c0_357, %c0_358], %1005 {strides = array<i32>} : memref<8x1xf32, #tpu.memory_space<vmem>>, vector<8x1xf32>,
    return
  }
  func.func @transform_0(%arg0: i32) -> (i32, i32, i32) {
    %c0_i32 = arith.constant 0 : i32
    %c0_i32_0 = arith.constant 0 : i32
    %c0_i32_1 = arith.constant 0 : i32
    %c0_i32_2 = arith.constant 0 : i32
    return %c0_i32, %c0_i32_0, %c0_i32_1 : i32, i32, i32
  }
  func.func @transform_1(%arg0: i32) -> (i32, i32, i32) {
    %c0_i32 = arith.constant 0 : i32
    %c0_i32_0 = arith.constant 0 : i32
    %c0_i32_1 = arith.constant 0 : i32
    %c0_i32_2 = arith.constant 0 : i32
    return %c0_i32, %c0_i32_0, %c0_i32_1 : i32, i32, i32
  }
  func.func @transform_2(%arg0: i32) -> (i32, i32, i32) {
    %c0_i32 = arith.constant 0 : i32
    %c0_i32_0 = arith.constant 0 : i32
    %c0_i32_1 = arith.constant 0 : i32
    %c0_i32_2 = arith.constant 0 : i32
    return %c0_i32, %c0_i32_0, %c0_i32_1 : i32, i32, i32
  }
  func.func @transform_3(%arg0: i32) -> (i32, i32) {
    %c0_i32 = arith.constant 0 : i32
    %c0_i32_0 = arith.constant 0 : i32
    %c0_i32_1 = arith.constant 0 : i32
    return %c0_i32, %c0_i32_0 : i32, i32
  }
  func.func @transform_4(%arg0: i32) -> (i32, i32, i32) {
    %c0_i32 = arith.constant 0 : i32
    %c0_i32_0 = arith.constant 0 : i32
    %c0_i32_1 = arith.constant 0 : i32
    %c0_i32_2 = arith.constant 0 : i32
    return %c0_i32, %c0_i32_0, %c0_i32_1 : i32, i32, i32
  }
  func.func @transform_5(%arg0: i32) -> (i32, i32, i32) {
    %c0_i32 = arith.constant 0 : i32
    %c0_i32_0 = arith.constant 0 : i32
    %c0_i32_1 = arith.constant 0 : i32
    %c0_i32_2 = arith.constant 0 : i32
    return %c0_i32, %c0_i32_0, %c0_i32_1 : i32, i32, i32
  }
  func.func @transform_6(%arg0: i32) -> (i32, i32) {
    %c0_i32 = arith.constant 0 : i32
    %c0_i32_0 = arith.constant 0 : i32
    %c0_i32_1 = arith.constant 0 : i32
    return %c0_i32, %c0_i32_0 : i32, i32
  }
  func.func @transform_7(%arg0: i32) -> (i32, i32) {
    %c0_i32 = arith.constant 0 : i32
    %c0_i32_0 = arith.constant 0 : i32
    %c0_i32_1 = arith.constant 0 : i32
    return %c0_i32, %c0_i32_0 : i32, i32
  }
  func.func @transform_8(%arg0: i32) -> (i32, i32) {
    %c0_i32 = arith.constant 0 : i32
    %c0_i32_0 = arith.constant 0 : i32
    %c0_i32_1 = arith.constant 0 : i32
    return %c0_i32, %c0_i32_0 : i32, i32
  }
  func.func @transform_9(%arg0: i32) -> (i32, i32) {
    %c0_i32 = arith.constant 0 : i32
    %c0_i32_0 = arith.constant 0 : i32
    %c0_i32_1 = arith.constant 0 : i32
    return %c0_i32, %c0_i32_0 : i32, i32
  }
  func.func @transform_10(%arg0: i32) -> (i32, i32) {
    %c0_i32 = arith.constant 0 : i32
    %c0_i32_0 = arith.constant 0 : i32
    %c0_i32_1 = arith.constant 0 : i32
    return %c0_i32, %c0_i32_0 : i32, i32
  }
}

</mosaic_0001>

<llo_original>
// kernel: dense_lstm_forward.3
$region0: #{dense_lstm_forward.3}
  #allocation0 [shape = 'u32[]', space=smem, size = 0x4, offset = 0x4, fixed_abs, tag = 'smem constant byte address 0x4 - core index']
  #allocation1 [shape = 'u32[144,128]{1,0:T(1,128)}', space=vmem, size = 0x12000, scoped, tag = 'internal scratch']
  %s0 = inlined_call_operand.vmem [shape: bf16[16,24,128], index: 0, kind: input, shape index: {}]
  %s1 = inlined_call_operand.vmem [shape: bf16[3,128,128], index: 1, kind: input, shape index: {}]
  %s2 = inlined_call_operand.vmem [shape: f32[1,128], index: 2, kind: input, shape index: {}]
  %s3 = inlined_call_operand.vmem [shape: bf16[16,16,128], index: 3, kind: output, shape index: {}]
  %s4 = sld [smem:[#allocation0]]
  $region22: #{dense_lstm_forward.3} parent=0
    _
  %s6 = ssub.s32 1, %s4
  %s7 = scalar_select 0, %s6, %s4
  // Predicated region
  $region2: #{dense_lstm_forward.3} parent=0 // pred_check
    _
  $region3: #{dense_lstm_forward.3} parent=0 // pred_check_branch
    %9 = sbr.rel (0) target = $region5
  $region4: #{dense_lstm_forward.3} parent=0 // pred_region
    _
  $region5: #{dense_lstm_forward.3} parent=0 // pred_fallthru
    _
  // Predicated region
  $region6: #{dense_lstm_forward.3} parent=0 // pred_check
    _
  $region7: #{dense_lstm_forward.3} parent=0 // pred_check_branch
    %11 = sbr.rel (0) target = $region9
  $region8: #{dense_lstm_forward.3} parent=0 // pred_region
    _
  $region9: #{dense_lstm_forward.3} parent=0 // pred_fallthru
    _
  // Predicated region
  $region10: #{dense_lstm_forward.3} parent=0 // pred_check
    _
  $region11: #{dense_lstm_forward.3} parent=0 // pred_check_branch
    %13 = sbr.rel (0) target = $region13
  $region12: #{dense_lstm_forward.3} parent=0 // pred_region
    _
  $region13: #{dense_lstm_forward.3} parent=0 // pred_fallthru
    _
  %v15 = vld [vmem:[%s0] sm:$0xf]
  %v16 = vld [vmem:[%s0 + $0x4] sm:$0xf]
  %v17 = vld [vmem:[%s0 + $0xc] sm:$0xf]
  %v18 = vld [vmem:[%s0 + $0x10] sm:$0xf]
  %v19 = vld [vmem:[%s0 + $0x18] sm:$0xf]
  %v20 = vld [vmem:[%s0 + $0x1c] sm:$0xf]
  %v21 = vld [vmem:[%s0 + $0x24] sm:$0xf]
  %v22 = vld [vmem:[%s0 + $0x28] sm:$0xf]
  %v23 = vld [vmem:[%s0 + $0x30] sm:$0xf]
  %v24 = vld [vmem:[%s0 + $0x34] sm:$0xf]
  %v25 = vld [vmem:[%s0 + $0x3c] sm:$0xf]
  %v26 = vld [vmem:[%s0 + $0x40] sm:$0xf]
  %v27 = vld [vmem:[%s0 + $0x48] sm:$0xf]
  %v28 = vld [vmem:[%s0 + $0x4c] sm:$0xf]
  %v29 = vld [vmem:[%s0 + $0x54] sm:$0xf]
  %v30 = vld [vmem:[%s0 + $0x58] sm:$0xf]
  %v31 = vld [vmem:[%s0 + $0x60] sm:$0xf]
  %v32 = vld [vmem:[%s0 + $0x64] sm:$0xf]
  %v33 = vld [vmem:[%s0 + $0x6c] sm:$0xf]
  %v34 = vld [vmem:[%s0 + $0x70] sm:$0xf]
  %v35 = vld [vmem:[%s0 + $0x78] sm:$0xf]
  %v36 = vld [vmem:[%s0 + $0x7c] sm:$0xf]
  %v37 = vld [vmem:[%s0 + $0x84] sm:$0xf]
  %v38 = vld [vmem:[%s0 + $0x88] sm:$0xf]
  %v39 = vld [vmem:[%s0 + $0x90] sm:$0xf]
  %v40 = vld [vmem:[%s0 + $0x94] sm:$0xf]
  %v41 = vld [vmem:[%s0 + $0x9c] sm:$0xf]
  %v42 = vld [vmem:[%s0 + $0xa0] sm:$0xf]
  %v43 = vld [vmem:[%s0 + $0xa8] sm:$0xf]
  %v44 = vld [vmem:[%s0 + $0xac] sm:$0xf]
  %v45 = vld [vmem:[%s0 + $0xb4] sm:$0xf]
  %v46 = vld [vmem:[%s0 + $0xb8] sm:$0xf]
  %v47 = vld [vmem:[%s1] sm:$0xf]
  %v48 = vld [vmem:[%s1 + $0x4] sm:$0xf]
  %v49 = vld [vmem:[%s1 + $0x8] sm:$0xf]
  %v50 = vld [vmem:[%s1 + $0xc] sm:$0xf]
  %v51 = vld [vmem:[%s1 + $0x10] sm:$0xf]
  %v52 = vld [vmem:[%s1 + $0x14] sm:$0xf]
  %v53 = vld [vmem:[%s1 + $0x18] sm:$0xf]
  %v54 = vld [vmem:[%s1 + $0x1c] sm:$0xf]
  %v55 = vld [vmem:[%s1 + $0x20] sm:$0xf]
  %v56 = vld [vmem:[%s1 + $0x24] sm:$0xf]
  %v57 = vld [vmem:[%s1 + $0x28] sm:$0xf]
  %v58 = vld [vmem:[%s1 + $0x2c] sm:$0xf]
  %v59 = vld [vmem:[%s1 + $0x30] sm:$0xf]
  %v60 = vld [vmem:[%s1 + $0x34] sm:$0xf]
  %v61 = vld [vmem:[%s1 + $0x38] sm:$0xf]
  %v62 = vld [vmem:[%s1 + $0x3c] sm:$0xf]
  %v63 = vld [vmem:[%s0] sm:$0xf]
  %v64 = vld [vmem:[%s0 + $0x4] sm:$0xf]
  %v65 = vld [vmem:[%s0 + $0x8] sm:$0x1]
  %v66 = vld [vmem:[%s0 + $0xc] sm:$0xf]
  %v67 = vld [vmem:[%s0 + $0x10] sm:$0xf]
  %v68 = vld [vmem:[%s0 + $0x14] sm:$0x1]
  %v69 = vld [vmem:[%s0 + $0x18] sm:$0xf]
  %v70 = vld [vmem:[%s0 + $0x1c] sm:$0xf]
  %v71 = vld [vmem:[%s0 + $0x20] sm:$0x1]
  %v72 = vld [vmem:[%s0 + $0x24] sm:$0xf]
  %v73 = vld [vmem:[%s0 + $0x28] sm:$0xf]
  %v74 = vld [vmem:[%s0 + $0x2c] sm:$0x1]
  %v75 = vld [vmem:[%s0 + $0x30] sm:$0xf]
  %v76 = vld [vmem:[%s0 + $0x34] sm:$0xf]
  %v77 = vld [vmem:[%s0 + $0x38] sm:$0x1]
  %v78 = vld [vmem:[%s0 + $0x3c] sm:$0xf]
  %v79 = vld [vmem:[%s0 + $0x40] sm:$0xf]
  %v80 = vld [vmem:[%s0 + $0x44] sm:$0x1]
  %v81 = vld [vmem:[%s0 + $0x48] sm:$0xf]
  %v82 = vld [vmem:[%s0 + $0x4c] sm:$0xf]
  %v83 = vld [vmem:[%s0 + $0x50] sm:$0x1]
  %v84 = vld [vmem:[%s0 + $0x54] sm:$0xf]
  %v85 = vld [vmem:[%s0 + $0x58] sm:$0xf]
  %v86 = vld [vmem:[%s0 + $0x5c] sm:$0x1]
  %v87 = vld [vmem:[%s0 + $0x60] sm:$0xf]
  %v88 = vld [vmem:[%s0 + $0x64] sm:$0xf]
  %v89 = vld [vmem:[%s0 + $0x68] sm:$0x1]
  %v90 = vld [vmem:[%s0 + $0x6c] sm:$0xf]
  %v91 = vld [vmem:[%s0 + $0x70] sm:$0xf]
  %v92 = vld [vmem:[%s0 + $0x74] sm:$0x1]
  %v93 = vld [vmem:[%s0 + $0x78] sm:$0xf]
  %v94 = vld [vmem:[%s0 + $0x7c] sm:$0xf]
  %v95 = vld [vmem:[%s0 + $0x80] sm:$0x1]
  %v96 = vld [vmem:[%s0 + $0x84] sm:$0xf]
  %v97 = vld [vmem:[%s0 + $0x88] sm:$0xf]
  %v98 = vld [vmem:[%s0 + $0x8c] sm:$0x1]
  %v99 = vld [vmem:[%s0 + $0x90] sm:$0xf]
  %v100 = vld [vmem:[%s0 + $0x94] sm:$0xf]
  %v101 = vld [vmem:[%s0 + $0x98] sm:$0x1]
  %v102 = vld [vmem:[%s0 + $0x9c] sm:$0xf]
  %v103 = vld [vmem:[%s0 + $0xa0] sm:$0xf]
  %v104 = vld [vmem:[%s0 + $0xa4] sm:$0x1]
  %v105 = vld [vmem:[%s0 + $0xa8] sm:$0xf]
  %v106 = vld [vmem:[%s0 + $0xac] sm:$0xf]
  %v107 = vld [vmem:[%s0 + $0xb0] sm:$0x1]
  %v108 = vld [vmem:[%s0 + $0xb4] sm:$0xf]
  %v109 = vld [vmem:[%s0 + $0xb8] sm:$0xf]
  %v110 = vld [vmem:[%s0 + $0xbc] sm:$0x1]
  %vm111 = vsmask.f32 3328
  %vm112 = vsmask.f32 7440
  %vm113 = vmor %vm111, %vm112
  %v115 = vshrl.u32 %v63, 16
  %v117 = vrot.slane %v115, 4
  %v118 = vshll.u32 %v63, 16
  %v120 = vrot.slane %v118, 5
  %v121 = vor.u32 %v117, %v120
  %v122 = vrot.slane %v121, 4
  %v124 = vshll.u32 %v64, 16
  %v126 = vrot.slane %v124, 5
  %v127 = vsel %vm113, %v122, %v126
  %v128 = vshrl.u32 %v64, 16
  %v130 = vrot.slane %v128, 4
  %v131 = vor.u32 %v130, %v126
  %v132 = vrot.slane %v131, 4
  %v134 = vshll.u32 %v65, 16
  %v136 = vrot.slane %v134, 5
  %v137 = vsel %vm113, %v132, %v136
  %v139 = vshrl.u32 %v66, 16
  %v141 = vrot.slane %v139, 4
  %v142 = vshll.u32 %v66, 16
  %v144 = vrot.slane %v142, 5
  %v145 = vor.u32 %v141, %v144
  %v146 = vrot.slane %v145, 4
  %v148 = vshll.u32 %v67, 16
  %v150 = vrot.slane %v148, 5
  %v151 = vsel %vm113, %v146, %v150
  %v152 = vshrl.u32 %v67, 16
  %v154 = vrot.slane %v152, 4
  %v155 = vor.u32 %v154, %v150
  %v156 = vrot.slane %v155, 4
  %v158 = vshll.u32 %v68, 16
  %v160 = vrot.slane %v158, 5
  %v161 = vsel %vm113, %v156, %v160
  %v163 = vshrl.u32 %v69, 16
  %v165 = vrot.slane %v163, 4
  %v166 = vshll.u32 %v69, 16
  %v168 = vrot.slane %v166, 5
  %v169 = vor.u32 %v165, %v168
  %v170 = vrot.slane %v169, 4
  %v172 = vshll.u32 %v70, 16
  %v174 = vrot.slane %v172, 5
  %v175 = vsel %vm113, %v170, %v174
  %v176 = vshrl.u32 %v70, 16
  %v178 = vrot.slane %v176, 4
  %v179 = vor.u32 %v178, %v174
  %v180 = vrot.slane %v179, 4
  %v182 = vshll.u32 %v71, 16
  %v184 = vrot.slane %v182, 5
  %v185 = vsel %vm113, %v180, %v184
  %v187 = vshrl.u32 %v72, 16
  %v189 = vrot.slane %v187, 4
  %v190 = vshll.u32 %v72, 16
  %v192 = vrot.slane %v190, 5
  %v193 = vor.u32 %v189, %v192
  %v194 = vrot.slane %v193, 4
  %v196 = vshll.u32 %v73, 16
  %v198 = vrot.slane %v196, 5
  %v199 = vsel %vm113, %v194, %v198
  %v200 = vshrl.u32 %v73, 16
  %v202 = vrot.slane %v200, 4
  %v203 = vor.u32 %v202, %v198
  %v204 = vrot.slane %v203, 4
  %v206 = vshll.u32 %v74, 16
  %v208 = vrot.slane %v206, 5
  %v209 = vsel %vm113, %v204, %v208
  %v211 = vshrl.u32 %v75, 16
  %v213 = vrot.slane %v211, 4
  %v214 = vshll.u32 %v75, 16
  %v216 = vrot.slane %v214, 5
  %v217 = vor.u32 %v213, %v216
  %v218 = vrot.slane %v217, 4
  %v220 = vshll.u32 %v76, 16
  %v222 = vrot.slane %v220, 5
  %v223 = vsel %vm113, %v218, %v222
  %v224 = vshrl.u32 %v76, 16
  %v226 = vrot.slane %v224, 4
  %v227 = vor.u32 %v226, %v222
  %v228 = vrot.slane %v227, 4
  %v230 = vshll.u32 %v77, 16
  %v232 = vrot.slane %v230, 5
  %v233 = vsel %vm113, %v228, %v232
  %v235 = vshrl.u32 %v78, 16
  %v237 = vrot.slane %v235, 4
  %v238 = vshll.u32 %v78, 16
  %v240 = vrot.slane %v238, 5
  %v241 = vor.u32 %v237, %v240
  %v242 = vrot.slane %v241, 4
  %v244 = vshll.u32 %v79, 16
  %v246 = vrot.slane %v244, 5
  %v247 = vsel %vm113, %v242, %v246
  %v248 = vshrl.u32 %v79, 16
  %v250 = vrot.slane %v248, 4
  %v251 = vor.u32 %v250, %v246
  %v252 = vrot.slane %v251, 4
  %v254 = vshll.u32 %v80, 16
  %v256 = vrot.slane %v254, 5
  %v257 = vsel %vm113, %v252, %v256
  %v259 = vshrl.u32 %v81, 16
  %v261 = vrot.slane %v259, 4
  %v262 = vshll.u32 %v81, 16
  %v264 = vrot.slane %v262, 5
  %v265 = vor.u32 %v261, %v264
  %v266 = vrot.slane %v265, 4
  %v268 = vshll.u32 %v82, 16
  %v270 = vrot.slane %v268, 5
  %v271 = vsel %vm113, %v266, %v270
  %v272 = vshrl.u32 %v82, 16
  %v274 = vrot.slane %v272, 4
  %v275 = vor.u32 %v274, %v270
  %v276 = vrot.slane %v275, 4
  %v278 = vshll.u32 %v83, 16
  %v280 = vrot.slane %v278, 5
  %v281 = vsel %vm113, %v276, %v280
  %v283 = vshrl.u32 %v84, 16
  %v285 = vrot.slane %v283, 4
  %v286 = vshll.u32 %v84, 16
  %v288 = vrot.slane %v286, 5
  %v289 = vor.u32 %v285, %v288
  %v290 = vrot.slane %v289, 4
  %v292 = vshll.u32 %v85, 16
  %v294 = vrot.slane %v292, 5
  %v295 = vsel %vm113, %v290, %v294
  %v296 = vshrl.u32 %v85, 16
  %v298 = vrot.slane %v296, 4
  %v299 = vor.u32 %v298, %v294
  %v300 = vrot.slane %v299, 4
  %v302 = vshll.u32 %v86, 16
  %v304 = vrot.slane %v302, 5
  %v305 = vsel %vm113, %v300, %v304
  %v307 = vshrl.u32 %v87, 16
  %v309 = vrot.slane %v307, 4
  %v310 = vshll.u32 %v87, 16
  %v312 = vrot.slane %v310, 5
  %v313 = vor.u32 %v309, %v312
  %v314 = vrot.slane %v313, 4
  %v316 = vshll.u32 %v88, 16
  %v318 = vrot.slane %v316, 5
  %v319 = vsel %vm113, %v314, %v318
  %v320 = vshrl.u32 %v88, 16
  %v322 = vrot.slane %v320, 4
  %v323 = vor.u32 %v322, %v318
  %v324 = vrot.slane %v323, 4
  %v326 = vshll.u32 %v89, 16
  %v328 = vrot.slane %v326, 5
  %v329 = vsel %vm113, %v324, %v328
  %v331 = vshrl.u32 %v90, 16
  %v333 = vrot.slane %v331, 4
  %v334 = vshll.u32 %v90, 16
  %v336 = vrot.slane %v334, 5
  %v337 = vor.u32 %v333, %v336
  %v338 = vrot.slane %v337, 4
  %v340 = vshll.u32 %v91, 16
  %v342 = vrot.slane %v340, 5
  %v343 = vsel %vm113, %v338, %v342
  %v344 = vshrl.u32 %v91, 16
  %v346 = vrot.slane %v344, 4
  %v347 = vor.u32 %v346, %v342
  %v348 = vrot.slane %v347, 4
  %v350 = vshll.u32 %v92, 16
  %v352 = vrot.slane %v350, 5
  %v353 = vsel %vm113, %v348, %v352
  %v355 = vshrl.u32 %v93, 16
  %v357 = vrot.slane %v355, 4
  %v358 = vshll.u32 %v93, 16
  %v360 = vrot.slane %v358, 5
  %v361 = vor.u32 %v357, %v360
  %v362 = vrot.slane %v361, 4
  %v364 = vshll.u32 %v94, 16
  %v366 = vrot.slane %v364, 5
  %v367 = vsel %vm113, %v362, %v366
  %v368 = vshrl.u32 %v94, 16
  %v370 = vrot.slane %v368, 4
  %v371 = vor.u32 %v370, %v366
  %v372 = vrot.slane %v371, 4
  %v374 = vshll.u32 %v95, 16
  %v376 = vrot.slane %v374, 5
  %v377 = vsel %vm113, %v372, %v376
  %v379 = vshrl.u32 %v96, 16
  %v381 = vrot.slane %v379, 4
  %v382 = vshll.u32 %v96, 16
  %v384 = vrot.slane %v382, 5
  %v385 = vor.u32 %v381, %v384
  %v386 = vrot.slane %v385, 4
  %v388 = vshll.u32 %v97, 16
  %v390 = vrot.slane %v388, 5
  %v391 = vsel %vm113, %v386, %v390
  %v392 = vshrl.u32 %v97, 16
  %v394 = vrot.slane %v392, 4
  %v395 = vor.u32 %v394, %v390
  %v396 = vrot.slane %v395, 4
  %v398 = vshll.u32 %v98, 16
  %v400 = vrot.slane %v398, 5
  %v401 = vsel %vm113, %v396, %v400
  %v403 = vshrl.u32 %v99, 16
  %v405 = vrot.slane %v403, 4
  %v406 = vshll.u32 %v99, 16
  %v408 = vrot.slane %v406, 5
  %v409 = vor.u32 %v405, %v408
  %v410 = vrot.slane %v409, 4
  %v412 = vshll.u32 %v100, 16
  %v414 = vrot.slane %v412, 5
  %v415 = vsel %vm113, %v410, %v414
  %v416 = vshrl.u32 %v100, 16
  %v418 = vrot.slane %v416, 4
  %v419 = vor.u32 %v418, %v414
  %v420 = vrot.slane %v419, 4
  %v422 = vshll.u32 %v101, 16
  %v424 = vrot.slane %v422, 5
  %v425 = vsel %vm113, %v420, %v424
  %v427 = vshrl.u32 %v102, 16
  %v429 = vrot.slane %v427, 4
  %v430 = vshll.u32 %v102, 16
  %v432 = vrot.slane %v430, 5
  %v433 = vor.u32 %v429, %v432
  %v434 = vrot.slane %v433, 4
  %v436 = vshll.u32 %v103, 16
  %v438 = vrot.slane %v436, 5
  %v439 = vsel %vm113, %v434, %v438
  %v440 = vshrl.u32 %v103, 16
  %v442 = vrot.slane %v440, 4
  %v443 = vor.u32 %v442, %v438
  %v444 = vrot.slane %v443, 4
  %v446 = vshll.u32 %v104, 16
  %v448 = vrot.slane %v446, 5
  %v449 = vsel %vm113, %v444, %v448
  %v451 = vshrl.u32 %v105, 16
  %v453 = vrot.slane %v451, 4
  %v454 = vshll.u32 %v105, 16
  %v456 = vrot.slane %v454, 5
  %v457 = vor.u32 %v453, %v456
  %v458 = vrot.slane %v457, 4
  %v460 = vshll.u32 %v106, 16
  %v462 = vrot.slane %v460, 5
  %v463 = vsel %vm113, %v458, %v462
  %v464 = vshrl.u32 %v106, 16
  %v466 = vrot.slane %v464, 4
  %v467 = vor.u32 %v466, %v462
  %v468 = vrot.slane %v467, 4
  %v470 = vshll.u32 %v107, 16
  %v472 = vrot.slane %v470, 5
  %v473 = vsel %vm113, %v468, %v472
  %v475 = vshrl.u32 %v108, 16
  %v477 = vrot.slane %v475, 4
  %v478 = vshll.u32 %v108, 16
  %v480 = vrot.slane %v478, 5
  %v481 = vor.u32 %v477, %v480
  %v482 = vrot.slane %v481, 4
  %v484 = vshll.u32 %v109, 16
  %v486 = vrot.slane %v484, 5
  %v487 = vsel %vm113, %v482, %v486
  %v488 = vshrl.u32 %v109, 16
  %v490 = vrot.slane %v488, 4
  %v491 = vor.u32 %v490, %v486
  %v492 = vrot.slane %v491, 4
  %v494 = vshll.u32 %v110, 16
  %v496 = vrot.slane %v494, 5
  %v497 = vsel %vm113, %v492, %v496
  %s498 = scalar_lea.vmem %s1, 64
  %v499 = vld [vmem:[%s498] sm:$0xf]
  %v500 = vld [vmem:[%s498 + $0x4] sm:$0xf]
  %v501 = vld [vmem:[%s498 + $0x8] sm:$0xf]
  %v502 = vld [vmem:[%s498 + $0xc] sm:$0xf]
  %v503 = vld [vmem:[%s498 + $0x10] sm:$0xf]
  %v504 = vld [vmem:[%s498 + $0x14] sm:$0xf]
  %v505 = vld [vmem:[%s498 + $0x18] sm:$0xf]
  %v506 = vld [vmem:[%s498 + $0x1c] sm:$0xf]
  %v507 = vld [vmem:[%s498 + $0x20] sm:$0xf]
  %v508 = vld [vmem:[%s498 + $0x24] sm:$0xf]
  %v509 = vld [vmem:[%s498 + $0x28] sm:$0xf]
  %v510 = vld [vmem:[%s498 + $0x2c] sm:$0xf]
  %v511 = vld [vmem:[%s498 + $0x30] sm:$0xf]
  %v512 = vld [vmem:[%s498 + $0x34] sm:$0xf]
  %v513 = vld [vmem:[%s498 + $0x38] sm:$0xf]
  %v514 = vld [vmem:[%s498 + $0x3c] sm:$0xf]
  %v515 = vunpack.c.l.b16 %v127
  %v516 = vunpack.c.l.b16 %v137
  %v517 = vunpack.c.l.b16 %v151
  %v518 = vunpack.c.l.b16 %v161
  %v519 = vunpack.c.l.b16 %v175
  %v520 = vunpack.c.l.b16 %v185
  %v521 = vunpack.c.l.b16 %v199
  %v522 = vunpack.c.l.b16 %v209
  %v523 = vunpack.c.l.b16 %v223
  %v524 = vunpack.c.l.b16 %v233
  %v525 = vunpack.c.l.b16 %v247
  %v526 = vunpack.c.l.b16 %v257
  %v527 = vunpack.c.l.b16 %v271
  %v528 = vunpack.c.l.b16 %v281
  %v529 = vunpack.c.l.b16 %v295
  %v530 = vunpack.c.l.b16 %v305
  %v531 = vunpack.c.l.b16 %v319
  %v532 = vunpack.c.l.b16 %v329
  %v533 = vunpack.c.l.b16 %v343
  %v534 = vunpack.c.l.b16 %v353
  %v535 = vunpack.c.l.b16 %v367
  %v536 = vunpack.c.l.b16 %v377
  %v537 = vunpack.c.l.b16 %v391
  %v538 = vunpack.c.l.b16 %v401
  %v539 = vunpack.c.l.b16 %v415
  %v540 = vunpack.c.l.b16 %v425
  %v541 = vunpack.c.l.b16 %v439
  %v542 = vunpack.c.l.b16 %v449
  %v543 = vunpack.c.l.b16 %v463
  %v544 = vunpack.c.l.b16 %v473
  %v545 = vunpack.c.l.b16 %v487
  %v546 = vunpack.c.l.b16 %v497
  %v547 = vpack.c.b16 %v516, %v515
  %v548 = vpack.c.b16 %v518, %v517
  %v549 = vpack.c.b16 %v520, %v519
  %v550 = vpack.c.b16 %v522, %v521
  %v551 = vpack.c.b16 %v524, %v523
  %v552 = vpack.c.b16 %v526, %v525
  %v553 = vpack.c.b16 %v528, %v527
  %v554 = vpack.c.b16 %v530, %v529
  %v555 = vpack.c.b16 %v532, %v531
  %v556 = vpack.c.b16 %v534, %v533
  %v557 = vpack.c.b16 %v536, %v535
  %v558 = vpack.c.b16 %v538, %v537
  %v559 = vpack.c.b16 %v540, %v539
  %v560 = vpack.c.b16 %v542, %v541
  %v561 = vpack.c.b16 %v544, %v543
  %v562 = vpack.c.b16 %v546, %v545
  %v595 = vunpack.c.l.b16 %v499
  %v596 = vunpack.c.l.b16 %v500
  %v597 = vunpack.c.l.b16 %v501
  %v598 = vunpack.c.l.b16 %v502
  %v599 = vunpack.c.l.b16 %v503
  %v600 = vunpack.c.l.b16 %v504
  %v601 = vunpack.c.l.b16 %v505
  %v602 = vunpack.c.l.b16 %v506
  %v603 = vunpack.c.l.b16 %v507
  %v604 = vunpack.c.l.b16 %v508
  %v605 = vunpack.c.l.b16 %v509
  %v606 = vunpack.c.l.b16 %v510
  %v607 = vunpack.c.l.b16 %v511
  %v608 = vunpack.c.l.b16 %v512
  %v609 = vunpack.c.l.b16 %v513
  %v610 = vunpack.c.l.b16 %v514
  %v611 = vpack.c.b16 %v596, %v595
  %v612 = vpack.c.b16 %v598, %v597
  %v613 = vpack.c.b16 %v600, %v599
  %v614 = vpack.c.b16 %v602, %v601
  %v615 = vpack.c.b16 %v604, %v603
  %v616 = vpack.c.b16 %v606, %v605
  %v617 = vpack.c.b16 %v608, %v607
  %v618 = vpack.c.b16 %v610, %v609
  %627 = vmatprep.subr.bf16.mxu0 0
  %628 = vmatpush1.bf16.msra.mxu0 %v611
  %629 = vmatprep.subr.bf16.mxu0 0
  %630 = vmatpush1.bf16.msra.mxu0 %v612
  %631 = vmatprep.subr.bf16.mxu0 0
  %632 = vmatpush1.bf16.msra.mxu0 %v613
  %633 = vmatprep.subr.bf16.mxu0 0
  %634 = vmatpush1.bf16.msra.mxu0 %v614
  %635 = vmatprep.subr.bf16.mxu0 0
  %636 = vmatpush1.bf16.msra.mxu0 %v615
  %637 = vmatprep.subr.bf16.mxu0 0
  %638 = vmatpush1.bf16.msra.mxu0 %v616
  %639 = vmatprep.subr.bf16.mxu0 0
  %640 = vmatpush1.bf16.msra.mxu0 %v617
  %641 = vmatprep.subr.bf16.mxu0 0
  %642 = vmatpush1.bf16.msra.mxu0 %v618
  %643 = vmatprep.subr.bf16.mxu0 0
  %644 = vmatpush1.bf16.msra.mxu0 0
  %645 = vmatprep.subr.bf16.mxu0 0
  %646 = vmatpush1.bf16.msra.mxu0 0
  %647 = vmatprep.subr.bf16.mxu0 0
  %648 = vmatpush1.bf16.msra.mxu0 0
  %649 = vmatprep.subr.bf16.mxu0 0
  %650 = vmatpush1.bf16.msra.mxu0 0
  %651 = vmatprep.subr.bf16.mxu0 0
  %652 = vmatpush1.bf16.msra.mxu0 0
  %653 = vmatprep.subr.bf16.mxu0 0
  %654 = vmatpush1.bf16.msra.mxu0 0
  %655 = vmatprep.subr.bf16.mxu0 0
  %656 = vmatpush1.bf16.msra.mxu0 0
  %657 = vmatprep.subr.bf16.mxu0 0
  %658 = vmatpush1.bf16.msra.mxu0 0
  %659 = vmatprep.mubr.bf16.mxu0 0
  %660 = vmatmul.mubr.bf16.gmra.mrb[0].mxu0 %v547
  %v661 = vpop.f32.mrb[0].mxu0
  %v662 = vadd.f32 0.0, %v661
  %v663 = vpop.f32.mrb[0].mxu0
  %v664 = vpop.f32.mrb[0].mxu0
  %v665 = vadd.f32 0.0, %v664
  %v666 = vpop.f32.mrb[0].mxu0
  %667 = vmatprep.mubr.bf16.mxu0 0
  %668 = vmatmul.mubr.bf16.gmra.mrb[0].mxu0 %v548
  %v669 = vpop.f32.mrb[0].mxu0
  %v670 = vadd.f32 0.0, %v669
  %v671 = vpop.f32.mrb[0].mxu0
  %v672 = vpop.f32.mrb[0].mxu0
  %v673 = vadd.f32 0.0, %v672
  %v674 = vpop.f32.mrb[0].mxu0
  %675 = vmatprep.mubr.bf16.mxu0 0
  %676 = vmatmul.mubr.bf16.gmra.mrb[0].mxu0 %v549
  %v677 = vpop.f32.mrb[0].mxu0
  %v678 = vadd.f32 0.0, %v677
  %v679 = vpop.f32.mrb[0].mxu0
  %v680 = vpop.f32.mrb[0].mxu0
  %v681 = vadd.f32 0.0, %v680
  %v682 = vpop.f32.mrb[0].mxu0
  %683 = vmatprep.mubr.bf16.mxu0 0
  %684 = vmatmul.mubr.bf16.gmra.mrb[0].mxu0 %v550
  %v685 = vpop.f32.mrb[0].mxu0
  %v686 = vadd.f32 0.0, %v685
  %v687 = vpop.f32.mrb[0].mxu0
  %v688 = vpop.f32.mrb[0].mxu0
  %v689 = vadd.f32 0.0, %v688
  %v690 = vpop.f32.mrb[0].mxu0
  %691 = vmatprep.mubr.bf16.mxu0 0
  %692 = vmatmul.mubr.bf16.gmra.mrb[0].mxu0 %v551
  %v693 = vpop.f32.mrb[0].mxu0
  %v694 = vadd.f32 0.0, %v693
  %v695 = vpop.f32.mrb[0].mxu0
  %v696 = vpop.f32.mrb[0].mxu0
  %v697 = vadd.f32 0.0, %v696
  %v698 = vpop.f32.mrb[0].mxu0
  %699 = vmatprep.mubr.bf16.mxu0 0
  %700 = vmatmul.mubr.bf16.gmra.mrb[0].mxu0 %v552
  %v701 = vpop.f32.mrb[0].mxu0
  %v702 = vadd.f32 0.0, %v701
  %v703 = vpop.f32.mrb[0].mxu0
  %v704 = vpop.f32.mrb[0].mxu0
  %v705 = vadd.f32 0.0, %v704
  %v706 = vpop.f32.mrb[0].mxu0
  %707 = vmatprep.mubr.bf16.mxu0 0
  %708 = vmatmul.mubr.bf16.gmra.mrb[0].mxu0 %v553
  %v709 = vpop.f32.mrb[0].mxu0
  %v710 = vadd.f32 0.0, %v709
  %v711 = vpop.f32.mrb[0].mxu0
  %v712 = vpop.f32.mrb[0].mxu0
  %v713 = vadd.f32 0.0, %v712
  %v714 = vpop.f32.mrb[0].mxu0
  %715 = vmatprep.mubr.bf16.mxu0 0
  %716 = vmatmul.mubr.bf16.gmra.mrb[0].mxu0 %v554
  %v717 = vpop.f32.mrb[0].mxu0
  %v718 = vadd.f32 0.0, %v717
  %v719 = vpop.f32.mrb[0].mxu0
  %v720 = vpop.f32.mrb[0].mxu0
  %v721 = vadd.f32 0.0, %v720
  %v722 = vpop.f32.mrb[0].mxu0
  %723 = vmatprep.mubr.bf16.mxu0 0
  %724 = vmatmul.mubr.bf16.gmra.mrb[0].mxu0 %v555
  %v725 = vpop.f32.mrb[0].mxu0
  %v726 = vadd.f32 0.0, %v725
  %v727 = vpop.f32.mrb[0].mxu0
  %v728 = vpop.f32.mrb[0].mxu0
  %v729 = vadd.f32 0.0, %v728
  %v730 = vpop.f32.mrb[0].mxu0
  %731 = vmatprep.mubr.bf16.mxu0 0
  %732 = vmatmul.mubr.bf16.gmra.mrb[0].mxu0 %v556
  %v733 = vpop.f32.mrb[0].mxu0
  %v734 = vadd.f32 0.0, %v733
  %v735 = vpop.f32.mrb[0].mxu0
  %v736 = vpop.f32.mrb[0].mxu0
  %v737 = vadd.f32 0.0, %v736
  %v738 = vpop.f32.mrb[0].mxu0
  %739 = vmatprep.mubr.bf16.mxu0 0
  %740 = vmatmul.mubr.bf16.gmra.mrb[0].mxu0 %v557
  %v741 = vpop.f32.mrb[0].mxu0
  %v742 = vadd.f32 0.0, %v741
  %v743 = vpop.f32.mrb[0].mxu0
  %v744 = vpop.f32.mrb[0].mxu0
  %v745 = vadd.f32 0.0, %v744
  %v746 = vpop.f32.mrb[0].mxu0
  %747 = vmatprep.mubr.bf16.mxu0 0
  %748 = vmatmul.mubr.bf16.gmra.mrb[0].mxu0 %v558
  %v749 = vpop.f32.mrb[0].mxu0
  %v750 = vadd.f32 0.0, %v749
  %v751 = vpop.f32.mrb[0].mxu0
  %v752 = vpop.f32.mrb[0].mxu0
  %v753 = vadd.f32 0.0, %v752
  %v754 = vpop.f32.mrb[0].mxu0
  %755 = vmatprep.mubr.bf16.mxu0 0
  %756 = vmatmul.mubr.bf16.gmra.mrb[0].mxu0 %v559
  %v757 = vpop.f32.mrb[0].mxu0
  %v758 = vadd.f32 0.0, %v757
  %v759 = vpop.f32.mrb[0].mxu0
  %v760 = vpop.f32.mrb[0].mxu0
  %v761 = vadd.f32 0.0, %v760
  %v762 = vpop.f32.mrb[0].mxu0
  %763 = vmatprep.mubr.bf16.mxu0 0
  %764 = vmatmul.mubr.bf16.gmra.mrb[0].mxu0 %v560
  %v765 = vpop.f32.mrb[0].mxu0
  %v766 = vadd.f32 0.0, %v765
  %v767 = vpop.f32.mrb[0].mxu0
  %v768 = vpop.f32.mrb[0].mxu0
  %v769 = vadd.f32 0.0, %v768
  %v770 = vpop.f32.mrb[0].mxu0
  %771 = vmatprep.mubr.bf16.mxu0 0
  %772 = vmatmul.mubr.bf16.gmra.mrb[0].mxu0 %v561
  %v773 = vpop.f32.mrb[0].mxu0
  %v774 = vadd.f32 0.0, %v773
  %v775 = vpop.f32.mrb[0].mxu0
  %v776 = vpop.f32.mrb[0].mxu0
  %v777 = vadd.f32 0.0, %v776
  %v778 = vpop.f32.mrb[0].mxu0
  %779 = vmatprep.mubr.bf16.mxu0 0
  %780 = vmatmul.mubr.bf16.gmra.mrb[0].mxu0 %v562
  %v781 = vpop.f32.mrb[0].mxu0
  %v782 = vadd.f32 0.0, %v781
  %v783 = vpop.f32.mrb[0].mxu0
  %v784 = vpop.f32.mrb[0].mxu0
  %v785 = vadd.f32 0.0, %v784
  %v786 = vpop.f32.mrb[0].mxu0
  %787 = vdwg.mxu0
  %v820 = vunpack.c.l.b16 %v15
  %v821 = vunpack.c.l.b16 %v16
  %v822 = vunpack.c.l.b16 %v17
  %v823 = vunpack.c.l.b16 %v18
  %v824 = vunpack.c.l.b16 %v19
  %v825 = vunpack.c.l.b16 %v20
  %v826 = vunpack.c.l.b16 %v21
  %v827 = vunpack.c.l.b16 %v22
  %v828 = vunpack.c.l.b16 %v23
  %v829 = vunpack.c.l.b16 %v24
  %v830 = vunpack.c.l.b16 %v25
  %v831 = vunpack.c.l.b16 %v26
  %v832 = vunpack.c.l.b16 %v27
  %v833 = vunpack.c.l.b16 %v28
  %v834 = vunpack.c.l.b16 %v29
  %v835 = vunpack.c.l.b16 %v30
  %v836 = vunpack.c.l.b16 %v31
  %v837 = vunpack.c.l.b16 %v32
  %v838 = vunpack.c.l.b16 %v33
  %v839 = vunpack.c.l.b16 %v34
  %v840 = vunpack.c.l.b16 %v35
  %v841 = vunpack.c.l.b16 %v36
  %v842 = vunpack.c.l.b16 %v37
  %v843 = vunpack.c.l.b16 %v38
  %v844 = vunpack.c.l.b16 %v39
  %v845 = vunpack.c.l.b16 %v40
  %v846 = vunpack.c.l.b16 %v41
  %v847 = vunpack.c.l.b16 %v42
  %v848 = vunpack.c.l.b16 %v43
  %v849 = vunpack.c.l.b16 %v44
  %v850 = vunpack.c.l.b16 %v45
  %v851 = vunpack.c.l.b16 %v46
  %v852 = vpack.c.b16 %v821, %v820
  %v853 = vpack.c.b16 %v823, %v822
  %v854 = vpack.c.b16 %v825, %v824
  %v855 = vpack.c.b16 %v827, %v826
  %v856 = vpack.c.b16 %v829, %v828
  %v857 = vpack.c.b16 %v831, %v830
  %v858 = vpack.c.b16 %v833, %v832
  %v859 = vpack.c.b16 %v835, %v834
  %v860 = vpack.c.b16 %v837, %v836
  %v861 = vpack.c.b16 %v839, %v838
  %v862 = vpack.c.b16 %v841, %v840
  %v863 = vpack.c.b16 %v843, %v842
  %v864 = vpack.c.b16 %v845, %v844
  %v865 = vpack.c.b16 %v847, %v846
  %v866 = vpack.c.b16 %v849, %v848
  %v867 = vpack.c.b16 %v851, %v850
  %v900 = vunpack.c.l.b16 %v47
  %v901 = vunpack.c.l.b16 %v48
  %v902 = vunpack.c.l.b16 %v49
  %v903 = vunpack.c.l.b16 %v50
  %v904 = vunpack.c.l.b16 %v51
  %v905 = vunpack.c.l.b16 %v52
  %v906 = vunpack.c.l.b16 %v53
  %v907 = vunpack.c.l.b16 %v54
  %v908 = vunpack.c.l.b16 %v55
  %v909 = vunpack.c.l.b16 %v56
  %v910 = vunpack.c.l.b16 %v57
  %v911 = vunpack.c.l.b16 %v58
  %v912 = vunpack.c.l.b16 %v59
  %v913 = vunpack.c.l.b16 %v60
  %v914 = vunpack.c.l.b16 %v61
  %v915 = vunpack.c.l.b16 %v62
  %v916 = vpack.c.b16 %v901, %v900
  %v917 = vpack.c.b16 %v903, %v902
  %v918 = vpack.c.b16 %v905, %v904
  %v919 = vpack.c.b16 %v907, %v906
  %v920 = vpack.c.b16 %v909, %v908
  %v921 = vpack.c.b16 %v911, %v910
  %v922 = vpack.c.b16 %v913, %v912
  %v923 = vpack.c.b16 %v915, %v914
  %932 = vmatprep.subr.bf16.mxu0 0
  %933 = vmatpush1.bf16.msra.mxu0 %v916
  %934 = vmatprep.subr.bf16.mxu0 0
  %935 = vmatpush1.bf16.msra.mxu0 %v917
  %936 = vmatprep.subr.bf16.mxu0 0
  %937 = vmatpush1.bf16.msra.mxu0 %v918
  %938 = vmatprep.subr.bf16.mxu0 0
  %939 = vmatpush1.bf16.msra.mxu0 %v919
  %940 = vmatprep.subr.bf16.mxu0 0
  %941 = vmatpush1.bf16.msra.mxu0 %v920
  %942 = vmatprep.subr.bf16.mxu0 0
  %943 = vmatpush1.bf16.msra.mxu0 %v921
  %944 = vmatprep.subr.bf16.mxu0 0
  %945 = vmatpush1.bf16.msra.mxu0 %v922
  %946 = vmatprep.subr.bf16.mxu0 0
  %947 = vmatpush1.bf16.msra.mxu0 %v923
  %948 = vmatprep.subr.bf16.mxu0 0
  %949 = vmatpush1.bf16.msra.mxu0 0
  %950 = vmatprep.subr.bf16.mxu0 0
  %951 = vmatpush1.bf16.msra.mxu0 0
  %952 = vmatprep.subr.bf16.mxu0 0
  %953 = vmatpush1.bf16.msra.mxu0 0
  %954 = vmatprep.subr.bf16.mxu0 0
  %955 = vmatpush1.bf16.msra.mxu0 0
  %956 = vmatprep.subr.bf16.mxu0 0
  %957 = vmatpush1.bf16.msra.mxu0 0
  %958 = vmatprep.subr.bf16.mxu0 0
  %959 = vmatpush1.bf16.msra.mxu0 0
  %960 = vmatprep.subr.bf16.mxu0 0
  %961 = vmatpush1.bf16.msra.mxu0 0
  %962 = vmatprep.subr.bf16.mxu0 0
  %963 = vmatpush1.bf16.msra.mxu0 0
  %964 = vmatprep.mubr.bf16.mxu0 0
  %965 = vmatmul.mubr.bf16.gmra.mrb[0].mxu0 %v852
  %v966 = vpop.f32.mrb[0].mxu0
  %v967 = vadd.f32 %v662, %v966
  %v968 = vpop.f32.mrb[0].mxu0
  %v969 = vpop.f32.mrb[0].mxu0
  %v970 = vadd.f32 %v665, %v969
  %v971 = vpop.f32.mrb[0].mxu0
  %972 = vmatprep.mubr.bf16.mxu0 0
  %973 = vmatmul.mubr.bf16.gmra.mrb[0].mxu0 %v853
  %v974 = vpop.f32.mrb[0].mxu0
  %v975 = vadd.f32 %v670, %v974
  %v976 = vpop.f32.mrb[0].mxu0
  %v977 = vpop.f32.mrb[0].mxu0
  %v978 = vadd.f32 %v673, %v977
  %v979 = vpop.f32.mrb[0].mxu0
  %980 = vmatprep.mubr.bf16.mxu0 0
  %981 = vmatmul.mubr.bf16.gmra.mrb[0].mxu0 %v854
  %v982 = vpop.f32.mrb[0].mxu0
  %v983 = vadd.f32 %v678, %v982
  %v984 = vpop.f32.mrb[0].mxu0
  %v985 = vpop.f32.mrb[0].mxu0
  %v986 = vadd.f32 %v681, %v985
  %v987 = vpop.f32.mrb[0].mxu0
  %988 = vmatprep.mubr.bf16.mxu0 0
  %989 = vmatmul.mubr.bf16.gmra.mrb[0].mxu0 %v855
  %v990 = vpop.f32.mrb[0].mxu0
  %v991 = vadd.f32 %v686, %v990
  %v992 = vpop.f32.mrb[0].mxu0
  %v993 = vpop.f32.mrb[0].mxu0
  %v994 = vadd.f32 %v689, %v993
  %v995 = vpop.f32.mrb[0].mxu0
  %996 = vmatprep.mubr.bf16.mxu0 0
  %997 = vmatmul.mubr.bf16.gmra.mrb[0].mxu0 %v856
  %v998 = vpop.f32.mrb[0].mxu0
  %v999 = vadd.f32 %v694, %v998
  %v1000 = vpop.f32.mrb[0].mxu0
  %v1001 = vpop.f32.mrb[0].mxu0
  %v1002 = vadd.f32 %v697, %v1001
  %v1003 = vpop.f32.mrb[0].mxu0
  %1004 = vmatprep.mubr.bf16.mxu0 0
  %1005 = vmatmul.mubr.bf16.gmra.mrb[0].mxu0 %v857
  %v1006 = vpop.f32.mrb[0].mxu0
  %v1007 = vadd.f32 %v702, %v1006
  %v1008 = vpop.f32.mrb[0].mxu0
  %v1009 = vpop.f32.mrb[0].mxu0
  %v1010 = vadd.f32 %v705, %v1009
  %v1011 = vpop.f32.mrb[0].mxu0
  %1012 = vmatprep.mubr.bf16.mxu0 0
  %1013 = vmatmul.mubr.bf16.gmra.mrb[0].mxu0 %v858
  %v1014 = vpop.f32.mrb[0].mxu0
  %v1015 = vadd.f32 %v710, %v1014
  %v1016 = vpop.f32.mrb[0].mxu0
  %v1017 = vpop.f32.mrb[0].mxu0
  %v1018 = vadd.f32 %v713, %v1017
  %v1019 = vpop.f32.mrb[0].mxu0
  %1020 = vmatprep.mubr.bf16.mxu0 0
  %1021 = vmatmul.mubr.bf16.gmra.mrb[0].mxu0 %v859
  %v1022 = vpop.f32.mrb[0].mxu0
  %v1023 = vadd.f32 %v718, %v1022
  %v1024 = vpop.f32.mrb[0].mxu0
  %v1025 = vpop.f32.mrb[0].mxu0
  %v1026 = vadd.f32 %v721, %v1025
  %v1027 = vpop.f32.mrb[0].mxu0
  %1028 = vmatprep.mubr.bf16.mxu0 0
  %1029 = vmatmul.mubr.bf16.gmra.mrb[0].mxu0 %v860
  %v1030 = vpop.f32.mrb[0].mxu0
  %v1031 = vadd.f32 %v726, %v1030
  %v1032 = vpop.f32.mrb[0].mxu0
  %v1033 = vpop.f32.mrb[0].mxu0
  %v1034 = vadd.f32 %v729, %v1033
  %v1035 = vpop.f32.mrb[0].mxu0
  %1036 = vmatprep.mubr.bf16.mxu0 0
  %1037 = vmatmul.mubr.bf16.gmra.mrb[0].mxu0 %v861
  %v1038 = vpop.f32.mrb[0].mxu0
  %v1039 = vadd.f32 %v734, %v1038
  %v1040 = vpop.f32.mrb[0].mxu0
  %v1041 = vpop.f32.mrb[0].mxu0
  %v1042 = vadd.f32 %v737, %v1041
  %v1043 = vpop.f32.mrb[0].mxu0
  %1044 = vmatprep.mubr.bf16.mxu0 0
  %1045 = vmatmul.mubr.bf16.gmra.mrb[0].mxu0 %v862
  %v1046 = vpop.f32.mrb[0].mxu0
  %v1047 = vadd.f32 %v742, %v1046
  %v1048 = vpop.f32.mrb[0].mxu0
  %v1049 = vpop.f32.mrb[0].mxu0
  %v1050 = vadd.f32 %v745, %v1049
  %v1051 = vpop.f32.mrb[0].mxu0
  %1052 = vmatprep.mubr.bf16.mxu0 0
  %1053 = vmatmul.mubr.bf16.gmra.mrb[0].mxu0 %v863
  %v1054 = vpop.f32.mrb[0].mxu0
  %v1055 = vadd.f32 %v750, %v1054
  %v1056 = vpop.f32.mrb[0].mxu0
  %v1057 = vpop.f32.mrb[0].mxu0
  %v1058 = vadd.f32 %v753, %v1057
  %v1059 = vpop.f32.mrb[0].mxu0
  %1060 = vmatprep.mubr.bf16.mxu0 0
  %1061 = vmatmul.mubr.bf16.gmra.mrb[0].mxu0 %v864
  %v1062 = vpop.f32.mrb[0].mxu0
  %v1063 = vadd.f32 %v758, %v1062
  %v1064 = vpop.f32.mrb[0].mxu0
  %v1065 = vpop.f32.mrb[0].mxu0
  %v1066 = vadd.f32 %v761, %v1065
  %v1067 = vpop.f32.mrb[0].mxu0
  %1068 = vmatprep.mubr.bf16.mxu0 0
  %1069 = vmatmul.mubr.bf16.gmra.mrb[0].mxu0 %v865
  %v1070 = vpop.f32.mrb[0].mxu0
  %v1071 = vadd.f32 %v766, %v1070
  %v1072 = vpop.f32.mrb[0].mxu0
  %v1073 = vpop.f32.mrb[0].mxu0
  %v1074 = vadd.f32 %v769, %v1073
  %v1075 = vpop.f32.mrb[0].mxu0
  %1076 = vmatprep.mubr.bf16.mxu0 0
  %1077 = vmatmul.mubr.bf16.gmra.mrb[0].mxu0 %v866
  %v1078 = vpop.f32.mrb[0].mxu0
  %v1079 = vadd.f32 %v774, %v1078
  %v1080 = vpop.f32.mrb[0].mxu0
  %v1081 = vpop.f32.mrb[0].mxu0
  %v1082 = vadd.f32 %v777, %v1081
  %v1083 = vpop.f32.mrb[0].mxu0
  %1084 = vmatprep.mubr.bf16.mxu0 0
  %1085 = vmatmul.mubr.bf16.gmra.mrb[0].mxu0 %v867
  %v1086 = vpop.f32.mrb[0].mxu0
  %v1087 = vadd.f32 %v782, %v1086
  %v1088 = vpop.f32.mrb[0].mxu0
  %v1089 = vpop.f32.mrb[0].mxu0
  %v1090 = vadd.f32 %v785, %v1089
  %v1091 = vpop.f32.mrb[0].mxu0
  %1092 = vdwg.mxu0
  %v1093 = vld [vmem:[%s0] sm:$0xe]
  %v1094 = vld [vmem:[%s0 + $0xc] sm:$0xe]
  %v1095 = vld [vmem:[%s0 + $0x18] sm:$0xe]
  %v1096 = vld [vmem:[%s0 + $0x24] sm:$0xe]
  %v1097 = vld [vmem:[%s0 + $0x30] sm:$0xe]
  %v1098 = vld [vmem:[%s0 + $0x3c] sm:$0xe]
  %v1099 = vld [vmem:[%s0 + $0x48] sm:$0xe]
  %v1100 = vld [vmem:[%s0 + $0x54] sm:$0xe]
  %v1101 = vld [vmem:[%s0 + $0x60] sm:$0xe]
  %v1102 = vld [vmem:[%s0 + $0x6c] sm:$0xe]
  %v1103 = vld [vmem:[%s0 + $0x78] sm:$0xe]
  %v1104 = vld [vmem:[%s0 + $0x84] sm:$0xe]
  %v1105 = vld [vmem:[%s0 + $0x90] sm:$0xe]
  %v1106 = vld [vmem:[%s0 + $0x9c] sm:$0xe]
  %v1107 = vld [vmem:[%s0 + $0xa8] sm:$0xe]
  %v1108 = vld [vmem:[%s0 + $0xb4] sm:$0xe]
  %vm1157 = vcmask 1042432
  %vm1158 = vcmask 1046532
  %vm1159 = vmor %vm1157, %vm1158
  %v1160 = vrot.slane %v1093, 5
  %v1161 = vrot.slane %v1160, 4
  %v1162 = vrot.slane %v64, 5
  %v1163 = vsel %vm1159, %v1161, %v1162
  %v1164 = vrot.slane %v1162, 4
  %v1165 = vrot.slane %v65, 5
  %v1166 = vsel %vm1159, %v1164, %v1165
  %v1167 = vrot.slane %v1094, 5
  %v1168 = vrot.slane %v1167, 4
  %v1169 = vrot.slane %v67, 5
  %v1170 = vsel %vm1159, %v1168, %v1169
  %v1171 = vrot.slane %v1169, 4
  %v1172 = vrot.slane %v68, 5
  %v1173 = vsel %vm1159, %v1171, %v1172
  %v1174 = vrot.slane %v1095, 5
  %v1175 = vrot.slane %v1174, 4
  %v1176 = vrot.slane %v70, 5
  %v1177 = vsel %vm1159, %v1175, %v1176
  %v1178 = vrot.slane %v1176, 4
  %v1179 = vrot.slane %v71, 5
  %v1180 = vsel %vm1159, %v1178, %v1179
  %v1181 = vrot.slane %v1096, 5
  %v1182 = vrot.slane %v1181, 4
  %v1183 = vrot.slane %v73, 5
  %v1184 = vsel %vm1159, %v1182, %v1183
  %v1185 = vrot.slane %v1183, 4
  %v1186 = vrot.slane %v74, 5
  %v1187 = vsel %vm1159, %v1185, %v1186
  %v1188 = vrot.slane %v1097, 5
  %v1189 = vrot.slane %v1188, 4
  %v1190 = vrot.slane %v76, 5
  %v1191 = vsel %vm1159, %v1189, %v1190
  %v1192 = vrot.slane %v1190, 4
  %v1193 = vrot.slane %v77, 5
  %v1194 = vsel %vm1159, %v1192, %v1193
  %v1195 = vrot.slane %v1098, 5
  %v1196 = vrot.slane %v1195, 4
  %v1197 = vrot.slane %v79, 5
  %v1198 = vsel %vm1159, %v1196, %v1197
  %v1199 = vrot.slane %v1197, 4
  %v1200 = vrot.slane %v80, 5
  %v1201 = vsel %vm1159, %v1199, %v1200
  %v1202 = vrot.slane %v1099, 5
  %v1203 = vrot.slane %v1202, 4
  %v1204 = vrot.slane %v82, 5
  %v1205 = vsel %vm1159, %v1203, %v1204
  %v1206 = vrot.slane %v1204, 4
  %v1207 = vrot.slane %v83, 5
  %v1208 = vsel %vm1159, %v1206, %v1207
  %v1209 = vrot.slane %v1100, 5
  %v1210 = vrot.slane %v1209, 4
  %v1211 = vrot.slane %v85, 5
  %v1212 = vsel %vm1159, %v1210, %v1211
  %v1213 = vrot.slane %v1211, 4
  %v1214 = vrot.slane %v86, 5
  %v1215 = vsel %vm1159, %v1213, %v1214
  %v1216 = vrot.slane %v1101, 5
  %v1217 = vrot.slane %v1216, 4
  %v1218 = vrot.slane %v88, 5
  %v1219 = vsel %vm1159, %v1217, %v1218
  %v1220 = vrot.slane %v1218, 4
  %v1221 = vrot.slane %v89, 5
  %v1222 = vsel %vm1159, %v1220, %v1221
  %v1223 = vrot.slane %v1102, 5
  %v1224 = vrot.slane %v1223, 4
  %v1225 = vrot.slane %v91, 5
  %v1226 = vsel %vm1159, %v1224, %v1225
  %v1227 = vrot.slane %v1225, 4
  %v1228 = vrot.slane %v92, 5
  %v1229 = vsel %vm1159, %v1227, %v1228
  %v1230 = vrot.slane %v1103, 5
  %v1231 = vrot.slane %v1230, 4
  %v1232 = vrot.slane %v94, 5
  %v1233 = vsel %vm1159, %v1231, %v1232
  %v1234 = vrot.slane %v1232, 4
  %v1235 = vrot.slane %v95, 5
  %v1236 = vsel %vm1159, %v1234, %v1235
  %v1237 = vrot.slane %v1104, 5
  %v1238 = vrot.slane %v1237, 4
  %v1239 = vrot.slane %v97, 5
  %v1240 = vsel %vm1159, %v1238, %v1239
  %v1241 = vrot.slane %v1239, 4
  %v1242 = vrot.slane %v98, 5
  %v1243 = vsel %vm1159, %v1241, %v1242
  %v1244 = vrot.slane %v1105, 5
  %v1245 = vrot.slane %v1244, 4
  %v1246 = vrot.slane %v100, 5
  %v1247 = vsel %vm1159, %v1245, %v1246
  %v1248 = vrot.slane %v1246, 4
  %v1249 = vrot.slane %v101, 5
  %v1250 = vsel %vm1159, %v1248, %v1249
  %v1251 = vrot.slane %v1106, 5
  %v1252 = vrot.slane %v1251, 4
  %v1253 = vrot.slane %v103, 5
  %v1254 = vsel %vm1159, %v1252, %v1253
  %v1255 = vrot.slane %v1253, 4
  %v1256 = vrot.slane %v104, 5
  %v1257 = vsel %vm1159, %v1255, %v1256
  %v1258 = vrot.slane %v1107, 5
  %v1259 = vrot.slane %v1258, 4
  %v1260 = vrot.slane %v106, 5
  %v1261 = vsel %vm1159, %v1259, %v1260
  %v1262 = vrot.slane %v1260, 4
  %v1263 = vrot.slane %v107, 5
  %v1264 = vsel %vm1159, %v1262, %v1263
  %v1265 = vrot.slane %v1108, 5
  %v1266 = vrot.slane %v1265, 4
  %v1267 = vrot.slane %v109, 5
  %v1268 = vsel %vm1159, %v1266, %v1267
  %v1269 = vrot.slane %v1267, 4
  %v1270 = vrot.slane %v110, 5
  %v1271 = vsel %vm1159, %v1269, %v1270
  %s1272 = scalar_lea.vmem %s1, 128
  %v1273 = vld [vmem:[%s1272] sm:$0xf]
  %v1274 = vld [vmem:[%s1272 + $0x4] sm:$0xf]
  %v1275 = vld [vmem:[%s1272 + $0x8] sm:$0xf]
  %v1276 = vld [vmem:[%s1272 + $0xc] sm:$0xf]
  %v1277 = vld [vmem:[%s1272 + $0x10] sm:$0xf]
  %v1278 = vld [vmem:[%s1272 + $0x14] sm:$0xf]
  %v1279 = vld [vmem:[%s1272 + $0x18] sm:$0xf]
  %v1280 = vld [vmem:[%s1272 + $0x1c] sm:$0xf]
  %v1281 = vld [vmem:[%s1272 + $0x20] sm:$0xf]
  %v1282 = vld [vmem:[%s1272 + $0x24] sm:$0xf]
  %v1283 = vld [vmem:[%s1272 + $0x28] sm:$0xf]
  %v1284 = vld [vmem:[%s1272 + $0x2c] sm:$0xf]
  %v1285 = vld [vmem:[%s1272 + $0x30] sm:$0xf]
  %v1286 = vld [vmem:[%s1272 + $0x34] sm:$0xf]
  %v1287 = vld [vmem:[%s1272 + $0x38] sm:$0xf]
  %v1288 = vld [vmem:[%s1272 + $0x3c] sm:$0xf]
  %v1289 = vunpack.c.l.b16 %v1163
  %v1290 = vunpack.c.l.b16 %v1166
  %v1291 = vunpack.c.l.b16 %v1170
  %v1292 = vunpack.c.l.b16 %v1173
  %v1293 = vunpack.c.l.b16 %v1177
  %v1294 = vunpack.c.l.b16 %v1180
  %v1295 = vunpack.c.l.b16 %v1184
  %v1296 = vunpack.c.l.b16 %v1187
  %v1297 = vunpack.c.l.b16 %v1191
  %v1298 = vunpack.c.l.b16 %v1194
  %v1299 = vunpack.c.l.b16 %v1198
  %v1300 = vunpack.c.l.b16 %v1201
  %v1301 = vunpack.c.l.b16 %v1205
  %v1302 = vunpack.c.l.b16 %v1208
  %v1303 = vunpack.c.l.b16 %v1212
  %v1304 = vunpack.c.l.b16 %v1215
  %v1305 = vunpack.c.l.b16 %v1219
  %v1306 = vunpack.c.l.b16 %v1222
  %v1307 = vunpack.c.l.b16 %v1226
  %v1308 = vunpack.c.l.b16 %v1229
  %v1309 = vunpack.c.l.b16 %v1233
  %v1310 = vunpack.c.l.b16 %v1236
  %v1311 = vunpack.c.l.b16 %v1240
  %v1312 = vunpack.c.l.b16 %v1243
  %v1313 = vunpack.c.l.b16 %v1247
  %v1314 = vunpack.c.l.b16 %v1250
  %v1315 = vunpack.c.l.b16 %v1254
  %v1316 = vunpack.c.l.b16 %v1257
  %v1317 = vunpack.c.l.b16 %v1261
  %v1318 = vunpack.c.l.b16 %v1264
  %v1319 = vunpack.c.l.b16 %v1268
  %v1320 = vunpack.c.l.b16 %v1271
  %v1321 = vpack.c.b16 %v1290, %v1289
  %v1322 = vpack.c.b16 %v1292, %v1291
  %v1323 = vpack.c.b16 %v1294, %v1293
  %v1324 = vpack.c.b16 %v1296, %v1295
  %v1325 = vpack.c.b16 %v1298, %v1297
  %v1326 = vpack.c.b16 %v1300, %v1299
  %v1327 = vpack.c.b16 %v1302, %v1301
  %v1328 = vpack.c.b16 %v1304, %v1303
  %v1329 = vpack.c.b16 %v1306, %v1305
  %v1330 = vpack.c.b16 %v1308, %v1307
  %v1331 = vpack.c.b16 %v1310, %v1309
  %v1332 = vpack.c.b16 %v1312, %v1311
  %v1333 = vpack.c.b16 %v1314, %v1313
  %v1334 = vpack.c.b16 %v1316, %v1315
  %v1335 = vpack.c.b16 %v1318, %v1317
  %v1336 = vpack.c.b16 %v1320, %v1319
  %v1369 = vunpack.c.l.b16 %v1273
  %v1370 = vunpack.c.l.b16 %v1274
  %v1371 = vunpack.c.l.b16 %v1275
  %v1372 = vunpack.c.l.b16 %v1276
  %v1373 = vunpack.c.l.b16 %v1277
  %v1374 = vunpack.c.l.b16 %v1278
  %v1375 = vunpack.c.l.b16 %v1279
  %v1376 = vunpack.c.l.b16 %v1280
  %v1377 = vunpack.c.l.b16 %v1281
  %v1378 = vunpack.c.l.b16 %v1282
  %v1379 = vunpack.c.l.b16 %v1283
  %v1380 = vunpack.c.l.b16 %v1284
  %v1381 = vunpack.c.l.b16 %v1285
  %v1382 = vunpack.c.l.b16 %v1286
  %v1383 = vunpack.c.l.b16 %v1287
  %v1384 = vunpack.c.l.b16 %v1288
  %v1385 = vpack.c.b16 %v1370, %v1369
  %v1386 = vpack.c.b16 %v1372, %v1371
  %v1387 = vpack.c.b16 %v1374, %v1373
  %v1388 = vpack.c.b16 %v1376, %v1375
  %v1389 = vpack.c.b16 %v1378, %v1377
  %v1390 = vpack.c.b16 %v1380, %v1379
  %v1391 = vpack.c.b16 %v1382, %v1381
  %v1392 = vpack.c.b16 %v1384, %v1383
  %1401 = vmatprep.subr.bf16.mxu0 0
  %1402 = vmatpush1.bf16.msra.mxu0 %v1385
  %1403 = vmatprep.subr.bf16.mxu0 0
  %1404 = vmatpush1.bf16.msra.mxu0 %v1386
  %1405 = vmatprep.subr.bf16.mxu0 0
  %1406 = vmatpush1.bf16.msra.mxu0 %v1387
  %1407 = vmatprep.subr.bf16.mxu0 0
  %1408 = vmatpush1.bf16.msra.mxu0 %v1388
  %1409 = vmatprep.subr.bf16.mxu0 0
  %1410 = vmatpush1.bf16.msra.mxu0 %v1389
  %1411 = vmatprep.subr.bf16.mxu0 0
  %1412 = vmatpush1.bf16.msra.mxu0 %v1390
  %1413 = vmatprep.subr.bf16.mxu0 0
  %1414 = vmatpush1.bf16.msra.mxu0 %v1391
  %1415 = vmatprep.subr.bf16.mxu0 0
  %1416 = vmatpush1.bf16.msra.mxu0 %v1392
  %1417 = vmatprep.subr.bf16.mxu0 0
  %1418 = vmatpush1.bf16.msra.mxu0 0
  %1419 = vmatprep.subr.bf16.mxu0 0
  %1420 = vmatpush1.bf16.msra.mxu0 0
  %1421 = vmatprep.subr.bf16.mxu0 0
  %1422 = vmatpush1.bf16.msra.mxu0 0
  %1423 = vmatprep.subr.bf16.mxu0 0
  %1424 = vmatpush1.bf16.msra.mxu0 0
  %1425 = vmatprep.subr.bf16.mxu0 0
  %1426 = vmatpush1.bf16.msra.mxu0 0
  %1427 = vmatprep.subr.bf16.mxu0 0
  %1428 = vmatpush1.bf16.msra.mxu0 0
  %1429 = vmatprep.subr.bf16.mxu0 0
  %1430 = vmatpush1.bf16.msra.mxu0 0
  %1431 = vmatprep.subr.bf16.mxu0 0
  %1432 = vmatpush1.bf16.msra.mxu0 0
  %1433 = vmatprep.mubr.bf16.mxu0 0
  %1434 = vmatmul.mubr.bf16.gmra.mrb[0].mxu0 %v1321
  %v1435 = vpop.f32.mrb[0].mxu0
  %v1436 = vadd.f32 0.0, %v1435
  %v1437 = vpop.f32.mrb[0].mxu0
  %v1438 = vpop.f32.mrb[0].mxu0
  %v1439 = vadd.f32 0.0, %v1438
  %v1440 = vpop.f32.mrb[0].mxu0
  %1441 = vmatprep.mubr.bf16.mxu0 0
  %1442 = vmatmul.mubr.bf16.gmra.mrb[0].mxu0 %v1322
  %v1443 = vpop.f32.mrb[0].mxu0
  %v1444 = vadd.f32 0.0, %v1443
  %v1445 = vpop.f32.mrb[0].mxu0
  %v1446 = vpop.f32.mrb[0].mxu0
  %v1447 = vadd.f32 0.0, %v1446
  %v1448 = vpop.f32.mrb[0].mxu0
  %1449 = vmatprep.mubr.bf16.mxu0 0
  %1450 = vmatmul.mubr.bf16.gmra.mrb[0].mxu0 %v1323
  %v1451 = vpop.f32.mrb[0].mxu0
  %v1452 = vadd.f32 0.0, %v1451
  %v1453 = vpop.f32.mrb[0].mxu0
  %v1454 = vpop.f32.mrb[0].mxu0
  %v1455 = vadd.f32 0.0, %v1454
  %v1456 = vpop.f32.mrb[0].mxu0
  %1457 = vmatprep.mubr.bf16.mxu0 0
  %1458 = vmatmul.mubr.bf16.gmra.mrb[0].mxu0 %v1324
  %v1459 = vpop.f32.mrb[0].mxu0
  %v1460 = vadd.f32 0.0, %v1459
  %v1461 = vpop.f32.mrb[0].mxu0
  %v1462 = vpop.f32.mrb[0].mxu0
  %v1463 = vadd.f32 0.0, %v1462
  %v1464 = vpop.f32.mrb[0].mxu0
  %1465 = vmatprep.mubr.bf16.mxu0 0
  %1466 = vmatmul.mubr.bf16.gmra.mrb[0].mxu0 %v1325
  %v1467 = vpop.f32.mrb[0].mxu0
  %v1468 = vadd.f32 0.0, %v1467
  %v1469 = vpop.f32.mrb[0].mxu0
  %v1470 = vpop.f32.mrb[0].mxu0
  %v1471 = vadd.f32 0.0, %v1470
  %v1472 = vpop.f32.mrb[0].mxu0
  %1473 = vmatprep.mubr.bf16.mxu0 0
  %1474 = vmatmul.mubr.bf16.gmra.mrb[0].mxu0 %v1326
  %v1475 = vpop.f32.mrb[0].mxu0
  %v1476 = vadd.f32 0.0, %v1475
  %v1477 = vpop.f32.mrb[0].mxu0
  %v1478 = vpop.f32.mrb[0].mxu0
  %v1479 = vadd.f32 0.0, %v1478
  %v1480 = vpop.f32.mrb[0].mxu0
  %1481 = vmatprep.mubr.bf16.mxu0 0
  %1482 = vmatmul.mubr.bf16.gmra.mrb[0].mxu0 %v1327
  %v1483 = vpop.f32.mrb[0].mxu0
  %v1484 = vadd.f32 0.0, %v1483
  %v1485 = vpop.f32.mrb[0].mxu0
  %v1486 = vpop.f32.mrb[0].mxu0
  %v1487 = vadd.f32 0.0, %v1486
  %v1488 = vpop.f32.mrb[0].mxu0
  %1489 = vmatprep.mubr.bf16.mxu0 0
  %1490 = vmatmul.mubr.bf16.gmra.mrb[0].mxu0 %v1328
  %v1491 = vpop.f32.mrb[0].mxu0
  %v1492 = vadd.f32 0.0, %v1491
  %v1493 = vpop.f32.mrb[0].mxu0
  %v1494 = vpop.f32.mrb[0].mxu0
  %v1495 = vadd.f32 0.0, %v1494
  %v1496 = vpop.f32.mrb[0].mxu0
  %1497 = vmatprep.mubr.bf16.mxu0 0
  %1498 = vmatmul.mubr.bf16.gmra.mrb[0].mxu0 %v1329
  %v1499 = vpop.f32.mrb[0].mxu0
  %v1500 = vadd.f32 0.0, %v1499
  %v1501 = vpop.f32.mrb[0].mxu0
  %v1502 = vpop.f32.mrb[0].mxu0
  %v1503 = vadd.f32 0.0, %v1502
  %v1504 = vpop.f32.mrb[0].mxu0
  %1505 = vmatprep.mubr.bf16.mxu0 0
  %1506 = vmatmul.mubr.bf16.gmra.mrb[0].mxu0 %v1330
  %v1507 = vpop.f32.mrb[0].mxu0
  %v1508 = vadd.f32 0.0, %v1507
  %v1509 = vpop.f32.mrb[0].mxu0
  %v1510 = vpop.f32.mrb[0].mxu0
  %v1511 = vadd.f32 0.0, %v1510
  %v1512 = vpop.f32.mrb[0].mxu0
  %1513 = vmatprep.mubr.bf16.mxu0 0
  %1514 = vmatmul.mubr.bf16.gmra.mrb[0].mxu0 %v1331
  %v1515 = vpop.f32.mrb[0].mxu0
  %v1516 = vadd.f32 0.0, %v1515
  %v1517 = vpop.f32.mrb[0].mxu0
  %v1518 = vpop.f32.mrb[0].mxu0
  %v1519 = vadd.f32 0.0, %v1518
  %v1520 = vpop.f32.mrb[0].mxu0
  %1521 = vmatprep.mubr.bf16.mxu0 0
  %1522 = vmatmul.mubr.bf16.gmra.mrb[0].mxu0 %v1332
  %v1523 = vpop.f32.mrb[0].mxu0
  %v1524 = vadd.f32 0.0, %v1523
  %v1525 = vpop.f32.mrb[0].mxu0
  %v1526 = vpop.f32.mrb[0].mxu0
  %v1527 = vadd.f32 0.0, %v1526
  %v1528 = vpop.f32.mrb[0].mxu0
  %1529 = vmatprep.mubr.bf16.mxu0 0
  %1530 = vmatmul.mubr.bf16.gmra.mrb[0].mxu0 %v1333
  %v1531 = vpop.f32.mrb[0].mxu0
  %v1532 = vadd.f32 0.0, %v1531
  %v1533 = vpop.f32.mrb[0].mxu0
  %v1534 = vpop.f32.mrb[0].mxu0
  %v1535 = vadd.f32 0.0, %v1534
  %v1536 = vpop.f32.mrb[0].mxu0
  %1537 = vmatprep.mubr.bf16.mxu0 0
  %1538 = vmatmul.mubr.bf16.gmra.mrb[0].mxu0 %v1334
  %v1539 = vpop.f32.mrb[0].mxu0
  %v1540 = vadd.f32 0.0, %v1539
  %v1541 = vpop.f32.mrb[0].mxu0
  %v1542 = vpop.f32.mrb[0].mxu0
  %v1543 = vadd.f32 0.0, %v1542
  %v1544 = vpop.f32.mrb[0].mxu0
  %1545 = vmatprep.mubr.bf16.mxu0 0
  %1546 = vmatmul.mubr.bf16.gmra.mrb[0].mxu0 %v1335
  %v1547 = vpop.f32.mrb[0].mxu0
  %v1548 = vadd.f32 0.0, %v1547
  %v1549 = vpop.f32.mrb[0].mxu0
  %v1550 = vpop.f32.mrb[0].mxu0
  %v1551 = vadd.f32 0.0, %v1550
  %v1552 = vpop.f32.mrb[0].mxu0
  %1553 = vmatprep.mubr.bf16.mxu0 0
  %1554 = vmatmul.mubr.bf16.gmra.mrb[0].mxu0 %v1336
  %v1555 = vpop.f32.mrb[0].mxu0
  %v1556 = vadd.f32 0.0, %v1555
  %v1557 = vpop.f32.mrb[0].mxu0
  %v1558 = vpop.f32.mrb[0].mxu0
  %v1559 = vadd.f32 0.0, %v1558
  %v1560 = vpop.f32.mrb[0].mxu0
  %1561 = vdwg.mxu0
  %v1562 = vadd.f32 %v967, %v1436
  %v1563 = vadd.f32 %v970, %v1439
  %v1564 = vadd.f32 %v975, %v1444
  %v1565 = vadd.f32 %v978, %v1447
  %v1566 = vadd.f32 %v983, %v1452
  %v1567 = vadd.f32 %v986, %v1455
  %v1568 = vadd.f32 %v991, %v1460
  %v1569 = vadd.f32 %v994, %v1463
  %v1570 = vadd.f32 %v999, %v1468
  %v1571 = vadd.f32 %v1002, %v1471
  %v1572 = vadd.f32 %v1007, %v1476
  %v1573 = vadd.f32 %v1010, %v1479
  %v1574 = vadd.f32 %v1015, %v1484
  %v1575 = vadd.f32 %v1018, %v1487
  %v1576 = vadd.f32 %v1023, %v1492
  %v1577 = vadd.f32 %v1026, %v1495
  %v1578 = vadd.f32 %v1031, %v1500
  %v1579 = vadd.f32 %v1034, %v1503
  %v1580 = vadd.f32 %v1039, %v1508
  %v1581 = vadd.f32 %v1042, %v1511
  %v1582 = vadd.f32 %v1047, %v1516
  %v1583 = vadd.f32 %v1050, %v1519
  %v1584 = vadd.f32 %v1055, %v1524
  %v1585 = vadd.f32 %v1058, %v1527
  %v1586 = vadd.f32 %v1063, %v1532
  %v1587 = vadd.f32 %v1066, %v1535
  %v1588 = vadd.f32 %v1071, %v1540
  %v1589 = vadd.f32 %v1074, %v1543
  %v1590 = vadd.f32 %v1079, %v1548
  %v1591 = vadd.f32 %v1082, %v1551
  %v1592 = vadd.f32 %v1087, %v1556
  %v1593 = vadd.f32 %v1090, %v1559
  %v1594 = vld [vmem:[%s2] sm:$0x1]
  %v1596 = vlaneseq
  %v1597 = vshrl.u32 %v1596, 7
  %v1598 = vsub.s32 0, %v1597
  %v1599 = vrot.slane %v1594, %v1598
  %v1601 = vadd.f32 %v1562, %v1599
  %v1602 = vadd.f32 %v1563, %v1599
  %v1603 = vadd.f32 %v1564, %v1599
  %v1604 = vadd.f32 %v1565, %v1599
  %v1605 = vadd.f32 %v1566, %v1599
  %v1606 = vadd.f32 %v1567, %v1599
  %v1607 = vadd.f32 %v1568, %v1599
  %v1608 = vadd.f32 %v1569, %v1599
  %v1609 = vadd.f32 %v1570, %v1599
  %v1610 = vadd.f32 %v1571, %v1599
  %v1611 = vadd.f32 %v1572, %v1599
  %v1612 = vadd.f32 %v1573, %v1599
  %v1613 = vadd.f32 %v1574, %v1599
  %v1614 = vadd.f32 %v1575, %v1599
  %v1615 = vadd.f32 %v1576, %v1599
  %v1616 = vadd.f32 %v1577, %v1599
  %v1617 = vadd.f32 %v1578, %v1599
  %v1618 = vadd.f32 %v1579, %v1599
  %v1619 = vadd.f32 %v1580, %v1599
  %v1620 = vadd.f32 %v1581, %v1599
  %v1621 = vadd.f32 %v1582, %v1599
  %v1622 = vadd.f32 %v1583, %v1599
  %v1623 = vadd.f32 %v1584, %v1599
  %v1624 = vadd.f32 %v1585, %v1599
  %v1625 = vadd.f32 %v1586, %v1599
  %v1626 = vadd.f32 %v1587, %v1599
  %v1627 = vadd.f32 %v1588, %v1599
  %v1628 = vadd.f32 %v1589, %v1599
  %v1629 = vadd.f32 %v1590, %v1599
  %v1630 = vadd.f32 %v1591, %v1599
  %v1631 = vadd.f32 %v1592, %v1599
  %v1632 = vadd.f32 %v1593, %v1599
  %v1633 = vmax.f32 %v1601, 0.0
  %v1634 = vmax.f32 %v1602, 0.0
  %v1635 = vmax.f32 %v1603, 0.0
  %v1636 = vmax.f32 %v1604, 0.0
  %v1637 = vmax.f32 %v1605, 0.0
  %v1638 = vmax.f32 %v1606, 0.0
  %v1639 = vmax.f32 %v1607, 0.0
  %v1640 = vmax.f32 %v1608, 0.0
  %v1641 = vmax.f32 %v1609, 0.0
  %v1642 = vmax.f32 %v1610, 0.0
  %v1643 = vmax.f32 %v1611, 0.0
  %v1644 = vmax.f32 %v1612, 0.0
  %v1645 = vmax.f32 %v1613, 0.0
  %v1646 = vmax.f32 %v1614, 0.0
  %v1647 = vmax.f32 %v1615, 0.0
  %v1648 = vmax.f32 %v1616, 0.0
  %v1649 = vmax.f32 %v1617, 0.0
  %v1650 = vmax.f32 %v1618, 0.0
  %v1651 = vmax.f32 %v1619, 0.0
  %v1652 = vmax.f32 %v1620, 0.0
  %v1653 = vmax.f32 %v1621, 0.0
  %v1654 = vmax.f32 %v1622, 0.0
  %v1655 = vmax.f32 %v1623, 0.0
  %v1656 = vmax.f32 %v1624, 0.0
  %v1657 = vmax.f32 %v1625, 0.0
  %v1658 = vmax.f32 %v1626, 0.0
  %v1659 = vmax.f32 %v1627, 0.0
  %v1660 = vmax.f32 %v1628, 0.0
  %v1661 = vmax.f32 %v1629, 0.0
  %v1662 = vmax.f32 %v1630, 0.0
  %v1663 = vmax.f32 %v1631, 0.0
  %v1664 = vmax.f32 %v1632, 0.0
  %v1665 = vpack.c.bf16 %v1634, %v1633
  %v1666 = vpack.c.bf16 %v1636, %v1635
  %v1667 = vpack.c.bf16 %v1638, %v1637
  %v1668 = vpack.c.bf16 %v1640, %v1639
  %v1669 = vpack.c.bf16 %v1642, %v1641
  %v1670 = vpack.c.bf16 %v1644, %v1643
  %v1671 = vpack.c.bf16 %v1646, %v1645
  %v1672 = vpack.c.bf16 %v1648, %v1647
  %v1673 = vpack.c.bf16 %v1650, %v1649
  %v1674 = vpack.c.bf16 %v1652, %v1651
  %v1675 = vpack.c.bf16 %v1654, %v1653
  %v1676 = vpack.c.bf16 %v1656, %v1655
  %v1677 = vpack.c.bf16 %v1658, %v1657
  %v1678 = vpack.c.bf16 %v1660, %v1659
  %v1679 = vpack.c.bf16 %v1662, %v1661
  %v1680 = vpack.c.bf16 %v1664, %v1663
  %v1697 = vunpack.c.l.b16 %v1665
  %v1698 = vunpack.c.h.b16 %v1665
  %v1699 = vunpack.c.l.b16 %v1666
  %v1700 = vunpack.c.h.b16 %v1666
  %v1701 = vunpack.c.l.b16 %v1667
  %v1702 = vunpack.c.h.b16 %v1667
  %v1703 = vunpack.c.l.b16 %v1668
  %v1704 = vunpack.c.h.b16 %v1668
  %v1705 = vunpack.c.l.b16 %v1669
  %v1706 = vunpack.c.h.b16 %v1669
  %v1707 = vunpack.c.l.b16 %v1670
  %v1708 = vunpack.c.h.b16 %v1670
  %v1709 = vunpack.c.l.b16 %v1671
  %v1710 = vunpack.c.h.b16 %v1671
  %v1711 = vunpack.c.l.b16 %v1672
  %v1712 = vunpack.c.h.b16 %v1672
  %v1713 = vunpack.c.l.b16 %v1673
  %v1714 = vunpack.c.h.b16 %v1673
  %v1715 = vunpack.c.l.b16 %v1674
  %v1716 = vunpack.c.h.b16 %v1674
  %v1717 = vunpack.c.l.b16 %v1675
  %v1718 = vunpack.c.h.b16 %v1675
  %v1719 = vunpack.c.l.b16 %v1676
  %v1720 = vunpack.c.h.b16 %v1676
  %v1721 = vunpack.c.l.b16 %v1677
  %v1722 = vunpack.c.h.b16 %v1677
  %v1723 = vunpack.c.l.b16 %v1678
  %v1724 = vunpack.c.h.b16 %v1678
  %v1725 = vunpack.c.l.b16 %v1679
  %v1726 = vunpack.c.h.b16 %v1679
  %v1727 = vunpack.c.l.b16 %v1680
  %v1728 = vunpack.c.h.b16 %v1680
  %v1729 = vpack.c.b16 %v1697, %v1697
  %v1730 = vpack.c.b16 %v1698, %v1698
  %v1731 = vpack.c.b16 %v1699, %v1699
  %v1732 = vpack.c.b16 %v1700, %v1700
  %v1733 = vpack.c.b16 %v1701, %v1701
  %v1734 = vpack.c.b16 %v1702, %v1702
  %v1735 = vpack.c.b16 %v1703, %v1703
  %v1736 = vpack.c.b16 %v1704, %v1704
  %v1737 = vpack.c.b16 %v1705, %v1705
  %v1738 = vpack.c.b16 %v1706, %v1706
  %v1739 = vpack.c.b16 %v1707, %v1707
  %v1740 = vpack.c.b16 %v1708, %v1708
  %v1741 = vpack.c.b16 %v1709, %v1709
  %v1742 = vpack.c.b16 %v1710, %v1710
  %v1743 = vpack.c.b16 %v1711, %v1711
  %v1744 = vpack.c.b16 %v1712, %v1712
  %v1745 = vpack.c.b16 %v1713, %v1713
  %v1746 = vpack.c.b16 %v1714, %v1714
  %v1747 = vpack.c.b16 %v1715, %v1715
  %v1748 = vpack.c.b16 %v1716, %v1716
  %v1749 = vpack.c.b16 %v1717, %v1717
  %v1750 = vpack.c.b16 %v1718, %v1718
  %v1751 = vpack.c.b16 %v1719, %v1719
  %v1752 = vpack.c.b16 %v1720, %v1720
  %v1753 = vpack.c.b16 %v1721, %v1721
  %v1754 = vpack.c.b16 %v1722, %v1722
  %v1755 = vpack.c.b16 %v1723, %v1723
  %v1756 = vpack.c.b16 %v1724, %v1724
  %v1757 = vpack.c.b16 %v1725, %v1725
  %v1758 = vpack.c.b16 %v1726, %v1726
  %v1759 = vpack.c.b16 %v1727, %v1727
  %v1760 = vpack.c.b16 %v1728, %v1728
  %1793 = vst [vmem:[%s3] sm:$0xf] %v1729
  %1794 = vst [vmem:[%s3 + $0x4] sm:$0xf] %v1730
  %1795 = vst [vmem:[%s3 + $0x8] sm:$0xf] %v1731
  %1796 = vst [vmem:[%s3 + $0xc] sm:$0xf] %v1732
  %1797 = vst [vmem:[%s3 + $0x10] sm:$0xf] %v1733
  %1798 = vst [vmem:[%s3 + $0x14] sm:$0xf] %v1734
  %1799 = vst [vmem:[%s3 + $0x18] sm:$0xf] %v1735
  %1800 = vst [vmem:[%s3 + $0x1c] sm:$0xf] %v1736
  %1801 = vst [vmem:[%s3 + $0x20] sm:$0xf] %v1737
  %1802 = vst [vmem:[%s3 + $0x24] sm:$0xf] %v1738
  %1803 = vst [vmem:[%s3 + $0x28] sm:$0xf] %v1739
  %1804 = vst [vmem:[%s3 + $0x2c] sm:$0xf] %v1740
  %1805 = vst [vmem:[%s3 + $0x30] sm:$0xf] %v1741
  %1806 = vst [vmem:[%s3 + $0x34] sm:$0xf] %v1742
  %1807 = vst [vmem:[%s3 + $0x38] sm:$0xf] %v1743
  %1808 = vst [vmem:[%s3 + $0x3c] sm:$0xf] %v1744
  %1809 = vst [vmem:[%s3 + $0x40] sm:$0xf] %v1745
  %1810 = vst [vmem:[%s3 + $0x44] sm:$0xf] %v1746
  %1811 = vst [vmem:[%s3 + $0x48] sm:$0xf] %v1747
  %1812 = vst [vmem:[%s3 + $0x4c] sm:$0xf] %v1748
  %1813 = vst [vmem:[%s3 + $0x50] sm:$0xf] %v1749
  %1814 = vst [vmem:[%s3 + $0x54] sm:$0xf] %v1750
  %1815 = vst [vmem:[%s3 + $0x58] sm:$0xf] %v1751
  %1816 = vst [vmem:[%s3 + $0x5c] sm:$0xf] %v1752
  %1817 = vst [vmem:[%s3 + $0x60] sm:$0xf] %v1753
  %1818 = vst [vmem:[%s3 + $0x64] sm:$0xf] %v1754
  %1819 = vst [vmem:[%s3 + $0x68] sm:$0xf] %v1755
  %1820 = vst [vmem:[%s3 + $0x6c] sm:$0xf] %v1756
  %1821 = vst [vmem:[%s3 + $0x70] sm:$0xf] %v1757
  %1822 = vst [vmem:[%s3 + $0x74] sm:$0xf] %v1758
  %1823 = vst [vmem:[%s3 + $0x78] sm:$0xf] %v1759
  %1824 = vst [vmem:[%s3 + $0x7c] sm:$0xf] %v1760
  // Predicated region
  $region14: #{dense_lstm_forward.3} parent=0 // pred_check
    _
  $region15: #{dense_lstm_forward.3} parent=0 // pred_check_branch
    %1826 = sbr.rel (0) target = $region17
  $region16: #{dense_lstm_forward.3} parent=0 // pred_region
    _
  $region17: #{dense_lstm_forward.3} parent=0 // pred_fallthru
    _
  // Predicated region
  $region18: #{dense_lstm_forward.3} parent=0 // pred_check
    _
  $region19: #{dense_lstm_forward.3} parent=0 // pred_check_branch
    %1828 = sbr.rel (0) target = $region21
  $region20: #{dense_lstm_forward.3} parent=0 // pred_region
    _
  $region21: #{dense_lstm_forward.3} parent=0 // pred_fallthru
    _

// kernel: dense_lstm_forward.4
$region0: #{dense_lstm_forward.4}
  #allocation0 [shape = 'u32[]', space=smem, size = 0x4, offset = 0x4, fixed_abs, tag = 'smem constant byte address 0x4 - core index']
  #allocation1 [shape = 'u32[144,128]{1,0:T(1,128)}', space=vmem, size = 0x12000, scoped, tag = 'internal scratch']
  #allocation2 [shape = 'f32[16,512]{1,0:T(8,128)}', space=vmem, size = 0x8000, scoped, tag = 'scratch operand']
  %s0 = inlined_call_operand.vmem [shape: bf16[16,2048], index: 0, kind: input, shape index: {}]
  %s1 = inlined_call_operand.vmem [shape: bf16[2048,512], index: 1, kind: input, shape index: {}]
  %s2 = inlined_call_operand.vmem [shape: f32[1,512], index: 2, kind: input, shape index: {}]
  %s3 = inlined_call_operand.vmem [shape: bf16[16,512], index: 3, kind: output, shape index: {}]
  %s4 = sld [smem:[#allocation0]]
  $region76: #{dense_lstm_forward.4} parent=0
    _
  %s6 = ssub.s32 1, %s4
  %s7 = scalar_select 0, %s6, %s4
  $region1: #{dense_lstm_forward.4} parent=0
    #allocation3 [shape = 'u8[65536]{0}', space=vmem, size = 0x10000, scoped, tag = 'input window, operand 0']
    loop: start=0, step=1, limit=4
    $region2: #{dense_lstm_forward.4} parent=1 // loop_pre_header
      _
    $region3: #{dense_lstm_forward.4} parent=1 // loop_header
      %s9 = sphi 0, %s13
      %p10 = scmp.ge.s32.totalorder %s9, 4
      %s16 = sphi 0, %s28
      %s17 = sphi 0, %s24
      %s18 = sphi 0, %s16
      %s19 = sphi 0, %s17
      %s20 = sphi 0, %s18
      %s21 = sphi 0, %s19
      %s31 = sphi 0, %s33
      %s34 = sphi 0, %s31
      %s35 = sphi 0, %s34
      %s51 = sphi 0, %s35
      %s59 = sphi 0, %s61
      %s62 = sphi 0, %s59
      %s63 = sphi 0, %s62
      %s79 = sphi 0, %s63
      %s85 = sphi 0, %s87
      %s88 = sphi 0, %s85
      %s89 = sphi 0, %s88
      %s105 = sphi 0, %s89
      %s111 = sphi 0, %s113
      %s114 = sphi 0, %s111
      %s115 = sphi 0, %s114
      %s131 = sphi 0, %s115
    $region4: #{dense_lstm_forward.4} parent=1 // loop_header_branch
      %12 = sbr.rel (%p10) target = $region8
    $region5: #{dense_lstm_forward.4} parent=1 // loop_body
      %s14 = ssub.s32 %s9, 1
      %s15 = ssub.s32 %s9, 2
      %s22 = sadd.s32 1, %s17
      %p23 = scmp.ge.s32.totalorder %s22, 2
      %s24 = scalar_select %p23, 0, %s22
      %s25 = sadd.s32 1, %s16
      %s26 = scalar_select %p23, %s25, %s16
      %p27 = scmp.ge.s32.totalorder %s26, 1
      %s28 = scalar_select %p27, 0, %s26
      %s29 = ssub.s32 %s17, %s24
      %p30 = scmp.eq.s32.totalorder %s29, 0
      %s32 = sadd.s32 %s31, 1
      %s33 = scalar_select %p30, %s31, %s32
      %p36 = pneg %p30
      %p37 = scmp.eq.s32.totalorder %s9, 1
      %p38 = por %p36, %p37
      %p39 = scmp.ne.s32.totalorder %s31, %s34
      %p40 = scmp.eq.s32.totalorder %s9, 0
      %p41 = por %p39, %p40
      %p42 = scmp.ne.s32.totalorder %s31, %s34
      %p43 = scmp.eq.s32.totalorder %s14, 1
      %p44 = por %p42, %p43
      %p45 = scmp.ne.s32.totalorder %s34, %s35
      %p46 = scmp.eq.s32.totalorder %s14, 0
      %p47 = por %p45, %p46
      %p48 = scmp.ne.s32.totalorder %s34, %s35
      %p49 = scmp.eq.s32.totalorder %s15, 1
      %p50 = por %p48, %p49
      %p52 = scmp.ne.s32.totalorder %s35, %s51
      %p53 = scmp.eq.s32.totalorder %s15, 0
      %p54 = por %p52, %p53
      %s55 = ssub.s32 %s17, %s24
      %s56 = ssub.s32 %s16, %s28
      %s57 = sor.u32 %s55, %s56
      %p58 = scmp.eq.s32.totalorder %s57, 0
      %s60 = sadd.s32 %s59, 1
      %s61 = scalar_select %p58, %s59, %s60
      %p64 = pneg %p58
      %p65 = scmp.eq.s32.totalorder %s9, 1
      %p66 = por %p64, %p65
      %p67 = scmp.ne.s32.totalorder %s59, %s62
      %p68 = scmp.eq.s32.totalorder %s9, 0
      %p69 = por %p67, %p68
      %p70 = scmp.ne.s32.totalorder %s59, %s62
      %p71 = scmp.eq.s32.totalorder %s14, 1
      %p72 = por %p70, %p71
      %p73 = scmp.ne.s32.totalorder %s62, %s63
      %p74 = scmp.eq.s32.totalorder %s14, 0
      %p75 = por %p73, %p74
      %p76 = scmp.ne.s32.totalorder %s62, %s63
      %p77 = scmp.eq.s32.totalorder %s15, 1
      %p78 = por %p76, %p77
      %p80 = scmp.ne.s32.totalorder %s63, %s79
      %p81 = scmp.eq.s32.totalorder %s15, 0
      %p82 = por %p80, %p81
      %s83 = ssub.s32 %s16, %s28
      %p84 = scmp.eq.s32.totalorder %s83, 0
      %s86 = sadd.s32 %s85, 1
      %s87 = scalar_select %p84, %s85, %s86
      %p90 = pneg %p84
      %p91 = scmp.eq.s32.totalorder %s9, 1
      %p92 = por %p90, %p91
      %p93 = scmp.ne.s32.totalorder %s85, %s88
      %p94 = scmp.eq.s32.totalorder %s9, 0
      %p95 = por %p93, %p94
      %p96 = scmp.ne.s32.totalorder %s85, %s88
      %p97 = scmp.eq.s32.totalorder %s14, 1
      %p98 = por %p96, %p97
      %p99 = scmp.ne.s32.totalorder %s88, %s89
      %p100 = scmp.eq.s32.totalorder %s14, 0
      %p101 = por %p99, %p100
      %p102 = scmp.ne.s32.totalorder %s88, %s89
      %p103 = scmp.eq.s32.totalorder %s15, 1
      %p104 = por %p102, %p103
      %p106 = scmp.ne.s32.totalorder %s89, %s105
      %p107 = scmp.eq.s32.totalorder %s15, 0
      %p108 = por %p106, %p107
      %s109 = ssub.s32 %s16, %s28
      %p110 = scmp.eq.s32.totalorder %s109, 0
      %s112 = sadd.s32 %s111, 1
      %s113 = scalar_select %p110, %s111, %s112
      %p116 = pneg %p110
      %p117 = scmp.eq.s32.totalorder %s9, 1
      %p118 = por %p116, %p117
      %p119 = scmp.ne.s32.totalorder %s111, %s114
      %p120 = scmp.eq.s32.totalorder %s9, 0
      %p121 = por %p119, %p120
      %p122 = scmp.ne.s32.totalorder %s111, %s114
      %p123 = scmp.eq.s32.totalorder %s14, 1
      %p124 = por %p122, %p123
      %p125 = scmp.ne.s32.totalorder %s114, %s115
      %p126 = scmp.eq.s32.totalorder %s14, 0
      %p127 = por %p125, %p126
      %p128 = scmp.ne.s32.totalorder %s114, %s115
      %p129 = scmp.eq.s32.totalorder %s15, 1
      %p130 = por %p128, %p129
      %p132 = scmp.ne.s32.totalorder %s115, %s131
      %p133 = scmp.eq.s32.totalorder %s15, 0
      %p134 = por %p132, %p133
      %p135 = scmp.le.s32.totalorder 1, %s9
      %p136 = scmp.lt.s32.totalorder %s9, 3
      %p137 = pnand %p135, %p136
      %p138 = pneg %p137
      // Predicated region
      $region9: #{dense_lstm_forward.4} parent=5 // pred_check
        _
      $region10: #{dense_lstm_forward.4} parent=5 // pred_check_branch
        %140 = sbr.rel (%p137) target = $region12
      $region11: #{dense_lstm_forward.4} parent=5 // pred_region
        %s141 = ssub.s32 %s9, 1
        // Predicated region
        $region13: #{dense_lstm_forward.4} parent=11 // pred_check
          %p142 = pneg %p101
        $region14: #{dense_lstm_forward.4} parent=11 // pred_check_branch
          %144 = sbr.rel (%p142) target = $region16
        $region15: #{dense_lstm_forward.4} parent=11 // pred_region
          %s145 = smul.u32 4, %s18
          %p146 = scmp.lt.s32.totalorder %s145, 3
          %s147 = scalar_select %p146, %s145, 3
          %s148 = scalar_lea.vmem %s2, %s147
          %s149 = smul.u32 4, %s18
        $region16: #{dense_lstm_forward.4} parent=11 // pred_fallthru
          _
      $region12: #{dense_lstm_forward.4} parent=5 // pred_fallthru
        _
      %p150 = scmp.lt.s32.totalorder %s9, 2
      // Predicated region
      $region17: #{dense_lstm_forward.4} parent=5 // pred_check
        %p151 = pneg %p150
      $region18: #{dense_lstm_forward.4} parent=5 // pred_check_branch
        %153 = sbr.rel (%p151) target = $region20
      $region19: #{dense_lstm_forward.4} parent=5 // pred_region
        // Predicated region
        $region21: #{dense_lstm_forward.4} parent=19 // pred_check
          %p154 = pneg %p41
        $region22: #{dense_lstm_forward.4} parent=19 // pred_check_branch
          %156 = sbr.rel (%p154) target = $region24
        $region23: #{dense_lstm_forward.4} parent=19 // pred_region
          %s157 = sand.u32 %s31, 1
          %s158 = sand.u32 %s31, 1
          %s159 = smul.addr %s158, 64
          %s160 = scalar_lea.vmem [#allocation3], %s159
          %s161 = smul.u32 8, %s17
          %s162 = smul.addr %s161, 4
          %s163 = scalar_lea.vmem %s0, %s162
          // Predicated region
          $region25: #{dense_lstm_forward.4} parent=23 // pred_check
            _
          $region26: #{dense_lstm_forward.4} parent=23 // pred_check_branch
            %165 = sbr.rel (0) target = $region28
          $region27: #{dense_lstm_forward.4} parent=23 // pred_region
            // Predicated region
            $region29: #{dense_lstm_forward.4} parent=27 // pred_check
              _
            $region30: #{dense_lstm_forward.4} parent=27 // pred_check_branch
              %167 = sbr.rel (0) target = $region32
            $region31: #{dense_lstm_forward.4} parent=27 // pred_region
              loop: start=0, step=1, limit=1
              $region33: #{dense_lstm_forward.4} parent=31 // loop_pre_header
                _
              $region34: #{dense_lstm_forward.4} parent=31 // loop_header
                %s169 = sphi 0, %s173
                %p170 = scmp.ge.s32.totalorder %s169, 1
                %s174 = sphi %s163, %s163
                %s175 = sphi %s160, %s160
              $region35: #{dense_lstm_forward.4} parent=31 // loop_header_branch
                %172 = sbr.rel (%p170) target = $region39
              $region36: #{dense_lstm_forward.4} parent=31 // loop_body
                %v176 = vld [vmem:[%s174] sm:$0xff]
                %177 = vst [vmem:[%s175] sm:$0xff] %v176
                %v178 = vld [vmem:[%s174 + $0x8] sm:$0xff]
                %179 = vst [vmem:[%s175 + $0x8] sm:$0xff] %v178
                %v180 = vld [vmem:[%s174 + $0x10] sm:$0xff]
                %181 = vst [vmem:[%s175 + $0x10] sm:$0xff] %v180
                %v182 = vld [vmem:[%s174 + $0x18] sm:$0xff]
                %183 = vst [vmem:[%s175 + $0x18] sm:$0xff] %v182
                %v184 = vld [vmem:[%s174 + $0x40] sm:$0xff]
                %185 = vst [vmem:[%s175 + $0x20] sm:$0xff] %v184
                %v186 = vld [vmem:[%s174 + $0x48] sm:$0xff]
                %187 = vst [vmem:[%s175 + $0x28] sm:$0xff] %v186
                %v188 = vld [vmem:[%s174 + $0x50] sm:$0xff]
                %189 = vst [vmem:[%s175 + $0x30] sm:$0xff] %v188
                %v190 = vld [vmem:[%s174 + $0x58] sm:$0xff]
                %191 = vst [vmem:[%s175 + $0x38] sm:$0xff] %v190
              $region37: #{dense_lstm_forward.4} parent=31 // loop_footer
                %s173 = sadd.s32 1, %s169
              $region38: #{dense_lstm_forward.4} parent=31 // loop_footer_branch
                %168 = sbr.rel target = $region34
              $region39: #{dense_lstm_forward.4} parent=31 // loop_exit
                _
            $region32: #{dense_lstm_forward.4} parent=27 // pred_fallthru
              _
            // Predicated region
            $region40: #{dense_lstm_forward.4} parent=27 // pred_check
              _
            $region41: #{dense_lstm_forward.4} parent=27 // pred_check_branch
              %193 = sbr.rel target = $region43
            $region42: #{dense_lstm_forward.4} parent=27 // pred_region
              _
            $region43: #{dense_lstm_forward.4} parent=27 // pred_fallthru
              _
          $region28: #{dense_lstm_forward.4} parent=23 // pred_fallthru
            _
          %194 = vnop
        $region24: #{dense_lstm_forward.4} parent=19 // pred_fallthru
          _
        // Predicated region
        $region44: #{dense_lstm_forward.4} parent=19 // pred_check
          %p195 = pneg %p69
        $region45: #{dense_lstm_forward.4} parent=19 // pred_check_branch
          %197 = sbr.rel (%p195) target = $region47
        $region46: #{dense_lstm_forward.4} parent=19 // pred_region
          %s198 = smul.u32 128, %s17
          %s199 = smul.u32 4, %s16
          %p200 = scmp.lt.s32.totalorder %s198, 255
          %s201 = scalar_select %p200, %s198, 255
          %p202 = scmp.lt.s32.totalorder %s199, 3
          %s203 = scalar_select %p202, %s199, 3
          %s204 = smul.addr %s201, 4
          %s205 = sadd.s32 %s203, %s204
          %s206 = smul.addr %s205, 4
          %s207 = scalar_lea.vmem %s1, %s206
          %s208 = smul.u32 128, %s17
          %s209 = smul.u32 4, %s16
        $region47: #{dense_lstm_forward.4} parent=19 // pred_fallthru
          _
      $region20: #{dense_lstm_forward.4} parent=5 // pred_fallthru
        _
      %p210 = scmp.le.s32.totalorder 1, %s9
      %p211 = scmp.lt.s32.totalorder %s9, 3
      %p212 = pnand %p210, %p211
      %p213 = pneg %p212
      // Predicated region
      $region48: #{dense_lstm_forward.4} parent=5 // pred_check
        _
      $region49: #{dense_lstm_forward.4} parent=5 // pred_check_branch
        %215 = sbr.rel (%p212) target = $region51
      $region50: #{dense_lstm_forward.4} parent=5 // pred_region
        %s216 = ssub.s32 %s9, 1
        %s217 = sand.u32 %s34, 1
        %s218 = sand.u32 %s34, 1
        %s219 = smul.addr %s218, 64
        %s220 = scalar_lea.vmem [#allocation3], %s219
        // Predicated region
        $region52: #{dense_lstm_forward.4} parent=50 // pred_check
          %p221 = pneg %p47
        $region53: #{dense_lstm_forward.4} parent=50 // pred_check_branch
          %223 = sbr.rel (%p221) target = $region55
        $region54: #{dense_lstm_forward.4} parent=50 // pred_region
          _
        $region55: #{dense_lstm_forward.4} parent=50 // pred_fallthru
          _
        %s224 = sand.u32 %s34, 1
        %s225 = sand.u32 %s34, 1
        %s226 = smul.addr %s225, 64
        %s227 = scalar_lea.vmem [#allocation3], %s226
        %p228 = pneg %p47
        %p229 = pneg %p44
        %s230 = smul.u32 128, %s19
        %s231 = smul.u32 4, %s18
        %p232 = scmp.lt.s32.totalorder %s230, 255
        %s233 = scalar_select %p232, %s230, 255
        %p234 = scmp.lt.s32.totalorder %s231, 3
        %s235 = scalar_select %p234, %s231, 3
        %s236 = smul.addr %s233, 4
        %s237 = sadd.s32 %s235, %s236
        %s238 = smul.addr %s237, 4
        %s239 = scalar_lea.vmem %s1, %s238
        %p240 = pneg %p75
        %p241 = pneg %p72
        %s242 = smul.u32 4, %s18
        %p243 = scmp.lt.s32.totalorder %s242, 3
        %s244 = scalar_select %p243, %s242, 3
        %s245 = scalar_lea.vmem %s2, %s244
        %p246 = pneg %p101
        %p247 = pneg %p98
        %p248 = pneg %p127
        %p249 = pneg %p124
        %s250 = smul.u32 4, %s18
        %p251 = scmp.lt.s32.totalorder %s250, 3
        %s252 = scalar_select %p251, %s250, 3
        %s253 = smul.addr %s252, 4
        %s254 = scalar_lea.vmem %s3, %s253
        %s255 = smul.u32 8, %s19
        %s256 = smul.u32 128, %s19
        %s257 = smul.u32 4, %s18
        %p258 = scmp.lt.s32.totalorder %s256, 255
        %s259 = scalar_select %p258, %s256, 255
        %p260 = scmp.lt.s32.totalorder %s257, 3
        %s261 = scalar_select %p260, %s257, 3
        %s262 = smul.addr %s259, 4
        %s263 = sadd.s32 %s261, %s262
        %s264 = smul.addr %s263, 4
        %s265 = scalar_lea.vmem %s1, %s264
        %s266 = smul.u32 128, %s19
        %s267 = smul.u32 4, %s18
        %s268 = smul.u32 4, %s18
        %p269 = scmp.lt.s32.totalorder %s268, 3
        %s270 = scalar_select %p269, %s268, 3
        %s271 = scalar_lea.vmem %s2, %s270
        %s272 = smul.u32 4, %s18
        %s273 = smul.u32 4, %s18
        %p274 = scmp.lt.s32.totalorder %s273, 3
        %s275 = scalar_select %p274, %s273, 3
        %s276 = smul.addr %s275, 4
        %s277 = scalar_lea.vmem %s3, %s276
        %s278 = smul.u32 4, %s18
        %p279 = scmp.eq.s32.totalorder %s19, 0
        // Predicated region
        $region56: #{dense_lstm_forward.4} parent=50 // pred_check
          %p280 = pneg %p279
        $region57: #{dense_lstm_forward.4} parent=50 // pred_check_branch
          %282 = sbr.rel (%p280) target = $region59
        $region58: #{dense_lstm_forward.4} parent=50 // pred_region
          %283 = vst [vmem:[#allocation2] sm:$0xff] 0.0
          %284 = vst [vmem:[#allocation2 + $0x8] sm:$0xff] 0.0
          %285 = vst [vmem:[#allocation2 + $0x10] sm:$0xff] 0.0
          %286 = vst [vmem:[#allocation2 + $0x18] sm:$0xff] 0.0
          %287 = vst [vmem:[#allocation2 + $0x20] sm:$0xff] 0.0
          %288 = vst [vmem:[#allocation2 + $0x28] sm:$0xff] 0.0
          %289 = vst [vmem:[#allocation2 + $0x30] sm:$0xff] 0.0
          %290 = vst [vmem:[#allocation2 + $0x38] sm:$0xff] 0.0
        $region59: #{dense_lstm_forward.4} parent=50 // pred_fallthru
          _
        %v291 = vld [vmem:[#allocation2] sm:$0xff]
        %v292 = vld [vmem:[#allocation2 + $0x8] sm:$0xff]
        %v293 = vld [vmem:[#allocation2 + $0x10] sm:$0xff]
        %v294 = vld [vmem:[#allocation2 + $0x18] sm:$0xff]
        %v295 = vld [vmem:[#allocation2 + $0x20] sm:$0xff]
        %v296 = vld [vmem:[#allocation2 + $0x28] sm:$0xff]
        %v297 = vld [vmem:[#allocation2 + $0x30] sm:$0xff]
        %v298 = vld [vmem:[#allocation2 + $0x38] sm:$0xff]
        %v299 = vld [vmem:[%s220] sm:$0xff]
        %v300 = vld [vmem:[%s220 + $0x8] sm:$0xff]
        %v301 = vld [vmem:[%s220 + $0x10] sm:$0xff]
        %v302 = vld [vmem:[%s220 + $0x18] sm:$0xff]
        %v303 = vld [vmem:[%s220 + $0x20] sm:$0xff]
        %v304 = vld [vmem:[%s220 + $0x28] sm:$0xff]
        %v305 = vld [vmem:[%s220 + $0x30] sm:$0xff]
        %v306 = vld [vmem:[%s220 + $0x38] sm:$0xff]
        %v307 = vld [vmem:[%s265] sm:$0xff]
        %v308 = vld [vmem:[%s265 + $0x8] sm:$0xff]
        %v309 = vld [vmem:[%s265 + $0x10] sm:$0xff]
        %v310 = vld [vmem:[%s265 + $0x18] sm:$0xff]
        %v311 = vld [vmem:[%s265 + $0x20] sm:$0xff]
        %v312 = vld [vmem:[%s265 + $0x28] sm:$0xff]
        %v313 = vld [vmem:[%s265 + $0x30] sm:$0xff]
        %v314 = vld [vmem:[%s265 + $0x38] sm:$0xff]
        %v315 = vld [vmem:[%s265 + $0x40] sm:$0xff]
        %v316 = vld [vmem:[%s265 + $0x48] sm:$0xff]
        %v317 = vld [vmem:[%s265 + $0x50] sm:$0xff]
        %v318 = vld [vmem:[%s265 + $0x58] sm:$0xff]
        %v319 = vld [vmem:[%s265 + $0x60] sm:$0xff]
        %v320 = vld [vmem:[%s265 + $0x68] sm:$0xff]
        %v321 = vld [vmem:[%s265 + $0x70] sm:$0xff]
        %v322 = vld [vmem:[%s265 + $0x78] sm:$0xff]
        %v323 = vld [vmem:[%s265 + $0x80] sm:$0xff]
        %v324 = vld [vmem:[%s265 + $0x88] sm:$0xff]
        %v325 = vld [vmem:[%s265 + $0x90] sm:$0xff]
        %v326 = vld [vmem:[%s265 + $0x98] sm:$0xff]
        %v327 = vld [vmem:[%s265 + $0xa0] sm:$0xff]
        %v328 = vld [vmem:[%s265 + $0xa8] sm:$0xff]
        %v329 = vld [vmem:[%s265 + $0xb0] sm:$0xff]
        %v330 = vld [vmem:[%s265 + $0xb8] sm:$0xff]
        %v331 = vld [vmem:[%s265 + $0xc0] sm:$0xff]
        %v332 = vld [vmem:[%s265 + $0xc8] sm:$0xff]
        %v333 = vld [vmem:[%s265 + $0xd0] sm:$0xff]
        %v334 = vld [vmem:[%s265 + $0xd8] sm:$0xff]
        %v335 = vld [vmem:[%s265 + $0xe0] sm:$0xff]
        %v336 = vld [vmem:[%s265 + $0xe8] sm:$0xff]
        %v337 = vld [vmem:[%s265 + $0xf0] sm:$0xff]
        %v338 = vld [vmem:[%s265 + $0xf8] sm:$0xff]
        %v339 = vld [vmem:[%s265 + $0x100] sm:$0xff]
        %v340 = vld [vmem:[%s265 + $0x108] sm:$0xff]
        %v341 = vld [vmem:[%s265 + $0x110] sm:$0xff]
        %v342 = vld [vmem:[%s265 + $0x118] sm:$0xff]
        %v343 = vld [vmem:[%s265 + $0x120] sm:$0xff]
        %v344 = vld [vmem:[%s265 + $0x128] sm:$0xff]
        %v345 = vld [vmem:[%s265 + $0x130] sm:$0xff]
        %v346 = vld [vmem:[%s265 + $0x138] sm:$0xff]
        %v347 = vld [vmem:[%s265 + $0x140] sm:$0xff]
        %v348 = vld [vmem:[%s265 + $0x148] sm:$0xff]
        %v349 = vld [vmem:[%s265 + $0x150] sm:$0xff]
        %v350 = vld [vmem:[%s265 + $0x158] sm:$0xff]
        %v351 = vld [vmem:[%s265 + $0x160] sm:$0xff]
        %v352 = vld [vmem:[%s265 + $0x168] sm:$0xff]
        %v353 = vld [vmem:[%s265 + $0x170] sm:$0xff]
        %v354 = vld [vmem:[%s265 + $0x178] sm:$0xff]
        %v355 = vld [vmem:[%s265 + $0x180] sm:$0xff]
        %v356 = vld [vmem:[%s265 + $0x188] sm:$0xff]
        %v357 = vld [vmem:[%s265 + $0x190] sm:$0xff]
        %v358 = vld [vmem:[%s265 + $0x198] sm:$0xff]
        %v359 = vld [vmem:[%s265 + $0x1a0] sm:$0xff]
        %v360 = vld [vmem:[%s265 + $0x1a8] sm:$0xff]
        %v361 = vld [vmem:[%s265 + $0x1b0] sm:$0xff]
        %v362 = vld [vmem:[%s265 + $0x1b8] sm:$0xff]
        %v363 = vld [vmem:[%s265 + $0x1c0] sm:$0xff]
        %v364 = vld [vmem:[%s265 + $0x1c8] sm:$0xff]
        %v365 = vld [vmem:[%s265 + $0x1d0] sm:$0xff]
        %v366 = vld [vmem:[%s265 + $0x1d8] sm:$0xff]
        %v367 = vld [vmem:[%s265 + $0x1e0] sm:$0xff]
        %v368 = vld [vmem:[%s265 + $0x1e8] sm:$0xff]
        %v369 = vld [vmem:[%s265 + $0x1f0] sm:$0xff]
        %v370 = vld [vmem:[%s265 + $0x1f8] sm:$0xff]
        %v371 = vld [vmem:[%s265 + $0x200] sm:$0xff]
        %v372 = vld [vmem:[%s265 + $0x208] sm:$0xff]
        %v373 = vld [vmem:[%s265 + $0x210] sm:$0xff]
        %v374 = vld [vmem:[%s265 + $0x218] sm:$0xff]
        %v375 = vld [vmem:[%s265 + $0x220] sm:$0xff]
        %v376 = vld [vmem:[%s265 + $0x228] sm:$0xff]
        %v377 = vld [vmem:[%s265 + $0x230] sm:$0xff]
        %v378 = vld [vmem:[%s265 + $0x238] sm:$0xff]
        %v379 = vld [vmem:[%s265 + $0x240] sm:$0xff]
        %v380 = vld [vmem:[%s265 + $0x248] sm:$0xff]
        %v381 = vld [vmem:[%s265 + $0x250] sm:$0xff]
        %v382 = vld [vmem:[%s265 + $0x258] sm:$0xff]
        %v383 = vld [vmem:[%s265 + $0x260] sm:$0xff]
        %v384 = vld [vmem:[%s265 + $0x268] sm:$0xff]
        %v385 = vld [vmem:[%s265 + $0x270] sm:$0xff]
        %v386 = vld [vmem:[%s265 + $0x278] sm:$0xff]
        %v387 = vld [vmem:[%s265 + $0x280] sm:$0xff]
        %v388 = vld [vmem:[%s265 + $0x288] sm:$0xff]
        %v389 = vld [vmem:[%s265 + $0x290] sm:$0xff]
        %v390 = vld [vmem:[%s265 + $0x298] sm:$0xff]
        %v391 = vld [vmem:[%s265 + $0x2a0] sm:$0xff]
        %v392 = vld [vmem:[%s265 + $0x2a8] sm:$0xff]
        %v393 = vld [vmem:[%s265 + $0x2b0] sm:$0xff]
        %v394 = vld [vmem:[%s265 + $0x2b8] sm:$0xff]
        %v395 = vld [vmem:[%s265 + $0x2c0] sm:$0xff]
        %v396 = vld [vmem:[%s265 + $0x2c8] sm:$0xff]
        %v397 = vld [vmem:[%s265 + $0x2d0] sm:$0xff]
        %v398 = vld [vmem:[%s265 + $0x2d8] sm:$0xff]
        %v399 = vld [vmem:[%s265 + $0x2e0] sm:$0xff]
        %v400 = vld [vmem:[%s265 + $0x2e8] sm:$0xff]
        %v401 = vld [vmem:[%s265 + $0x2f0] sm:$0xff]
        %v402 = vld [vmem:[%s265 + $0x2f8] sm:$0xff]
        %v403 = vld [vmem:[%s265 + $0x300] sm:$0xff]
        %v404 = vld [vmem:[%s265 + $0x308] sm:$0xff]
        %v405 = vld [vmem:[%s265 + $0x310] sm:$0xff]
        %v406 = vld [vmem:[%s265 + $0x318] sm:$0xff]
        %v407 = vld [vmem:[%s265 + $0x320] sm:$0xff]
        %v408 = vld [vmem:[%s265 + $0x328] sm:$0xff]
        %v409 = vld [vmem:[%s265 + $0x330] sm:$0xff]
        %v410 = vld [vmem:[%s265 + $0x338] sm:$0xff]
        %v411 = vld [vmem:[%s265 + $0x340] sm:$0xff]
        %v412 = vld [vmem:[%s265 + $0x348] sm:$0xff]
        %v413 = vld [vmem:[%s265 + $0x350] sm:$0xff]
        %v414 = vld [vmem:[%s265 + $0x358] sm:$0xff]
        %v415 = vld [vmem:[%s265 + $0x360] sm:$0xff]
        %v416 = vld [vmem:[%s265 + $0x368] sm:$0xff]
        %v417 = vld [vmem:[%s265 + $0x370] sm:$0xff]
        %v418 = vld [vmem:[%s265 + $0x378] sm:$0xff]
        %v419 = vld [vmem:[%s265 + $0x380] sm:$0xff]
        %v420 = vld [vmem:[%s265 + $0x388] sm:$0xff]
        %v421 = vld [vmem:[%s265 + $0x390] sm:$0xff]
        %v422 = vld [vmem:[%s265 + $0x398] sm:$0xff]
        %v423 = vld [vmem:[%s265 + $0x3a0] sm:$0xff]
        %v424 = vld [vmem:[%s265 + $0x3a8] sm:$0xff]
        %v425 = vld [vmem:[%s265 + $0x3b0] sm:$0xff]
        %v426 = vld [vmem:[%s265 + $0x3b8] sm:$0xff]
        %v427 = vld [vmem:[%s265 + $0x3c0] sm:$0xff]
        %v428 = vld [vmem:[%s265 + $0x3c8] sm:$0xff]
        %v429 = vld [vmem:[%s265 + $0x3d0] sm:$0xff]
        %v430 = vld [vmem:[%s265 + $0x3d8] sm:$0xff]
        %v431 = vld [vmem:[%s265 + $0x3e0] sm:$0xff]
        %v432 = vld [vmem:[%s265 + $0x3e8] sm:$0xff]
        %v433 = vld [vmem:[%s265 + $0x3f0] sm:$0xff]
        %v434 = vld [vmem:[%s265 + $0x3f8] sm:$0xff]
        %v435 = vld [vmem:[%s265 + $0x400] sm:$0xff]
        %v436 = vld [vmem:[%s265 + $0x408] sm:$0xff]
        %v437 = vld [vmem:[%s265 + $0x410] sm:$0xff]
        %v438 = vld [vmem:[%s265 + $0x418] sm:$0xff]
        %v439 = vld [vmem:[%s265 + $0x420] sm:$0xff]
        %v440 = vld [vmem:[%s265 + $0x428] sm:$0xff]
        %v441 = vld [vmem:[%s265 + $0x430] sm:$0xff]
        %v442 = vld [vmem:[%s265 + $0x438] sm:$0xff]
        %v443 = vld [vmem:[%s265 + $0x440] sm:$0xff]
        %v444 = vld [vmem:[%s265 + $0x448] sm:$0xff]
        %v445 = vld [vmem:[%s265 + $0x450] sm:$0xff]
        %v446 = vld [vmem:[%s265 + $0x458] sm:$0xff]
        %v447 = vld [vmem:[%s265 + $0x460] sm:$0xff]
        %v448 = vld [vmem:[%s265 + $0x468] sm:$0xff]
        %v449 = vld [vmem:[%s265 + $0x470] sm:$0xff]
        %v450 = vld [vmem:[%s265 + $0x478] sm:$0xff]
        %v451 = vld [vmem:[%s265 + $0x480] sm:$0xff]
        %v452 = vld [vmem:[%s265 + $0x488] sm:$0xff]
        %v453 = vld [vmem:[%s265 + $0x490] sm:$0xff]
        %v454 = vld [vmem:[%s265 + $0x498] sm:$0xff]
        %v455 = vld [vmem:[%s265 + $0x4a0] sm:$0xff]
        %v456 = vld [vmem:[%s265 + $0x4a8] sm:$0xff]
        %v457 = vld [vmem:[%s265 + $0x4b0] sm:$0xff]
        %v458 = vld [vmem:[%s265 + $0x4b8] sm:$0xff]
        %v459 = vld [vmem:[%s265 + $0x4c0] sm:$0xff]
        %v460 = vld [vmem:[%s265 + $0x4c8] sm:$0xff]
        %v461 = vld [vmem:[%s265 + $0x4d0] sm:$0xff]
        %v462 = vld [vmem:[%s265 + $0x4d8] sm:$0xff]
        %v463 = vld [vmem:[%s265 + $0x4e0] sm:$0xff]
        %v464 = vld [vmem:[%s265 + $0x4e8] sm:$0xff]
        %v465 = vld [vmem:[%s265 + $0x4f0] sm:$0xff]
        %v466 = vld [vmem:[%s265 + $0x4f8] sm:$0xff]
        %v467 = vld [vmem:[%s265 + $0x500] sm:$0xff]
        %v468 = vld [vmem:[%s265 + $0x508] sm:$0xff]
        %v469 = vld [vmem:[%s265 + $0x510] sm:$0xff]
        %v470 = vld [vmem:[%s265 + $0x518] sm:$0xff]
        %v471 = vld [vmem:[%s265 + $0x520] sm:$0xff]
        %v472 = vld [vmem:[%s265 + $0x528] sm:$0xff]
        %v473 = vld [vmem:[%s265 + $0x530] sm:$0xff]
        %v474 = vld [vmem:[%s265 + $0x538] sm:$0xff]
        %v475 = vld [vmem:[%s265 + $0x540] sm:$0xff]
        %v476 = vld [vmem:[%s265 + $0x548] sm:$0xff]
        %v477 = vld [vmem:[%s265 + $0x550] sm:$0xff]
        %v478 = vld [vmem:[%s265 + $0x558] sm:$0xff]
        %v479 = vld [vmem:[%s265 + $0x560] sm:$0xff]
        %v480 = vld [vmem:[%s265 + $0x568] sm:$0xff]
        %v481 = vld [vmem:[%s265 + $0x570] sm:$0xff]
        %v482 = vld [vmem:[%s265 + $0x578] sm:$0xff]
        %v483 = vld [vmem:[%s265 + $0x580] sm:$0xff]
        %v484 = vld [vmem:[%s265 + $0x588] sm:$0xff]
        %v485 = vld [vmem:[%s265 + $0x590] sm:$0xff]
        %v486 = vld [vmem:[%s265 + $0x598] sm:$0xff]
        %v487 = vld [vmem:[%s265 + $0x5a0] sm:$0xff]
        %v488 = vld [vmem:[%s265 + $0x5a8] sm:$0xff]
        %v489 = vld [vmem:[%s265 + $0x5b0] sm:$0xff]
        %v490 = vld [vmem:[%s265 + $0x5b8] sm:$0xff]
        %v491 = vld [vmem:[%s265 + $0x5c0] sm:$0xff]
        %v492 = vld [vmem:[%s265 + $0x5c8] sm:$0xff]
        %v493 = vld [vmem:[%s265 + $0x5d0] sm:$0xff]
        %v494 = vld [vmem:[%s265 + $0x5d8] sm:$0xff]
        %v495 = vld [vmem:[%s265 + $0x5e0] sm:$0xff]
        %v496 = vld [vmem:[%s265 + $0x5e8] sm:$0xff]
        %v497 = vld [vmem:[%s265 + $0x5f0] sm:$0xff]
        %v498 = vld [vmem:[%s265 + $0x5f8] sm:$0xff]
        %v499 = vld [vmem:[%s265 + $0x600] sm:$0xff]
        %v500 = vld [vmem:[%s265 + $0x608] sm:$0xff]
        %v501 = vld [vmem:[%s265 + $0x610] sm:$0xff]
        %v502 = vld [vmem:[%s265 + $0x618] sm:$0xff]
        %v503 = vld [vmem:[%s265 + $0x620] sm:$0xff]
        %v504 = vld [vmem:[%s265 + $0x628] sm:$0xff]
        %v505 = vld [vmem:[%s265 + $0x630] sm:$0xff]
        %v506 = vld [vmem:[%s265 + $0x638] sm:$0xff]
        %v507 = vld [vmem:[%s265 + $0x640] sm:$0xff]
        %v508 = vld [vmem:[%s265 + $0x648] sm:$0xff]
        %v509 = vld [vmem:[%s265 + $0x650] sm:$0xff]
        %v510 = vld [vmem:[%s265 + $0x658] sm:$0xff]
        %v511 = vld [vmem:[%s265 + $0x660] sm:$0xff]
        %v512 = vld [vmem:[%s265 + $0x668] sm:$0xff]
        %v513 = vld [vmem:[%s265 + $0x670] sm:$0xff]
        %v514 = vld [vmem:[%s265 + $0x678] sm:$0xff]
        %v515 = vld [vmem:[%s265 + $0x680] sm:$0xff]
        %v516 = vld [vmem:[%s265 + $0x688] sm:$0xff]
        %v517 = vld [vmem:[%s265 + $0x690] sm:$0xff]
        %v518 = vld [vmem:[%s265 + $0x698] sm:$0xff]
        %v519 = vld [vmem:[%s265 + $0x6a0] sm:$0xff]
        %v520 = vld [vmem:[%s265 + $0x6a8] sm:$0xff]
        %v521 = vld [vmem:[%s265 + $0x6b0] sm:$0xff]
        %v522 = vld [vmem:[%s265 + $0x6b8] sm:$0xff]
        %v523 = vld [vmem:[%s265 + $0x6c0] sm:$0xff]
        %v524 = vld [vmem:[%s265 + $0x6c8] sm:$0xff]
        %v525 = vld [vmem:[%s265 + $0x6d0] sm:$0xff]
        %v526 = vld [vmem:[%s265 + $0x6d8] sm:$0xff]
        %v527 = vld [vmem:[%s265 + $0x6e0] sm:$0xff]
        %v528 = vld [vmem:[%s265 + $0x6e8] sm:$0xff]
        %v529 = vld [vmem:[%s265 + $0x6f0] sm:$0xff]
        %v530 = vld [vmem:[%s265 + $0x6f8] sm:$0xff]
        %v531 = vld [vmem:[%s265 + $0x700] sm:$0xff]
        %v532 = vld [vmem:[%s265 + $0x708] sm:$0xff]
        %v533 = vld [vmem:[%s265 + $0x710] sm:$0xff]
        %v534 = vld [vmem:[%s265 + $0x718] sm:$0xff]
        %v535 = vld [vmem:[%s265 + $0x720] sm:$0xff]
        %v536 = vld [vmem:[%s265 + $0x728] sm:$0xff]
        %v537 = vld [vmem:[%s265 + $0x730] sm:$0xff]
        %v538 = vld [vmem:[%s265 + $0x738] sm:$0xff]
        %v539 = vld [vmem:[%s265 + $0x740] sm:$0xff]
        %v540 = vld [vmem:[%s265 + $0x748] sm:$0xff]
        %v541 = vld [vmem:[%s265 + $0x750] sm:$0xff]
        %v542 = vld [vmem:[%s265 + $0x758] sm:$0xff]
        %v543 = vld [vmem:[%s265 + $0x760] sm:$0xff]
        %v544 = vld [vmem:[%s265 + $0x768] sm:$0xff]
        %v545 = vld [vmem:[%s265 + $0x770] sm:$0xff]
        %v546 = vld [vmem:[%s265 + $0x778] sm:$0xff]
        %v547 = vld [vmem:[%s265 + $0x780] sm:$0xff]
        %v548 = vld [vmem:[%s265 + $0x788] sm:$0xff]
        %v549 = vld [vmem:[%s265 + $0x790] sm:$0xff]
        %v550 = vld [vmem:[%s265 + $0x798] sm:$0xff]
        %v551 = vld [vmem:[%s265 + $0x7a0] sm:$0xff]
        %v552 = vld [vmem:[%s265 + $0x7a8] sm:$0xff]
        %v553 = vld [vmem:[%s265 + $0x7b0] sm:$0xff]
        %v554 = vld [vmem:[%s265 + $0x7b8] sm:$0xff]
        %v555 = vld [vmem:[%s265 + $0x7c0] sm:$0xff]
        %v556 = vld [vmem:[%s265 + $0x7c8] sm:$0xff]
        %v557 = vld [vmem:[%s265 + $0x7d0] sm:$0xff]
        %v558 = vld [vmem:[%s265 + $0x7d8] sm:$0xff]
        %v559 = vld [vmem:[%s265 + $0x7e0] sm:$0xff]
        %v560 = vld [vmem:[%s265 + $0x7e8] sm:$0xff]
        %v561 = vld [vmem:[%s265 + $0x7f0] sm:$0xff]
        %v562 = vld [vmem:[%s265 + $0x7f8] sm:$0xff]
        %v571 = vunpack.c.l.b16 %v299
        %v572 = vunpack.c.h.b16 %v299
        %v573 = vunpack.c.l.b16 %v300
        %v574 = vunpack.c.h.b16 %v300
        %v575 = vunpack.c.l.b16 %v301
        %v576 = vunpack.c.h.b16 %v301
        %v577 = vunpack.c.l.b16 %v302
        %v578 = vunpack.c.h.b16 %v302
        %v579 = vunpack.c.l.b16 %v303
        %v580 = vunpack.c.h.b16 %v303
        %v581 = vunpack.c.l.b16 %v304
        %v582 = vunpack.c.h.b16 %v304
        %v583 = vunpack.c.l.b16 %v305
        %v584 = vunpack.c.h.b16 %v305
        %v585 = vunpack.c.l.b16 %v306
        %v586 = vunpack.c.h.b16 %v306
        %v587 = vpack.c.b16 %v579, %v571
        %v588 = vpack.c.b16 %v580, %v572
        %v589 = vpack.c.b16 %v581, %v573
        %v590 = vpack.c.b16 %v582, %v574
        %v591 = vpack.c.b16 %v583, %v575
        %v592 = vpack.c.b16 %v584, %v576
        %v593 = vpack.c.b16 %v585, %v577
        %v594 = vpack.c.b16 %v586, %v578
        %v859 = vunpack.c.l.b16 %v307
        %v860 = vunpack.c.h.b16 %v307
        %v861 = vunpack.c.l.b16 %v308
        %v862 = vunpack.c.h.b16 %v308
        %v863 = vunpack.c.l.b16 %v309
        %v864 = vunpack.c.h.b16 %v309
        %v865 = vunpack.c.l.b16 %v310
        %v866 = vunpack.c.h.b16 %v310
        %v867 = vunpack.c.l.b16 %v311
        %v868 = vunpack.c.h.b16 %v311
        %v869 = vunpack.c.l.b16 %v312
        %v870 = vunpack.c.h.b16 %v312
        %v871 = vunpack.c.l.b16 %v313
        %v872 = vunpack.c.h.b16 %v313
        %v873 = vunpack.c.l.b16 %v314
        %v874 = vunpack.c.h.b16 %v314
        %v875 = vunpack.c.l.b16 %v315
        %v876 = vunpack.c.h.b16 %v315
        %v877 = vunpack.c.l.b16 %v316
        %v878 = vunpack.c.h.b16 %v316
        %v879 = vunpack.c.l.b16 %v317
        %v880 = vunpack.c.h.b16 %v317
        %v881 = vunpack.c.l.b16 %v318
        %v882 = vunpack.c.h.b16 %v318
        %v883 = vunpack.c.l.b16 %v319
        %v884 = vunpack.c.h.b16 %v319
        %v885 = vunpack.c.l.b16 %v320
        %v886 = vunpack.c.h.b16 %v320
        %v887 = vunpack.c.l.b16 %v321
        %v888 = vunpack.c.h.b16 %v321
        %v889 = vunpack.c.l.b16 %v322
        %v890 = vunpack.c.h.b16 %v322
        %v891 = vunpack.c.l.b16 %v323
        %v892 = vunpack.c.h.b16 %v323
        %v893 = vunpack.c.l.b16 %v324
        %v894 = vunpack.c.h.b16 %v324
        %v895 = vunpack.c.l.b16 %v325
        %v896 = vunpack.c.h.b16 %v325
        %v897 = vunpack.c.l.b16 %v326
        %v898 = vunpack.c.h.b16 %v326
        %v899 = vunpack.c.l.b16 %v327
        %v900 = vunpack.c.h.b16 %v327
        %v901 = vunpack.c.l.b16 %v328
        %v902 = vunpack.c.h.b16 %v328
        %v903 = vunpack.c.l.b16 %v329
        %v904 = vunpack.c.h.b16 %v329
        %v905 = vunpack.c.l.b16 %v330
        %v906 = vunpack.c.h.b16 %v330
        %v907 = vunpack.c.l.b16 %v331
        %v908 = vunpack.c.h.b16 %v331
        %v909 = vunpack.c.l.b16 %v332
        %v910 = vunpack.c.h.b16 %v332
        %v911 = vunpack.c.l.b16 %v333
        %v912 = vunpack.c.h.b16 %v333
        %v913 = vunpack.c.l.b16 %v334
        %v914 = vunpack.c.h.b16 %v334
        %v915 = vunpack.c.l.b16 %v335
        %v916 = vunpack.c.h.b16 %v335
        %v917 = vunpack.c.l.b16 %v336
        %v918 = vunpack.c.h.b16 %v336
        %v919 = vunpack.c.l.b16 %v337
        %v920 = vunpack.c.h.b16 %v337
        %v921 = vunpack.c.l.b16 %v338
        %v922 = vunpack.c.h.b16 %v338
        %v923 = vunpack.c.l.b16 %v339
        %v924 = vunpack.c.h.b16 %v339
        %v925 = vunpack.c.l.b16 %v340
        %v926 = vunpack.c.h.b16 %v340
        %v927 = vunpack.c.l.b16 %v341
        %v928 = vunpack.c.h.b16 %v341
        %v929 = vunpack.c.l.b16 %v342
        %v930 = vunpack.c.h.b16 %v342
        %v931 = vunpack.c.l.b16 %v343
        %v932 = vunpack.c.h.b16 %v343
        %v933 = vunpack.c.l.b16 %v344
        %v934 = vunpack.c.h.b16 %v344
        %v935 = vunpack.c.l.b16 %v345
        %v936 = vunpack.c.h.b16 %v345
        %v937 = vunpack.c.l.b16 %v346
        %v938 = vunpack.c.h.b16 %v346
        %v939 = vunpack.c.l.b16 %v347
        %v940 = vunpack.c.h.b16 %v347
        %v941 = vunpack.c.l.b16 %v348
        %v942 = vunpack.c.h.b16 %v348
        %v943 = vunpack.c.l.b16 %v349
        %v944 = vunpack.c.h.b16 %v349
        %v945 = vunpack.c.l.b16 %v350
        %v946 = vunpack.c.h.b16 %v350
        %v947 = vunpack.c.l.b16 %v351
        %v948 = vunpack.c.h.b16 %v351
        %v949 = vunpack.c.l.b16 %v352
        %v950 = vunpack.c.h.b16 %v352
        %v951 = vunpack.c.l.b16 %v353
        %v952 = vunpack.c.h.b16 %v353
        %v953 = vunpack.c.l.b16 %v354
        %v954 = vunpack.c.h.b16 %v354
        %v955 = vunpack.c.l.b16 %v355
        %v956 = vunpack.c.h.b16 %v355
        %v957 = vunpack.c.l.b16 %v356
        %v958 = vunpack.c.h.b16 %v356
        %v959 = vunpack.c.l.b16 %v357
        %v960 = vunpack.c.h.b16 %v357
        %v961 = vunpack.c.l.b16 %v358
        %v962 = vunpack.c.h.b16 %v358
        %v963 = vunpack.c.l.b16 %v359
        %v964 = vunpack.c.h.b16 %v359
        %v965 = vunpack.c.l.b16 %v360
        %v966 = vunpack.c.h.b16 %v360
        %v967 = vunpack.c.l.b16 %v361
        %v968 = vunpack.c.h.b16 %v361
        %v969 = vunpack.c.l.b16 %v362
        %v970 = vunpack.c.h.b16 %v362
        %v971 = vunpack.c.l.b16 %v363
        %v972 = vunpack.c.h.b16 %v363
        %v973 = vunpack.c.l.b16 %v364
        %v974 = vunpack.c.h.b16 %v364
        %v975 = vunpack.c.l.b16 %v365
        %v976 = vunpack.c.h.b16 %v365
        %v977 = vunpack.c.l.b16 %v366
        %v978 = vunpack.c.h.b16 %v366
        %v979 = vunpack.c.l.b16 %v367
        %v980 = vunpack.c.h.b16 %v367
        %v981 = vunpack.c.l.b16 %v368
        %v982 = vunpack.c.h.b16 %v368
        %v983 = vunpack.c.l.b16 %v369
        %v984 = vunpack.c.h.b16 %v369
        %v985 = vunpack.c.l.b16 %v370
        %v986 = vunpack.c.h.b16 %v370
        %v987 = vunpack.c.l.b16 %v371
        %v988 = vunpack.c.h.b16 %v371
        %v989 = vunpack.c.l.b16 %v372
        %v990 = vunpack.c.h.b16 %v372
        %v991 = vunpack.c.l.b16 %v373
        %v992 = vunpack.c.h.b16 %v373
        %v993 = vunpack.c.l.b16 %v374
        %v994 = vunpack.c.h.b16 %v374
        %v995 = vunpack.c.l.b16 %v375
        %v996 = vunpack.c.h.b16 %v375
        %v997 = vunpack.c.l.b16 %v376
        %v998 = vunpack.c.h.b16 %v376
        %v999 = vunpack.c.l.b16 %v377
        %v1000 = vunpack.c.h.b16 %v377
        %v1001 = vunpack.c.l.b16 %v378
        %v1002 = vunpack.c.h.b16 %v378
        %v1003 = vunpack.c.l.b16 %v379
        %v1004 = vunpack.c.h.b16 %v379
        %v1005 = vunpack.c.l.b16 %v380
        %v1006 = vunpack.c.h.b16 %v380
        %v1007 = vunpack.c.l.b16 %v381
        %v1008 = vunpack.c.h.b16 %v381
        %v1009 = vunpack.c.l.b16 %v382
        %v1010 = vunpack.c.h.b16 %v382
        %v1011 = vunpack.c.l.b16 %v383
        %v1012 = vunpack.c.h.b16 %v383
        %v1013 = vunpack.c.l.b16 %v384
        %v1014 = vunpack.c.h.b16 %v384
        %v1015 = vunpack.c.l.b16 %v385
        %v1016 = vunpack.c.h.b16 %v385
        %v1017 = vunpack.c.l.b16 %v386
        %v1018 = vunpack.c.h.b16 %v386
        %v1019 = vunpack.c.l.b16 %v387
        %v1020 = vunpack.c.h.b16 %v387
        %v1021 = vunpack.c.l.b16 %v388
        %v1022 = vunpack.c.h.b16 %v388
        %v1023 = vunpack.c.l.b16 %v389
        %v1024 = vunpack.c.h.b16 %v389
        %v1025 = vunpack.c.l.b16 %v390
        %v1026 = vunpack.c.h.b16 %v390
        %v1027 = vunpack.c.l.b16 %v391
        %v1028 = vunpack.c.h.b16 %v391
        %v1029 = vunpack.c.l.b16 %v392
        %v1030 = vunpack.c.h.b16 %v392
        %v1031 = vunpack.c.l.b16 %v393
        %v1032 = vunpack.c.h.b16 %v393
        %v1033 = vunpack.c.l.b16 %v394
        %v1034 = vunpack.c.h.b16 %v394
        %v1035 = vunpack.c.l.b16 %v395
        %v1036 = vunpack.c.h.b16 %v395
        %v1037 = vunpack.c.l.b16 %v396
        %v1038 = vunpack.c.h.b16 %v396
        %v1039 = vunpack.c.l.b16 %v397
        %v1040 = vunpack.c.h.b16 %v397
        %v1041 = vunpack.c.l.b16 %v398
        %v1042 = vunpack.c.h.b16 %v398
        %v1043 = vunpack.c.l.b16 %v399
        %v1044 = vunpack.c.h.b16 %v399
        %v1045 = vunpack.c.l.b16 %v400
        %v1046 = vunpack.c.h.b16 %v400
        %v1047 = vunpack.c.l.b16 %v401
        %v1048 = vunpack.c.h.b16 %v401
        %v1049 = vunpack.c.l.b16 %v402
        %v1050 = vunpack.c.h.b16 %v402
        %v1051 = vunpack.c.l.b16 %v403
        %v1052 = vunpack.c.h.b16 %v403
        %v1053 = vunpack.c.l.b16 %v404
        %v1054 = vunpack.c.h.b16 %v404
        %v1055 = vunpack.c.l.b16 %v405
        %v1056 = vunpack.c.h.b16 %v405
        %v1057 = vunpack.c.l.b16 %v406
        %v1058 = vunpack.c.h.b16 %v406
        %v1059 = vunpack.c.l.b16 %v407
        %v1060 = vunpack.c.h.b16 %v407
        %v1061 = vunpack.c.l.b16 %v408
        %v1062 = vunpack.c.h.b16 %v408
        %v1063 = vunpack.c.l.b16 %v409
        %v1064 = vunpack.c.h.b16 %v409
        %v1065 = vunpack.c.l.b16 %v410
        %v1066 = vunpack.c.h.b16 %v410
        %v1067 = vunpack.c.l.b16 %v411
        %v1068 = vunpack.c.h.b16 %v411
        %v1069 = vunpack.c.l.b16 %v412
        %v1070 = vunpack.c.h.b16 %v412
        %v1071 = vunpack.c.l.b16 %v413
        %v1072 = vunpack.c.h.b16 %v413
        %v1073 = vunpack.c.l.b16 %v414
        %v1074 = vunpack.c.h.b16 %v414
        %v1075 = vunpack.c.l.b16 %v415
        %v1076 = vunpack.c.h.b16 %v415
        %v1077 = vunpack.c.l.b16 %v416
        %v1078 = vunpack.c.h.b16 %v416
        %v1079 = vunpack.c.l.b16 %v417
        %v1080 = vunpack.c.h.b16 %v417
        %v1081 = vunpack.c.l.b16 %v418
        %v1082 = vunpack.c.h.b16 %v418
        %v1083 = vunpack.c.l.b16 %v419
        %v1084 = vunpack.c.h.b16 %v419
        %v1085 = vunpack.c.l.b16 %v420
        %v1086 = vunpack.c.h.b16 %v420
        %v1087 = vunpack.c.l.b16 %v421
        %v1088 = vunpack.c.h.b16 %v421
        %v1089 = vunpack.c.l.b16 %v422
        %v1090 = vunpack.c.h.b16 %v422
        %v1091 = vunpack.c.l.b16 %v423
        %v1092 = vunpack.c.h.b16 %v423
        %v1093 = vunpack.c.l.b16 %v424
        %v1094 = vunpack.c.h.b16 %v424
        %v1095 = vunpack.c.l.b16 %v425
        %v1096 = vunpack.c.h.b16 %v425
        %v1097 = vunpack.c.l.b16 %v426
        %v1098 = vunpack.c.h.b16 %v426
        %v1099 = vunpack.c.l.b16 %v427
        %v1100 = vunpack.c.h.b16 %v427
        %v1101 = vunpack.c.l.b16 %v428
        %v1102 = vunpack.c.h.b16 %v428
        %v1103 = vunpack.c.l.b16 %v429
        %v1104 = vunpack.c.h.b16 %v429
        %v1105 = vunpack.c.l.b16 %v430
        %v1106 = vunpack.c.h.b16 %v430
        %v1107 = vunpack.c.l.b16 %v431
        %v1108 = vunpack.c.h.b16 %v431
        %v1109 = vunpack.c.l.b16 %v432
        %v1110 = vunpack.c.h.b16 %v432
        %v1111 = vunpack.c.l.b16 %v433
        %v1112 = vunpack.c.h.b16 %v433
        %v1113 = vunpack.c.l.b16 %v434
        %v1114 = vunpack.c.h.b16 %v434
        %v1115 = vunpack.c.l.b16 %v435
        %v1116 = vunpack.c.h.b16 %v435
        %v1117 = vunpack.c.l.b16 %v436
        %v1118 = vunpack.c.h.b16 %v436
        %v1119 = vunpack.c.l.b16 %v437
        %v1120 = vunpack.c.h.b16 %v437
        %v1121 = vunpack.c.l.b16 %v438
        %v1122 = vunpack.c.h.b16 %v438
        %v1123 = vunpack.c.l.b16 %v439
        %v1124 = vunpack.c.h.b16 %v439
        %v1125 = vunpack.c.l.b16 %v440
        %v1126 = vunpack.c.h.b16 %v440
        %v1127 = vunpack.c.l.b16 %v441
        %v1128 = vunpack.c.h.b16 %v441
        %v1129 = vunpack.c.l.b16 %v442
        %v1130 = vunpack.c.h.b16 %v442
        %v1131 = vunpack.c.l.b16 %v443
        %v1132 = vunpack.c.h.b16 %v443
        %v1133 = vunpack.c.l.b16 %v444
        %v1134 = vunpack.c.h.b16 %v444
        %v1135 = vunpack.c.l.b16 %v445
        %v1136 = vunpack.c.h.b16 %v445
        %v1137 = vunpack.c.l.b16 %v446
        %v1138 = vunpack.c.h.b16 %v446
        %v1139 = vunpack.c.l.b16 %v447
        %v1140 = vunpack.c.h.b16 %v447
        %v1141 = vunpack.c.l.b16 %v448
        %v1142 = vunpack.c.h.b16 %v448
        %v1143 = vunpack.c.l.b16 %v449
        %v1144 = vunpack.c.h.b16 %v449
        %v1145 = vunpack.c.l.b16 %v450
        %v1146 = vunpack.c.h.b16 %v450
        %v1147 = vunpack.c.l.b16 %v451
        %v1148 = vunpack.c.h.b16 %v451
        %v1149 = vunpack.c.l.b16 %v452
        %v1150 = vunpack.c.h.b16 %v452
        %v1151 = vunpack.c.l.b16 %v453
        %v1152 = vunpack.c.h.b16 %v453
        %v1153 = vunpack.c.l.b16 %v454
        %v1154 = vunpack.c.h.b16 %v454
        %v1155 = vunpack.c.l.b16 %v455
        %v1156 = vunpack.c.h.b16 %v455
        %v1157 = vunpack.c.l.b16 %v456
        %v1158 = vunpack.c.h.b16 %v456
        %v1159 = vunpack.c.l.b16 %v457
        %v1160 = vunpack.c.h.b16 %v457
        %v1161 = vunpack.c.l.b16 %v458
        %v1162 = vunpack.c.h.b16 %v458
        %v1163 = vunpack.c.l.b16 %v459
        %v1164 = vunpack.c.h.b16 %v459
        %v1165 = vunpack.c.l.b16 %v460
        %v1166 = vunpack.c.h.b16 %v460
        %v1167 = vunpack.c.l.b16 %v461
        %v1168 = vunpack.c.h.b16 %v461
        %v1169 = vunpack.c.l.b16 %v462
        %v1170 = vunpack.c.h.b16 %v462
        %v1171 = vunpack.c.l.b16 %v463
        %v1172 = vunpack.c.h.b16 %v463
        %v1173 = vunpack.c.l.b16 %v464
        %v1174 = vunpack.c.h.b16 %v464
        %v1175 = vunpack.c.l.b16 %v465
        %v1176 = vunpack.c.h.b16 %v465
        %v1177 = vunpack.c.l.b16 %v466
        %v1178 = vunpack.c.h.b16 %v466
        %v1179 = vunpack.c.l.b16 %v467
        %v1180 = vunpack.c.h.b16 %v467
        %v1181 = vunpack.c.l.b16 %v468
        %v1182 = vunpack.c.h.b16 %v468
        %v1183 = vunpack.c.l.b16 %v469
        %v1184 = vunpack.c.h.b16 %v469
        %v1185 = vunpack.c.l.b16 %v470
        %v1186 = vunpack.c.h.b16 %v470
        %v1187 = vunpack.c.l.b16 %v471
        %v1188 = vunpack.c.h.b16 %v471
        %v1189 = vunpack.c.l.b16 %v472
        %v1190 = vunpack.c.h.b16 %v472
        %v1191 = vunpack.c.l.b16 %v473
        %v1192 = vunpack.c.h.b16 %v473
        %v1193 = vunpack.c.l.b16 %v474
        %v1194 = vunpack.c.h.b16 %v474
        %v1195 = vunpack.c.l.b16 %v475
        %v1196 = vunpack.c.h.b16 %v475
        %v1197 = vunpack.c.l.b16 %v476
        %v1198 = vunpack.c.h.b16 %v476
        %v1199 = vunpack.c.l.b16 %v477
        %v1200 = vunpack.c.h.b16 %v477
        %v1201 = vunpack.c.l.b16 %v478
        %v1202 = vunpack.c.h.b16 %v478
        %v1203 = vunpack.c.l.b16 %v479
        %v1204 = vunpack.c.h.b16 %v479
        %v1205 = vunpack.c.l.b16 %v480
        %v1206 = vunpack.c.h.b16 %v480
        %v1207 = vunpack.c.l.b16 %v481
        %v1208 = vunpack.c.h.b16 %v481
        %v1209 = vunpack.c.l.b16 %v482
        %v1210 = vunpack.c.h.b16 %v482
        %v1211 = vunpack.c.l.b16 %v483
        %v1212 = vunpack.c.h.b16 %v483
        %v1213 = vunpack.c.l.b16 %v484
        %v1214 = vunpack.c.h.b16 %v484
        %v1215 = vunpack.c.l.b16 %v485
        %v1216 = vunpack.c.h.b16 %v485
        %v1217 = vunpack.c.l.b16 %v486
        %v1218 = vunpack.c.h.b16 %v486
        %v1219 = vunpack.c.l.b16 %v487
        %v1220 = vunpack.c.h.b16 %v487
        %v1221 = vunpack.c.l.b16 %v488
        %v1222 = vunpack.c.h.b16 %v488
        %v1223 = vunpack.c.l.b16 %v489
        %v1224 = vunpack.c.h.b16 %v489
        %v1225 = vunpack.c.l.b16 %v490
        %v1226 = vunpack.c.h.b16 %v490
        %v1227 = vunpack.c.l.b16 %v491
        %v1228 = vunpack.c.h.b16 %v491
        %v1229 = vunpack.c.l.b16 %v492
        %v1230 = vunpack.c.h.b16 %v492
        %v1231 = vunpack.c.l.b16 %v493
        %v1232 = vunpack.c.h.b16 %v493
        %v1233 = vunpack.c.l.b16 %v494
        %v1234 = vunpack.c.h.b16 %v494
        %v1235 = vunpack.c.l.b16 %v495
        %v1236 = vunpack.c.h.b16 %v495
        %v1237 = vunpack.c.l.b16 %v496
        %v1238 = vunpack.c.h.b16 %v496
        %v1239 = vunpack.c.l.b16 %v497
        %v1240 = vunpack.c.h.b16 %v497
        %v1241 = vunpack.c.l.b16 %v498
        %v1242 = vunpack.c.h.b16 %v498
        %v1243 = vunpack.c.l.b16 %v499
        %v1244 = vunpack.c.h.b16 %v499
        %v1245 = vunpack.c.l.b16 %v500
        %v1246 = vunpack.c.h.b16 %v500
        %v1247 = vunpack.c.l.b16 %v501
        %v1248 = vunpack.c.h.b16 %v501
        %v1249 = vunpack.c.l.b16 %v502
        %v1250 = vunpack.c.h.b16 %v502
        %v1251 = vunpack.c.l.b16 %v503
        %v1252 = vunpack.c.h.b16 %v503
        %v1253 = vunpack.c.l.b16 %v504
        %v1254 = vunpack.c.h.b16 %v504
        %v1255 = vunpack.c.l.b16 %v505
        %v1256 = vunpack.c.h.b16 %v505
        %v1257 = vunpack.c.l.b16 %v506
        %v1258 = vunpack.c.h.b16 %v506
        %v1259 = vunpack.c.l.b16 %v507
        %v1260 = vunpack.c.h.b16 %v507
        %v1261 = vunpack.c.l.b16 %v508
        %v1262 = vunpack.c.h.b16 %v508
        %v1263 = vunpack.c.l.b16 %v509
        %v1264 = vunpack.c.h.b16 %v509
        %v1265 = vunpack.c.l.b16 %v510
        %v1266 = vunpack.c.h.b16 %v510
        %v1267 = vunpack.c.l.b16 %v511
        %v1268 = vunpack.c.h.b16 %v511
        %v1269 = vunpack.c.l.b16 %v512
        %v1270 = vunpack.c.h.b16 %v512
        %v1271 = vunpack.c.l.b16 %v513
        %v1272 = vunpack.c.h.b16 %v513
        %v1273 = vunpack.c.l.b16 %v514
        %v1274 = vunpack.c.h.b16 %v514
        %v1275 = vunpack.c.l.b16 %v515
        %v1276 = vunpack.c.h.b16 %v515
        %v1277 = vunpack.c.l.b16 %v516
        %v1278 = vunpack.c.h.b16 %v516
        %v1279 = vunpack.c.l.b16 %v517
        %v1280 = vunpack.c.h.b16 %v517
        %v1281 = vunpack.c.l.b16 %v518
        %v1282 = vunpack.c.h.b16 %v518
        %v1283 = vunpack.c.l.b16 %v519
        %v1284 = vunpack.c.h.b16 %v519
        %v1285 = vunpack.c.l.b16 %v520
        %v1286 = vunpack.c.h.b16 %v520
        %v1287 = vunpack.c.l.b16 %v521
        %v1288 = vunpack.c.h.b16 %v521
        %v1289 = vunpack.c.l.b16 %v522
        %v1290 = vunpack.c.h.b16 %v522
        %v1291 = vunpack.c.l.b16 %v523
        %v1292 = vunpack.c.h.b16 %v523
        %v1293 = vunpack.c.l.b16 %v524
        %v1294 = vunpack.c.h.b16 %v524
        %v1295 = vunpack.c.l.b16 %v525
        %v1296 = vunpack.c.h.b16 %v525
        %v1297 = vunpack.c.l.b16 %v526
        %v1298 = vunpack.c.h.b16 %v526
        %v1299 = vunpack.c.l.b16 %v527
        %v1300 = vunpack.c.h.b16 %v527
        %v1301 = vunpack.c.l.b16 %v528
        %v1302 = vunpack.c.h.b16 %v528
        %v1303 = vunpack.c.l.b16 %v529
        %v1304 = vunpack.c.h.b16 %v529
        %v1305 = vunpack.c.l.b16 %v530
        %v1306 = vunpack.c.h.b16 %v530
        %v1307 = vunpack.c.l.b16 %v531
        %v1308 = vunpack.c.h.b16 %v531
        %v1309 = vunpack.c.l.b16 %v532
        %v1310 = vunpack.c.h.b16 %v532
        %v1311 = vunpack.c.l.b16 %v533
        %v1312 = vunpack.c.h.b16 %v533
        %v1313 = vunpack.c.l.b16 %v534
        %v1314 = vunpack.c.h.b16 %v534
        %v1315 = vunpack.c.l.b16 %v535
        %v1316 = vunpack.c.h.b16 %v535
        %v1317 = vunpack.c.l.b16 %v536
        %v1318 = vunpack.c.h.b16 %v536
        %v1319 = vunpack.c.l.b16 %v537
        %v1320 = vunpack.c.h.b16 %v537
        %v1321 = vunpack.c.l.b16 %v538
        %v1322 = vunpack.c.h.b16 %v538
        %v1323 = vunpack.c.l.b16 %v539
        %v1324 = vunpack.c.h.b16 %v539
        %v1325 = vunpack.c.l.b16 %v540
        %v1326 = vunpack.c.h.b16 %v540
        %v1327 = vunpack.c.l.b16 %v541
        %v1328 = vunpack.c.h.b16 %v541
        %v1329 = vunpack.c.l.b16 %v542
        %v1330 = vunpack.c.h.b16 %v542
        %v1331 = vunpack.c.l.b16 %v543
        %v1332 = vunpack.c.h.b16 %v543
        %v1333 = vunpack.c.l.b16 %v544
        %v1334 = vunpack.c.h.b16 %v544
        %v1335 = vunpack.c.l.b16 %v545
        %v1336 = vunpack.c.h.b16 %v545
        %v1337 = vunpack.c.l.b16 %v546
        %v1338 = vunpack.c.h.b16 %v546
        %v1339 = vunpack.c.l.b16 %v547
        %v1340 = vunpack.c.h.b16 %v547
        %v1341 = vunpack.c.l.b16 %v548
        %v1342 = vunpack.c.h.b16 %v548
        %v1343 = vunpack.c.l.b16 %v549
        %v1344 = vunpack.c.h.b16 %v549
        %v1345 = vunpack.c.l.b16 %v550
        %v1346 = vunpack.c.h.b16 %v550
        %v1347 = vunpack.c.l.b16 %v551
        %v1348 = vunpack.c.h.b16 %v551
        %v1349 = vunpack.c.l.b16 %v552
        %v1350 = vunpack.c.h.b16 %v552
        %v1351 = vunpack.c.l.b16 %v553
        %v1352 = vunpack.c.h.b16 %v553
        %v1353 = vunpack.c.l.b16 %v554
        %v1354 = vunpack.c.h.b16 %v554
        %v1355 = vunpack.c.l.b16 %v555
        %v1356 = vunpack.c.h.b16 %v555
        %v1357 = vunpack.c.l.b16 %v556
        %v1358 = vunpack.c.h.b16 %v556
        %v1359 = vunpack.c.l.b16 %v557
        %v1360 = vunpack.c.h.b16 %v557
        %v1361 = vunpack.c.l.b16 %v558
        %v1362 = vunpack.c.h.b16 %v558
        %v1363 = vunpack.c.l.b16 %v559
        %v1364 = vunpack.c.h.b16 %v559
        %v1365 = vunpack.c.l.b16 %v560
        %v1366 = vunpack.c.h.b16 %v560
        %v1367 = vunpack.c.l.b16 %v561
        %v1368 = vunpack.c.h.b16 %v561
        %v1369 = vunpack.c.l.b16 %v562
        %v1370 = vunpack.c.h.b16 %v562
        %v1371 = vpack.c.b16 %v863, %v859
        %v1372 = vpack.c.b16 %v864, %v860
        %v1373 = vpack.c.b16 %v865, %v861
        %v1374 = vpack.c.b16 %v866, %v862
        %v1375 = vpack.c.b16 %v871, %v867
        %v1376 = vpack.c.b16 %v872, %v868
        %v1377 = vpack.c.b16 %v873, %v869
        %v1378 = vpack.c.b16 %v874, %v870
        %v1379 = vpack.c.b16 %v879, %v875
        %v1380 = vpack.c.b16 %v880, %v876
        %v1381 = vpack.c.b16 %v881, %v877
        %v1382 = vpack.c.b16 %v882, %v878
        %v1383 = vpack.c.b16 %v887, %v883
        %v1384 = vpack.c.b16 %v888, %v884
        %v1385 = vpack.c.b16 %v889, %v885
        %v1386 = vpack.c.b16 %v890, %v886
        %v1387 = vpack.c.b16 %v895, %v891
        %v1388 = vpack.c.b16 %v896, %v892
        %v1389 = vpack.c.b16 %v897, %v893
        %v1390 = vpack.c.b16 %v898, %v894
        %v1391 = vpack.c.b16 %v903, %v899
        %v1392 = vpack.c.b16 %v904, %v900
        %v1393 = vpack.c.b16 %v905, %v901
        %v1394 = vpack.c.b16 %v906, %v902
        %v1395 = vpack.c.b16 %v911, %v907
        %v1396 = vpack.c.b16 %v912, %v908
        %v1397 = vpack.c.b16 %v913, %v909
        %v1398 = vpack.c.b16 %v914, %v910
        %v1399 = vpack.c.b16 %v919, %v915
        %v1400 = vpack.c.b16 %v920, %v916
        %v1401 = vpack.c.b16 %v921, %v917
        %v1402 = vpack.c.b16 %v922, %v918
        %v1403 = vpack.c.b16 %v927, %v923
        %v1404 = vpack.c.b16 %v928, %v924
        %v1405 = vpack.c.b16 %v929, %v925
        %v1406 = vpack.c.b16 %v930, %v926
        %v1407 = vpack.c.b16 %v935, %v931
        %v1408 = vpack.c.b16 %v936, %v932
        %v1409 = vpack.c.b16 %v937, %v933
        %v1410 = vpack.c.b16 %v938, %v934
        %v1411 = vpack.c.b16 %v943, %v939
        %v1412 = vpack.c.b16 %v944, %v940
        %v1413 = vpack.c.b16 %v945, %v941
        %v1414 = vpack.c.b16 %v946, %v942
        %v1415 = vpack.c.b16 %v951, %v947
        %v1416 = vpack.c.b16 %v952, %v948
        %v1417 = vpack.c.b16 %v953, %v949
        %v1418 = vpack.c.b16 %v954, %v950
        %v1419 = vpack.c.b16 %v959, %v955
        %v1420 = vpack.c.b16 %v960, %v956
        %v1421 = vpack.c.b16 %v961, %v957
        %v1422 = vpack.c.b16 %v962, %v958
        %v1423 = vpack.c.b16 %v967, %v963
        %v1424 = vpack.c.b16 %v968, %v964
        %v1425 = vpack.c.b16 %v969, %v965
        %v1426 = vpack.c.b16 %v970, %v966
        %v1427 = vpack.c.b16 %v975, %v971
        %v1428 = vpack.c.b16 %v976, %v972
        %v1429 = vpack.c.b16 %v977, %v973
        %v1430 = vpack.c.b16 %v978, %v974
        %v1431 = vpack.c.b16 %v983, %v979
        %v1432 = vpack.c.b16 %v984, %v980
        %v1433 = vpack.c.b16 %v985, %v981
        %v1434 = vpack.c.b16 %v986, %v982
        %v1435 = vpack.c.b16 %v991, %v987
        %v1436 = vpack.c.b16 %v992, %v988
        %v1437 = vpack.c.b16 %v993, %v989
        %v1438 = vpack.c.b16 %v994, %v990
        %v1439 = vpack.c.b16 %v999, %v995
        %v1440 = vpack.c.b16 %v1000, %v996
        %v1441 = vpack.c.b16 %v1001, %v997
        %v1442 = vpack.c.b16 %v1002, %v998
        %v1443 = vpack.c.b16 %v1007, %v1003
        %v1444 = vpack.c.b16 %v1008, %v1004
        %v1445 = vpack.c.b16 %v1009, %v1005
        %v1446 = vpack.c.b16 %v1010, %v1006
        %v1447 = vpack.c.b16 %v1015, %v1011
        %v1448 = vpack.c.b16 %v1016, %v1012
        %v1449 = vpack.c.b16 %v1017, %v1013
        %v1450 = vpack.c.b16 %v1018, %v1014
        %v1451 = vpack.c.b16 %v1023, %v1019
        %v1452 = vpack.c.b16 %v1024, %v1020
        %v1453 = vpack.c.b16 %v1025, %v1021
        %v1454 = vpack.c.b16 %v1026, %v1022
        %v1455 = vpack.c.b16 %v1031, %v1027
        %v1456 = vpack.c.b16 %v1032, %v1028
        %v1457 = vpack.c.b16 %v1033, %v1029
        %v1458 = vpack.c.b16 %v1034, %v1030
        %v1459 = vpack.c.b16 %v1039, %v1035
        %v1460 = vpack.c.b16 %v1040, %v1036
        %v1461 = vpack.c.b16 %v1041, %v1037
        %v1462 = vpack.c.b16 %v1042, %v1038
        %v1463 = vpack.c.b16 %v1047, %v1043
        %v1464 = vpack.c.b16 %v1048, %v1044
        %v1465 = vpack.c.b16 %v1049, %v1045
        %v1466 = vpack.c.b16 %v1050, %v1046
        %v1467 = vpack.c.b16 %v1055, %v1051
        %v1468 = vpack.c.b16 %v1056, %v1052
        %v1469 = vpack.c.b16 %v1057, %v1053
        %v1470 = vpack.c.b16 %v1058, %v1054
        %v1471 = vpack.c.b16 %v1063, %v1059
        %v1472 = vpack.c.b16 %v1064, %v1060
        %v1473 = vpack.c.b16 %v1065, %v1061
        %v1474 = vpack.c.b16 %v1066, %v1062
        %v1475 = vpack.c.b16 %v1071, %v1067
        %v1476 = vpack.c.b16 %v1072, %v1068
        %v1477 = vpack.c.b16 %v1073, %v1069
        %v1478 = vpack.c.b16 %v1074, %v1070
        %v1479 = vpack.c.b16 %v1079, %v1075
        %v1480 = vpack.c.b16 %v1080, %v1076
        %v1481 = vpack.c.b16 %v1081, %v1077
        %v1482 = vpack.c.b16 %v1082, %v1078
        %v1483 = vpack.c.b16 %v1087, %v1083
        %v1484 = vpack.c.b16 %v1088, %v1084
        %v1485 = vpack.c.b16 %v1089, %v1085
        %v1486 = vpack.c.b16 %v1090, %v1086
        %v1487 = vpack.c.b16 %v1095, %v1091
        %v1488 = vpack.c.b16 %v1096, %v1092
        %v1489 = vpack.c.b16 %v1097, %v1093
        %v1490 = vpack.c.b16 %v1098, %v1094
        %v1491 = vpack.c.b16 %v1103, %v1099
        %v1492 = vpack.c.b16 %v1104, %v1100
        %v1493 = vpack.c.b16 %v1105, %v1101
        %v1494 = vpack.c.b16 %v1106, %v1102
        %v1495 = vpack.c.b16 %v1111, %v1107
        %v1496 = vpack.c.b16 %v1112, %v1108
        %v1497 = vpack.c.b16 %v1113, %v1109
        %v1498 = vpack.c.b16 %v1114, %v1110
        %v1499 = vpack.c.b16 %v1119, %v1115
        %v1500 = vpack.c.b16 %v1120, %v1116
        %v1501 = vpack.c.b16 %v1121, %v1117
        %v1502 = vpack.c.b16 %v1122, %v1118
        %v1503 = vpack.c.b16 %v1127, %v1123
        %v1504 = vpack.c.b16 %v1128, %v1124
        %v1505 = vpack.c.b16 %v1129, %v1125
        %v1506 = vpack.c.b16 %v1130, %v1126
        %v1507 = vpack.c.b16 %v1135, %v1131
        %v1508 = vpack.c.b16 %v1136, %v1132
        %v1509 = vpack.c.b16 %v1137, %v1133
        %v1510 = vpack.c.b16 %v1138, %v1134
        %v1511 = vpack.c.b16 %v1143, %v1139
        %v1512 = vpack.c.b16 %v1144, %v1140
        %v1513 = vpack.c.b16 %v1145, %v1141
        %v1514 = vpack.c.b16 %v1146, %v1142
        %v1515 = vpack.c.b16 %v1151, %v1147
        %v1516 = vpack.c.b16 %v1152, %v1148
        %v1517 = vpack.c.b16 %v1153, %v1149
        %v1518 = vpack.c.b16 %v1154, %v1150
        %v1519 = vpack.c.b16 %v1159, %v1155
        %v1520 = vpack.c.b16 %v1160, %v1156
        %v1521 = vpack.c.b16 %v1161, %v1157
        %v1522 = vpack.c.b16 %v1162, %v1158
        %v1523 = vpack.c.b16 %v1167, %v1163
        %v1524 = vpack.c.b16 %v1168, %v1164
        %v1525 = vpack.c.b16 %v1169, %v1165
        %v1526 = vpack.c.b16 %v1170, %v1166
        %v1527 = vpack.c.b16 %v1175, %v1171
        %v1528 = vpack.c.b16 %v1176, %v1172
        %v1529 = vpack.c.b16 %v1177, %v1173
        %v1530 = vpack.c.b16 %v1178, %v1174
        %v1531 = vpack.c.b16 %v1183, %v1179
        %v1532 = vpack.c.b16 %v1184, %v1180
        %v1533 = vpack.c.b16 %v1185, %v1181
        %v1534 = vpack.c.b16 %v1186, %v1182
        %v1535 = vpack.c.b16 %v1191, %v1187
        %v1536 = vpack.c.b16 %v1192, %v1188
        %v1537 = vpack.c.b16 %v1193, %v1189
        %v1538 = vpack.c.b16 %v1194, %v1190
        %v1539 = vpack.c.b16 %v1199, %v1195
        %v1540 = vpack.c.b16 %v1200, %v1196
        %v1541 = vpack.c.b16 %v1201, %v1197
        %v1542 = vpack.c.b16 %v1202, %v1198
        %v1543 = vpack.c.b16 %v1207, %v1203
        %v1544 = vpack.c.b16 %v1208, %v1204
        %v1545 = vpack.c.b16 %v1209, %v1205
        %v1546 = vpack.c.b16 %v1210, %v1206
        %v1547 = vpack.c.b16 %v1215, %v1211
        %v1548 = vpack.c.b16 %v1216, %v1212
        %v1549 = vpack.c.b16 %v1217, %v1213
        %v1550 = vpack.c.b16 %v1218, %v1214
        %v1551 = vpack.c.b16 %v1223, %v1219
        %v1552 = vpack.c.b16 %v1224, %v1220
        %v1553 = vpack.c.b16 %v1225, %v1221
        %v1554 = vpack.c.b16 %v1226, %v1222
        %v1555 = vpack.c.b16 %v1231, %v1227
        %v1556 = vpack.c.b16 %v1232, %v1228
        %v1557 = vpack.c.b16 %v1233, %v1229
        %v1558 = vpack.c.b16 %v1234, %v1230
        %v1559 = vpack.c.b16 %v1239, %v1235
        %v1560 = vpack.c.b16 %v1240, %v1236
        %v1561 = vpack.c.b16 %v1241, %v1237
        %v1562 = vpack.c.b16 %v1242, %v1238
        %v1563 = vpack.c.b16 %v1247, %v1243
        %v1564 = vpack.c.b16 %v1248, %v1244
        %v1565 = vpack.c.b16 %v1249, %v1245
        %v1566 = vpack.c.b16 %v1250, %v1246
        %v1567 = vpack.c.b16 %v1255, %v1251
        %v1568 = vpack.c.b16 %v1256, %v1252
        %v1569 = vpack.c.b16 %v1257, %v1253
        %v1570 = vpack.c.b16 %v1258, %v1254
        %v1571 = vpack.c.b16 %v1263, %v1259
        %v1572 = vpack.c.b16 %v1264, %v1260
        %v1573 = vpack.c.b16 %v1265, %v1261
        %v1574 = vpack.c.b16 %v1266, %v1262
        %v1575 = vpack.c.b16 %v1271, %v1267
        %v1576 = vpack.c.b16 %v1272, %v1268
        %v1577 = vpack.c.b16 %v1273, %v1269
        %v1578 = vpack.c.b16 %v1274, %v1270
        %v1579 = vpack.c.b16 %v1279, %v1275
        %v1580 = vpack.c.b16 %v1280, %v1276
        %v1581 = vpack.c.b16 %v1281, %v1277
        %v1582 = vpack.c.b16 %v1282, %v1278
        %v1583 = vpack.c.b16 %v1287, %v1283
        %v1584 = vpack.c.b16 %v1288, %v1284
        %v1585 = vpack.c.b16 %v1289, %v1285
        %v1586 = vpack.c.b16 %v1290, %v1286
        %v1587 = vpack.c.b16 %v1295, %v1291
        %v1588 = vpack.c.b16 %v1296, %v1292
        %v1589 = vpack.c.b16 %v1297, %v1293
        %v1590 = vpack.c.b16 %v1298, %v1294
        %v1591 = vpack.c.b16 %v1303, %v1299
        %v1592 = vpack.c.b16 %v1304, %v1300
        %v1593 = vpack.c.b16 %v1305, %v1301
        %v1594 = vpack.c.b16 %v1306, %v1302
        %v1595 = vpack.c.b16 %v1311, %v1307
        %v1596 = vpack.c.b16 %v1312, %v1308
        %v1597 = vpack.c.b16 %v1313, %v1309
        %v1598 = vpack.c.b16 %v1314, %v1310
        %v1599 = vpack.c.b16 %v1319, %v1315
        %v1600 = vpack.c.b16 %v1320, %v1316
        %v1601 = vpack.c.b16 %v1321, %v1317
        %v1602 = vpack.c.b16 %v1322, %v1318
        %v1603 = vpack.c.b16 %v1327, %v1323
        %v1604 = vpack.c.b16 %v1328, %v1324
        %v1605 = vpack.c.b16 %v1329, %v1325
        %v1606 = vpack.c.b16 %v1330, %v1326
        %v1607 = vpack.c.b16 %v1335, %v1331
        %v1608 = vpack.c.b16 %v1336, %v1332
        %v1609 = vpack.c.b16 %v1337, %v1333
        %v1610 = vpack.c.b16 %v1338, %v1334
        %v1611 = vpack.c.b16 %v1343, %v1339
        %v1612 = vpack.c.b16 %v1344, %v1340
        %v1613 = vpack.c.b16 %v1345, %v1341
        %v1614 = vpack.c.b16 %v1346, %v1342
        %v1615 = vpack.c.b16 %v1351, %v1347
        %v1616 = vpack.c.b16 %v1352, %v1348
        %v1617 = vpack.c.b16 %v1353, %v1349
        %v1618 = vpack.c.b16 %v1354, %v1350
        %v1619 = vpack.c.b16 %v1359, %v1355
        %v1620 = vpack.c.b16 %v1360, %v1356
        %v1621 = vpack.c.b16 %v1361, %v1357
        %v1622 = vpack.c.b16 %v1362, %v1358
        %v1623 = vpack.c.b16 %v1367, %v1363
        %v1624 = vpack.c.b16 %v1368, %v1364
        %v1625 = vpack.c.b16 %v1369, %v1365
        %v1626 = vpack.c.b16 %v1370, %v1366
        %1883 = vmatprep.subr.bf16.mxu0 %v1372
        %1884 = vmatpush1.bf16.msra.mxu0 %v1371
        %1885 = vmatprep.subr.bf16.mxu0 %v1376
        %1886 = vmatpush1.bf16.msra.mxu0 %v1375
        %1887 = vmatprep.subr.bf16.mxu0 %v1380
        %1888 = vmatpush1.bf16.msra.mxu0 %v1379
        %1889 = vmatprep.subr.bf16.mxu0 %v1384
        %1890 = vmatpush1.bf16.msra.mxu0 %v1383
        %1891 = vmatprep.subr.bf16.mxu0 %v1388
        %1892 = vmatpush1.bf16.msra.mxu0 %v1387
        %1893 = vmatprep.subr.bf16.mxu0 %v1392
        %1894 = vmatpush1.bf16.msra.mxu0 %v1391
        %1895 = vmatprep.subr.bf16.mxu0 %v1396
        %1896 = vmatpush1.bf16.msra.mxu0 %v1395
        %1897 = vmatprep.subr.bf16.mxu0 %v1400
        %1898 = vmatpush1.bf16.msra.mxu0 %v1399
        %1899 = vmatprep.subr.bf16.mxu0 %v1404
        %1900 = vmatpush1.bf16.msra.mxu0 %v1403
        %1901 = vmatprep.subr.bf16.mxu0 %v1408
        %1902 = vmatpush1.bf16.msra.mxu0 %v1407
        %1903 = vmatprep.subr.bf16.mxu0 %v1412
        %1904 = vmatpush1.bf16.msra.mxu0 %v1411
        %1905 = vmatprep.subr.bf16.mxu0 %v1416
        %1906 = vmatpush1.bf16.msra.mxu0 %v1415
        %1907 = vmatprep.subr.bf16.mxu0 %v1420
        %1908 = vmatpush1.bf16.msra.mxu0 %v1419
        %1909 = vmatprep.subr.bf16.mxu0 %v1424
        %1910 = vmatpush1.bf16.msra.mxu0 %v1423
        %1911 = vmatprep.subr.bf16.mxu0 %v1428
        %1912 = vmatpush1.bf16.msra.mxu0 %v1427
        %1913 = vmatprep.subr.bf16.mxu0 %v1432
        %1914 = vmatpush1.bf16.msra.mxu0 %v1431
        %1915 = vmatprep.mubr.bf16.mxu0 %v588
        %1916 = vmatmul.mubr.bf16.gmra.mrb[0].mxu0 %v587
        %v1917 = vpop.f32.mrb[0].mxu0
        %v1918 = vadd.f32 0.0, %v1917
        %v1919 = vpop.f32.mrb[0].mxu0
        %v1920 = vadd.f32 0.0, %v1919
        %v1921 = vpop.f32.mrb[0].mxu0
        %v1922 = vadd.f32 0.0, %v1921
        %v1923 = vpop.f32.mrb[0].mxu0
        %v1924 = vadd.f32 0.0, %v1923
        %1925 = vdwg.mxu0
        %1926 = vmatprep.subr.bf16.mxu0 %v1436
        %1927 = vmatpush1.bf16.msra.mxu0 %v1435
        %1928 = vmatprep.subr.bf16.mxu0 %v1440
        %1929 = vmatpush1.bf16.msra.mxu0 %v1439
        %1930 = vmatprep.subr.bf16.mxu0 %v1444
        %1931 = vmatpush1.bf16.msra.mxu0 %v1443
        %1932 = vmatprep.subr.bf16.mxu0 %v1448
        %1933 = vmatpush1.bf16.msra.mxu0 %v1447
        %1934 = vmatprep.subr.bf16.mxu0 %v1452
        %1935 = vmatpush1.bf16.msra.mxu0 %v1451
        %1936 = vmatprep.subr.bf16.mxu0 %v1456
        %1937 = vmatpush1.bf16.msra.mxu0 %v1455
        %1938 = vmatprep.subr.bf16.mxu0 %v1460
        %1939 = vmatpush1.bf16.msra.mxu0 %v1459
        %1940 = vmatprep.subr.bf16.mxu0 %v1464
        %1941 = vmatpush1.bf16.msra.mxu0 %v1463
        %1942 = vmatprep.subr.bf16.mxu0 %v1468
        %1943 = vmatpush1.bf16.msra.mxu0 %v1467
        %1944 = vmatprep.subr.bf16.mxu0 %v1472
        %1945 = vmatpush1.bf16.msra.mxu0 %v1471
        %1946 = vmatprep.subr.bf16.mxu0 %v1476
        %1947 = vmatpush1.bf16.msra.mxu0 %v1475
        %1948 = vmatprep.subr.bf16.mxu0 %v1480
        %1949 = vmatpush1.bf16.msra.mxu0 %v1479
        %1950 = vmatprep.subr.bf16.mxu0 %v1484
        %1951 = vmatpush1.bf16.msra.mxu0 %v1483
        %1952 = vmatprep.subr.bf16.mxu0 %v1488
        %1953 = vmatpush1.bf16.msra.mxu0 %v1487
        %1954 = vmatprep.subr.bf16.mxu0 %v1492
        %1955 = vmatpush1.bf16.msra.mxu0 %v1491
        %1956 = vmatprep.subr.bf16.mxu0 %v1496
        %1957 = vmatpush1.bf16.msra.mxu0 %v1495
        %1958 = vmatprep.mubr.bf16.mxu0 %v590
        %1959 = vmatmul.mubr.bf16.gmra.mrb[0].mxu0 %v589
        %v1960 = vpop.f32.mrb[0].mxu0
        %v1961 = vadd.f32 %v1918, %v1960
        %v1962 = vpop.f32.mrb[0].mxu0
        %v1963 = vadd.f32 %v1920, %v1962
        %v1964 = vpop.f32.mrb[0].mxu0
        %v1965 = vadd.f32 %v1922, %v1964
        %v1966 = vpop.f32.mrb[0].mxu0
        %v1967 = vadd.f32 %v1924, %v1966
        %1968 = vdwg.mxu0
        %1969 = vmatprep.subr.bf16.mxu0 %v1500
        %1970 = vmatpush1.bf16.msra.mxu0 %v1499
        %1971 = vmatprep.subr.bf16.mxu0 %v1504
        %1972 = vmatpush1.bf16.msra.mxu0 %v1503
        %1973 = vmatprep.subr.bf16.mxu0 %v1508
        %1974 = vmatpush1.bf16.msra.mxu0 %v1507
        %1975 = vmatprep.subr.bf16.mxu0 %v1512
        %1976 = vmatpush1.bf16.msra.mxu0 %v1511
        %1977 = vmatprep.subr.bf16.mxu0 %v1516
        %1978 = vmatpush1.bf16.msra.mxu0 %v1515
        %1979 = vmatprep.subr.bf16.mxu0 %v1520
        %1980 = vmatpush1.bf16.msra.mxu0 %v1519
        %1981 = vmatprep.subr.bf16.mxu0 %v1524
        %1982 = vmatpush1.bf16.msra.mxu0 %v1523
        %1983 = vmatprep.subr.bf16.mxu0 %v1528
        %1984 = vmatpush1.bf16.msra.mxu0 %v1527
        %1985 = vmatprep.subr.bf16.mxu0 %v1532
        %1986 = vmatpush1.bf16.msra.mxu0 %v1531
        %1987 = vmatprep.subr.bf16.mxu0 %v1536
        %1988 = vmatpush1.bf16.msra.mxu0 %v1535
        %1989 = vmatprep.subr.bf16.mxu0 %v1540
        %1990 = vmatpush1.bf16.msra.mxu0 %v1539
        %1991 = vmatprep.subr.bf16.mxu0 %v1544
        %1992 = vmatpush1.bf16.msra.mxu0 %v1543
        %1993 = vmatprep.subr.bf16.mxu0 %v1548
        %1994 = vmatpush1.bf16.msra.mxu0 %v1547
        %1995 = vmatprep.subr.bf16.mxu0 %v1552
        %1996 = vmatpush1.bf16.msra.mxu0 %v1551
        %1997 = vmatprep.subr.bf16.mxu0 %v1556
        %1998 = vmatpush1.bf16.msra.mxu0 %v1555
        %1999 = vmatprep.subr.bf16.mxu0 %v1560
        %2000 = vmatpush1.bf16.msra.mxu0 %v1559
        %2001 = vmatprep.mubr.bf16.mxu0 %v592
        %2002 = vmatmul.mubr.bf16.gmra.mrb[0].mxu0 %v591
        %v2003 = vpop.f32.mrb[0].mxu0
        %v2004 = vadd.f32 %v1961, %v2003
        %v2005 = vpop.f32.mrb[0].mxu0
        %v2006 = vadd.f32 %v1963, %v2005
        %v2007 = vpop.f32.mrb[0].mxu0
        %v2008 = vadd.f32 %v1965, %v2007
        %v2009 = vpop.f32.mrb[0].mxu0
        %v2010 = vadd.f32 %v1967, %v2009
        %2011 = vdwg.mxu0
        %2012 = vmatprep.subr.bf16.mxu0 %v1564
        %2013 = vmatpush1.bf16.msra.mxu0 %v1563
        %2014 = vmatprep.subr.bf16.mxu0 %v1568
        %2015 = vmatpush1.bf16.msra.mxu0 %v1567
        %2016 = vmatprep.subr.bf16.mxu0 %v1572
        %2017 = vmatpush1.bf16.msra.mxu0 %v1571
        %2018 = vmatprep.subr.bf16.mxu0 %v1576
        %2019 = vmatpush1.bf16.msra.mxu0 %v1575
        %2020 = vmatprep.subr.bf16.mxu0 %v1580
        %2021 = vmatpush1.bf16.msra.mxu0 %v1579
        %2022 = vmatprep.subr.bf16.mxu0 %v1584
        %2023 = vmatpush1.bf16.msra.mxu0 %v1583
        %2024 = vmatprep.subr.bf16.mxu0 %v1588
        %2025 = vmatpush1.bf16.msra.mxu0 %v1587
        %2026 = vmatprep.subr.bf16.mxu0 %v1592
        %2027 = vmatpush1.bf16.msra.mxu0 %v1591
        %2028 = vmatprep.subr.bf16.mxu0 %v1596
        %2029 = vmatpush1.bf16.msra.mxu0 %v1595
        %2030 = vmatprep.subr.bf16.mxu0 %v1600
        %2031 = vmatpush1.bf16.msra.mxu0 %v1599
        %2032 = vmatprep.subr.bf16.mxu0 %v1604
        %2033 = vmatpush1.bf16.msra.mxu0 %v1603
        %2034 = vmatprep.subr.bf16.mxu0 %v1608
        %2035 = vmatpush1.bf16.msra.mxu0 %v1607
        %2036 = vmatprep.subr.bf16.mxu0 %v1612
        %2037 = vmatpush1.bf16.msra.mxu0 %v1611
        %2038 = vmatprep.subr.bf16.mxu0 %v1616
        %2039 = vmatpush1.bf16.msra.mxu0 %v1615
        %2040 = vmatprep.subr.bf16.mxu0 %v1620
        %2041 = vmatpush1.bf16.msra.mxu0 %v1619
        %2042 = vmatprep.subr.bf16.mxu0 %v1624
        %2043 = vmatpush1.bf16.msra.mxu0 %v1623
        %2044 = vmatprep.mubr.bf16.mxu0 %v594
        %2045 = vmatmul.mubr.bf16.gmra.mrb[0].mxu0 %v593
        %v2046 = vpop.f32.mrb[0].mxu0
        %v2047 = vadd.f32 %v2004, %v2046
        %v2048 = vpop.f32.mrb[0].mxu0
        %v2049 = vadd.f32 %v2006, %v2048
        %v2050 = vpop.f32.mrb[0].mxu0
        %v2051 = vadd.f32 %v2008, %v2050
        %v2052 = vpop.f32.mrb[0].mxu0
        %v2053 = vadd.f32 %v2010, %v2052
        %2054 = vdwg.mxu0
        %2055 = vmatprep.subr.bf16.mxu0 %v1374
        %2056 = vmatpush1.bf16.msra.mxu0 %v1373
        %2057 = vmatprep.subr.bf16.mxu0 %v1378
        %2058 = vmatpush1.bf16.msra.mxu0 %v1377
        %2059 = vmatprep.subr.bf16.mxu0 %v1382
        %2060 = vmatpush1.bf16.msra.mxu0 %v1381
        %2061 = vmatprep.subr.bf16.mxu0 %v1386
        %2062 = vmatpush1.bf16.msra.mxu0 %v1385
        %2063 = vmatprep.subr.bf16.mxu0 %v1390
        %2064 = vmatpush1.bf16.msra.mxu0 %v1389
        %2065 = vmatprep.subr.bf16.mxu0 %v1394
        %2066 = vmatpush1.bf16.msra.mxu0 %v1393
        %2067 = vmatprep.subr.bf16.mxu0 %v1398
        %2068 = vmatpush1.bf16.msra.mxu0 %v1397
        %2069 = vmatprep.subr.bf16.mxu0 %v1402
        %2070 = vmatpush1.bf16.msra.mxu0 %v1401
        %2071 = vmatprep.subr.bf16.mxu0 %v1406
        %2072 = vmatpush1.bf16.msra.mxu0 %v1405
        %2073 = vmatprep.subr.bf16.mxu0 %v1410
        %2074 = vmatpush1.bf16.msra.mxu0 %v1409
        %2075 = vmatprep.subr.bf16.mxu0 %v1414
        %2076 = vmatpush1.bf16.msra.mxu0 %v1413
        %2077 = vmatprep.subr.bf16.mxu0 %v1418
        %2078 = vmatpush1.bf16.msra.mxu0 %v1417
        %2079 = vmatprep.subr.bf16.mxu0 %v1422
        %2080 = vmatpush1.bf16.msra.mxu0 %v1421
        %2081 = vmatprep.subr.bf16.mxu0 %v1426
        %2082 = vmatpush1.bf16.msra.mxu0 %v1425
        %2083 = vmatprep.subr.bf16.mxu0 %v1430
        %2084 = vmatpush1.bf16.msra.mxu0 %v1429
        %2085 = vmatprep.subr.bf16.mxu0 %v1434
        %2086 = vmatpush1.bf16.msra.mxu0 %v1433
        %2087 = vmatprep.mubr.bf16.mxu0 %v588
        %2088 = vmatmul.mubr.bf16.gmra.mrb[0].mxu0 %v587
        %v2089 = vpop.f32.mrb[0].mxu0
        %v2090 = vadd.f32 0.0, %v2089
        %v2091 = vpop.f32.mrb[0].mxu0
        %v2092 = vadd.f32 0.0, %v2091
        %v2093 = vpop.f32.mrb[0].mxu0
        %v2094 = vadd.f32 0.0, %v2093
        %v2095 = vpop.f32.mrb[0].mxu0
        %v2096 = vadd.f32 0.0, %v2095
        %2097 = vdwg.mxu0
        %2098 = vmatprep.subr.bf16.mxu0 %v1438
        %2099 = vmatpush1.bf16.msra.mxu0 %v1437
        %2100 = vmatprep.subr.bf16.mxu0 %v1442
        %2101 = vmatpush1.bf16.msra.mxu0 %v1441
        %2102 = vmatprep.subr.bf16.mxu0 %v1446
        %2103 = vmatpush1.bf16.msra.mxu0 %v1445
        %2104 = vmatprep.subr.bf16.mxu0 %v1450
        %2105 = vmatpush1.bf16.msra.mxu0 %v1449
        %2106 = vmatprep.subr.bf16.mxu0 %v1454
        %2107 = vmatpush1.bf16.msra.mxu0 %v1453
        %2108 = vmatprep.subr.bf16.mxu0 %v1458
        %2109 = vmatpush1.bf16.msra.mxu0 %v1457
        %2110 = vmatprep.subr.bf16.mxu0 %v1462
        %2111 = vmatpush1.bf16.msra.mxu0 %v1461
        %2112 = vmatprep.subr.bf16.mxu0 %v1466
        %2113 = vmatpush1.bf16.msra.mxu0 %v1465
        %2114 = vmatprep.subr.bf16.mxu0 %v1470
        %2115 = vmatpush1.bf16.msra.mxu0 %v1469
        %2116 = vmatprep.subr.bf16.mxu0 %v1474
        %2117 = vmatpush1.bf16.msra.mxu0 %v1473
        %2118 = vmatprep.subr.bf16.mxu0 %v1478
        %2119 = vmatpush1.bf16.msra.mxu0 %v1477
        %2120 = vmatprep.subr.bf16.mxu0 %v1482
        %2121 = vmatpush1.bf16.msra.mxu0 %v1481
        %2122 = vmatprep.subr.bf16.mxu0 %v1486
        %2123 = vmatpush1.bf16.msra.mxu0 %v1485
        %2124 = vmatprep.subr.bf16.mxu0 %v1490
        %2125 = vmatpush1.bf16.msra.mxu0 %v1489
        %2126 = vmatprep.subr.bf16.mxu0 %v1494
        %2127 = vmatpush1.bf16.msra.mxu0 %v1493
        %2128 = vmatprep.subr.bf16.mxu0 %v1498
        %2129 = vmatpush1.bf16.msra.mxu0 %v1497
        %2130 = vmatprep.mubr.bf16.mxu0 %v590
        %2131 = vmatmul.mubr.bf16.gmra.mrb[0].mxu0 %v589
        %v2132 = vpop.f32.mrb[0].mxu0
        %v2133 = vadd.f32 %v2090, %v2132
        %v2134 = vpop.f32.mrb[0].mxu0
        %v2135 = vadd.f32 %v2092, %v2134
        %v2136 = vpop.f32.mrb[0].mxu0
        %v2137 = vadd.f32 %v2094, %v2136
        %v2138 = vpop.f32.mrb[0].mxu0
        %v2139 = vadd.f32 %v2096, %v2138
        %2140 = vdwg.mxu0
        %2141 = vmatprep.subr.bf16.mxu0 %v1502
        %2142 = vmatpush1.bf16.msra.mxu0 %v1501
        %2143 = vmatprep.subr.bf16.mxu0 %v1506
        %2144 = vmatpush1.bf16.msra.mxu0 %v1505
        %2145 = vmatprep.subr.bf16.mxu0 %v1510
        %2146 = vmatpush1.bf16.msra.mxu0 %v1509
        %2147 = vmatprep.subr.bf16.mxu0 %v1514
        %2148 = vmatpush1.bf16.msra.mxu0 %v1513
        %2149 = vmatprep.subr.bf16.mxu0 %v1518
        %2150 = vmatpush1.bf16.msra.mxu0 %v1517
        %2151 = vmatprep.subr.bf16.mxu0 %v1522
        %2152 = vmatpush1.bf16.msra.mxu0 %v1521
        %2153 = vmatprep.subr.bf16.mxu0 %v1526
        %2154 = vmatpush1.bf16.msra.mxu0 %v1525
        %2155 = vmatprep.subr.bf16.mxu0 %v1530
        %2156 = vmatpush1.bf16.msra.mxu0 %v1529
        %2157 = vmatprep.subr.bf16.mxu0 %v1534
        %2158 = vmatpush1.bf16.msra.mxu0 %v1533
        %2159 = vmatprep.subr.bf16.mxu0 %v1538
        %2160 = vmatpush1.bf16.msra.mxu0 %v1537
        %2161 = vmatprep.subr.bf16.mxu0 %v1542
        %2162 = vmatpush1.bf16.msra.mxu0 %v1541
        %2163 = vmatprep.subr.bf16.mxu0 %v1546
        %2164 = vmatpush1.bf16.msra.mxu0 %v1545
        %2165 = vmatprep.subr.bf16.mxu0 %v1550
        %2166 = vmatpush1.bf16.msra.mxu0 %v1549
        %2167 = vmatprep.subr.bf16.mxu0 %v1554
        %2168 = vmatpush1.bf16.msra.mxu0 %v1553
        %2169 = vmatprep.subr.bf16.mxu0 %v1558
        %2170 = vmatpush1.bf16.msra.mxu0 %v1557
        %2171 = vmatprep.subr.bf16.mxu0 %v1562
        %2172 = vmatpush1.bf16.msra.mxu0 %v1561
        %2173 = vmatprep.mubr.bf16.mxu0 %v592
        %2174 = vmatmul.mubr.bf16.gmra.mrb[0].mxu0 %v591
        %v2175 = vpop.f32.mrb[0].mxu0
        %v2176 = vadd.f32 %v2133, %v2175
        %v2177 = vpop.f32.mrb[0].mxu0
        %v2178 = vadd.f32 %v2135, %v2177
        %v2179 = vpop.f32.mrb[0].mxu0
        %v2180 = vadd.f32 %v2137, %v2179
        %v2181 = vpop.f32.mrb[0].mxu0
        %v2182 = vadd.f32 %v2139, %v2181
        %2183 = vdwg.mxu0
        %2184 = vmatprep.subr.bf16.mxu0 %v1566
        %2185 = vmatpush1.bf16.msra.mxu0 %v1565
        %2186 = vmatprep.subr.bf16.mxu0 %v1570
        %2187 = vmatpush1.bf16.msra.mxu0 %v1569
        %2188 = vmatprep.subr.bf16.mxu0 %v1574
        %2189 = vmatpush1.bf16.msra.mxu0 %v1573
        %2190 = vmatprep.subr.bf16.mxu0 %v1578
        %2191 = vmatpush1.bf16.msra.mxu0 %v1577
        %2192 = vmatprep.subr.bf16.mxu0 %v1582
        %2193 = vmatpush1.bf16.msra.mxu0 %v1581
        %2194 = vmatprep.subr.bf16.mxu0 %v1586
        %2195 = vmatpush1.bf16.msra.mxu0 %v1585
        %2196 = vmatprep.subr.bf16.mxu0 %v1590
        %2197 = vmatpush1.bf16.msra.mxu0 %v1589
        %2198 = vmatprep.subr.bf16.mxu0 %v1594
        %2199 = vmatpush1.bf16.msra.mxu0 %v1593
        %2200 = vmatprep.subr.bf16.mxu0 %v1598
        %2201 = vmatpush1.bf16.msra.mxu0 %v1597
        %2202 = vmatprep.subr.bf16.mxu0 %v1602
        %2203 = vmatpush1.bf16.msra.mxu0 %v1601
        %2204 = vmatprep.subr.bf16.mxu0 %v1606
        %2205 = vmatpush1.bf16.msra.mxu0 %v1605
        %2206 = vmatprep.subr.bf16.mxu0 %v1610
        %2207 = vmatpush1.bf16.msra.mxu0 %v1609
        %2208 = vmatprep.subr.bf16.mxu0 %v1614
        %2209 = vmatpush1.bf16.msra.mxu0 %v1613
        %2210 = vmatprep.subr.bf16.mxu0 %v1618
        %2211 = vmatpush1.bf16.msra.mxu0 %v1617
        %2212 = vmatprep.subr.bf16.mxu0 %v1622
        %2213 = vmatpush1.bf16.msra.mxu0 %v1621
        %2214 = vmatprep.subr.bf16.mxu0 %v1626
        %2215 = vmatpush1.bf16.msra.mxu0 %v1625
        %2216 = vmatprep.mubr.bf16.mxu0 %v594
        %2217 = vmatmul.mubr.bf16.gmra.mrb[0].mxu0 %v593
        %v2218 = vpop.f32.mrb[0].mxu0
        %v2219 = vadd.f32 %v2176, %v2218
        %v2220 = vpop.f32.mrb[0].mxu0
        %v2221 = vadd.f32 %v2178, %v2220
        %v2222 = vpop.f32.mrb[0].mxu0
        %v2223 = vadd.f32 %v2180, %v2222
        %v2224 = vpop.f32.mrb[0].mxu0
        %v2225 = vadd.f32 %v2182, %v2224
        %2226 = vdwg.mxu0
        %v2227 = vadd.f32 %v291, %v2047
        %v2228 = vadd.f32 %v292, %v2049
        %v2229 = vadd.f32 %v293, %v2219
        %v2230 = vadd.f32 %v294, %v2221
        %v2231 = vadd.f32 %v295, %v2051
        %v2232 = vadd.f32 %v296, %v2053
        %v2233 = vadd.f32 %v297, %v2223
        %v2234 = vadd.f32 %v298, %v2225
        %2235 = vst [vmem:[#allocation2] sm:$0xff] %v2227
        %2236 = vst [vmem:[#allocation2 + $0x8] sm:$0xff] %v2228
        %2237 = vst [vmem:[#allocation2 + $0x10] sm:$0xff] %v2229
        %2238 = vst [vmem:[#allocation2 + $0x18] sm:$0xff] %v2230
        %2239 = vst [vmem:[#allocation2 + $0x20] sm:$0xff] %v2231
        %2240 = vst [vmem:[#allocation2 + $0x28] sm:$0xff] %v2232
        %2241 = vst [vmem:[#allocation2 + $0x30] sm:$0xff] %v2233
        %2242 = vst [vmem:[#allocation2 + $0x38] sm:$0xff] %v2234
        %p2243 = scmp.eq.s32.totalorder %s19, 1
        // Predicated region
        $region60: #{dense_lstm_forward.4} parent=50 // pred_check
          %p2244 = pneg %p2243
        $region61: #{dense_lstm_forward.4} parent=50 // pred_check_branch
          %2246 = sbr.rel (%p2244) target = $region63
        $region62: #{dense_lstm_forward.4} parent=50 // pred_region
          %v2247 = vld [vmem:[#allocation2] sm:$0xff]
          %v2248 = vld [vmem:[#allocation2 + $0x8] sm:$0xff]
          %v2249 = vld [vmem:[#allocation2 + $0x10] sm:$0xff]
          %v2250 = vld [vmem:[#allocation2 + $0x18] sm:$0xff]
          %v2251 = vld [vmem:[#allocation2 + $0x20] sm:$0xff]
          %v2252 = vld [vmem:[#allocation2 + $0x28] sm:$0xff]
          %v2253 = vld [vmem:[#allocation2 + $0x30] sm:$0xff]
          %v2254 = vld [vmem:[#allocation2 + $0x38] sm:$0xff]
          %v2255 = vld [vmem:[%s271] sm:$0xf]
          %v2257 = vlaneseq
          %v2258 = vshrl.u32 %v2257, 7
          %v2259 = vsub.s32 0, %v2258
          %v2260 = vrot.slane %v2255, %v2259
          %v2261 = vlaneseq
          %v2262 = vshrl.u32 %v2261, 7
          %v2263 = vsub.s32 1, %v2262
          %v2264 = vrot.slane %v2255, %v2263
          %v2265 = vlaneseq
          %v2266 = vshrl.u32 %v2265, 7
          %v2267 = vsub.s32 2, %v2266
          %v2268 = vrot.slane %v2255, %v2267
          %v2269 = vlaneseq
          %v2270 = vshrl.u32 %v2269, 7
          %v2271 = vsub.s32 3, %v2270
          %v2272 = vrot.slane %v2255, %v2271
          %v2277 = vadd.f32 %v2247, %v2260
          %v2278 = vadd.f32 %v2248, %v2264
          %v2279 = vadd.f32 %v2249, %v2268
          %v2280 = vadd.f32 %v2250, %v2272
          %v2281 = vadd.f32 %v2251, %v2260
          %v2282 = vadd.f32 %v2252, %v2264
          %v2283 = vadd.f32 %v2253, %v2268
          %v2284 = vadd.f32 %v2254, %v2272
          %v2285 = vpack.c.bf16 %v2281, %v2277
          %v2286 = vpack.c.bf16 %v2282, %v2278
          %v2287 = vpack.c.bf16 %v2283, %v2279
          %v2288 = vpack.c.bf16 %v2284, %v2280
          %v2293 = vunpack.c.l.b16 %v2285
          %v2294 = vunpack.c.l.b16 %v2286
          %v2295 = vunpack.c.l.b16 %v2287
          %v2296 = vunpack.c.l.b16 %v2288
          %v2297 = vunpack.c.h.b16 %v2285
          %v2298 = vunpack.c.h.b16 %v2286
          %v2299 = vunpack.c.h.b16 %v2287
          %v2300 = vunpack.c.h.b16 %v2288
          %v2301 = vpack.c.b16 %v2294, %v2293
          %v2302 = vpack.c.b16 %v2296, %v2295
          %v2303 = vpack.c.b16 %v2298, %v2297
          %v2304 = vpack.c.b16 %v2300, %v2299
          %2309 = vst [vmem:[%s277] sm:$0xff] %v2301
          %2310 = vst [vmem:[%s277 + $0x8] sm:$0xff] %v2302
          %2311 = vst [vmem:[%s277 + $0x10] sm:$0xff] %v2303
          %2312 = vst [vmem:[%s277 + $0x18] sm:$0xff] %v2304
        $region63: #{dense_lstm_forward.4} parent=50 // pred_fallthru
          _
        %s2313 = smul.u32 4, %s18
        %p2314 = scmp.lt.s32.totalorder %s2313, 3
        %s2315 = scalar_select %p2314, %s2313, 3
        %s2316 = smul.addr %s2315, 4
        %s2317 = scalar_lea.vmem %s3, %s2316
        // Predicated region
        $region64: #{dense_lstm_forward.4} parent=50 // pred_check
          %p2318 = pneg %p124
        $region65: #{dense_lstm_forward.4} parent=50 // pred_check_branch
          %2320 = sbr.rel (%p2318) target = $region67
        $region66: #{dense_lstm_forward.4} parent=50 // pred_region
          %s2321 = smul.u32 4, %s18
        $region67: #{dense_lstm_forward.4} parent=50 // pred_fallthru
          _
        // Predicated region
        $region68: #{dense_lstm_forward.4} parent=50 // pred_check
          %p2322 = pneg %p124
        $region69: #{dense_lstm_forward.4} parent=50 // pred_check_branch
          %2324 = sbr.rel (%p2322) target = $region71
        $region70: #{dense_lstm_forward.4} parent=50 // pred_region
          %s2325 = smul.u32 4, %s18
          %p2326 = scmp.lt.s32.totalorder %s2325, 3
          %s2327 = scalar_select %p2326, %s2325, 3
          %s2328 = smul.addr %s2327, 4
          %s2329 = scalar_lea.vmem %s3, %s2328
        $region71: #{dense_lstm_forward.4} parent=50 // pred_fallthru
          _
      $region51: #{dense_lstm_forward.4} parent=5 // pred_fallthru
        _
      %p2330 = scmp.le.s32.totalorder 2, %s9
      // Predicated region
      $region72: #{dense_lstm_forward.4} parent=5 // pred_check
        %p2331 = pneg %p2330
      $region73: #{dense_lstm_forward.4} parent=5 // pred_check_branch
        %2333 = sbr.rel (%p2331) target = $region75
      $region74: #{dense_lstm_forward.4} parent=5 // pred_region
        %s2334 = ssub.s32 %s9, 2
      $region75: #{dense_lstm_forward.4} parent=5 // pred_fallthru
        _
    $region6: #{dense_lstm_forward.4} parent=1 // loop_footer
      %s13 = sadd.s32 1, %s9
    $region7: #{dense_lstm_forward.4} parent=1 // loop_footer_branch
      %8 = sbr.rel target = $region3
    $region8: #{dense_lstm_forward.4} parent=1 // loop_exit
      _

// kernel: dense_lstm_forward.5
$region0: #{dense_lstm_forward.5}
  #allocation0 [shape = 'u32[]', space=smem, size = 0x4, offset = 0x4, fixed_abs, tag = 'smem constant byte address 0x4 - core index']
  #allocation1 [shape = 'u32[144,128]{1,0:T(1,128)}', space=vmem, size = 0x12000, scoped, tag = 'internal scratch']
  #allocation2 [shape = 'f32[1,1]{1,0:T(1,128)S(1)}', space=vmem, size = 0x200, scoped, tag = 'scoped memory for dense_lstm_forward.5']
  %s0 = inlined_call_operand.vmem [shape: bf16[8,8,512], index: 0, kind: input, shape index: {}]
  %s1 = inlined_call_operand.vmem [shape: f32[3,8,128], index: 1, kind: input, shape index: {}]
  %s2 = inlined_call_operand.vmem [shape: f32[3,8,128], index: 2, kind: input, shape index: {}]
  %s3 = inlined_call_operand.vmem [shape: bf16[128,512], index: 3, kind: input, shape index: {}]
  %s4 = inlined_call_operand.vmem [shape: bf16[2,256,512], index: 4, kind: input, shape index: {}]
  %s5 = inlined_call_operand.vmem [shape: f32[2,1,512], index: 5, kind: input, shape index: {}]
  %s6 = inlined_call_operand.vmem [shape: f32[128,64], index: 6, kind: input, shape index: {}]
  %s7 = inlined_call_operand.vmem [shape: f32[1,64], index: 7, kind: input, shape index: {}]
  %s8 = inlined_call_operand.vmem [shape: f32[64,1], index: 8, kind: input, shape index: {}]
  %s9 = inlined_call_operand.<no memory space> [shape: f32[1,1], index: 9, kind: input, shape index: {}]
  %s10 = inlined_call_operand.vmem [shape: f32[8,1], index: 10, kind: output, shape index: {}]
  %s11 = sld [smem:[#allocation0]]
  $region50: #{dense_lstm_forward.5} parent=0
    _
  %s13 = ssub.s32 1, %s11
  %s14 = scalar_select 0, %s13, %s11
  %v15 = vstv %s9
  %16 = vst [vmem:[#allocation2] sm:$0x1] %v15
  // Predicated region
  $region2: #{dense_lstm_forward.5} parent=0 // pred_check
    _
  $region3: #{dense_lstm_forward.5} parent=0 // pred_check_branch
    %18 = sbr.rel (0) target = $region5
  $region4: #{dense_lstm_forward.5} parent=0 // pred_region
    _
  $region5: #{dense_lstm_forward.5} parent=0 // pred_fallthru
    _
  // Predicated region
  $region6: #{dense_lstm_forward.5} parent=0 // pred_check
    _
  $region7: #{dense_lstm_forward.5} parent=0 // pred_check_branch
    %20 = sbr.rel (0) target = $region9
  $region8: #{dense_lstm_forward.5} parent=0 // pred_region
    _
  $region9: #{dense_lstm_forward.5} parent=0 // pred_fallthru
    _
  // Predicated region
  $region10: #{dense_lstm_forward.5} parent=0 // pred_check
    _
  $region11: #{dense_lstm_forward.5} parent=0 // pred_check_branch
    %22 = sbr.rel (0) target = $region13
  $region12: #{dense_lstm_forward.5} parent=0 // pred_region
    _
  $region13: #{dense_lstm_forward.5} parent=0 // pred_fallthru
    _
  // Predicated region
  $region14: #{dense_lstm_forward.5} parent=0 // pred_check
    _
  $region15: #{dense_lstm_forward.5} parent=0 // pred_check_branch
    %24 = sbr.rel (0) target = $region17
  $region16: #{dense_lstm_forward.5} parent=0 // pred_region
    _
  $region17: #{dense_lstm_forward.5} parent=0 // pred_fallthru
    _
  // Predicated region
  $region18: #{dense_lstm_forward.5} parent=0 // pred_check
    _
  $region19: #{dense_lstm_forward.5} parent=0 // pred_check_branch
    %26 = sbr.rel (0) target = $region21
  $region20: #{dense_lstm_forward.5} parent=0 // pred_region
    _
  $region21: #{dense_lstm_forward.5} parent=0 // pred_fallthru
    _
  // Predicated region
  $region22: #{dense_lstm_forward.5} parent=0 // pred_check
    _
  $region23: #{dense_lstm_forward.5} parent=0 // pred_check_branch
    %28 = sbr.rel (0) target = $region25
  $region24: #{dense_lstm_forward.5} parent=0 // pred_region
    _
  $region25: #{dense_lstm_forward.5} parent=0 // pred_fallthru
    _
  // Predicated region
  $region26: #{dense_lstm_forward.5} parent=0 // pred_check
    _
  $region27: #{dense_lstm_forward.5} parent=0 // pred_check_branch
    %30 = sbr.rel (0) target = $region29
  $region28: #{dense_lstm_forward.5} parent=0 // pred_region
    _
  $region29: #{dense_lstm_forward.5} parent=0 // pred_fallthru
    _
  // Predicated region
  $region30: #{dense_lstm_forward.5} parent=0 // pred_check
    _
  $region31: #{dense_lstm_forward.5} parent=0 // pred_check_branch
    %32 = sbr.rel (0) target = $region33
  $region32: #{dense_lstm_forward.5} parent=0 // pred_region
    _
  $region33: #{dense_lstm_forward.5} parent=0 // pred_fallthru
    _
  // Predicated region
  $region34: #{dense_lstm_forward.5} parent=0 // pred_check
    _
  $region35: #{dense_lstm_forward.5} parent=0 // pred_check_branch
    %34 = sbr.rel (0) target = $region37
  $region36: #{dense_lstm_forward.5} parent=0 // pred_region
    _
  $region37: #{dense_lstm_forward.5} parent=0 // pred_fallthru
    _
  // Predicated region
  $region38: #{dense_lstm_forward.5} parent=0 // pred_check
    _
  $region39: #{dense_lstm_forward.5} parent=0 // pred_check_branch
    %36 = sbr.rel (0) target = $region41
  $region40: #{dense_lstm_forward.5} parent=0 // pred_region
    _
  $region41: #{dense_lstm_forward.5} parent=0 // pred_fallthru
    _
  %v38 = vld [vmem:[%s1] sm:$0xff]
  %s39 = scalar_lea.vmem %s1, 8
  %v40 = vld [vmem:[%s39] sm:$0xff]
  %s41 = scalar_lea.vmem %s1, 16
  %v42 = vld [vmem:[%s41] sm:$0xff]
  %v43 = vld [vmem:[%s2] sm:$0xff]
  %s44 = scalar_lea.vmem %s2, 8
  %v45 = vld [vmem:[%s44] sm:$0xff]
  %s46 = scalar_lea.vmem %s2, 16
  %v47 = vld [vmem:[%s46] sm:$0xff]
  %v48 = vld [vmem:[%s0] sm:$0xff]
  %v49 = vld [vmem:[%s0 + $0x8] sm:$0xff]
  %v50 = vunpack.c.l.bf16 %v48
  %v51 = vunpack.c.h.bf16 %v48
  %v52 = vunpack.c.l.bf16 %v49
  %v53 = vunpack.c.h.bf16 %v49
  %v54 = vpack.c.bf16 %v38, %v38
  %v55 = vld [vmem:[%s3] sm:$0xff]
  %v56 = vld [vmem:[%s3 + $0x8] sm:$0xff]
  %v57 = vld [vmem:[%s3 + $0x10] sm:$0xff]
  %v58 = vld [vmem:[%s3 + $0x18] sm:$0xff]
  %v59 = vld [vmem:[%s3 + $0x20] sm:$0xff]
  %v60 = vld [vmem:[%s3 + $0x28] sm:$0xff]
  %v61 = vld [vmem:[%s3 + $0x30] sm:$0xff]
  %v62 = vld [vmem:[%s3 + $0x38] sm:$0xff]
  %v63 = vld [vmem:[%s3 + $0x40] sm:$0xff]
  %v64 = vld [vmem:[%s3 + $0x48] sm:$0xff]
  %v65 = vld [vmem:[%s3 + $0x50] sm:$0xff]
  %v66 = vld [vmem:[%s3 + $0x58] sm:$0xff]
  %v67 = vld [vmem:[%s3 + $0x60] sm:$0xff]
  %v68 = vld [vmem:[%s3 + $0x68] sm:$0xff]
  %v69 = vld [vmem:[%s3 + $0x70] sm:$0xff]
  %v70 = vld [vmem:[%s3 + $0x78] sm:$0xff]
  %v71 = vld [vmem:[%s3 + $0x80] sm:$0xff]
  %v72 = vld [vmem:[%s3 + $0x88] sm:$0xff]
  %v73 = vld [vmem:[%s3 + $0x90] sm:$0xff]
  %v74 = vld [vmem:[%s3 + $0x98] sm:$0xff]
  %v75 = vld [vmem:[%s3 + $0xa0] sm:$0xff]
  %v76 = vld [vmem:[%s3 + $0xa8] sm:$0xff]
  %v77 = vld [vmem:[%s3 + $0xb0] sm:$0xff]
  %v78 = vld [vmem:[%s3 + $0xb8] sm:$0xff]
  %v79 = vld [vmem:[%s3 + $0xc0] sm:$0xff]
  %v80 = vld [vmem:[%s3 + $0xc8] sm:$0xff]
  %v81 = vld [vmem:[%s3 + $0xd0] sm:$0xff]
  %v82 = vld [vmem:[%s3 + $0xd8] sm:$0xff]
  %v83 = vld [vmem:[%s3 + $0xe0] sm:$0xff]
  %v84 = vld [vmem:[%s3 + $0xe8] sm:$0xff]
  %v85 = vld [vmem:[%s3 + $0xf0] sm:$0xff]
  %v86 = vld [vmem:[%s3 + $0xf8] sm:$0xff]
  %v119 = vunpack.c.l.b16 %v55
  %v120 = vunpack.c.h.b16 %v55
  %v121 = vunpack.c.l.b16 %v56
  %v122 = vunpack.c.h.b16 %v56
  %v123 = vunpack.c.l.b16 %v57
  %v124 = vunpack.c.h.b16 %v57
  %v125 = vunpack.c.l.b16 %v58
  %v126 = vunpack.c.h.b16 %v58
  %v127 = vunpack.c.l.b16 %v59
  %v128 = vunpack.c.h.b16 %v59
  %v129 = vunpack.c.l.b16 %v60
  %v130 = vunpack.c.h.b16 %v60
  %v131 = vunpack.c.l.b16 %v61
  %v132 = vunpack.c.h.b16 %v61
  %v133 = vunpack.c.l.b16 %v62
  %v134 = vunpack.c.h.b16 %v62
  %v135 = vunpack.c.l.b16 %v63
  %v136 = vunpack.c.h.b16 %v63
  %v137 = vunpack.c.l.b16 %v64
  %v138 = vunpack.c.h.b16 %v64
  %v139 = vunpack.c.l.b16 %v65
  %v140 = vunpack.c.h.b16 %v65
  %v141 = vunpack.c.l.b16 %v66
  %v142 = vunpack.c.h.b16 %v66
  %v143 = vunpack.c.l.b16 %v67
  %v144 = vunpack.c.h.b16 %v67
  %v145 = vunpack.c.l.b16 %v68
  %v146 = vunpack.c.h.b16 %v68
  %v147 = vunpack.c.l.b16 %v69
  %v148 = vunpack.c.h.b16 %v69
  %v149 = vunpack.c.l.b16 %v70
  %v150 = vunpack.c.h.b16 %v70
  %v151 = vunpack.c.l.b16 %v71
  %v152 = vunpack.c.h.b16 %v71
  %v153 = vunpack.c.l.b16 %v72
  %v154 = vunpack.c.h.b16 %v72
  %v155 = vunpack.c.l.b16 %v73
  %v156 = vunpack.c.h.b16 %v73
  %v157 = vunpack.c.l.b16 %v74
  %v158 = vunpack.c.h.b16 %v74
  %v159 = vunpack.c.l.b16 %v75
  %v160 = vunpack.c.h.b16 %v75
  %v161 = vunpack.c.l.b16 %v76
  %v162 = vunpack.c.h.b16 %v76
  %v163 = vunpack.c.l.b16 %v77
  %v164 = vunpack.c.h.b16 %v77
  %v165 = vunpack.c.l.b16 %v78
  %v166 = vunpack.c.h.b16 %v78
  %v167 = vunpack.c.l.b16 %v79
  %v168 = vunpack.c.h.b16 %v79
  %v169 = vunpack.c.l.b16 %v80
  %v170 = vunpack.c.h.b16 %v80
  %v171 = vunpack.c.l.b16 %v81
  %v172 = vunpack.c.h.b16 %v81
  %v173 = vunpack.c.l.b16 %v82
  %v174 = vunpack.c.h.b16 %v82
  %v175 = vunpack.c.l.b16 %v83
  %v176 = vunpack.c.h.b16 %v83
  %v177 = vunpack.c.l.b16 %v84
  %v178 = vunpack.c.h.b16 %v84
  %v179 = vunpack.c.l.b16 %v85
  %v180 = vunpack.c.h.b16 %v85
  %v181 = vunpack.c.l.b16 %v86
  %v182 = vunpack.c.h.b16 %v86
  %v183 = vpack.c.b16 %v123, %v119
  %v184 = vpack.c.b16 %v124, %v120
  %v185 = vpack.c.b16 %v125, %v121
  %v186 = vpack.c.b16 %v126, %v122
  %v187 = vpack.c.b16 %v131, %v127
  %v188 = vpack.c.b16 %v132, %v128
  %v189 = vpack.c.b16 %v133, %v129
  %v190 = vpack.c.b16 %v134, %v130
  %v191 = vpack.c.b16 %v139, %v135
  %v192 = vpack.c.b16 %v140, %v136
  %v193 = vpack.c.b16 %v141, %v137
  %v194 = vpack.c.b16 %v142, %v138
  %v195 = vpack.c.b16 %v147, %v143
  %v196 = vpack.c.b16 %v148, %v144
  %v197 = vpack.c.b16 %v149, %v145
  %v198 = vpack.c.b16 %v150, %v146
  %v199 = vpack.c.b16 %v155, %v151
  %v200 = vpack.c.b16 %v156, %v152
  %v201 = vpack.c.b16 %v157, %v153
  %v202 = vpack.c.b16 %v158, %v154
  %v203 = vpack.c.b16 %v163, %v159
  %v204 = vpack.c.b16 %v164, %v160
  %v205 = vpack.c.b16 %v165, %v161
  %v206 = vpack.c.b16 %v166, %v162
  %v207 = vpack.c.b16 %v171, %v167
  %v208 = vpack.c.b16 %v172, %v168
  %v209 = vpack.c.b16 %v173, %v169
  %v210 = vpack.c.b16 %v174, %v170
  %v211 = vpack.c.b16 %v179, %v175
  %v212 = vpack.c.b16 %v180, %v176
  %v213 = vpack.c.b16 %v181, %v177
  %v214 = vpack.c.b16 %v182, %v178
  %247 = vmatprep.subr.bf16.mxu0 %v184
  %248 = vmatpush1.bf16.msra.mxu0 %v183
  %249 = vmatprep.subr.bf16.mxu0 %v188
  %250 = vmatpush1.bf16.msra.mxu0 %v187
  %251 = vmatprep.subr.bf16.mxu0 %v192
  %252 = vmatpush1.bf16.msra.mxu0 %v191
  %253 = vmatprep.subr.bf16.mxu0 %v196
  %254 = vmatpush1.bf16.msra.mxu0 %v195
  %255 = vmatprep.subr.bf16.mxu0 %v200
  %256 = vmatpush1.bf16.msra.mxu0 %v199
  %257 = vmatprep.subr.bf16.mxu0 %v204
  %258 = vmatpush1.bf16.msra.mxu0 %v203
  %259 = vmatprep.subr.bf16.mxu0 %v208
  %260 = vmatpush1.bf16.msra.mxu0 %v207
  %261 = vmatprep.subr.bf16.mxu0 %v212
  %262 = vmatpush1.bf16.msra.mxu0 %v211
  %263 = vmatprep.subr.bf16.mxu0 0
  %264 = vmatpush1.bf16.msra.mxu0 0
  %265 = vmatprep.subr.bf16.mxu0 0
  %266 = vmatpush1.bf16.msra.mxu0 0
  %267 = vmatprep.subr.bf16.mxu0 0
  %268 = vmatpush1.bf16.msra.mxu0 0
  %269 = vmatprep.subr.bf16.mxu0 0
  %270 = vmatpush1.bf16.msra.mxu0 0
  %271 = vmatprep.subr.bf16.mxu0 0
  %272 = vmatpush1.bf16.msra.mxu0 0
  %273 = vmatprep.subr.bf16.mxu0 0
  %274 = vmatpush1.bf16.msra.mxu0 0
  %275 = vmatprep.subr.bf16.mxu0 0
  %276 = vmatpush1.bf16.msra.mxu0 0
  %277 = vmatprep.subr.bf16.mxu0 0
  %278 = vmatpush1.bf16.msra.mxu0 0
  %279 = vmatprep.mubr.bf16.mxu0 0
  %280 = vmatmul.mubr.bf16.gmra.mrb[0].mxu0 %v54
  %v281 = vpop.f32.mrb[0].mxu0
  %v282 = vadd.f32 0.0, %v281
  %v283 = vpop.f32.mrb[0].mxu0
  %v284 = vadd.f32 0.0, %v283
  %v285 = vpop.f32.mrb[0].mxu0
  %v286 = vpop.f32.mrb[0].mxu0
  %287 = vdwg.mxu0
  %288 = vmatprep.subr.bf16.mxu0 %v186
  %289 = vmatpush1.bf16.msra.mxu0 %v185
  %290 = vmatprep.subr.bf16.mxu0 %v190
  %291 = vmatpush1.bf16.msra.mxu0 %v189
  %292 = vmatprep.subr.bf16.mxu0 %v194
  %293 = vmatpush1.bf16.msra.mxu0 %v193
  %294 = vmatprep.subr.bf16.mxu0 %v198
  %295 = vmatpush1.bf16.msra.mxu0 %v197
  %296 = vmatprep.subr.bf16.mxu0 %v202
  %297 = vmatpush1.bf16.msra.mxu0 %v201
  %298 = vmatprep.subr.bf16.mxu0 %v206
  %299 = vmatpush1.bf16.msra.mxu0 %v205
  %300 = vmatprep.subr.bf16.mxu0 %v210
  %301 = vmatpush1.bf16.msra.mxu0 %v209
  %302 = vmatprep.subr.bf16.mxu0 %v214
  %303 = vmatpush1.bf16.msra.mxu0 %v213
  %304 = vmatprep.subr.bf16.mxu0 0
  %305 = vmatpush1.bf16.msra.mxu0 0
  %306 = vmatprep.subr.bf16.mxu0 0
  %307 = vmatpush1.bf16.msra.mxu0 0
  %308 = vmatprep.subr.bf16.mxu0 0
  %309 = vmatpush1.bf16.msra.mxu0 0
  %310 = vmatprep.subr.bf16.mxu0 0
  %311 = vmatpush1.bf16.msra.mxu0 0
  %312 = vmatprep.subr.bf16.mxu0 0
  %313 = vmatpush1.bf16.msra.mxu0 0
  %314 = vmatprep.subr.bf16.mxu0 0
  %315 = vmatpush1.bf16.msra.mxu0 0
  %316 = vmatprep.subr.bf16.mxu0 0
  %317 = vmatpush1.bf16.msra.mxu0 0
  %318 = vmatprep.subr.bf16.mxu0 0
  %319 = vmatpush1.bf16.msra.mxu0 0
  %320 = vmatprep.mubr.bf16.mxu0 0
  %321 = vmatmul.mubr.bf16.gmra.mrb[0].mxu0 %v54
  %v322 = vpop.f32.mrb[0].mxu0
  %v323 = vadd.f32 0.0, %v322
  %v324 = vpop.f32.mrb[0].mxu0
  %v325 = vadd.f32 0.0, %v324
  %v326 = vpop.f32.mrb[0].mxu0
  %v327 = vpop.f32.mrb[0].mxu0
  %328 = vdwg.mxu0
  %v329 = vadd.f32 %v50, %v282
  %v330 = vadd.f32 %v51, %v284
  %v331 = vadd.f32 %v52, %v323
  %v332 = vadd.f32 %v53, %v325
  %v333 = vxor.u32 %v329, 2147483648
  %v334 = vxor.u32 %v330, 2147483648
  %v335 = vxor.u32 %v331, 2147483648
  %v336 = vmul.f32 %v333, 1.442695
  %v337 = vpow.pop %v336
  %v338 = vmul.f32 %v334, 1.442695
  %v339 = vpow.pop %v338
  %v340 = vmul.f32 %v335, 1.442695
  %v341 = vpow.pop %v340
  %v342 = vadd.f32 %v337, 1.0
  %v343 = vadd.f32 %v339, 1.0
  %v344 = vadd.f32 %v341, 1.0
  %v345 = vrcp.pop %v342
  %v346 = vmul.f32 1.0, %v345
  %v347 = vrcp.pop %v343
  %v348 = vmul.f32 1.0, %v347
  %v349 = vrcp.pop %v344
  %v350 = vmul.f32 1.0, %v349
  %v351 = vtanh.pop %v332
  %v352 = vmul.f32 %v348, %v43
  %v353 = vmul.f32 %v346, %v351
  %v354 = vadd.f32 %v352, %v353
  %v355 = vtanh.pop %v354
  %v356 = vmul.f32 %v350, %v355
  %s357 = scalar_lea.vmem %s0, 16
  %v358 = vld [vmem:[%s357] sm:$0xff]
  %v359 = vld [vmem:[%s357 + $0x8] sm:$0xff]
  %v360 = vunpack.c.l.bf16 %v358
  %v361 = vunpack.c.h.bf16 %v358
  %v362 = vunpack.c.l.bf16 %v359
  %v363 = vunpack.c.h.bf16 %v359
  %v364 = vpack.c.bf16 %v356, %v356
  %365 = vmatprep.subr.bf16.mxu0 %v184
  %366 = vmatpush1.bf16.msra.mxu0 %v183
  %367 = vmatprep.subr.bf16.mxu0 %v188
  %368 = vmatpush1.bf16.msra.mxu0 %v187
  %369 = vmatprep.subr.bf16.mxu0 %v192
  %370 = vmatpush1.bf16.msra.mxu0 %v191
  %371 = vmatprep.subr.bf16.mxu0 %v196
  %372 = vmatpush1.bf16.msra.mxu0 %v195
  %373 = vmatprep.subr.bf16.mxu0 %v200
  %374 = vmatpush1.bf16.msra.mxu0 %v199
  %375 = vmatprep.subr.bf16.mxu0 %v204
  %376 = vmatpush1.bf16.msra.mxu0 %v203
  %377 = vmatprep.subr.bf16.mxu0 %v208
  %378 = vmatpush1.bf16.msra.mxu0 %v207
  %379 = vmatprep.subr.bf16.mxu0 %v212
  %380 = vmatpush1.bf16.msra.mxu0 %v211
  %381 = vmatprep.subr.bf16.mxu0 0
  %382 = vmatpush1.bf16.msra.mxu0 0
  %383 = vmatprep.subr.bf16.mxu0 0
  %384 = vmatpush1.bf16.msra.mxu0 0
  %385 = vmatprep.subr.bf16.mxu0 0
  %386 = vmatpush1.bf16.msra.mxu0 0
  %387 = vmatprep.subr.bf16.mxu0 0
  %388 = vmatpush1.bf16.msra.mxu0 0
  %389 = vmatprep.subr.bf16.mxu0 0
  %390 = vmatpush1.bf16.msra.mxu0 0
  %391 = vmatprep.subr.bf16.mxu0 0
  %392 = vmatpush1.bf16.msra.mxu0 0
  %393 = vmatprep.subr.bf16.mxu0 0
  %394 = vmatpush1.bf16.msra.mxu0 0
  %395 = vmatprep.subr.bf16.mxu0 0
  %396 = vmatpush1.bf16.msra.mxu0 0
  %397 = vmatprep.mubr.bf16.mxu0 0
  %398 = vmatmul.mubr.bf16.gmra.mrb[0].mxu0 %v364
  %v399 = vpop.f32.mrb[0].mxu0
  %v400 = vadd.f32 0.0, %v399
  %v401 = vpop.f32.mrb[0].mxu0
  %v402 = vadd.f32 0.0, %v401
  %v403 = vpop.f32.mrb[0].mxu0
  %v404 = vpop.f32.mrb[0].mxu0
  %405 = vdwg.mxu0
  %406 = vmatprep.subr.bf16.mxu0 %v186
  %407 = vmatpush1.bf16.msra.mxu0 %v185
  %408 = vmatprep.subr.bf16.mxu0 %v190
  %409 = vmatpush1.bf16.msra.mxu0 %v189
  %410 = vmatprep.subr.bf16.mxu0 %v194
  %411 = vmatpush1.bf16.msra.mxu0 %v193
  %412 = vmatprep.subr.bf16.mxu0 %v198
  %413 = vmatpush1.bf16.msra.mxu0 %v197
  %414 = vmatprep.subr.bf16.mxu0 %v202
  %415 = vmatpush1.bf16.msra.mxu0 %v201
  %416 = vmatprep.subr.bf16.mxu0 %v206
  %417 = vmatpush1.bf16.msra.mxu0 %v205
  %418 = vmatprep.subr.bf16.mxu0 %v210
  %419 = vmatpush1.bf16.msra.mxu0 %v209
  %420 = vmatprep.subr.bf16.mxu0 %v214
  %421 = vmatpush1.bf16.msra.mxu0 %v213
  %422 = vmatprep.subr.bf16.mxu0 0
  %423 = vmatpush1.bf16.msra.mxu0 0
  %424 = vmatprep.subr.bf16.mxu0 0
  %425 = vmatpush1.bf16.msra.mxu0 0
  %426 = vmatprep.subr.bf16.mxu0 0
  %427 = vmatpush1.bf16.msra.mxu0 0
  %428 = vmatprep.subr.bf16.mxu0 0
  %429 = vmatpush1.bf16.msra.mxu0 0
  %430 = vmatprep.subr.bf16.mxu0 0
  %431 = vmatpush1.bf16.msra.mxu0 0
  %432 = vmatprep.subr.bf16.mxu0 0
  %433 = vmatpush1.bf16.msra.mxu0 0
  %434 = vmatprep.subr.bf16.mxu0 0
  %435 = vmatpush1.bf16.msra.mxu0 0
  %436 = vmatprep.subr.bf16.mxu0 0
  %437 = vmatpush1.bf16.msra.mxu0 0
  %438 = vmatprep.mubr.bf16.mxu0 0
  %439 = vmatmul.mubr.bf16.gmra.mrb[0].mxu0 %v364
  %v440 = vpop.f32.mrb[0].mxu0
  %v441 = vadd.f32 0.0, %v440
  %v442 = vpop.f32.mrb[0].mxu0
  %v443 = vadd.f32 0.0, %v442
  %v444 = vpop.f32.mrb[0].mxu0
  %v445 = vpop.f32.mrb[0].mxu0
  %446 = vdwg.mxu0
  %v447 = vadd.f32 %v360, %v400
  %v448 = vadd.f32 %v361, %v402
  %v449 = vadd.f32 %v362, %v441
  %v450 = vadd.f32 %v363, %v443
  %v451 = vxor.u32 %v447, 2147483648
  %v452 = vxor.u32 %v448, 2147483648
  %v453 = vxor.u32 %v449, 2147483648
  %v454 = vmul.f32 %v451, 1.442695
  %v455 = vpow.pop %v454
  %v456 = vmul.f32 %v452, 1.442695
  %v457 = vpow.pop %v456
  %v458 = vmul.f32 %v453, 1.442695
  %v459 = vpow.pop %v458
  %v460 = vadd.f32 %v455, 1.0
  %v461 = vadd.f32 %v457, 1.0
  %v462 = vadd.f32 %v459, 1.0
  %v463 = vrcp.pop %v460
  %v464 = vmul.f32 1.0, %v463
  %v465 = vrcp.pop %v461
  %v466 = vmul.f32 1.0, %v465
  %v467 = vrcp.pop %v462
  %v468 = vmul.f32 1.0, %v467
  %v469 = vtanh.pop %v450
  %v470 = vmul.f32 %v466, %v354
  %v471 = vmul.f32 %v464, %v469
  %v472 = vadd.f32 %v470, %v471
  %v473 = vtanh.pop %v472
  %v474 = vmul.f32 %v468, %v473
  %v475 = vpack.c.bf16 %v40, %v40
  %v476 = vld [vmem:[%s4] sm:$0xff]
  %v477 = vld [vmem:[%s4 + $0x8] sm:$0xff]
  %v478 = vld [vmem:[%s4 + $0x10] sm:$0xff]
  %v479 = vld [vmem:[%s4 + $0x18] sm:$0xff]
  %v480 = vld [vmem:[%s4 + $0x20] sm:$0xff]
  %v481 = vld [vmem:[%s4 + $0x28] sm:$0xff]
  %v482 = vld [vmem:[%s4 + $0x30] sm:$0xff]
  %v483 = vld [vmem:[%s4 + $0x38] sm:$0xff]
  %v484 = vld [vmem:[%s4 + $0x40] sm:$0xff]
  %v485 = vld [vmem:[%s4 + $0x48] sm:$0xff]
  %v486 = vld [vmem:[%s4 + $0x50] sm:$0xff]
  %v487 = vld [vmem:[%s4 + $0x58] sm:$0xff]
  %v488 = vld [vmem:[%s4 + $0x60] sm:$0xff]
  %v489 = vld [vmem:[%s4 + $0x68] sm:$0xff]
  %v490 = vld [vmem:[%s4 + $0x70] sm:$0xff]
  %v491 = vld [vmem:[%s4 + $0x78] sm:$0xff]
  %v492 = vld [vmem:[%s4 + $0x80] sm:$0xff]
  %v493 = vld [vmem:[%s4 + $0x88] sm:$0xff]
  %v494 = vld [vmem:[%s4 + $0x90] sm:$0xff]
  %v495 = vld [vmem:[%s4 + $0x98] sm:$0xff]
  %v496 = vld [vmem:[%s4 + $0xa0] sm:$0xff]
  %v497 = vld [vmem:[%s4 + $0xa8] sm:$0xff]
  %v498 = vld [vmem:[%s4 + $0xb0] sm:$0xff]
  %v499 = vld [vmem:[%s4 + $0xb8] sm:$0xff]
  %v500 = vld [vmem:[%s4 + $0xc0] sm:$0xff]
  %v501 = vld [vmem:[%s4 + $0xc8] sm:$0xff]
  %v502 = vld [vmem:[%s4 + $0xd0] sm:$0xff]
  %v503 = vld [vmem:[%s4 + $0xd8] sm:$0xff]
  %v504 = vld [vmem:[%s4 + $0xe0] sm:$0xff]
  %v505 = vld [vmem:[%s4 + $0xe8] sm:$0xff]
  %v506 = vld [vmem:[%s4 + $0xf0] sm:$0xff]
  %v507 = vld [vmem:[%s4 + $0xf8] sm:$0xff]
  %v508 = vld [vmem:[%s4 + $0x100] sm:$0xff]
  %v509 = vld [vmem:[%s4 + $0x108] sm:$0xff]
  %v510 = vld [vmem:[%s4 + $0x110] sm:$0xff]
  %v511 = vld [vmem:[%s4 + $0x118] sm:$0xff]
  %v512 = vld [vmem:[%s4 + $0x120] sm:$0xff]
  %v513 = vld [vmem:[%s4 + $0x128] sm:$0xff]
  %v514 = vld [vmem:[%s4 + $0x130] sm:$0xff]
  %v515 = vld [vmem:[%s4 + $0x138] sm:$0xff]
  %v516 = vld [vmem:[%s4 + $0x140] sm:$0xff]
  %v517 = vld [vmem:[%s4 + $0x148] sm:$0xff]
  %v518 = vld [vmem:[%s4 + $0x150] sm:$0xff]
  %v519 = vld [vmem:[%s4 + $0x158] sm:$0xff]
  %v520 = vld [vmem:[%s4 + $0x160] sm:$0xff]
  %v521 = vld [vmem:[%s4 + $0x168] sm:$0xff]
  %v522 = vld [vmem:[%s4 + $0x170] sm:$0xff]
  %v523 = vld [vmem:[%s4 + $0x178] sm:$0xff]
  %v524 = vld [vmem:[%s4 + $0x180] sm:$0xff]
  %v525 = vld [vmem:[%s4 + $0x188] sm:$0xff]
  %v526 = vld [vmem:[%s4 + $0x190] sm:$0xff]
  %v527 = vld [vmem:[%s4 + $0x198] sm:$0xff]
  %v528 = vld [vmem:[%s4 + $0x1a0] sm:$0xff]
  %v529 = vld [vmem:[%s4 + $0x1a8] sm:$0xff]
  %v530 = vld [vmem:[%s4 + $0x1b0] sm:$0xff]
  %v531 = vld [vmem:[%s4 + $0x1b8] sm:$0xff]
  %v532 = vld [vmem:[%s4 + $0x1c0] sm:$0xff]
  %v533 = vld [vmem:[%s4 + $0x1c8] sm:$0xff]
  %v534 = vld [vmem:[%s4 + $0x1d0] sm:$0xff]
  %v535 = vld [vmem:[%s4 + $0x1d8] sm:$0xff]
  %v536 = vld [vmem:[%s4 + $0x1e0] sm:$0xff]
  %v537 = vld [vmem:[%s4 + $0x1e8] sm:$0xff]
  %v538 = vld [vmem:[%s4 + $0x1f0] sm:$0xff]
  %v539 = vld [vmem:[%s4 + $0x1f8] sm:$0xff]
  %v540 = vld [vmem:[%s5] sm:$0xf]
  %v542 = vlaneseq
  %v543 = vshrl.u32 %v542, 7
  %v544 = vsub.s32 0, %v543
  %v545 = vrot.slane %v540, %v544
  %v546 = vlaneseq
  %v547 = vshrl.u32 %v546, 7
  %v548 = vsub.s32 1, %v547
  %v549 = vrot.slane %v540, %v548
  %v550 = vlaneseq
  %v551 = vshrl.u32 %v550, 7
  %v552 = vsub.s32 2, %v551
  %v553 = vrot.slane %v540, %v552
  %v554 = vlaneseq
  %v555 = vshrl.u32 %v554, 7
  %v556 = vsub.s32 3, %v555
  %v557 = vrot.slane %v540, %v556
  %v626 = vunpack.c.l.b16 %v476
  %v627 = vunpack.c.h.b16 %v476
  %v628 = vunpack.c.l.b16 %v477
  %v629 = vunpack.c.h.b16 %v477
  %v630 = vunpack.c.l.b16 %v478
  %v631 = vunpack.c.h.b16 %v478
  %v632 = vunpack.c.l.b16 %v479
  %v633 = vunpack.c.h.b16 %v479
  %v634 = vunpack.c.l.b16 %v480
  %v635 = vunpack.c.h.b16 %v480
  %v636 = vunpack.c.l.b16 %v481
  %v637 = vunpack.c.h.b16 %v481
  %v638 = vunpack.c.l.b16 %v482
  %v639 = vunpack.c.h.b16 %v482
  %v640 = vunpack.c.l.b16 %v483
  %v641 = vunpack.c.h.b16 %v483
  %v642 = vunpack.c.l.b16 %v484
  %v643 = vunpack.c.h.b16 %v484
  %v644 = vunpack.c.l.b16 %v485
  %v645 = vunpack.c.h.b16 %v485
  %v646 = vunpack.c.l.b16 %v486
  %v647 = vunpack.c.h.b16 %v486
  %v648 = vunpack.c.l.b16 %v487
  %v649 = vunpack.c.h.b16 %v487
  %v650 = vunpack.c.l.b16 %v488
  %v651 = vunpack.c.h.b16 %v488
  %v652 = vunpack.c.l.b16 %v489
  %v653 = vunpack.c.h.b16 %v489
  %v654 = vunpack.c.l.b16 %v490
  %v655 = vunpack.c.h.b16 %v490
  %v656 = vunpack.c.l.b16 %v491
  %v657 = vunpack.c.h.b16 %v491
  %v658 = vunpack.c.l.b16 %v492
  %v659 = vunpack.c.h.b16 %v492
  %v660 = vunpack.c.l.b16 %v493
  %v661 = vunpack.c.h.b16 %v493
  %v662 = vunpack.c.l.b16 %v494
  %v663 = vunpack.c.h.b16 %v494
  %v664 = vunpack.c.l.b16 %v495
  %v665 = vunpack.c.h.b16 %v495
  %v666 = vunpack.c.l.b16 %v496
  %v667 = vunpack.c.h.b16 %v496
  %v668 = vunpack.c.l.b16 %v497
  %v669 = vunpack.c.h.b16 %v497
  %v670 = vunpack.c.l.b16 %v498
  %v671 = vunpack.c.h.b16 %v498
  %v672 = vunpack.c.l.b16 %v499
  %v673 = vunpack.c.h.b16 %v499
  %v674 = vunpack.c.l.b16 %v500
  %v675 = vunpack.c.h.b16 %v500
  %v676 = vunpack.c.l.b16 %v501
  %v677 = vunpack.c.h.b16 %v501
  %v678 = vunpack.c.l.b16 %v502
  %v679 = vunpack.c.h.b16 %v502
  %v680 = vunpack.c.l.b16 %v503
  %v681 = vunpack.c.h.b16 %v503
  %v682 = vunpack.c.l.b16 %v504
  %v683 = vunpack.c.h.b16 %v504
  %v684 = vunpack.c.l.b16 %v505
  %v685 = vunpack.c.h.b16 %v505
  %v686 = vunpack.c.l.b16 %v506
  %v687 = vunpack.c.h.b16 %v506
  %v688 = vunpack.c.l.b16 %v507
  %v689 = vunpack.c.h.b16 %v507
  %v690 = vunpack.c.l.b16 %v508
  %v691 = vunpack.c.h.b16 %v508
  %v692 = vunpack.c.l.b16 %v509
  %v693 = vunpack.c.h.b16 %v509
  %v694 = vunpack.c.l.b16 %v510
  %v695 = vunpack.c.h.b16 %v510
  %v696 = vunpack.c.l.b16 %v511
  %v697 = vunpack.c.h.b16 %v511
  %v698 = vunpack.c.l.b16 %v512
  %v699 = vunpack.c.h.b16 %v512
  %v700 = vunpack.c.l.b16 %v513
  %v701 = vunpack.c.h.b16 %v513
  %v702 = vunpack.c.l.b16 %v514
  %v703 = vunpack.c.h.b16 %v514
  %v704 = vunpack.c.l.b16 %v515
  %v705 = vunpack.c.h.b16 %v515
  %v706 = vunpack.c.l.b16 %v516
  %v707 = vunpack.c.h.b16 %v516
  %v708 = vunpack.c.l.b16 %v517
  %v709 = vunpack.c.h.b16 %v517
  %v710 = vunpack.c.l.b16 %v518
  %v711 = vunpack.c.h.b16 %v518
  %v712 = vunpack.c.l.b16 %v519
  %v713 = vunpack.c.h.b16 %v519
  %v714 = vunpack.c.l.b16 %v520
  %v715 = vunpack.c.h.b16 %v520
  %v716 = vunpack.c.l.b16 %v521
  %v717 = vunpack.c.h.b16 %v521
  %v718 = vunpack.c.l.b16 %v522
  %v719 = vunpack.c.h.b16 %v522
  %v720 = vunpack.c.l.b16 %v523
  %v721 = vunpack.c.h.b16 %v523
  %v722 = vunpack.c.l.b16 %v524
  %v723 = vunpack.c.h.b16 %v524
  %v724 = vunpack.c.l.b16 %v525
  %v725 = vunpack.c.h.b16 %v525
  %v726 = vunpack.c.l.b16 %v526
  %v727 = vunpack.c.h.b16 %v526
  %v728 = vunpack.c.l.b16 %v527
  %v729 = vunpack.c.h.b16 %v527
  %v730 = vunpack.c.l.b16 %v528
  %v731 = vunpack.c.h.b16 %v528
  %v732 = vunpack.c.l.b16 %v529
  %v733 = vunpack.c.h.b16 %v529
  %v734 = vunpack.c.l.b16 %v530
  %v735 = vunpack.c.h.b16 %v530
  %v736 = vunpack.c.l.b16 %v531
  %v737 = vunpack.c.h.b16 %v531
  %v738 = vunpack.c.l.b16 %v532
  %v739 = vunpack.c.h.b16 %v532
  %v740 = vunpack.c.l.b16 %v533
  %v741 = vunpack.c.h.b16 %v533
  %v742 = vunpack.c.l.b16 %v534
  %v743 = vunpack.c.h.b16 %v534
  %v744 = vunpack.c.l.b16 %v535
  %v745 = vunpack.c.h.b16 %v535
  %v746 = vunpack.c.l.b16 %v536
  %v747 = vunpack.c.h.b16 %v536
  %v748 = vunpack.c.l.b16 %v537
  %v749 = vunpack.c.h.b16 %v537
  %v750 = vunpack.c.l.b16 %v538
  %v751 = vunpack.c.h.b16 %v538
  %v752 = vunpack.c.l.b16 %v539
  %v753 = vunpack.c.h.b16 %v539
  %v754 = vpack.c.b16 %v630, %v626
  %v755 = vpack.c.b16 %v631, %v627
  %v756 = vpack.c.b16 %v632, %v628
  %v757 = vpack.c.b16 %v633, %v629
  %v758 = vpack.c.b16 %v638, %v634
  %v759 = vpack.c.b16 %v639, %v635
  %v760 = vpack.c.b16 %v640, %v636
  %v761 = vpack.c.b16 %v641, %v637
  %v762 = vpack.c.b16 %v646, %v642
  %v763 = vpack.c.b16 %v647, %v643
  %v764 = vpack.c.b16 %v648, %v644
  %v765 = vpack.c.b16 %v649, %v645
  %v766 = vpack.c.b16 %v654, %v650
  %v767 = vpack.c.b16 %v655, %v651
  %v768 = vpack.c.b16 %v656, %v652
  %v769 = vpack.c.b16 %v657, %v653
  %v770 = vpack.c.b16 %v662, %v658
  %v771 = vpack.c.b16 %v663, %v659
  %v772 = vpack.c.b16 %v664, %v660
  %v773 = vpack.c.b16 %v665, %v661
  %v774 = vpack.c.b16 %v670, %v666
  %v775 = vpack.c.b16 %v671, %v667
  %v776 = vpack.c.b16 %v672, %v668
  %v777 = vpack.c.b16 %v673, %v669
  %v778 = vpack.c.b16 %v678, %v674
  %v779 = vpack.c.b16 %v679, %v675
  %v780 = vpack.c.b16 %v680, %v676
  %v781 = vpack.c.b16 %v681, %v677
  %v782 = vpack.c.b16 %v686, %v682
  %v783 = vpack.c.b16 %v687, %v683
  %v784 = vpack.c.b16 %v688, %v684
  %v785 = vpack.c.b16 %v689, %v685
  %v786 = vpack.c.b16 %v694, %v690
  %v787 = vpack.c.b16 %v695, %v691
  %v788 = vpack.c.b16 %v696, %v692
  %v789 = vpack.c.b16 %v697, %v693
  %v790 = vpack.c.b16 %v702, %v698
  %v791 = vpack.c.b16 %v703, %v699
  %v792 = vpack.c.b16 %v704, %v700
  %v793 = vpack.c.b16 %v705, %v701
  %v794 = vpack.c.b16 %v710, %v706
  %v795 = vpack.c.b16 %v711, %v707
  %v796 = vpack.c.b16 %v712, %v708
  %v797 = vpack.c.b16 %v713, %v709
  %v798 = vpack.c.b16 %v718, %v714
  %v799 = vpack.c.b16 %v719, %v715
  %v800 = vpack.c.b16 %v720, %v716
  %v801 = vpack.c.b16 %v721, %v717
  %v802 = vpack.c.b16 %v726, %v722
  %v803 = vpack.c.b16 %v727, %v723
  %v804 = vpack.c.b16 %v728, %v724
  %v805 = vpack.c.b16 %v729, %v725
  %v806 = vpack.c.b16 %v734, %v730
  %v807 = vpack.c.b16 %v735, %v731
  %v808 = vpack.c.b16 %v736, %v732
  %v809 = vpack.c.b16 %v737, %v733
  %v810 = vpack.c.b16 %v742, %v738
  %v811 = vpack.c.b16 %v743, %v739
  %v812 = vpack.c.b16 %v744, %v740
  %v813 = vpack.c.b16 %v745, %v741
  %v814 = vpack.c.b16 %v750, %v746
  %v815 = vpack.c.b16 %v751, %v747
  %v816 = vpack.c.b16 %v752, %v748
  %v817 = vpack.c.b16 %v753, %v749
  %882 = vmatprep.subr.bf16.mxu0 %v755
  %883 = vmatpush1.bf16.msra.mxu0 %v754
  %884 = vmatprep.subr.bf16.mxu0 %v759
  %885 = vmatpush1.bf16.msra.mxu0 %v758
  %886 = vmatprep.subr.bf16.mxu0 %v763
  %887 = vmatpush1.bf16.msra.mxu0 %v762
  %888 = vmatprep.subr.bf16.mxu0 %v767
  %889 = vmatpush1.bf16.msra.mxu0 %v766
  %890 = vmatprep.subr.bf16.mxu0 %v771
  %891 = vmatpush1.bf16.msra.mxu0 %v770
  %892 = vmatprep.subr.bf16.mxu0 %v775
  %893 = vmatpush1.bf16.msra.mxu0 %v774
  %894 = vmatprep.subr.bf16.mxu0 %v779
  %895 = vmatpush1.bf16.msra.mxu0 %v778
  %896 = vmatprep.subr.bf16.mxu0 %v783
  %897 = vmatpush1.bf16.msra.mxu0 %v782
  %898 = vmatprep.subr.bf16.mxu0 %v787
  %899 = vmatpush1.bf16.msra.mxu0 %v786
  %900 = vmatprep.subr.bf16.mxu0 %v791
  %901 = vmatpush1.bf16.msra.mxu0 %v790
  %902 = vmatprep.subr.bf16.mxu0 %v795
  %903 = vmatpush1.bf16.msra.mxu0 %v794
  %904 = vmatprep.subr.bf16.mxu0 %v799
  %905 = vmatpush1.bf16.msra.mxu0 %v798
  %906 = vmatprep.subr.bf16.mxu0 %v803
  %907 = vmatpush1.bf16.msra.mxu0 %v802
  %908 = vmatprep.subr.bf16.mxu0 %v807
  %909 = vmatpush1.bf16.msra.mxu0 %v806
  %910 = vmatprep.subr.bf16.mxu0 %v811
  %911 = vmatpush1.bf16.msra.mxu0 %v810
  %912 = vmatprep.subr.bf16.mxu0 %v815
  %913 = vmatpush1.bf16.msra.mxu0 %v814
  %914 = vmatprep.mubr.bf16.mxu0 %v475
  %915 = vmatmul.mubr.bf16.gmra.mrb[0].mxu0 %v364
  %v916 = vpop.f32.mrb[0].mxu0
  %v917 = vadd.f32 %v545, %v916
  %v918 = vpop.f32.mrb[0].mxu0
  %v919 = vadd.f32 %v549, %v918
  %v920 = vpop.f32.mrb[0].mxu0
  %v921 = vpop.f32.mrb[0].mxu0
  %922 = vdwg.mxu0
  %923 = vmatprep.subr.bf16.mxu0 %v757
  %924 = vmatpush1.bf16.msra.mxu0 %v756
  %925 = vmatprep.subr.bf16.mxu0 %v761
  %926 = vmatpush1.bf16.msra.mxu0 %v760
  %927 = vmatprep.subr.bf16.mxu0 %v765
  %928 = vmatpush1.bf16.msra.mxu0 %v764
  %929 = vmatprep.subr.bf16.mxu0 %v769
  %930 = vmatpush1.bf16.msra.mxu0 %v768
  %931 = vmatprep.subr.bf16.mxu0 %v773
  %932 = vmatpush1.bf16.msra.mxu0 %v772
  %933 = vmatprep.subr.bf16.mxu0 %v777
  %934 = vmatpush1.bf16.msra.mxu0 %v776
  %935 = vmatprep.subr.bf16.mxu0 %v781
  %936 = vmatpush1.bf16.msra.mxu0 %v780
  %937 = vmatprep.subr.bf16.mxu0 %v785
  %938 = vmatpush1.bf16.msra.mxu0 %v784
  %939 = vmatprep.subr.bf16.mxu0 %v789
  %940 = vmatpush1.bf16.msra.mxu0 %v788
  %941 = vmatprep.subr.bf16.mxu0 %v793
  %942 = vmatpush1.bf16.msra.mxu0 %v792
  %943 = vmatprep.subr.bf16.mxu0 %v797
  %944 = vmatpush1.bf16.msra.mxu0 %v796
  %945 = vmatprep.subr.bf16.mxu0 %v801
  %946 = vmatpush1.bf16.msra.mxu0 %v800
  %947 = vmatprep.subr.bf16.mxu0 %v805
  %948 = vmatpush1.bf16.msra.mxu0 %v804
  %949 = vmatprep.subr.bf16.mxu0 %v809
  %950 = vmatpush1.bf16.msra.mxu0 %v808
  %951 = vmatprep.subr.bf16.mxu0 %v813
  %952 = vmatpush1.bf16.msra.mxu0 %v812
  %953 = vmatprep.subr.bf16.mxu0 %v817
  %954 = vmatpush1.bf16.msra.mxu0 %v816
  %955 = vmatprep.mubr.bf16.mxu0 %v475
  %956 = vmatmul.mubr.bf16.gmra.mrb[0].mxu0 %v364
  %v957 = vpop.f32.mrb[0].mxu0
  %v958 = vadd.f32 %v553, %v957
  %v959 = vpop.f32.mrb[0].mxu0
  %v960 = vadd.f32 %v557, %v959
  %v961 = vpop.f32.mrb[0].mxu0
  %v962 = vpop.f32.mrb[0].mxu0
  %963 = vdwg.mxu0
  %v964 = vxor.u32 %v917, 2147483648
  %v965 = vxor.u32 %v919, 2147483648
  %v966 = vxor.u32 %v958, 2147483648
  %v967 = vmul.f32 %v964, 1.442695
  %v968 = vpow.pop %v967
  %v969 = vmul.f32 %v965, 1.442695
  %v970 = vpow.pop %v969
  %v971 = vmul.f32 %v966, 1.442695
  %v972 = vpow.pop %v971
  %v973 = vadd.f32 %v968, 1.0
  %v974 = vadd.f32 %v970, 1.0
  %v975 = vadd.f32 %v972, 1.0
  %v976 = vrcp.pop %v973
  %v977 = vmul.f32 1.0, %v976
  %v978 = vrcp.pop %v974
  %v979 = vmul.f32 1.0, %v978
  %v980 = vrcp.pop %v975
  %v981 = vmul.f32 1.0, %v980
  %v982 = vtanh.pop %v960
  %v983 = vmul.f32 %v979, %v45
  %v984 = vmul.f32 %v977, %v982
  %v985 = vadd.f32 %v983, %v984
  %v986 = vtanh.pop %v985
  %v987 = vmul.f32 %v981, %v986
  %s988 = scalar_lea.vmem %s0, 32
  %v989 = vld [vmem:[%s988] sm:$0xff]
  %v990 = vld [vmem:[%s988 + $0x8] sm:$0xff]
  %v991 = vunpack.c.l.bf16 %v989
  %v992 = vunpack.c.h.bf16 %v989
  %v993 = vunpack.c.l.bf16 %v990
  %v994 = vunpack.c.h.bf16 %v990
  %v995 = vpack.c.bf16 %v474, %v474
  %996 = vmatprep.subr.bf16.mxu0 %v184
  %997 = vmatpush1.bf16.msra.mxu0 %v183
  %998 = vmatprep.subr.bf16.mxu0 %v188
  %999 = vmatpush1.bf16.msra.mxu0 %v187
  %1000 = vmatprep.subr.bf16.mxu0 %v192
  %1001 = vmatpush1.bf16.msra.mxu0 %v191
  %1002 = vmatprep.subr.bf16.mxu0 %v196
  %1003 = vmatpush1.bf16.msra.mxu0 %v195
  %1004 = vmatprep.subr.bf16.mxu0 %v200
  %1005 = vmatpush1.bf16.msra.mxu0 %v199
  %1006 = vmatprep.subr.bf16.mxu0 %v204
  %1007 = vmatpush1.bf16.msra.mxu0 %v203
  %1008 = vmatprep.subr.bf16.mxu0 %v208
  %1009 = vmatpush1.bf16.msra.mxu0 %v207
  %1010 = vmatprep.subr.bf16.mxu0 %v212
  %1011 = vmatpush1.bf16.msra.mxu0 %v211
  %1012 = vmatprep.subr.bf16.mxu0 0
  %1013 = vmatpush1.bf16.msra.mxu0 0
  %1014 = vmatprep.subr.bf16.mxu0 0
  %1015 = vmatpush1.bf16.msra.mxu0 0
  %1016 = vmatprep.subr.bf16.mxu0 0
  %1017 = vmatpush1.bf16.msra.mxu0 0
  %1018 = vmatprep.subr.bf16.mxu0 0
  %1019 = vmatpush1.bf16.msra.mxu0 0
  %1020 = vmatprep.subr.bf16.mxu0 0
  %1021 = vmatpush1.bf16.msra.mxu0 0
  %1022 = vmatprep.subr.bf16.mxu0 0
  %1023 = vmatpush1.bf16.msra.mxu0 0
  %1024 = vmatprep.subr.bf16.mxu0 0
  %1025 = vmatpush1.bf16.msra.mxu0 0
  %1026 = vmatprep.subr.bf16.mxu0 0
  %1027 = vmatpush1.bf16.msra.mxu0 0
  %1028 = vmatprep.mubr.bf16.mxu0 0
  %1029 = vmatmul.mubr.bf16.gmra.mrb[0].mxu0 %v995
  %v1030 = vpop.f32.mrb[0].mxu0
  %v1031 = vadd.f32 0.0, %v1030
  %v1032 = vpop.f32.mrb[0].mxu0
  %v1033 = vadd.f32 0.0, %v1032
  %v1034 = vpop.f32.mrb[0].mxu0
  %v1035 = vpop.f32.mrb[0].mxu0
  %1036 = vdwg.mxu0
  %1037 = vmatprep.subr.bf16.mxu0 %v186
  %1038 = vmatpush1.bf16.msra.mxu0 %v185
  %1039 = vmatprep.subr.bf16.mxu0 %v190
  %1040 = vmatpush1.bf16.msra.mxu0 %v189
  %1041 = vmatprep.subr.bf16.mxu0 %v194
  %1042 = vmatpush1.bf16.msra.mxu0 %v193
  %1043 = vmatprep.subr.bf16.mxu0 %v198
  %1044 = vmatpush1.bf16.msra.mxu0 %v197
  %1045 = vmatprep.subr.bf16.mxu0 %v202
  %1046 = vmatpush1.bf16.msra.mxu0 %v201
  %1047 = vmatprep.subr.bf16.mxu0 %v206
  %1048 = vmatpush1.bf16.msra.mxu0 %v205
  %1049 = vmatprep.subr.bf16.mxu0 %v210
  %1050 = vmatpush1.bf16.msra.mxu0 %v209
  %1051 = vmatprep.subr.bf16.mxu0 %v214
  %1052 = vmatpush1.bf16.msra.mxu0 %v213
  %1053 = vmatprep.subr.bf16.mxu0 0
  %1054 = vmatpush1.bf16.msra.mxu0 0
  %1055 = vmatprep.subr.bf16.mxu0 0
  %1056 = vmatpush1.bf16.msra.mxu0 0
  %1057 = vmatprep.subr.bf16.mxu0 0
  %1058 = vmatpush1.bf16.msra.mxu0 0
  %1059 = vmatprep.subr.bf16.mxu0 0
  %1060 = vmatpush1.bf16.msra.mxu0 0
  %1061 = vmatprep.subr.bf16.mxu0 0
  %1062 = vmatpush1.bf16.msra.mxu0 0
  %1063 = vmatprep.subr.bf16.mxu0 0
  %1064 = vmatpush1.bf16.msra.mxu0 0
  %1065 = vmatprep.subr.bf16.mxu0 0
  %1066 = vmatpush1.bf16.msra.mxu0 0
  %1067 = vmatprep.subr.bf16.mxu0 0
  %1068 = vmatpush1.bf16.msra.mxu0 0
  %1069 = vmatprep.mubr.bf16.mxu0 0
  %1070 = vmatmul.mubr.bf16.gmra.mrb[0].mxu0 %v995
  %v1071 = vpop.f32.mrb[0].mxu0
  %v1072 = vadd.f32 0.0, %v1071
  %v1073 = vpop.f32.mrb[0].mxu0
  %v1074 = vadd.f32 0.0, %v1073
  %v1075 = vpop.f32.mrb[0].mxu0
  %v1076 = vpop.f32.mrb[0].mxu0
  %1077 = vdwg.mxu0
  %v1078 = vadd.f32 %v991, %v1031
  %v1079 = vadd.f32 %v992, %v1033
  %v1080 = vadd.f32 %v993, %v1072
  %v1081 = vadd.f32 %v994, %v1074
  %v1082 = vxor.u32 %v1078, 2147483648
  %v1083 = vxor.u32 %v1079, 2147483648
  %v1084 = vxor.u32 %v1080, 2147483648
  %v1085 = vmul.f32 %v1082, 1.442695
  %v1086 = vpow.pop %v1085
  %v1087 = vmul.f32 %v1083, 1.442695
  %v1088 = vpow.pop %v1087
  %v1089 = vmul.f32 %v1084, 1.442695
  %v1090 = vpow.pop %v1089
  %v1091 = vadd.f32 %v1086, 1.0
  %v1092 = vadd.f32 %v1088, 1.0
  %v1093 = vadd.f32 %v1090, 1.0
  %v1094 = vrcp.pop %v1091
  %v1095 = vmul.f32 1.0, %v1094
  %v1096 = vrcp.pop %v1092
  %v1097 = vmul.f32 1.0, %v1096
  %v1098 = vrcp.pop %v1093
  %v1099 = vmul.f32 1.0, %v1098
  %v1100 = vtanh.pop %v1081
  %v1101 = vmul.f32 %v1097, %v472
  %v1102 = vmul.f32 %v1095, %v1100
  %v1103 = vadd.f32 %v1101, %v1102
  %v1104 = vtanh.pop %v1103
  %v1105 = vmul.f32 %v1099, %v1104
  %v1106 = vpack.c.bf16 %v987, %v987
  %1107 = vmatprep.subr.bf16.mxu0 %v755
  %1108 = vmatpush1.bf16.msra.mxu0 %v754
  %1109 = vmatprep.subr.bf16.mxu0 %v759
  %1110 = vmatpush1.bf16.msra.mxu0 %v758
  %1111 = vmatprep.subr.bf16.mxu0 %v763
  %1112 = vmatpush1.bf16.msra.mxu0 %v762
  %1113 = vmatprep.subr.bf16.mxu0 %v767
  %1114 = vmatpush1.bf16.msra.mxu0 %v766
  %1115 = vmatprep.subr.bf16.mxu0 %v771
  %1116 = vmatpush1.bf16.msra.mxu0 %v770
  %1117 = vmatprep.subr.bf16.mxu0 %v775
  %1118 = vmatpush1.bf16.msra.mxu0 %v774
  %1119 = vmatprep.subr.bf16.mxu0 %v779
  %1120 = vmatpush1.bf16.msra.mxu0 %v778
  %1121 = vmatprep.subr.bf16.mxu0 %v783
  %1122 = vmatpush1.bf16.msra.mxu0 %v782
  %1123 = vmatprep.subr.bf16.mxu0 %v787
  %1124 = vmatpush1.bf16.msra.mxu0 %v786
  %1125 = vmatprep.subr.bf16.mxu0 %v791
  %1126 = vmatpush1.bf16.msra.mxu0 %v790
  %1127 = vmatprep.subr.bf16.mxu0 %v795
  %1128 = vmatpush1.bf16.msra.mxu0 %v794
  %1129 = vmatprep.subr.bf16.mxu0 %v799
  %1130 = vmatpush1.bf16.msra.mxu0 %v798
  %1131 = vmatprep.subr.bf16.mxu0 %v803
  %1132 = vmatpush1.bf16.msra.mxu0 %v802
  %1133 = vmatprep.subr.bf16.mxu0 %v807
  %1134 = vmatpush1.bf16.msra.mxu0 %v806
  %1135 = vmatprep.subr.bf16.mxu0 %v811
  %1136 = vmatpush1.bf16.msra.mxu0 %v810
  %1137 = vmatprep.subr.bf16.mxu0 %v815
  %1138 = vmatpush1.bf16.msra.mxu0 %v814
  %1139 = vmatprep.mubr.bf16.mxu0 %v1106
  %1140 = vmatmul.mubr.bf16.gmra.mrb[0].mxu0 %v995
  %v1141 = vpop.f32.mrb[0].mxu0
  %v1142 = vadd.f32 %v545, %v1141
  %v1143 = vpop.f32.mrb[0].mxu0
  %v1144 = vadd.f32 %v549, %v1143
  %v1145 = vpop.f32.mrb[0].mxu0
  %v1146 = vpop.f32.mrb[0].mxu0
  %1147 = vdwg.mxu0
  %1148 = vmatprep.subr.bf16.mxu0 %v757
  %1149 = vmatpush1.bf16.msra.mxu0 %v756
  %1150 = vmatprep.subr.bf16.mxu0 %v761
  %1151 = vmatpush1.bf16.msra.mxu0 %v760
  %1152 = vmatprep.subr.bf16.mxu0 %v765
  %1153 = vmatpush1.bf16.msra.mxu0 %v764
  %1154 = vmatprep.subr.bf16.mxu0 %v769
  %1155 = vmatpush1.bf16.msra.mxu0 %v768
  %1156 = vmatprep.subr.bf16.mxu0 %v773
  %1157 = vmatpush1.bf16.msra.mxu0 %v772
  %1158 = vmatprep.subr.bf16.mxu0 %v777
  %1159 = vmatpush1.bf16.msra.mxu0 %v776
  %1160 = vmatprep.subr.bf16.mxu0 %v781
  %1161 = vmatpush1.bf16.msra.mxu0 %v780
  %1162 = vmatprep.subr.bf16.mxu0 %v785
  %1163 = vmatpush1.bf16.msra.mxu0 %v784
  %1164 = vmatprep.subr.bf16.mxu0 %v789
  %1165 = vmatpush1.bf16.msra.mxu0 %v788
  %1166 = vmatprep.subr.bf16.mxu0 %v793
  %1167 = vmatpush1.bf16.msra.mxu0 %v792
  %1168 = vmatprep.subr.bf16.mxu0 %v797
  %1169 = vmatpush1.bf16.msra.mxu0 %v796
  %1170 = vmatprep.subr.bf16.mxu0 %v801
  %1171 = vmatpush1.bf16.msra.mxu0 %v800
  %1172 = vmatprep.subr.bf16.mxu0 %v805
  %1173 = vmatpush1.bf16.msra.mxu0 %v804
  %1174 = vmatprep.subr.bf16.mxu0 %v809
  %1175 = vmatpush1.bf16.msra.mxu0 %v808
  %1176 = vmatprep.subr.bf16.mxu0 %v813
  %1177 = vmatpush1.bf16.msra.mxu0 %v812
  %1178 = vmatprep.subr.bf16.mxu0 %v817
  %1179 = vmatpush1.bf16.msra.mxu0 %v816
  %1180 = vmatprep.mubr.bf16.mxu0 %v1106
  %1181 = vmatmul.mubr.bf16.gmra.mrb[0].mxu0 %v995
  %v1182 = vpop.f32.mrb[0].mxu0
  %v1183 = vadd.f32 %v553, %v1182
  %v1184 = vpop.f32.mrb[0].mxu0
  %v1185 = vadd.f32 %v557, %v1184
  %v1186 = vpop.f32.mrb[0].mxu0
  %v1187 = vpop.f32.mrb[0].mxu0
  %1188 = vdwg.mxu0
  %v1189 = vxor.u32 %v1142, 2147483648
  %v1190 = vxor.u32 %v1144, 2147483648
  %v1191 = vxor.u32 %v1183, 2147483648
  %v1192 = vmul.f32 %v1189, 1.442695
  %v1193 = vpow.pop %v1192
  %v1194 = vmul.f32 %v1190, 1.442695
  %v1195 = vpow.pop %v1194
  %v1196 = vmul.f32 %v1191, 1.442695
  %v1197 = vpow.pop %v1196
  %v1198 = vadd.f32 %v1193, 1.0
  %v1199 = vadd.f32 %v1195, 1.0
  %v1200 = vadd.f32 %v1197, 1.0
  %v1201 = vrcp.pop %v1198
  %v1202 = vmul.f32 1.0, %v1201
  %v1203 = vrcp.pop %v1199
  %v1204 = vmul.f32 1.0, %v1203
  %v1205 = vrcp.pop %v1200
  %v1206 = vmul.f32 1.0, %v1205
  %v1207 = vtanh.pop %v1185
  %v1208 = vmul.f32 %v1204, %v985
  %v1209 = vmul.f32 %v1202, %v1207
  %v1210 = vadd.f32 %v1208, %v1209
  %v1211 = vtanh.pop %v1210
  %v1212 = vmul.f32 %v1206, %v1211
  %v1213 = vpack.c.bf16 %v42, %v42
  %s1214 = scalar_lea.vmem %s4, 512
  %v1215 = vld [vmem:[%s1214] sm:$0xff]
  %v1216 = vld [vmem:[%s1214 + $0x8] sm:$0xff]
  %v1217 = vld [vmem:[%s1214 + $0x10] sm:$0xff]
  %v1218 = vld [vmem:[%s1214 + $0x18] sm:$0xff]
  %v1219 = vld [vmem:[%s1214 + $0x20] sm:$0xff]
  %v1220 = vld [vmem:[%s1214 + $0x28] sm:$0xff]
  %v1221 = vld [vmem:[%s1214 + $0x30] sm:$0xff]
  %v1222 = vld [vmem:[%s1214 + $0x38] sm:$0xff]
  %v1223 = vld [vmem:[%s1214 + $0x40] sm:$0xff]
  %v1224 = vld [vmem:[%s1214 + $0x48] sm:$0xff]
  %v1225 = vld [vmem:[%s1214 + $0x50] sm:$0xff]
  %v1226 = vld [vmem:[%s1214 + $0x58] sm:$0xff]
  %v1227 = vld [vmem:[%s1214 + $0x60] sm:$0xff]
  %v1228 = vld [vmem:[%s1214 + $0x68] sm:$0xff]
  %v1229 = vld [vmem:[%s1214 + $0x70] sm:$0xff]
  %v1230 = vld [vmem:[%s1214 + $0x78] sm:$0xff]
  %v1231 = vld [vmem:[%s1214 + $0x80] sm:$0xff]
  %v1232 = vld [vmem:[%s1214 + $0x88] sm:$0xff]
  %v1233 = vld [vmem:[%s1214 + $0x90] sm:$0xff]
  %v1234 = vld [vmem:[%s1214 + $0x98] sm:$0xff]
  %v1235 = vld [vmem:[%s1214 + $0xa0] sm:$0xff]
  %v1236 = vld [vmem:[%s1214 + $0xa8] sm:$0xff]
  %v1237 = vld [vmem:[%s1214 + $0xb0] sm:$0xff]
  %v1238 = vld [vmem:[%s1214 + $0xb8] sm:$0xff]
  %v1239 = vld [vmem:[%s1214 + $0xc0] sm:$0xff]
  %v1240 = vld [vmem:[%s1214 + $0xc8] sm:$0xff]
  %v1241 = vld [vmem:[%s1214 + $0xd0] sm:$0xff]
  %v1242 = vld [vmem:[%s1214 + $0xd8] sm:$0xff]
  %v1243 = vld [vmem:[%s1214 + $0xe0] sm:$0xff]
  %v1244 = vld [vmem:[%s1214 + $0xe8] sm:$0xff]
  %v1245 = vld [vmem:[%s1214 + $0xf0] sm:$0xff]
  %v1246 = vld [vmem:[%s1214 + $0xf8] sm:$0xff]
  %v1247 = vld [vmem:[%s1214 + $0x100] sm:$0xff]
  %v1248 = vld [vmem:[%s1214 + $0x108] sm:$0xff]
  %v1249 = vld [vmem:[%s1214 + $0x110] sm:$0xff]
  %v1250 = vld [vmem:[%s1214 + $0x118] sm:$0xff]
  %v1251 = vld [vmem:[%s1214 + $0x120] sm:$0xff]
  %v1252 = vld [vmem:[%s1214 + $0x128] sm:$0xff]
  %v1253 = vld [vmem:[%s1214 + $0x130] sm:$0xff]
  %v1254 = vld [vmem:[%s1214 + $0x138] sm:$0xff]
  %v1255 = vld [vmem:[%s1214 + $0x140] sm:$0xff]
  %v1256 = vld [vmem:[%s1214 + $0x148] sm:$0xff]
  %v1257 = vld [vmem:[%s1214 + $0x150] sm:$0xff]
  %v1258 = vld [vmem:[%s1214 + $0x158] sm:$0xff]
  %v1259 = vld [vmem:[%s1214 + $0x160] sm:$0xff]
  %v1260 = vld [vmem:[%s1214 + $0x168] sm:$0xff]
  %v1261 = vld [vmem:[%s1214 + $0x170] sm:$0xff]
  %v1262 = vld [vmem:[%s1214 + $0x178] sm:$0xff]
  %v1263 = vld [vmem:[%s1214 + $0x180] sm:$0xff]
  %v1264 = vld [vmem:[%s1214 + $0x188] sm:$0xff]
  %v1265 = vld [vmem:[%s1214 + $0x190] sm:$0xff]
  %v1266 = vld [vmem:[%s1214 + $0x198] sm:$0xff]
  %v1267 = vld [vmem:[%s1214 + $0x1a0] sm:$0xff]
  %v1268 = vld [vmem:[%s1214 + $0x1a8] sm:$0xff]
  %v1269 = vld [vmem:[%s1214 + $0x1b0] sm:$0xff]
  %v1270 = vld [vmem:[%s1214 + $0x1b8] sm:$0xff]
  %v1271 = vld [vmem:[%s1214 + $0x1c0] sm:$0xff]
  %v1272 = vld [vmem:[%s1214 + $0x1c8] sm:$0xff]
  %v1273 = vld [vmem:[%s1214 + $0x1d0] sm:$0xff]
  %v1274 = vld [vmem:[%s1214 + $0x1d8] sm:$0xff]
  %v1275 = vld [vmem:[%s1214 + $0x1e0] sm:$0xff]
  %v1276 = vld [vmem:[%s1214 + $0x1e8] sm:$0xff]
  %v1277 = vld [vmem:[%s1214 + $0x1f0] sm:$0xff]
  %v1278 = vld [vmem:[%s1214 + $0x1f8] sm:$0xff]
  %s1279 = scalar_lea.vmem %s5, 4
  %v1280 = vld [vmem:[%s1279] sm:$0xf]
  %v1282 = vlaneseq
  %v1283 = vshrl.u32 %v1282, 7
  %v1284 = vsub.s32 0, %v1283
  %v1285 = vrot.slane %v1280, %v1284
  %v1286 = vlaneseq
  %v1287 = vshrl.u32 %v1286, 7
  %v1288 = vsub.s32 1, %v1287
  %v1289 = vrot.slane %v1280, %v1288
  %v1290 = vlaneseq
  %v1291 = vshrl.u32 %v1290, 7
  %v1292 = vsub.s32 2, %v1291
  %v1293 = vrot.slane %v1280, %v1292
  %v1294 = vlaneseq
  %v1295 = vshrl.u32 %v1294, 7
  %v1296 = vsub.s32 3, %v1295
  %v1297 = vrot.slane %v1280, %v1296
  %v1366 = vunpack.c.l.b16 %v1215
  %v1367 = vunpack.c.h.b16 %v1215
  %v1368 = vunpack.c.l.b16 %v1216
  %v1369 = vunpack.c.h.b16 %v1216
  %v1370 = vunpack.c.l.b16 %v1217
  %v1371 = vunpack.c.h.b16 %v1217
  %v1372 = vunpack.c.l.b16 %v1218
  %v1373 = vunpack.c.h.b16 %v1218
  %v1374 = vunpack.c.l.b16 %v1219
  %v1375 = vunpack.c.h.b16 %v1219
  %v1376 = vunpack.c.l.b16 %v1220
  %v1377 = vunpack.c.h.b16 %v1220
  %v1378 = vunpack.c.l.b16 %v1221
  %v1379 = vunpack.c.h.b16 %v1221
  %v1380 = vunpack.c.l.b16 %v1222
  %v1381 = vunpack.c.h.b16 %v1222
  %v1382 = vunpack.c.l.b16 %v1223
  %v1383 = vunpack.c.h.b16 %v1223
  %v1384 = vunpack.c.l.b16 %v1224
  %v1385 = vunpack.c.h.b16 %v1224
  %v1386 = vunpack.c.l.b16 %v1225
  %v1387 = vunpack.c.h.b16 %v1225
  %v1388 = vunpack.c.l.b16 %v1226
  %v1389 = vunpack.c.h.b16 %v1226
  %v1390 = vunpack.c.l.b16 %v1227
  %v1391 = vunpack.c.h.b16 %v1227
  %v1392 = vunpack.c.l.b16 %v1228
  %v1393 = vunpack.c.h.b16 %v1228
  %v1394 = vunpack.c.l.b16 %v1229
  %v1395 = vunpack.c.h.b16 %v1229
  %v1396 = vunpack.c.l.b16 %v1230
  %v1397 = vunpack.c.h.b16 %v1230
  %v1398 = vunpack.c.l.b16 %v1231
  %v1399 = vunpack.c.h.b16 %v1231
  %v1400 = vunpack.c.l.b16 %v1232
  %v1401 = vunpack.c.h.b16 %v1232
  %v1402 = vunpack.c.l.b16 %v1233
  %v1403 = vunpack.c.h.b16 %v1233
  %v1404 = vunpack.c.l.b16 %v1234
  %v1405 = vunpack.c.h.b16 %v1234
  %v1406 = vunpack.c.l.b16 %v1235
  %v1407 = vunpack.c.h.b16 %v1235
  %v1408 = vunpack.c.l.b16 %v1236
  %v1409 = vunpack.c.h.b16 %v1236
  %v1410 = vunpack.c.l.b16 %v1237
  %v1411 = vunpack.c.h.b16 %v1237
  %v1412 = vunpack.c.l.b16 %v1238
  %v1413 = vunpack.c.h.b16 %v1238
  %v1414 = vunpack.c.l.b16 %v1239
  %v1415 = vunpack.c.h.b16 %v1239
  %v1416 = vunpack.c.l.b16 %v1240
  %v1417 = vunpack.c.h.b16 %v1240
  %v1418 = vunpack.c.l.b16 %v1241
  %v1419 = vunpack.c.h.b16 %v1241
  %v1420 = vunpack.c.l.b16 %v1242
  %v1421 = vunpack.c.h.b16 %v1242
  %v1422 = vunpack.c.l.b16 %v1243
  %v1423 = vunpack.c.h.b16 %v1243
  %v1424 = vunpack.c.l.b16 %v1244
  %v1425 = vunpack.c.h.b16 %v1244
  %v1426 = vunpack.c.l.b16 %v1245
  %v1427 = vunpack.c.h.b16 %v1245
  %v1428 = vunpack.c.l.b16 %v1246
  %v1429 = vunpack.c.h.b16 %v1246
  %v1430 = vunpack.c.l.b16 %v1247
  %v1431 = vunpack.c.h.b16 %v1247
  %v1432 = vunpack.c.l.b16 %v1248
  %v1433 = vunpack.c.h.b16 %v1248
  %v1434 = vunpack.c.l.b16 %v1249
  %v1435 = vunpack.c.h.b16 %v1249
  %v1436 = vunpack.c.l.b16 %v1250
  %v1437 = vunpack.c.h.b16 %v1250
  %v1438 = vunpack.c.l.b16 %v1251
  %v1439 = vunpack.c.h.b16 %v1251
  %v1440 = vunpack.c.l.b16 %v1252
  %v1441 = vunpack.c.h.b16 %v1252
  %v1442 = vunpack.c.l.b16 %v1253
  %v1443 = vunpack.c.h.b16 %v1253
  %v1444 = vunpack.c.l.b16 %v1254
  %v1445 = vunpack.c.h.b16 %v1254
  %v1446 = vunpack.c.l.b16 %v1255
  %v1447 = vunpack.c.h.b16 %v1255
  %v1448 = vunpack.c.l.b16 %v1256
  %v1449 = vunpack.c.h.b16 %v1256
  %v1450 = vunpack.c.l.b16 %v1257
  %v1451 = vunpack.c.h.b16 %v1257
  %v1452 = vunpack.c.l.b16 %v1258
  %v1453 = vunpack.c.h.b16 %v1258
  %v1454 = vunpack.c.l.b16 %v1259
  %v1455 = vunpack.c.h.b16 %v1259
  %v1456 = vunpack.c.l.b16 %v1260
  %v1457 = vunpack.c.h.b16 %v1260
  %v1458 = vunpack.c.l.b16 %v1261
  %v1459 = vunpack.c.h.b16 %v1261
  %v1460 = vunpack.c.l.b16 %v1262
  %v1461 = vunpack.c.h.b16 %v1262
  %v1462 = vunpack.c.l.b16 %v1263
  %v1463 = vunpack.c.h.b16 %v1263
  %v1464 = vunpack.c.l.b16 %v1264
  %v1465 = vunpack.c.h.b16 %v1264
  %v1466 = vunpack.c.l.b16 %v1265
  %v1467 = vunpack.c.h.b16 %v1265
  %v1468 = vunpack.c.l.b16 %v1266
  %v1469 = vunpack.c.h.b16 %v1266
  %v1470 = vunpack.c.l.b16 %v1267
  %v1471 = vunpack.c.h.b16 %v1267
  %v1472 = vunpack.c.l.b16 %v1268
  %v1473 = vunpack.c.h.b16 %v1268
  %v1474 = vunpack.c.l.b16 %v1269
  %v1475 = vunpack.c.h.b16 %v1269
  %v1476 = vunpack.c.l.b16 %v1270
  %v1477 = vunpack.c.h.b16 %v1270
  %v1478 = vunpack.c.l.b16 %v1271
  %v1479 = vunpack.c.h.b16 %v1271
  %v1480 = vunpack.c.l.b16 %v1272
  %v1481 = vunpack.c.h.b16 %v1272
  %v1482 = vunpack.c.l.b16 %v1273
  %v1483 = vunpack.c.h.b16 %v1273
  %v1484 = vunpack.c.l.b16 %v1274
  %v1485 = vunpack.c.h.b16 %v1274
  %v1486 = vunpack.c.l.b16 %v1275
  %v1487 = vunpack.c.h.b16 %v1275
  %v1488 = vunpack.c.l.b16 %v1276
  %v1489 = vunpack.c.h.b16 %v1276
  %v1490 = vunpack.c.l.b16 %v1277
  %v1491 = vunpack.c.h.b16 %v1277
  %v1492 = vunpack.c.l.b16 %v1278
  %v1493 = vunpack.c.h.b16 %v1278
  %v1494 = vpack.c.b16 %v1370, %v1366
  %v1495 = vpack.c.b16 %v1371, %v1367
  %v1496 = vpack.c.b16 %v1372, %v1368
  %v1497 = vpack.c.b16 %v1373, %v1369
  %v1498 = vpack.c.b16 %v1378, %v1374
  %v1499 = vpack.c.b16 %v1379, %v1375
  %v1500 = vpack.c.b16 %v1380, %v1376
  %v1501 = vpack.c.b16 %v1381, %v1377
  %v1502 = vpack.c.b16 %v1386, %v1382
  %v1503 = vpack.c.b16 %v1387, %v1383
  %v1504 = vpack.c.b16 %v1388, %v1384
  %v1505 = vpack.c.b16 %v1389, %v1385
  %v1506 = vpack.c.b16 %v1394, %v1390
  %v1507 = vpack.c.b16 %v1395, %v1391
  %v1508 = vpack.c.b16 %v1396, %v1392
  %v1509 = vpack.c.b16 %v1397, %v1393
  %v1510 = vpack.c.b16 %v1402, %v1398
  %v1511 = vpack.c.b16 %v1403, %v1399
  %v1512 = vpack.c.b16 %v1404, %v1400
  %v1513 = vpack.c.b16 %v1405, %v1401
  %v1514 = vpack.c.b16 %v1410, %v1406
  %v1515 = vpack.c.b16 %v1411, %v1407
  %v1516 = vpack.c.b16 %v1412, %v1408
  %v1517 = vpack.c.b16 %v1413, %v1409
  %v1518 = vpack.c.b16 %v1418, %v1414
  %v1519 = vpack.c.b16 %v1419, %v1415
  %v1520 = vpack.c.b16 %v1420, %v1416
  %v1521 = vpack.c.b16 %v1421, %v1417
  %v1522 = vpack.c.b16 %v1426, %v1422
  %v1523 = vpack.c.b16 %v1427, %v1423
  %v1524 = vpack.c.b16 %v1428, %v1424
  %v1525 = vpack.c.b16 %v1429, %v1425
  %v1526 = vpack.c.b16 %v1434, %v1430
  %v1527 = vpack.c.b16 %v1435, %v1431
  %v1528 = vpack.c.b16 %v1436, %v1432
  %v1529 = vpack.c.b16 %v1437, %v1433
  %v1530 = vpack.c.b16 %v1442, %v1438
  %v1531 = vpack.c.b16 %v1443, %v1439
  %v1532 = vpack.c.b16 %v1444, %v1440
  %v1533 = vpack.c.b16 %v1445, %v1441
  %v1534 = vpack.c.b16 %v1450, %v1446
  %v1535 = vpack.c.b16 %v1451, %v1447
  %v1536 = vpack.c.b16 %v1452, %v1448
  %v1537 = vpack.c.b16 %v1453, %v1449
  %v1538 = vpack.c.b16 %v1458, %v1454
  %v1539 = vpack.c.b16 %v1459, %v1455
  %v1540 = vpack.c.b16 %v1460, %v1456
  %v1541 = vpack.c.b16 %v1461, %v1457
  %v1542 = vpack.c.b16 %v1466, %v1462
  %v1543 = vpack.c.b16 %v1467, %v1463
  %v1544 = vpack.c.b16 %v1468, %v1464
  %v1545 = vpack.c.b16 %v1469, %v1465
  %v1546 = vpack.c.b16 %v1474, %v1470
  %v1547 = vpack.c.b16 %v1475, %v1471
  %v1548 = vpack.c.b16 %v1476, %v1472
  %v1549 = vpack.c.b16 %v1477, %v1473
  %v1550 = vpack.c.b16 %v1482, %v1478
  %v1551 = vpack.c.b16 %v1483, %v1479
  %v1552 = vpack.c.b16 %v1484, %v1480
  %v1553 = vpack.c.b16 %v1485, %v1481
  %v1554 = vpack.c.b16 %v1490, %v1486
  %v1555 = vpack.c.b16 %v1491, %v1487
  %v1556 = vpack.c.b16 %v1492, %v1488
  %v1557 = vpack.c.b16 %v1493, %v1489
  %1622 = vmatprep.subr.bf16.mxu0 %v1495
  %1623 = vmatpush1.bf16.msra.mxu0 %v1494
  %1624 = vmatprep.subr.bf16.mxu0 %v1499
  %1625 = vmatpush1.bf16.msra.mxu0 %v1498
  %1626 = vmatprep.subr.bf16.mxu0 %v1503
  %1627 = vmatpush1.bf16.msra.mxu0 %v1502
  %1628 = vmatprep.subr.bf16.mxu0 %v1507
  %1629 = vmatpush1.bf16.msra.mxu0 %v1506
  %1630 = vmatprep.subr.bf16.mxu0 %v1511
  %1631 = vmatpush1.bf16.msra.mxu0 %v1510
  %1632 = vmatprep.subr.bf16.mxu0 %v1515
  %1633 = vmatpush1.bf16.msra.mxu0 %v1514
  %1634 = vmatprep.subr.bf16.mxu0 %v1519
  %1635 = vmatpush1.bf16.msra.mxu0 %v1518
  %1636 = vmatprep.subr.bf16.mxu0 %v1523
  %1637 = vmatpush1.bf16.msra.mxu0 %v1522
  %1638 = vmatprep.subr.bf16.mxu0 %v1527
  %1639 = vmatpush1.bf16.msra.mxu0 %v1526
  %1640 = vmatprep.subr.bf16.mxu0 %v1531
  %1641 = vmatpush1.bf16.msra.mxu0 %v1530
  %1642 = vmatprep.subr.bf16.mxu0 %v1535
  %1643 = vmatpush1.bf16.msra.mxu0 %v1534
  %1644 = vmatprep.subr.bf16.mxu0 %v1539
  %1645 = vmatpush1.bf16.msra.mxu0 %v1538
  %1646 = vmatprep.subr.bf16.mxu0 %v1543
  %1647 = vmatpush1.bf16.msra.mxu0 %v1542
  %1648 = vmatprep.subr.bf16.mxu0 %v1547
  %1649 = vmatpush1.bf16.msra.mxu0 %v1546
  %1650 = vmatprep.subr.bf16.mxu0 %v1551
  %1651 = vmatpush1.bf16.msra.mxu0 %v1550
  %1652 = vmatprep.subr.bf16.mxu0 %v1555
  %1653 = vmatpush1.bf16.msra.mxu0 %v1554
  %1654 = vmatprep.mubr.bf16.mxu0 %v1213
  %1655 = vmatmul.mubr.bf16.gmra.mrb[0].mxu0 %v1106
  %v1656 = vpop.f32.mrb[0].mxu0
  %v1657 = vadd.f32 %v1285, %v1656
  %v1658 = vpop.f32.mrb[0].mxu0
  %v1659 = vadd.f32 %v1289, %v1658
  %v1660 = vpop.f32.mrb[0].mxu0
  %v1661 = vpop.f32.mrb[0].mxu0
  %1662 = vdwg.mxu0
  %1663 = vmatprep.subr.bf16.mxu0 %v1497
  %1664 = vmatpush1.bf16.msra.mxu0 %v1496
  %1665 = vmatprep.subr.bf16.mxu0 %v1501
  %1666 = vmatpush1.bf16.msra.mxu0 %v1500
  %1667 = vmatprep.subr.bf16.mxu0 %v1505
  %1668 = vmatpush1.bf16.msra.mxu0 %v1504
  %1669 = vmatprep.subr.bf16.mxu0 %v1509
  %1670 = vmatpush1.bf16.msra.mxu0 %v1508
  %1671 = vmatprep.subr.bf16.mxu0 %v1513
  %1672 = vmatpush1.bf16.msra.mxu0 %v1512
  %1673 = vmatprep.subr.bf16.mxu0 %v1517
  %1674 = vmatpush1.bf16.msra.mxu0 %v1516
  %1675 = vmatprep.subr.bf16.mxu0 %v1521
  %1676 = vmatpush1.bf16.msra.mxu0 %v1520
  %1677 = vmatprep.subr.bf16.mxu0 %v1525
  %1678 = vmatpush1.bf16.msra.mxu0 %v1524
  %1679 = vmatprep.subr.bf16.mxu0 %v1529
  %1680 = vmatpush1.bf16.msra.mxu0 %v1528
  %1681 = vmatprep.subr.bf16.mxu0 %v1533
  %1682 = vmatpush1.bf16.msra.mxu0 %v1532
  %1683 = vmatprep.subr.bf16.mxu0 %v1537
  %1684 = vmatpush1.bf16.msra.mxu0 %v1536
  %1685 = vmatprep.subr.bf16.mxu0 %v1541
  %1686 = vmatpush1.bf16.msra.mxu0 %v1540
  %1687 = vmatprep.subr.bf16.mxu0 %v1545
  %1688 = vmatpush1.bf16.msra.mxu0 %v1544
  %1689 = vmatprep.subr.bf16.mxu0 %v1549
  %1690 = vmatpush1.bf16.msra.mxu0 %v1548
  %1691 = vmatprep.subr.bf16.mxu0 %v1553
  %1692 = vmatpush1.bf16.msra.mxu0 %v1552
  %1693 = vmatprep.subr.bf16.mxu0 %v1557
  %1694 = vmatpush1.bf16.msra.mxu0 %v1556
  %1695 = vmatprep.mubr.bf16.mxu0 %v1213
  %1696 = vmatmul.mubr.bf16.gmra.mrb[0].mxu0 %v1106
  %v1697 = vpop.f32.mrb[0].mxu0
  %v1698 = vadd.f32 %v1293, %v1697
  %v1699 = vpop.f32.mrb[0].mxu0
  %v1700 = vadd.f32 %v1297, %v1699
  %v1701 = vpop.f32.mrb[0].mxu0
  %v1702 = vpop.f32.mrb[0].mxu0
  %1703 = vdwg.mxu0
  %v1704 = vxor.u32 %v1657, 2147483648
  %v1705 = vxor.u32 %v1659, 2147483648
  %v1706 = vxor.u32 %v1698, 2147483648
  %v1707 = vmul.f32 %v1704, 1.442695
  %v1708 = vpow.pop %v1707
  %v1709 = vmul.f32 %v1705, 1.442695
  %v1710 = vpow.pop %v1709
  %v1711 = vmul.f32 %v1706, 1.442695
  %v1712 = vpow.pop %v1711
  %v1713 = vadd.f32 %v1708, 1.0
  %v1714 = vadd.f32 %v1710, 1.0
  %v1715 = vadd.f32 %v1712, 1.0
  %v1716 = vrcp.pop %v1713
  %v1717 = vmul.f32 1.0, %v1716
  %v1718 = vrcp.pop %v1714
  %v1719 = vmul.f32 1.0, %v1718
  %v1720 = vrcp.pop %v1715
  %v1721 = vmul.f32 1.0, %v1720
  %v1722 = vtanh.pop %v1700
  %v1723 = vmul.f32 %v1719, %v47
  %v1724 = vmul.f32 %v1717, %v1722
  %v1725 = vadd.f32 %v1723, %v1724
  %v1726 = vtanh.pop %v1725
  %v1727 = vmul.f32 %v1721, %v1726
  %s1728 = scalar_lea.vmem %s0, 48
  %v1729 = vld [vmem:[%s1728] sm:$0xff]
  %v1730 = vld [vmem:[%s1728 + $0x8] sm:$0xff]
  %v1731 = vunpack.c.l.bf16 %v1729
  %v1732 = vunpack.c.h.bf16 %v1729
  %v1733 = vunpack.c.l.bf16 %v1730
  %v1734 = vunpack.c.h.bf16 %v1730
  %v1735 = vpack.c.bf16 %v1105, %v1105
  %1736 = vmatprep.subr.bf16.mxu0 %v184
  %1737 = vmatpush1.bf16.msra.mxu0 %v183
  %1738 = vmatprep.subr.bf16.mxu0 %v188
  %1739 = vmatpush1.bf16.msra.mxu0 %v187
  %1740 = vmatprep.subr.bf16.mxu0 %v192
  %1741 = vmatpush1.bf16.msra.mxu0 %v191
  %1742 = vmatprep.subr.bf16.mxu0 %v196
  %1743 = vmatpush1.bf16.msra.mxu0 %v195
  %1744 = vmatprep.subr.bf16.mxu0 %v200
  %1745 = vmatpush1.bf16.msra.mxu0 %v199
  %1746 = vmatprep.subr.bf16.mxu0 %v204
  %1747 = vmatpush1.bf16.msra.mxu0 %v203
  %1748 = vmatprep.subr.bf16.mxu0 %v208
  %1749 = vmatpush1.bf16.msra.mxu0 %v207
  %1750 = vmatprep.subr.bf16.mxu0 %v212
  %1751 = vmatpush1.bf16.msra.mxu0 %v211
  %1752 = vmatprep.subr.bf16.mxu0 0
  %1753 = vmatpush1.bf16.msra.mxu0 0
  %1754 = vmatprep.subr.bf16.mxu0 0
  %1755 = vmatpush1.bf16.msra.mxu0 0
  %1756 = vmatprep.subr.bf16.mxu0 0
  %1757 = vmatpush1.bf16.msra.mxu0 0
  %1758 = vmatprep.subr.bf16.mxu0 0
  %1759 = vmatpush1.bf16.msra.mxu0 0
  %1760 = vmatprep.subr.bf16.mxu0 0
  %1761 = vmatpush1.bf16.msra.mxu0 0
  %1762 = vmatprep.subr.bf16.mxu0 0
  %1763 = vmatpush1.bf16.msra.mxu0 0
  %1764 = vmatprep.subr.bf16.mxu0 0
  %1765 = vmatpush1.bf16.msra.mxu0 0
  %1766 = vmatprep.subr.bf16.mxu0 0
  %1767 = vmatpush1.bf16.msra.mxu0 0
  %1768 = vmatprep.mubr.bf16.mxu0 0
  %1769 = vmatmul.mubr.bf16.gmra.mrb[0].mxu0 %v1735
  %v1770 = vpop.f32.mrb[0].mxu0
  %v1771 = vadd.f32 0.0, %v1770
  %v1772 = vpop.f32.mrb[0].mxu0
  %v1773 = vadd.f32 0.0, %v1772
  %v1774 = vpop.f32.mrb[0].mxu0
  %v1775 = vpop.f32.mrb[0].mxu0
  %1776 = vdwg.mxu0
  %1777 = vmatprep.subr.bf16.mxu0 %v186
  %1778 = vmatpush1.bf16.msra.mxu0 %v185
  %1779 = vmatprep.subr.bf16.mxu0 %v190
  %1780 = vmatpush1.bf16.msra.mxu0 %v189
  %1781 = vmatprep.subr.bf16.mxu0 %v194
  %1782 = vmatpush1.bf16.msra.mxu0 %v193
  %1783 = vmatprep.subr.bf16.mxu0 %v198
  %1784 = vmatpush1.bf16.msra.mxu0 %v197
  %1785 = vmatprep.subr.bf16.mxu0 %v202
  %1786 = vmatpush1.bf16.msra.mxu0 %v201
  %1787 = vmatprep.subr.bf16.mxu0 %v206
  %1788 = vmatpush1.bf16.msra.mxu0 %v205
  %1789 = vmatprep.subr.bf16.mxu0 %v210
  %1790 = vmatpush1.bf16.msra.mxu0 %v209
  %1791 = vmatprep.subr.bf16.mxu0 %v214
  %1792 = vmatpush1.bf16.msra.mxu0 %v213
  %1793 = vmatprep.subr.bf16.mxu0 0
  %1794 = vmatpush1.bf16.msra.mxu0 0
  %1795 = vmatprep.subr.bf16.mxu0 0
  %1796 = vmatpush1.bf16.msra.mxu0 0
  %1797 = vmatprep.subr.bf16.mxu0 0
  %1798 = vmatpush1.bf16.msra.mxu0 0
  %1799 = vmatprep.subr.bf16.mxu0 0
  %1800 = vmatpush1.bf16.msra.mxu0 0
  %1801 = vmatprep.subr.bf16.mxu0 0
  %1802 = vmatpush1.bf16.msra.mxu0 0
  %1803 = vmatprep.subr.bf16.mxu0 0
  %1804 = vmatpush1.bf16.msra.mxu0 0
  %1805 = vmatprep.subr.bf16.mxu0 0
  %1806 = vmatpush1.bf16.msra.mxu0 0
  %1807 = vmatprep.subr.bf16.mxu0 0
  %1808 = vmatpush1.bf16.msra.mxu0 0
  %1809 = vmatprep.mubr.bf16.mxu0 0
  %1810 = vmatmul.mubr.bf16.gmra.mrb[0].mxu0 %v1735
  %v1811 = vpop.f32.mrb[0].mxu0
  %v1812 = vadd.f32 0.0, %v1811
  %v1813 = vpop.f32.mrb[0].mxu0
  %v1814 = vadd.f32 0.0, %v1813
  %v1815 = vpop.f32.mrb[0].mxu0
  %v1816 = vpop.f32.mrb[0].mxu0
  %1817 = vdwg.mxu0
  %v1818 = vadd.f32 %v1731, %v1771
  %v1819 = vadd.f32 %v1732, %v1773
  %v1820 = vadd.f32 %v1733, %v1812
  %v1821 = vadd.f32 %v1734, %v1814
  %v1822 = vxor.u32 %v1818, 2147483648
  %v1823 = vxor.u32 %v1819, 2147483648
  %v1824 = vxor.u32 %v1820, 2147483648
  %v1825 = vmul.f32 %v1822, 1.442695
  %v1826 = vpow.pop %v1825
  %v1827 = vmul.f32 %v1823, 1.442695
  %v1828 = vpow.pop %v1827
  %v1829 = vmul.f32 %v1824, 1.442695
  %v1830 = vpow.pop %v1829
  %v1831 = vadd.f32 %v1826, 1.0
  %v1832 = vadd.f32 %v1828, 1.0
  %v1833 = vadd.f32 %v1830, 1.0
  %v1834 = vrcp.pop %v1831
  %v1835 = vmul.f32 1.0, %v1834
  %v1836 = vrcp.pop %v1832
  %v1837 = vmul.f32 1.0, %v1836
  %v1838 = vrcp.pop %v1833
  %v1839 = vmul.f32 1.0, %v1838
  %v1840 = vtanh.pop %v1821
  %v1841 = vmul.f32 %v1837, %v1103
  %v1842 = vmul.f32 %v1835, %v1840
  %v1843 = vadd.f32 %v1841, %v1842
  %v1844 = vtanh.pop %v1843
  %v1845 = vmul.f32 %v1839, %v1844
  %v1846 = vpack.c.bf16 %v1212, %v1212
  %1847 = vmatprep.subr.bf16.mxu0 %v755
  %1848 = vmatpush1.bf16.msra.mxu0 %v754
  %1849 = vmatprep.subr.bf16.mxu0 %v759
  %1850 = vmatpush1.bf16.msra.mxu0 %v758
  %1851 = vmatprep.subr.bf16.mxu0 %v763
  %1852 = vmatpush1.bf16.msra.mxu0 %v762
  %1853 = vmatprep.subr.bf16.mxu0 %v767
  %1854 = vmatpush1.bf16.msra.mxu0 %v766
  %1855 = vmatprep.subr.bf16.mxu0 %v771
  %1856 = vmatpush1.bf16.msra.mxu0 %v770
  %1857 = vmatprep.subr.bf16.mxu0 %v775
  %1858 = vmatpush1.bf16.msra.mxu0 %v774
  %1859 = vmatprep.subr.bf16.mxu0 %v779
  %1860 = vmatpush1.bf16.msra.mxu0 %v778
  %1861 = vmatprep.subr.bf16.mxu0 %v783
  %1862 = vmatpush1.bf16.msra.mxu0 %v782
  %1863 = vmatprep.subr.bf16.mxu0 %v787
  %1864 = vmatpush1.bf16.msra.mxu0 %v786
  %1865 = vmatprep.subr.bf16.mxu0 %v791
  %1866 = vmatpush1.bf16.msra.mxu0 %v790
  %1867 = vmatprep.subr.bf16.mxu0 %v795
  %1868 = vmatpush1.bf16.msra.mxu0 %v794
  %1869 = vmatprep.subr.bf16.mxu0 %v799
  %1870 = vmatpush1.bf16.msra.mxu0 %v798
  %1871 = vmatprep.subr.bf16.mxu0 %v803
  %1872 = vmatpush1.bf16.msra.mxu0 %v802
  %1873 = vmatprep.subr.bf16.mxu0 %v807
  %1874 = vmatpush1.bf16.msra.mxu0 %v806
  %1875 = vmatprep.subr.bf16.mxu0 %v811
  %1876 = vmatpush1.bf16.msra.mxu0 %v810
  %1877 = vmatprep.subr.bf16.mxu0 %v815
  %1878 = vmatpush1.bf16.msra.mxu0 %v814
  %1879 = vmatprep.mubr.bf16.mxu0 %v1846
  %1880 = vmatmul.mubr.bf16.gmra.mrb[0].mxu0 %v1735
  %v1881 = vpop.f32.mrb[0].mxu0
  %v1882 = vadd.f32 %v545, %v1881
  %v1883 = vpop.f32.mrb[0].mxu0
  %v1884 = vadd.f32 %v549, %v1883
  %v1885 = vpop.f32.mrb[0].mxu0
  %v1886 = vpop.f32.mrb[0].mxu0
  %1887 = vdwg.mxu0
  %1888 = vmatprep.subr.bf16.mxu0 %v757
  %1889 = vmatpush1.bf16.msra.mxu0 %v756
  %1890 = vmatprep.subr.bf16.mxu0 %v761
  %1891 = vmatpush1.bf16.msra.mxu0 %v760
  %1892 = vmatprep.subr.bf16.mxu0 %v765
  %1893 = vmatpush1.bf16.msra.mxu0 %v764
  %1894 = vmatprep.subr.bf16.mxu0 %v769
  %1895 = vmatpush1.bf16.msra.mxu0 %v768
  %1896 = vmatprep.subr.bf16.mxu0 %v773
  %1897 = vmatpush1.bf16.msra.mxu0 %v772
  %1898 = vmatprep.subr.bf16.mxu0 %v777
  %1899 = vmatpush1.bf16.msra.mxu0 %v776
  %1900 = vmatprep.subr.bf16.mxu0 %v781
  %1901 = vmatpush1.bf16.msra.mxu0 %v780
  %1902 = vmatprep.subr.bf16.mxu0 %v785
  %1903 = vmatpush1.bf16.msra.mxu0 %v784
  %1904 = vmatprep.subr.bf16.mxu0 %v789
  %1905 = vmatpush1.bf16.msra.mxu0 %v788
  %1906 = vmatprep.subr.bf16.mxu0 %v793
  %1907 = vmatpush1.bf16.msra.mxu0 %v792
  %1908 = vmatprep.subr.bf16.mxu0 %v797
  %1909 = vmatpush1.bf16.msra.mxu0 %v796
  %1910 = vmatprep.subr.bf16.mxu0 %v801
  %1911 = vmatpush1.bf16.msra.mxu0 %v800
  %1912 = vmatprep.subr.bf16.mxu0 %v805
  %1913 = vmatpush1.bf16.msra.mxu0 %v804
  %1914 = vmatprep.subr.bf16.mxu0 %v809
  %1915 = vmatpush1.bf16.msra.mxu0 %v808
  %1916 = vmatprep.subr.bf16.mxu0 %v813
  %1917 = vmatpush1.bf16.msra.mxu0 %v812
  %1918 = vmatprep.subr.bf16.mxu0 %v817
  %1919 = vmatpush1.bf16.msra.mxu0 %v816
  %1920 = vmatprep.mubr.bf16.mxu0 %v1846
  %1921 = vmatmul.mubr.bf16.gmra.mrb[0].mxu0 %v1735
  %v1922 = vpop.f32.mrb[0].mxu0
  %v1923 = vadd.f32 %v553, %v1922
  %v1924 = vpop.f32.mrb[0].mxu0
  %v1925 = vadd.f32 %v557, %v1924
  %v1926 = vpop.f32.mrb[0].mxu0
  %v1927 = vpop.f32.mrb[0].mxu0
  %1928 = vdwg.mxu0
  %v1929 = vxor.u32 %v1882, 2147483648
  %v1930 = vxor.u32 %v1884, 2147483648
  %v1931 = vxor.u32 %v1923, 2147483648
  %v1932 = vmul.f32 %v1929, 1.442695
  %v1933 = vpow.pop %v1932
  %v1934 = vmul.f32 %v1930, 1.442695
  %v1935 = vpow.pop %v1934
  %v1936 = vmul.f32 %v1931, 1.442695
  %v1937 = vpow.pop %v1936
  %v1938 = vadd.f32 %v1933, 1.0
  %v1939 = vadd.f32 %v1935, 1.0
  %v1940 = vadd.f32 %v1937, 1.0
  %v1941 = vrcp.pop %v1938
  %v1942 = vmul.f32 1.0, %v1941
  %v1943 = vrcp.pop %v1939
  %v1944 = vmul.f32 1.0, %v1943
  %v1945 = vrcp.pop %v1940
  %v1946 = vmul.f32 1.0, %v1945
  %v1947 = vtanh.pop %v1925
  %v1948 = vmul.f32 %v1944, %v1210
  %v1949 = vmul.f32 %v1942, %v1947
  %v1950 = vadd.f32 %v1948, %v1949
  %v1951 = vtanh.pop %v1950
  %v1952 = vmul.f32 %v1946, %v1951
  %v1953 = vpack.c.bf16 %v1727, %v1727
  %1954 = vmatprep.subr.bf16.mxu0 %v1495
  %1955 = vmatpush1.bf16.msra.mxu0 %v1494
  %1956 = vmatprep.subr.bf16.mxu0 %v1499
  %1957 = vmatpush1.bf16.msra.mxu0 %v1498
  %1958 = vmatprep.subr.bf16.mxu0 %v1503
  %1959 = vmatpush1.bf16.msra.mxu0 %v1502
  %1960 = vmatprep.subr.bf16.mxu0 %v1507
  %1961 = vmatpush1.bf16.msra.mxu0 %v1506
  %1962 = vmatprep.subr.bf16.mxu0 %v1511
  %1963 = vmatpush1.bf16.msra.mxu0 %v1510
  %1964 = vmatprep.subr.bf16.mxu0 %v1515
  %1965 = vmatpush1.bf16.msra.mxu0 %v1514
  %1966 = vmatprep.subr.bf16.mxu0 %v1519
  %1967 = vmatpush1.bf16.msra.mxu0 %v1518
  %1968 = vmatprep.subr.bf16.mxu0 %v1523
  %1969 = vmatpush1.bf16.msra.mxu0 %v1522
  %1970 = vmatprep.subr.bf16.mxu0 %v1527
  %1971 = vmatpush1.bf16.msra.mxu0 %v1526
  %1972 = vmatprep.subr.bf16.mxu0 %v1531
  %1973 = vmatpush1.bf16.msra.mxu0 %v1530
  %1974 = vmatprep.subr.bf16.mxu0 %v1535
  %1975 = vmatpush1.bf16.msra.mxu0 %v1534
  %1976 = vmatprep.subr.bf16.mxu0 %v1539
  %1977 = vmatpush1.bf16.msra.mxu0 %v1538
  %1978 = vmatprep.subr.bf16.mxu0 %v1543
  %1979 = vmatpush1.bf16.msra.mxu0 %v1542
  %1980 = vmatprep.subr.bf16.mxu0 %v1547
  %1981 = vmatpush1.bf16.msra.mxu0 %v1546
  %1982 = vmatprep.subr.bf16.mxu0 %v1551
  %1983 = vmatpush1.bf16.msra.mxu0 %v1550
  %1984 = vmatprep.subr.bf16.mxu0 %v1555
  %1985 = vmatpush1.bf16.msra.mxu0 %v1554
  %1986 = vmatprep.mubr.bf16.mxu0 %v1953
  %1987 = vmatmul.mubr.bf16.gmra.mrb[0].mxu0 %v1846
  %v1988 = vpop.f32.mrb[0].mxu0
  %v1989 = vadd.f32 %v1285, %v1988
  %v1990 = vpop.f32.mrb[0].mxu0
  %v1991 = vadd.f32 %v1289, %v1990
  %v1992 = vpop.f32.mrb[0].mxu0
  %v1993 = vpop.f32.mrb[0].mxu0
  %1994 = vdwg.mxu0
  %1995 = vmatprep.subr.bf16.mxu0 %v1497
  %1996 = vmatpush1.bf16.msra.mxu0 %v1496
  %1997 = vmatprep.subr.bf16.mxu0 %v1501
  %1998 = vmatpush1.bf16.msra.mxu0 %v1500
  %1999 = vmatprep.subr.bf16.mxu0 %v1505
  %2000 = vmatpush1.bf16.msra.mxu0 %v1504
  %2001 = vmatprep.subr.bf16.mxu0 %v1509
  %2002 = vmatpush1.bf16.msra.mxu0 %v1508
  %2003 = vmatprep.subr.bf16.mxu0 %v1513
  %2004 = vmatpush1.bf16.msra.mxu0 %v1512
  %2005 = vmatprep.subr.bf16.mxu0 %v1517
  %2006 = vmatpush1.bf16.msra.mxu0 %v1516
  %2007 = vmatprep.subr.bf16.mxu0 %v1521
  %2008 = vmatpush1.bf16.msra.mxu0 %v1520
  %2009 = vmatprep.subr.bf16.mxu0 %v1525
  %2010 = vmatpush1.bf16.msra.mxu0 %v1524
  %2011 = vmatprep.subr.bf16.mxu0 %v1529
  %2012 = vmatpush1.bf16.msra.mxu0 %v1528
  %2013 = vmatprep.subr.bf16.mxu0 %v1533
  %2014 = vmatpush1.bf16.msra.mxu0 %v1532
  %2015 = vmatprep.subr.bf16.mxu0 %v1537
  %2016 = vmatpush1.bf16.msra.mxu0 %v1536
  %2017 = vmatprep.subr.bf16.mxu0 %v1541
  %2018 = vmatpush1.bf16.msra.mxu0 %v1540
  %2019 = vmatprep.subr.bf16.mxu0 %v1545
  %2020 = vmatpush1.bf16.msra.mxu0 %v1544
  %2021 = vmatprep.subr.bf16.mxu0 %v1549
  %2022 = vmatpush1.bf16.msra.mxu0 %v1548
  %2023 = vmatprep.subr.bf16.mxu0 %v1553
  %2024 = vmatpush1.bf16.msra.mxu0 %v1552
  %2025 = vmatprep.subr.bf16.mxu0 %v1557
  %2026 = vmatpush1.bf16.msra.mxu0 %v1556
  %2027 = vmatprep.mubr.bf16.mxu0 %v1953
  %2028 = vmatmul.mubr.bf16.gmra.mrb[0].mxu0 %v1846
  %v2029 = vpop.f32.mrb[0].mxu0
  %v2030 = vadd.f32 %v1293, %v2029
  %v2031 = vpop.f32.mrb[0].mxu0
  %v2032 = vadd.f32 %v1297, %v2031
  %v2033 = vpop.f32.mrb[0].mxu0
  %v2034 = vpop.f32.mrb[0].mxu0
  %2035 = vdwg.mxu0
  %v2036 = vxor.u32 %v1989, 2147483648
  %v2037 = vxor.u32 %v1991, 2147483648
  %v2038 = vxor.u32 %v2030, 2147483648
  %v2039 = vmul.f32 %v2036, 1.442695
  %v2040 = vpow.pop %v2039
  %v2041 = vmul.f32 %v2037, 1.442695
  %v2042 = vpow.pop %v2041
  %v2043 = vmul.f32 %v2038, 1.442695
  %v2044 = vpow.pop %v2043
  %v2045 = vadd.f32 %v2040, 1.0
  %v2046 = vadd.f32 %v2042, 1.0
  %v2047 = vadd.f32 %v2044, 1.0
  %v2048 = vrcp.pop %v2045
  %v2049 = vmul.f32 1.0, %v2048
  %v2050 = vrcp.pop %v2046
  %v2051 = vmul.f32 1.0, %v2050
  %v2052 = vrcp.pop %v2047
  %v2053 = vmul.f32 1.0, %v2052
  %v2054 = vtanh.pop %v2032
  %v2055 = vmul.f32 %v2051, %v1725
  %v2056 = vmul.f32 %v2049, %v2054
  %v2057 = vadd.f32 %v2055, %v2056
  %v2058 = vtanh.pop %v2057
  %v2059 = vmul.f32 %v2053, %v2058
  %s2060 = scalar_lea.vmem %s0, 64
  %v2061 = vld [vmem:[%s2060] sm:$0xff]
  %v2062 = vld [vmem:[%s2060 + $0x8] sm:$0xff]
  %v2063 = vunpack.c.l.bf16 %v2061
  %v2064 = vunpack.c.h.bf16 %v2061
  %v2065 = vunpack.c.l.bf16 %v2062
  %v2066 = vunpack.c.h.bf16 %v2062
  %v2067 = vpack.c.bf16 %v1845, %v1845
  %2068 = vmatprep.subr.bf16.mxu0 %v184
  %2069 = vmatpush1.bf16.msra.mxu0 %v183
  %2070 = vmatprep.subr.bf16.mxu0 %v188
  %2071 = vmatpush1.bf16.msra.mxu0 %v187
  %2072 = vmatprep.subr.bf16.mxu0 %v192
  %2073 = vmatpush1.bf16.msra.mxu0 %v191
  %2074 = vmatprep.subr.bf16.mxu0 %v196
  %2075 = vmatpush1.bf16.msra.mxu0 %v195
  %2076 = vmatprep.subr.bf16.mxu0 %v200
  %2077 = vmatpush1.bf16.msra.mxu0 %v199
  %2078 = vmatprep.subr.bf16.mxu0 %v204
  %2079 = vmatpush1.bf16.msra.mxu0 %v203
  %2080 = vmatprep.subr.bf16.mxu0 %v208
  %2081 = vmatpush1.bf16.msra.mxu0 %v207
  %2082 = vmatprep.subr.bf16.mxu0 %v212
  %2083 = vmatpush1.bf16.msra.mxu0 %v211
  %2084 = vmatprep.subr.bf16.mxu0 0
  %2085 = vmatpush1.bf16.msra.mxu0 0
  %2086 = vmatprep.subr.bf16.mxu0 0
  %2087 = vmatpush1.bf16.msra.mxu0 0
  %2088 = vmatprep.subr.bf16.mxu0 0
  %2089 = vmatpush1.bf16.msra.mxu0 0
  %2090 = vmatprep.subr.bf16.mxu0 0
  %2091 = vmatpush1.bf16.msra.mxu0 0
  %2092 = vmatprep.subr.bf16.mxu0 0
  %2093 = vmatpush1.bf16.msra.mxu0 0
  %2094 = vmatprep.subr.bf16.mxu0 0
  %2095 = vmatpush1.bf16.msra.mxu0 0
  %2096 = vmatprep.subr.bf16.mxu0 0
  %2097 = vmatpush1.bf16.msra.mxu0 0
  %2098 = vmatprep.subr.bf16.mxu0 0
  %2099 = vmatpush1.bf16.msra.mxu0 0
  %2100 = vmatprep.mubr.bf16.mxu0 0
  %2101 = vmatmul.mubr.bf16.gmra.mrb[0].mxu0 %v2067
  %v2102 = vpop.f32.mrb[0].mxu0
  %v2103 = vadd.f32 0.0, %v2102
  %v2104 = vpop.f32.mrb[0].mxu0
  %v2105 = vadd.f32 0.0, %v2104
  %v2106 = vpop.f32.mrb[0].mxu0
  %v2107 = vpop.f32.mrb[0].mxu0
  %2108 = vdwg.mxu0
  %2109 = vmatprep.subr.bf16.mxu0 %v186
  %2110 = vmatpush1.bf16.msra.mxu0 %v185
  %2111 = vmatprep.subr.bf16.mxu0 %v190
  %2112 = vmatpush1.bf16.msra.mxu0 %v189
  %2113 = vmatprep.subr.bf16.mxu0 %v194
  %2114 = vmatpush1.bf16.msra.mxu0 %v193
  %2115 = vmatprep.subr.bf16.mxu0 %v198
  %2116 = vmatpush1.bf16.msra.mxu0 %v197
  %2117 = vmatprep.subr.bf16.mxu0 %v202
  %2118 = vmatpush1.bf16.msra.mxu0 %v201
  %2119 = vmatprep.subr.bf16.mxu0 %v206
  %2120 = vmatpush1.bf16.msra.mxu0 %v205
  %2121 = vmatprep.subr.bf16.mxu0 %v210
  %2122 = vmatpush1.bf16.msra.mxu0 %v209
  %2123 = vmatprep.subr.bf16.mxu0 %v214
  %2124 = vmatpush1.bf16.msra.mxu0 %v213
  %2125 = vmatprep.subr.bf16.mxu0 0
  %2126 = vmatpush1.bf16.msra.mxu0 0
  %2127 = vmatprep.subr.bf16.mxu0 0
  %2128 = vmatpush1.bf16.msra.mxu0 0
  %2129 = vmatprep.subr.bf16.mxu0 0
  %2130 = vmatpush1.bf16.msra.mxu0 0
  %2131 = vmatprep.subr.bf16.mxu0 0
  %2132 = vmatpush1.bf16.msra.mxu0 0
  %2133 = vmatprep.subr.bf16.mxu0 0
  %2134 = vmatpush1.bf16.msra.mxu0 0
  %2135 = vmatprep.subr.bf16.mxu0 0
  %2136 = vmatpush1.bf16.msra.mxu0 0
  %2137 = vmatprep.subr.bf16.mxu0 0
  %2138 = vmatpush1.bf16.msra.mxu0 0
  %2139 = vmatprep.subr.bf16.mxu0 0
  %2140 = vmatpush1.bf16.msra.mxu0 0
  %2141 = vmatprep.mubr.bf16.mxu0 0
  %2142 = vmatmul.mubr.bf16.gmra.mrb[0].mxu0 %v2067
  %v2143 = vpop.f32.mrb[0].mxu0
  %v2144 = vadd.f32 0.0, %v2143
  %v2145 = vpop.f32.mrb[0].mxu0
  %v2146 = vadd.f32 0.0, %v2145
  %v2147 = vpop.f32.mrb[0].mxu0
  %v2148 = vpop.f32.mrb[0].mxu0
  %2149 = vdwg.mxu0
  %v2150 = vadd.f32 %v2063, %v2103
  %v2151 = vadd.f32 %v2064, %v2105
  %v2152 = vadd.f32 %v2065, %v2144
  %v2153 = vadd.f32 %v2066, %v2146
  %v2154 = vxor.u32 %v2150, 2147483648
  %v2155 = vxor.u32 %v2151, 2147483648
  %v2156 = vxor.u32 %v2152, 2147483648
  %v2157 = vmul.f32 %v2154, 1.442695
  %v2158 = vpow.pop %v2157
  %v2159 = vmul.f32 %v2155, 1.442695
  %v2160 = vpow.pop %v2159
  %v2161 = vmul.f32 %v2156, 1.442695
  %v2162 = vpow.pop %v2161
  %v2163 = vadd.f32 %v2158, 1.0
  %v2164 = vadd.f32 %v2160, 1.0
  %v2165 = vadd.f32 %v2162, 1.0
  %v2166 = vrcp.pop %v2163
  %v2167 = vmul.f32 1.0, %v2166
  %v2168 = vrcp.pop %v2164
  %v2169 = vmul.f32 1.0, %v2168
  %v2170 = vrcp.pop %v2165
  %v2171 = vmul.f32 1.0, %v2170
  %v2172 = vtanh.pop %v2153
  %v2173 = vmul.f32 %v2169, %v1843
  %v2174 = vmul.f32 %v2167, %v2172
  %v2175 = vadd.f32 %v2173, %v2174
  %v2176 = vtanh.pop %v2175
  %v2177 = vmul.f32 %v2171, %v2176
  %v2178 = vpack.c.bf16 %v1952, %v1952
  %2179 = vmatprep.subr.bf16.mxu0 %v755
  %2180 = vmatpush1.bf16.msra.mxu0 %v754
  %2181 = vmatprep.subr.bf16.mxu0 %v759
  %2182 = vmatpush1.bf16.msra.mxu0 %v758
  %2183 = vmatprep.subr.bf16.mxu0 %v763
  %2184 = vmatpush1.bf16.msra.mxu0 %v762
  %2185 = vmatprep.subr.bf16.mxu0 %v767
  %2186 = vmatpush1.bf16.msra.mxu0 %v766
  %2187 = vmatprep.subr.bf16.mxu0 %v771
  %2188 = vmatpush1.bf16.msra.mxu0 %v770
  %2189 = vmatprep.subr.bf16.mxu0 %v775
  %2190 = vmatpush1.bf16.msra.mxu0 %v774
  %2191 = vmatprep.subr.bf16.mxu0 %v779
  %2192 = vmatpush1.bf16.msra.mxu0 %v778
  %2193 = vmatprep.subr.bf16.mxu0 %v783
  %2194 = vmatpush1.bf16.msra.mxu0 %v782
  %2195 = vmatprep.subr.bf16.mxu0 %v787
  %2196 = vmatpush1.bf16.msra.mxu0 %v786
  %2197 = vmatprep.subr.bf16.mxu0 %v791
  %2198 = vmatpush1.bf16.msra.mxu0 %v790
  %2199 = vmatprep.subr.bf16.mxu0 %v795
  %2200 = vmatpush1.bf16.msra.mxu0 %v794
  %2201 = vmatprep.subr.bf16.mxu0 %v799
  %2202 = vmatpush1.bf16.msra.mxu0 %v798
  %2203 = vmatprep.subr.bf16.mxu0 %v803
  %2204 = vmatpush1.bf16.msra.mxu0 %v802
  %2205 = vmatprep.subr.bf16.mxu0 %v807
  %2206 = vmatpush1.bf16.msra.mxu0 %v806
  %2207 = vmatprep.subr.bf16.mxu0 %v811
  %2208 = vmatpush1.bf16.msra.mxu0 %v810
  %2209 = vmatprep.subr.bf16.mxu0 %v815
  %2210 = vmatpush1.bf16.msra.mxu0 %v814
  %2211 = vmatprep.mubr.bf16.mxu0 %v2178
  %2212 = vmatmul.mubr.bf16.gmra.mrb[0].mxu0 %v2067
  %v2213 = vpop.f32.mrb[0].mxu0
  %v2214 = vadd.f32 %v545, %v2213
  %v2215 = vpop.f32.mrb[0].mxu0
  %v2216 = vadd.f32 %v549, %v2215
  %v2217 = vpop.f32.mrb[0].mxu0
  %v2218 = vpop.f32.mrb[0].mxu0
  %2219 = vdwg.mxu0
  %2220 = vmatprep.subr.bf16.mxu0 %v757
  %2221 = vmatpush1.bf16.msra.mxu0 %v756
  %2222 = vmatprep.subr.bf16.mxu0 %v761
  %2223 = vmatpush1.bf16.msra.mxu0 %v760
  %2224 = vmatprep.subr.bf16.mxu0 %v765
  %2225 = vmatpush1.bf16.msra.mxu0 %v764
  %2226 = vmatprep.subr.bf16.mxu0 %v769
  %2227 = vmatpush1.bf16.msra.mxu0 %v768
  %2228 = vmatprep.subr.bf16.mxu0 %v773
  %2229 = vmatpush1.bf16.msra.mxu0 %v772
  %2230 = vmatprep.subr.bf16.mxu0 %v777
  %2231 = vmatpush1.bf16.msra.mxu0 %v776
  %2232 = vmatprep.subr.bf16.mxu0 %v781
  %2233 = vmatpush1.bf16.msra.mxu0 %v780
  %2234 = vmatprep.subr.bf16.mxu0 %v785
  %2235 = vmatpush1.bf16.msra.mxu0 %v784
  %2236 = vmatprep.subr.bf16.mxu0 %v789
  %2237 = vmatpush1.bf16.msra.mxu0 %v788
  %2238 = vmatprep.subr.bf16.mxu0 %v793
  %2239 = vmatpush1.bf16.msra.mxu0 %v792
  %2240 = vmatprep.subr.bf16.mxu0 %v797
  %2241 = vmatpush1.bf16.msra.mxu0 %v796
  %2242 = vmatprep.subr.bf16.mxu0 %v801
  %2243 = vmatpush1.bf16.msra.mxu0 %v800
  %2244 = vmatprep.subr.bf16.mxu0 %v805
  %2245 = vmatpush1.bf16.msra.mxu0 %v804
  %2246 = vmatprep.subr.bf16.mxu0 %v809
  %2247 = vmatpush1.bf16.msra.mxu0 %v808
  %2248 = vmatprep.subr.bf16.mxu0 %v813
  %2249 = vmatpush1.bf16.msra.mxu0 %v812
  %2250 = vmatprep.subr.bf16.mxu0 %v817
  %2251 = vmatpush1.bf16.msra.mxu0 %v816
  %2252 = vmatprep.mubr.bf16.mxu0 %v2178
  %2253 = vmatmul.mubr.bf16.gmra.mrb[0].mxu0 %v2067
  %v2254 = vpop.f32.mrb[0].mxu0
  %v2255 = vadd.f32 %v553, %v2254
  %v2256 = vpop.f32.mrb[0].mxu0
  %v2257 = vadd.f32 %v557, %v2256
  %v2258 = vpop.f32.mrb[0].mxu0
  %v2259 = vpop.f32.mrb[0].mxu0
  %2260 = vdwg.mxu0
  %v2261 = vxor.u32 %v2214, 2147483648
  %v2262 = vxor.u32 %v2216, 2147483648
  %v2263 = vxor.u32 %v2255, 2147483648
  %v2264 = vmul.f32 %v2261, 1.442695
  %v2265 = vpow.pop %v2264
  %v2266 = vmul.f32 %v2262, 1.442695
  %v2267 = vpow.pop %v2266
  %v2268 = vmul.f32 %v2263, 1.442695
  %v2269 = vpow.pop %v2268
  %v2270 = vadd.f32 %v2265, 1.0
  %v2271 = vadd.f32 %v2267, 1.0
  %v2272 = vadd.f32 %v2269, 1.0
  %v2273 = vrcp.pop %v2270
  %v2274 = vmul.f32 1.0, %v2273
  %v2275 = vrcp.pop %v2271
  %v2276 = vmul.f32 1.0, %v2275
  %v2277 = vrcp.pop %v2272
  %v2278 = vmul.f32 1.0, %v2277
  %v2279 = vtanh.pop %v2257
  %v2280 = vmul.f32 %v2276, %v1950
  %v2281 = vmul.f32 %v2274, %v2279
  %v2282 = vadd.f32 %v2280, %v2281
  %v2283 = vtanh.pop %v2282
  %v2284 = vmul.f32 %v2278, %v2283
  %v2285 = vpack.c.bf16 %v2059, %v2059
  %2286 = vmatprep.subr.bf16.mxu0 %v1495
  %2287 = vmatpush1.bf16.msra.mxu0 %v1494
  %2288 = vmatprep.subr.bf16.mxu0 %v1499
  %2289 = vmatpush1.bf16.msra.mxu0 %v1498
  %2290 = vmatprep.subr.bf16.mxu0 %v1503
  %2291 = vmatpush1.bf16.msra.mxu0 %v1502
  %2292 = vmatprep.subr.bf16.mxu0 %v1507
  %2293 = vmatpush1.bf16.msra.mxu0 %v1506
  %2294 = vmatprep.subr.bf16.mxu0 %v1511
  %2295 = vmatpush1.bf16.msra.mxu0 %v1510
  %2296 = vmatprep.subr.bf16.mxu0 %v1515
  %2297 = vmatpush1.bf16.msra.mxu0 %v1514
  %2298 = vmatprep.subr.bf16.mxu0 %v1519
  %2299 = vmatpush1.bf16.msra.mxu0 %v1518
  %2300 = vmatprep.subr.bf16.mxu0 %v1523
  %2301 = vmatpush1.bf16.msra.mxu0 %v1522
  %2302 = vmatprep.subr.bf16.mxu0 %v1527
  %2303 = vmatpush1.bf16.msra.mxu0 %v1526
  %2304 = vmatprep.subr.bf16.mxu0 %v1531
  %2305 = vmatpush1.bf16.msra.mxu0 %v1530
  %2306 = vmatprep.subr.bf16.mxu0 %v1535
  %2307 = vmatpush1.bf16.msra.mxu0 %v1534
  %2308 = vmatprep.subr.bf16.mxu0 %v1539
  %2309 = vmatpush1.bf16.msra.mxu0 %v1538
  %2310 = vmatprep.subr.bf16.mxu0 %v1543
  %2311 = vmatpush1.bf16.msra.mxu0 %v1542
  %2312 = vmatprep.subr.bf16.mxu0 %v1547
  %2313 = vmatpush1.bf16.msra.mxu0 %v1546
  %2314 = vmatprep.subr.bf16.mxu0 %v1551
  %2315 = vmatpush1.bf16.msra.mxu0 %v1550
  %2316 = vmatprep.subr.bf16.mxu0 %v1555
  %2317 = vmatpush1.bf16.msra.mxu0 %v1554
  %2318 = vmatprep.mubr.bf16.mxu0 %v2285
  %2319 = vmatmul.mubr.bf16.gmra.mrb[0].mxu0 %v2178
  %v2320 = vpop.f32.mrb[0].mxu0
  %v2321 = vadd.f32 %v1285, %v2320
  %v2322 = vpop.f32.mrb[0].mxu0
  %v2323 = vadd.f32 %v1289, %v2322
  %v2324 = vpop.f32.mrb[0].mxu0
  %v2325 = vpop.f32.mrb[0].mxu0
  %2326 = vdwg.mxu0
  %2327 = vmatprep.subr.bf16.mxu0 %v1497
  %2328 = vmatpush1.bf16.msra.mxu0 %v1496
  %2329 = vmatprep.subr.bf16.mxu0 %v1501
  %2330 = vmatpush1.bf16.msra.mxu0 %v1500
  %2331 = vmatprep.subr.bf16.mxu0 %v1505
  %2332 = vmatpush1.bf16.msra.mxu0 %v1504
  %2333 = vmatprep.subr.bf16.mxu0 %v1509
  %2334 = vmatpush1.bf16.msra.mxu0 %v1508
  %2335 = vmatprep.subr.bf16.mxu0 %v1513
  %2336 = vmatpush1.bf16.msra.mxu0 %v1512
  %2337 = vmatprep.subr.bf16.mxu0 %v1517
  %2338 = vmatpush1.bf16.msra.mxu0 %v1516
  %2339 = vmatprep.subr.bf16.mxu0 %v1521
  %2340 = vmatpush1.bf16.msra.mxu0 %v1520
  %2341 = vmatprep.subr.bf16.mxu0 %v1525
  %2342 = vmatpush1.bf16.msra.mxu0 %v1524
  %2343 = vmatprep.subr.bf16.mxu0 %v1529
  %2344 = vmatpush1.bf16.msra.mxu0 %v1528
  %2345 = vmatprep.subr.bf16.mxu0 %v1533
  %2346 = vmatpush1.bf16.msra.mxu0 %v1532
  %2347 = vmatprep.subr.bf16.mxu0 %v1537
  %2348 = vmatpush1.bf16.msra.mxu0 %v1536
  %2349 = vmatprep.subr.bf16.mxu0 %v1541
  %2350 = vmatpush1.bf16.msra.mxu0 %v1540
  %2351 = vmatprep.subr.bf16.mxu0 %v1545
  %2352 = vmatpush1.bf16.msra.mxu0 %v1544
  %2353 = vmatprep.subr.bf16.mxu0 %v1549
  %2354 = vmatpush1.bf16.msra.mxu0 %v1548
  %2355 = vmatprep.subr.bf16.mxu0 %v1553
  %2356 = vmatpush1.bf16.msra.mxu0 %v1552
  %2357 = vmatprep.subr.bf16.mxu0 %v1557
  %2358 = vmatpush1.bf16.msra.mxu0 %v1556
  %2359 = vmatprep.mubr.bf16.mxu0 %v2285
  %2360 = vmatmul.mubr.bf16.gmra.mrb[0].mxu0 %v2178
  %v2361 = vpop.f32.mrb[0].mxu0
  %v2362 = vadd.f32 %v1293, %v2361
  %v2363 = vpop.f32.mrb[0].mxu0
  %v2364 = vadd.f32 %v1297, %v2363
  %v2365 = vpop.f32.mrb[0].mxu0
  %v2366 = vpop.f32.mrb[0].mxu0
  %2367 = vdwg.mxu0
  %v2368 = vxor.u32 %v2321, 2147483648
  %v2369 = vxor.u32 %v2323, 2147483648
  %v2370 = vxor.u32 %v2362, 2147483648
  %v2371 = vmul.f32 %v2368, 1.442695
  %v2372 = vpow.pop %v2371
  %v2373 = vmul.f32 %v2369, 1.442695
  %v2374 = vpow.pop %v2373
  %v2375 = vmul.f32 %v2370, 1.442695
  %v2376 = vpow.pop %v2375
  %v2377 = vadd.f32 %v2372, 1.0
  %v2378 = vadd.f32 %v2374, 1.0
  %v2379 = vadd.f32 %v2376, 1.0
  %v2380 = vrcp.pop %v2377
  %v2381 = vmul.f32 1.0, %v2380
  %v2382 = vrcp.pop %v2378
  %v2383 = vmul.f32 1.0, %v2382
  %v2384 = vrcp.pop %v2379
  %v2385 = vmul.f32 1.0, %v2384
  %v2386 = vtanh.pop %v2364
  %v2387 = vmul.f32 %v2383, %v2057
  %v2388 = vmul.f32 %v2381, %v2386
  %v2389 = vadd.f32 %v2387, %v2388
  %v2390 = vtanh.pop %v2389
  %v2391 = vmul.f32 %v2385, %v2390
  %s2392 = scalar_lea.vmem %s0, 80
  %v2393 = vld [vmem:[%s2392] sm:$0xff]
  %v2394 = vld [vmem:[%s2392 + $0x8] sm:$0xff]
  %v2395 = vunpack.c.l.bf16 %v2393
  %v2396 = vunpack.c.h.bf16 %v2393
  %v2397 = vunpack.c.l.bf16 %v2394
  %v2398 = vunpack.c.h.bf16 %v2394
  %v2399 = vpack.c.bf16 %v2177, %v2177
  %2400 = vmatprep.subr.bf16.mxu0 %v184
  %2401 = vmatpush1.bf16.msra.mxu0 %v183
  %2402 = vmatprep.subr.bf16.mxu0 %v188
  %2403 = vmatpush1.bf16.msra.mxu0 %v187
  %2404 = vmatprep.subr.bf16.mxu0 %v192
  %2405 = vmatpush1.bf16.msra.mxu0 %v191
  %2406 = vmatprep.subr.bf16.mxu0 %v196
  %2407 = vmatpush1.bf16.msra.mxu0 %v195
  %2408 = vmatprep.subr.bf16.mxu0 %v200
  %2409 = vmatpush1.bf16.msra.mxu0 %v199
  %2410 = vmatprep.subr.bf16.mxu0 %v204
  %2411 = vmatpush1.bf16.msra.mxu0 %v203
  %2412 = vmatprep.subr.bf16.mxu0 %v208
  %2413 = vmatpush1.bf16.msra.mxu0 %v207
  %2414 = vmatprep.subr.bf16.mxu0 %v212
  %2415 = vmatpush1.bf16.msra.mxu0 %v211
  %2416 = vmatprep.subr.bf16.mxu0 0
  %2417 = vmatpush1.bf16.msra.mxu0 0
  %2418 = vmatprep.subr.bf16.mxu0 0
  %2419 = vmatpush1.bf16.msra.mxu0 0
  %2420 = vmatprep.subr.bf16.mxu0 0
  %2421 = vmatpush1.bf16.msra.mxu0 0
  %2422 = vmatprep.subr.bf16.mxu0 0
  %2423 = vmatpush1.bf16.msra.mxu0 0
  %2424 = vmatprep.subr.bf16.mxu0 0
  %2425 = vmatpush1.bf16.msra.mxu0 0
  %2426 = vmatprep.subr.bf16.mxu0 0
  %2427 = vmatpush1.bf16.msra.mxu0 0
  %2428 = vmatprep.subr.bf16.mxu0 0
  %2429 = vmatpush1.bf16.msra.mxu0 0
  %2430 = vmatprep.subr.bf16.mxu0 0
  %2431 = vmatpush1.bf16.msra.mxu0 0
  %2432 = vmatprep.mubr.bf16.mxu0 0
  %2433 = vmatmul.mubr.bf16.gmra.mrb[0].mxu0 %v2399
  %v2434 = vpop.f32.mrb[0].mxu0
  %v2435 = vadd.f32 0.0, %v2434
  %v2436 = vpop.f32.mrb[0].mxu0
  %v2437 = vadd.f32 0.0, %v2436
  %v2438 = vpop.f32.mrb[0].mxu0
  %v2439 = vpop.f32.mrb[0].mxu0
  %2440 = vdwg.mxu0
  %2441 = vmatprep.subr.bf16.mxu0 %v186
  %2442 = vmatpush1.bf16.msra.mxu0 %v185
  %2443 = vmatprep.subr.bf16.mxu0 %v190
  %2444 = vmatpush1.bf16.msra.mxu0 %v189
  %2445 = vmatprep.subr.bf16.mxu0 %v194
  %2446 = vmatpush1.bf16.msra.mxu0 %v193
  %2447 = vmatprep.subr.bf16.mxu0 %v198
  %2448 = vmatpush1.bf16.msra.mxu0 %v197
  %2449 = vmatprep.subr.bf16.mxu0 %v202
  %2450 = vmatpush1.bf16.msra.mxu0 %v201
  %2451 = vmatprep.subr.bf16.mxu0 %v206
  %2452 = vmatpush1.bf16.msra.mxu0 %v205
  %2453 = vmatprep.subr.bf16.mxu0 %v210
  %2454 = vmatpush1.bf16.msra.mxu0 %v209
  %2455 = vmatprep.subr.bf16.mxu0 %v214
  %2456 = vmatpush1.bf16.msra.mxu0 %v213
  %2457 = vmatprep.subr.bf16.mxu0 0
  %2458 = vmatpush1.bf16.msra.mxu0 0
  %2459 = vmatprep.subr.bf16.mxu0 0
  %2460 = vmatpush1.bf16.msra.mxu0 0
  %2461 = vmatprep.subr.bf16.mxu0 0
  %2462 = vmatpush1.bf16.msra.mxu0 0
  %2463 = vmatprep.subr.bf16.mxu0 0
  %2464 = vmatpush1.bf16.msra.mxu0 0
  %2465 = vmatprep.subr.bf16.mxu0 0
  %2466 = vmatpush1.bf16.msra.mxu0 0
  %2467 = vmatprep.subr.bf16.mxu0 0
  %2468 = vmatpush1.bf16.msra.mxu0 0
  %2469 = vmatprep.subr.bf16.mxu0 0
  %2470 = vmatpush1.bf16.msra.mxu0 0
  %2471 = vmatprep.subr.bf16.mxu0 0
  %2472 = vmatpush1.bf16.msra.mxu0 0
  %2473 = vmatprep.mubr.bf16.mxu0 0
  %2474 = vmatmul.mubr.bf16.gmra.mrb[0].mxu0 %v2399
  %v2475 = vpop.f32.mrb[0].mxu0
  %v2476 = vadd.f32 0.0, %v2475
  %v2477 = vpop.f32.mrb[0].mxu0
  %v2478 = vadd.f32 0.0, %v2477
  %v2479 = vpop.f32.mrb[0].mxu0
  %v2480 = vpop.f32.mrb[0].mxu0
  %2481 = vdwg.mxu0
  %v2482 = vadd.f32 %v2395, %v2435
  %v2483 = vadd.f32 %v2396, %v2437
  %v2484 = vadd.f32 %v2397, %v2476
  %v2485 = vadd.f32 %v2398, %v2478
  %v2486 = vxor.u32 %v2482, 2147483648
  %v2487 = vxor.u32 %v2483, 2147483648
  %v2488 = vxor.u32 %v2484, 2147483648
  %v2489 = vmul.f32 %v2486, 1.442695
  %v2490 = vpow.pop %v2489
  %v2491 = vmul.f32 %v2487, 1.442695
  %v2492 = vpow.pop %v2491
  %v2493 = vmul.f32 %v2488, 1.442695
  %v2494 = vpow.pop %v2493
  %v2495 = vadd.f32 %v2490, 1.0
  %v2496 = vadd.f32 %v2492, 1.0
  %v2497 = vadd.f32 %v2494, 1.0
  %v2498 = vrcp.pop %v2495
  %v2499 = vmul.f32 1.0, %v2498
  %v2500 = vrcp.pop %v2496
  %v2501 = vmul.f32 1.0, %v2500
  %v2502 = vrcp.pop %v2497
  %v2503 = vmul.f32 1.0, %v2502
  %v2504 = vtanh.pop %v2485
  %v2505 = vmul.f32 %v2501, %v2175
  %v2506 = vmul.f32 %v2499, %v2504
  %v2507 = vadd.f32 %v2505, %v2506
  %v2508 = vtanh.pop %v2507
  %v2509 = vmul.f32 %v2503, %v2508
  %v2510 = vpack.c.bf16 %v2284, %v2284
  %2511 = vmatprep.subr.bf16.mxu0 %v755
  %2512 = vmatpush1.bf16.msra.mxu0 %v754
  %2513 = vmatprep.subr.bf16.mxu0 %v759
  %2514 = vmatpush1.bf16.msra.mxu0 %v758
  %2515 = vmatprep.subr.bf16.mxu0 %v763
  %2516 = vmatpush1.bf16.msra.mxu0 %v762
  %2517 = vmatprep.subr.bf16.mxu0 %v767
  %2518 = vmatpush1.bf16.msra.mxu0 %v766
  %2519 = vmatprep.subr.bf16.mxu0 %v771
  %2520 = vmatpush1.bf16.msra.mxu0 %v770
  %2521 = vmatprep.subr.bf16.mxu0 %v775
  %2522 = vmatpush1.bf16.msra.mxu0 %v774
  %2523 = vmatprep.subr.bf16.mxu0 %v779
  %2524 = vmatpush1.bf16.msra.mxu0 %v778
  %2525 = vmatprep.subr.bf16.mxu0 %v783
  %2526 = vmatpush1.bf16.msra.mxu0 %v782
  %2527 = vmatprep.subr.bf16.mxu0 %v787
  %2528 = vmatpush1.bf16.msra.mxu0 %v786
  %2529 = vmatprep.subr.bf16.mxu0 %v791
  %2530 = vmatpush1.bf16.msra.mxu0 %v790
  %2531 = vmatprep.subr.bf16.mxu0 %v795
  %2532 = vmatpush1.bf16.msra.mxu0 %v794
  %2533 = vmatprep.subr.bf16.mxu0 %v799
  %2534 = vmatpush1.bf16.msra.mxu0 %v798
  %2535 = vmatprep.subr.bf16.mxu0 %v803
  %2536 = vmatpush1.bf16.msra.mxu0 %v802
  %2537 = vmatprep.subr.bf16.mxu0 %v807
  %2538 = vmatpush1.bf16.msra.mxu0 %v806
  %2539 = vmatprep.subr.bf16.mxu0 %v811
  %2540 = vmatpush1.bf16.msra.mxu0 %v810
  %2541 = vmatprep.subr.bf16.mxu0 %v815
  %2542 = vmatpush1.bf16.msra.mxu0 %v814
  %2543 = vmatprep.mubr.bf16.mxu0 %v2510
  %2544 = vmatmul.mubr.bf16.gmra.mrb[0].mxu0 %v2399
  %v2545 = vpop.f32.mrb[0].mxu0
  %v2546 = vadd.f32 %v545, %v2545
  %v2547 = vpop.f32.mrb[0].mxu0
  %v2548 = vadd.f32 %v549, %v2547
  %v2549 = vpop.f32.mrb[0].mxu0
  %v2550 = vpop.f32.mrb[0].mxu0
  %2551 = vdwg.mxu0
  %2552 = vmatprep.subr.bf16.mxu0 %v757
  %2553 = vmatpush1.bf16.msra.mxu0 %v756
  %2554 = vmatprep.subr.bf16.mxu0 %v761
  %2555 = vmatpush1.bf16.msra.mxu0 %v760
  %2556 = vmatprep.subr.bf16.mxu0 %v765
  %2557 = vmatpush1.bf16.msra.mxu0 %v764
  %2558 = vmatprep.subr.bf16.mxu0 %v769
  %2559 = vmatpush1.bf16.msra.mxu0 %v768
  %2560 = vmatprep.subr.bf16.mxu0 %v773
  %2561 = vmatpush1.bf16.msra.mxu0 %v772
  %2562 = vmatprep.subr.bf16.mxu0 %v777
  %2563 = vmatpush1.bf16.msra.mxu0 %v776
  %2564 = vmatprep.subr.bf16.mxu0 %v781
  %2565 = vmatpush1.bf16.msra.mxu0 %v780
  %2566 = vmatprep.subr.bf16.mxu0 %v785
  %2567 = vmatpush1.bf16.msra.mxu0 %v784
  %2568 = vmatprep.subr.bf16.mxu0 %v789
  %2569 = vmatpush1.bf16.msra.mxu0 %v788
  %2570 = vmatprep.subr.bf16.mxu0 %v793
  %2571 = vmatpush1.bf16.msra.mxu0 %v792
  %2572 = vmatprep.subr.bf16.mxu0 %v797
  %2573 = vmatpush1.bf16.msra.mxu0 %v796
  %2574 = vmatprep.subr.bf16.mxu0 %v801
  %2575 = vmatpush1.bf16.msra.mxu0 %v800
  %2576 = vmatprep.subr.bf16.mxu0 %v805
  %2577 = vmatpush1.bf16.msra.mxu0 %v804
  %2578 = vmatprep.subr.bf16.mxu0 %v809
  %2579 = vmatpush1.bf16.msra.mxu0 %v808
  %2580 = vmatprep.subr.bf16.mxu0 %v813
  %2581 = vmatpush1.bf16.msra.mxu0 %v812
  %2582 = vmatprep.subr.bf16.mxu0 %v817
  %2583 = vmatpush1.bf16.msra.mxu0 %v816
  %2584 = vmatprep.mubr.bf16.mxu0 %v2510
  %2585 = vmatmul.mubr.bf16.gmra.mrb[0].mxu0 %v2399
  %v2586 = vpop.f32.mrb[0].mxu0
  %v2587 = vadd.f32 %v553, %v2586
  %v2588 = vpop.f32.mrb[0].mxu0
  %v2589 = vadd.f32 %v557, %v2588
  %v2590 = vpop.f32.mrb[0].mxu0
  %v2591 = vpop.f32.mrb[0].mxu0
  %2592 = vdwg.mxu0
  %v2593 = vxor.u32 %v2546, 2147483648
  %v2594 = vxor.u32 %v2548, 2147483648
  %v2595 = vxor.u32 %v2587, 2147483648
  %v2596 = vmul.f32 %v2593, 1.442695
  %v2597 = vpow.pop %v2596
  %v2598 = vmul.f32 %v2594, 1.442695
  %v2599 = vpow.pop %v2598
  %v2600 = vmul.f32 %v2595, 1.442695
  %v2601 = vpow.pop %v2600
  %v2602 = vadd.f32 %v2597, 1.0
  %v2603 = vadd.f32 %v2599, 1.0
  %v2604 = vadd.f32 %v2601, 1.0
  %v2605 = vrcp.pop %v2602
  %v2606 = vmul.f32 1.0, %v2605
  %v2607 = vrcp.pop %v2603
  %v2608 = vmul.f32 1.0, %v2607
  %v2609 = vrcp.pop %v2604
  %v2610 = vmul.f32 1.0, %v2609
  %v2611 = vtanh.pop %v2589
  %v2612 = vmul.f32 %v2608, %v2282
  %v2613 = vmul.f32 %v2606, %v2611
  %v2614 = vadd.f32 %v2612, %v2613
  %v2615 = vtanh.pop %v2614
  %v2616 = vmul.f32 %v2610, %v2615
  %v2617 = vpack.c.bf16 %v2391, %v2391
  %2618 = vmatprep.subr.bf16.mxu0 %v1495
  %2619 = vmatpush1.bf16.msra.mxu0 %v1494
  %2620 = vmatprep.subr.bf16.mxu0 %v1499
  %2621 = vmatpush1.bf16.msra.mxu0 %v1498
  %2622 = vmatprep.subr.bf16.mxu0 %v1503
  %2623 = vmatpush1.bf16.msra.mxu0 %v1502
  %2624 = vmatprep.subr.bf16.mxu0 %v1507
  %2625 = vmatpush1.bf16.msra.mxu0 %v1506
  %2626 = vmatprep.subr.bf16.mxu0 %v1511
  %2627 = vmatpush1.bf16.msra.mxu0 %v1510
  %2628 = vmatprep.subr.bf16.mxu0 %v1515
  %2629 = vmatpush1.bf16.msra.mxu0 %v1514
  %2630 = vmatprep.subr.bf16.mxu0 %v1519
  %2631 = vmatpush1.bf16.msra.mxu0 %v1518
  %2632 = vmatprep.subr.bf16.mxu0 %v1523
  %2633 = vmatpush1.bf16.msra.mxu0 %v1522
  %2634 = vmatprep.subr.bf16.mxu0 %v1527
  %2635 = vmatpush1.bf16.msra.mxu0 %v1526
  %2636 = vmatprep.subr.bf16.mxu0 %v1531
  %2637 = vmatpush1.bf16.msra.mxu0 %v1530
  %2638 = vmatprep.subr.bf16.mxu0 %v1535
  %2639 = vmatpush1.bf16.msra.mxu0 %v1534
  %2640 = vmatprep.subr.bf16.mxu0 %v1539
  %2641 = vmatpush1.bf16.msra.mxu0 %v1538
  %2642 = vmatprep.subr.bf16.mxu0 %v1543
  %2643 = vmatpush1.bf16.msra.mxu0 %v1542
  %2644 = vmatprep.subr.bf16.mxu0 %v1547
  %2645 = vmatpush1.bf16.msra.mxu0 %v1546
  %2646 = vmatprep.subr.bf16.mxu0 %v1551
  %2647 = vmatpush1.bf16.msra.mxu0 %v1550
  %2648 = vmatprep.subr.bf16.mxu0 %v1555
  %2649 = vmatpush1.bf16.msra.mxu0 %v1554
  %2650 = vmatprep.mubr.bf16.mxu0 %v2617
  %2651 = vmatmul.mubr.bf16.gmra.mrb[0].mxu0 %v2510
  %v2652 = vpop.f32.mrb[0].mxu0
  %v2653 = vadd.f32 %v1285, %v2652
  %v2654 = vpop.f32.mrb[0].mxu0
  %v2655 = vadd.f32 %v1289, %v2654
  %v2656 = vpop.f32.mrb[0].mxu0
  %v2657 = vpop.f32.mrb[0].mxu0
  %2658 = vdwg.mxu0
  %2659 = vmatprep.subr.bf16.mxu0 %v1497
  %2660 = vmatpush1.bf16.msra.mxu0 %v1496
  %2661 = vmatprep.subr.bf16.mxu0 %v1501
  %2662 = vmatpush1.bf16.msra.mxu0 %v1500
  %2663 = vmatprep.subr.bf16.mxu0 %v1505
  %2664 = vmatpush1.bf16.msra.mxu0 %v1504
  %2665 = vmatprep.subr.bf16.mxu0 %v1509
  %2666 = vmatpush1.bf16.msra.mxu0 %v1508
  %2667 = vmatprep.subr.bf16.mxu0 %v1513
  %2668 = vmatpush1.bf16.msra.mxu0 %v1512
  %2669 = vmatprep.subr.bf16.mxu0 %v1517
  %2670 = vmatpush1.bf16.msra.mxu0 %v1516
  %2671 = vmatprep.subr.bf16.mxu0 %v1521
  %2672 = vmatpush1.bf16.msra.mxu0 %v1520
  %2673 = vmatprep.subr.bf16.mxu0 %v1525
  %2674 = vmatpush1.bf16.msra.mxu0 %v1524
  %2675 = vmatprep.subr.bf16.mxu0 %v1529
  %2676 = vmatpush1.bf16.msra.mxu0 %v1528
  %2677 = vmatprep.subr.bf16.mxu0 %v1533
  %2678 = vmatpush1.bf16.msra.mxu0 %v1532
  %2679 = vmatprep.subr.bf16.mxu0 %v1537
  %2680 = vmatpush1.bf16.msra.mxu0 %v1536
  %2681 = vmatprep.subr.bf16.mxu0 %v1541
  %2682 = vmatpush1.bf16.msra.mxu0 %v1540
  %2683 = vmatprep.subr.bf16.mxu0 %v1545
  %2684 = vmatpush1.bf16.msra.mxu0 %v1544
  %2685 = vmatprep.subr.bf16.mxu0 %v1549
  %2686 = vmatpush1.bf16.msra.mxu0 %v1548
  %2687 = vmatprep.subr.bf16.mxu0 %v1553
  %2688 = vmatpush1.bf16.msra.mxu0 %v1552
  %2689 = vmatprep.subr.bf16.mxu0 %v1557
  %2690 = vmatpush1.bf16.msra.mxu0 %v1556
  %2691 = vmatprep.mubr.bf16.mxu0 %v2617
  %2692 = vmatmul.mubr.bf16.gmra.mrb[0].mxu0 %v2510
  %v2693 = vpop.f32.mrb[0].mxu0
  %v2694 = vadd.f32 %v1293, %v2693
  %v2695 = vpop.f32.mrb[0].mxu0
  %v2696 = vadd.f32 %v1297, %v2695
  %v2697 = vpop.f32.mrb[0].mxu0
  %v2698 = vpop.f32.mrb[0].mxu0
  %2699 = vdwg.mxu0
  %v2700 = vxor.u32 %v2653, 2147483648
  %v2701 = vxor.u32 %v2655, 2147483648
  %v2702 = vxor.u32 %v2694, 2147483648
  %v2703 = vmul.f32 %v2700, 1.442695
  %v2704 = vpow.pop %v2703
  %v2705 = vmul.f32 %v2701, 1.442695
  %v2706 = vpow.pop %v2705
  %v2707 = vmul.f32 %v2702, 1.442695
  %v2708 = vpow.pop %v2707
  %v2709 = vadd.f32 %v2704, 1.0
  %v2710 = vadd.f32 %v2706, 1.0
  %v2711 = vadd.f32 %v2708, 1.0
  %v2712 = vrcp.pop %v2709
  %v2713 = vmul.f32 1.0, %v2712
  %v2714 = vrcp.pop %v2710
  %v2715 = vmul.f32 1.0, %v2714
  %v2716 = vrcp.pop %v2711
  %v2717 = vmul.f32 1.0, %v2716
  %v2718 = vtanh.pop %v2696
  %v2719 = vmul.f32 %v2715, %v2389
  %v2720 = vmul.f32 %v2713, %v2718
  %v2721 = vadd.f32 %v2719, %v2720
  %v2722 = vtanh.pop %v2721
  %v2723 = vmul.f32 %v2717, %v2722
  %s2724 = scalar_lea.vmem %s0, 96
  %v2725 = vld [vmem:[%s2724] sm:$0xff]
  %v2726 = vld [vmem:[%s2724 + $0x8] sm:$0xff]
  %v2727 = vunpack.c.l.bf16 %v2725
  %v2728 = vunpack.c.h.bf16 %v2725
  %v2729 = vunpack.c.l.bf16 %v2726
  %v2730 = vunpack.c.h.bf16 %v2726
  %v2731 = vpack.c.bf16 %v2509, %v2509
  %2732 = vmatprep.subr.bf16.mxu0 %v184
  %2733 = vmatpush1.bf16.msra.mxu0 %v183
  %2734 = vmatprep.subr.bf16.mxu0 %v188
  %2735 = vmatpush1.bf16.msra.mxu0 %v187
  %2736 = vmatprep.subr.bf16.mxu0 %v192
  %2737 = vmatpush1.bf16.msra.mxu0 %v191
  %2738 = vmatprep.subr.bf16.mxu0 %v196
  %2739 = vmatpush1.bf16.msra.mxu0 %v195
  %2740 = vmatprep.subr.bf16.mxu0 %v200
  %2741 = vmatpush1.bf16.msra.mxu0 %v199
  %2742 = vmatprep.subr.bf16.mxu0 %v204
  %2743 = vmatpush1.bf16.msra.mxu0 %v203
  %2744 = vmatprep.subr.bf16.mxu0 %v208
  %2745 = vmatpush1.bf16.msra.mxu0 %v207
  %2746 = vmatprep.subr.bf16.mxu0 %v212
  %2747 = vmatpush1.bf16.msra.mxu0 %v211
  %2748 = vmatprep.subr.bf16.mxu0 0
  %2749 = vmatpush1.bf16.msra.mxu0 0
  %2750 = vmatprep.subr.bf16.mxu0 0
  %2751 = vmatpush1.bf16.msra.mxu0 0
  %2752 = vmatprep.subr.bf16.mxu0 0
  %2753 = vmatpush1.bf16.msra.mxu0 0
  %2754 = vmatprep.subr.bf16.mxu0 0
  %2755 = vmatpush1.bf16.msra.mxu0 0
  %2756 = vmatprep.subr.bf16.mxu0 0
  %2757 = vmatpush1.bf16.msra.mxu0 0
  %2758 = vmatprep.subr.bf16.mxu0 0
  %2759 = vmatpush1.bf16.msra.mxu0 0
  %2760 = vmatprep.subr.bf16.mxu0 0
  %2761 = vmatpush1.bf16.msra.mxu0 0
  %2762 = vmatprep.subr.bf16.mxu0 0
  %2763 = vmatpush1.bf16.msra.mxu0 0
  %2764 = vmatprep.mubr.bf16.mxu0 0
  %2765 = vmatmul.mubr.bf16.gmra.mrb[0].mxu0 %v2731
  %v2766 = vpop.f32.mrb[0].mxu0
  %v2767 = vadd.f32 0.0, %v2766
  %v2768 = vpop.f32.mrb[0].mxu0
  %v2769 = vadd.f32 0.0, %v2768
  %v2770 = vpop.f32.mrb[0].mxu0
  %v2771 = vpop.f32.mrb[0].mxu0
  %2772 = vdwg.mxu0
  %2773 = vmatprep.subr.bf16.mxu0 %v186
  %2774 = vmatpush1.bf16.msra.mxu0 %v185
  %2775 = vmatprep.subr.bf16.mxu0 %v190
  %2776 = vmatpush1.bf16.msra.mxu0 %v189
  %2777 = vmatprep.subr.bf16.mxu0 %v194
  %2778 = vmatpush1.bf16.msra.mxu0 %v193
  %2779 = vmatprep.subr.bf16.mxu0 %v198
  %2780 = vmatpush1.bf16.msra.mxu0 %v197
  %2781 = vmatprep.subr.bf16.mxu0 %v202
  %2782 = vmatpush1.bf16.msra.mxu0 %v201
  %2783 = vmatprep.subr.bf16.mxu0 %v206
  %2784 = vmatpush1.bf16.msra.mxu0 %v205
  %2785 = vmatprep.subr.bf16.mxu0 %v210
  %2786 = vmatpush1.bf16.msra.mxu0 %v209
  %2787 = vmatprep.subr.bf16.mxu0 %v214
  %2788 = vmatpush1.bf16.msra.mxu0 %v213
  %2789 = vmatprep.subr.bf16.mxu0 0
  %2790 = vmatpush1.bf16.msra.mxu0 0
  %2791 = vmatprep.subr.bf16.mxu0 0
  %2792 = vmatpush1.bf16.msra.mxu0 0
  %2793 = vmatprep.subr.bf16.mxu0 0
  %2794 = vmatpush1.bf16.msra.mxu0 0
  %2795 = vmatprep.subr.bf16.mxu0 0
  %2796 = vmatpush1.bf16.msra.mxu0 0
  %2797 = vmatprep.subr.bf16.mxu0 0
  %2798 = vmatpush1.bf16.msra.mxu0 0
  %2799 = vmatprep.subr.bf16.mxu0 0
  %2800 = vmatpush1.bf16.msra.mxu0 0
  %2801 = vmatprep.subr.bf16.mxu0 0
  %2802 = vmatpush1.bf16.msra.mxu0 0
  %2803 = vmatprep.subr.bf16.mxu0 0
  %2804 = vmatpush1.bf16.msra.mxu0 0
  %2805 = vmatprep.mubr.bf16.mxu0 0
  %2806 = vmatmul.mubr.bf16.gmra.mrb[0].mxu0 %v2731
  %v2807 = vpop.f32.mrb[0].mxu0
  %v2808 = vadd.f32 0.0, %v2807
  %v2809 = vpop.f32.mrb[0].mxu0
  %v2810 = vadd.f32 0.0, %v2809
  %v2811 = vpop.f32.mrb[0].mxu0
  %v2812 = vpop.f32.mrb[0].mxu0
  %2813 = vdwg.mxu0
  %v2814 = vadd.f32 %v2727, %v2767
  %v2815 = vadd.f32 %v2728, %v2769
  %v2816 = vadd.f32 %v2729, %v2808
  %v2817 = vadd.f32 %v2730, %v2810
  %v2818 = vxor.u32 %v2814, 2147483648
  %v2819 = vxor.u32 %v2815, 2147483648
  %v2820 = vxor.u32 %v2816, 2147483648
  %v2821 = vmul.f32 %v2818, 1.442695
  %v2822 = vpow.pop %v2821
  %v2823 = vmul.f32 %v2819, 1.442695
  %v2824 = vpow.pop %v2823
  %v2825 = vmul.f32 %v2820, 1.442695
  %v2826 = vpow.pop %v2825
  %v2827 = vadd.f32 %v2822, 1.0
  %v2828 = vadd.f32 %v2824, 1.0
  %v2829 = vadd.f32 %v2826, 1.0
  %v2830 = vrcp.pop %v2827
  %v2831 = vmul.f32 1.0, %v2830
  %v2832 = vrcp.pop %v2828
  %v2833 = vmul.f32 1.0, %v2832
  %v2834 = vrcp.pop %v2829
  %v2835 = vmul.f32 1.0, %v2834
  %v2836 = vtanh.pop %v2817
  %v2837 = vmul.f32 %v2833, %v2507
  %v2838 = vmul.f32 %v2831, %v2836
  %v2839 = vadd.f32 %v2837, %v2838
  %v2840 = vtanh.pop %v2839
  %v2841 = vmul.f32 %v2835, %v2840
  %v2842 = vpack.c.bf16 %v2616, %v2616
  %2843 = vmatprep.subr.bf16.mxu0 %v755
  %2844 = vmatpush1.bf16.msra.mxu0 %v754
  %2845 = vmatprep.subr.bf16.mxu0 %v759
  %2846 = vmatpush1.bf16.msra.mxu0 %v758
  %2847 = vmatprep.subr.bf16.mxu0 %v763
  %2848 = vmatpush1.bf16.msra.mxu0 %v762
  %2849 = vmatprep.subr.bf16.mxu0 %v767
  %2850 = vmatpush1.bf16.msra.mxu0 %v766
  %2851 = vmatprep.subr.bf16.mxu0 %v771
  %2852 = vmatpush1.bf16.msra.mxu0 %v770
  %2853 = vmatprep.subr.bf16.mxu0 %v775
  %2854 = vmatpush1.bf16.msra.mxu0 %v774
  %2855 = vmatprep.subr.bf16.mxu0 %v779
  %2856 = vmatpush1.bf16.msra.mxu0 %v778
  %2857 = vmatprep.subr.bf16.mxu0 %v783
  %2858 = vmatpush1.bf16.msra.mxu0 %v782
  %2859 = vmatprep.subr.bf16.mxu0 %v787
  %2860 = vmatpush1.bf16.msra.mxu0 %v786
  %2861 = vmatprep.subr.bf16.mxu0 %v791
  %2862 = vmatpush1.bf16.msra.mxu0 %v790
  %2863 = vmatprep.subr.bf16.mxu0 %v795
  %2864 = vmatpush1.bf16.msra.mxu0 %v794
  %2865 = vmatprep.subr.bf16.mxu0 %v799
  %2866 = vmatpush1.bf16.msra.mxu0 %v798
  %2867 = vmatprep.subr.bf16.mxu0 %v803
  %2868 = vmatpush1.bf16.msra.mxu0 %v802
  %2869 = vmatprep.subr.bf16.mxu0 %v807
  %2870 = vmatpush1.bf16.msra.mxu0 %v806
  %2871 = vmatprep.subr.bf16.mxu0 %v811
  %2872 = vmatpush1.bf16.msra.mxu0 %v810
  %2873 = vmatprep.subr.bf16.mxu0 %v815
  %2874 = vmatpush1.bf16.msra.mxu0 %v814
  %2875 = vmatprep.mubr.bf16.mxu0 %v2842
  %2876 = vmatmul.mubr.bf16.gmra.mrb[0].mxu0 %v2731
  %v2877 = vpop.f32.mrb[0].mxu0
  %v2878 = vadd.f32 %v545, %v2877
  %v2879 = vpop.f32.mrb[0].mxu0
  %v2880 = vadd.f32 %v549, %v2879
  %v2881 = vpop.f32.mrb[0].mxu0
  %v2882 = vpop.f32.mrb[0].mxu0
  %2883 = vdwg.mxu0
  %2884 = vmatprep.subr.bf16.mxu0 %v757
  %2885 = vmatpush1.bf16.msra.mxu0 %v756
  %2886 = vmatprep.subr.bf16.mxu0 %v761
  %2887 = vmatpush1.bf16.msra.mxu0 %v760
  %2888 = vmatprep.subr.bf16.mxu0 %v765
  %2889 = vmatpush1.bf16.msra.mxu0 %v764
  %2890 = vmatprep.subr.bf16.mxu0 %v769
  %2891 = vmatpush1.bf16.msra.mxu0 %v768
  %2892 = vmatprep.subr.bf16.mxu0 %v773
  %2893 = vmatpush1.bf16.msra.mxu0 %v772
  %2894 = vmatprep.subr.bf16.mxu0 %v777
  %2895 = vmatpush1.bf16.msra.mxu0 %v776
  %2896 = vmatprep.subr.bf16.mxu0 %v781
  %2897 = vmatpush1.bf16.msra.mxu0 %v780
  %2898 = vmatprep.subr.bf16.mxu0 %v785
  %2899 = vmatpush1.bf16.msra.mxu0 %v784
  %2900 = vmatprep.subr.bf16.mxu0 %v789
  %2901 = vmatpush1.bf16.msra.mxu0 %v788
  %2902 = vmatprep.subr.bf16.mxu0 %v793
  %2903 = vmatpush1.bf16.msra.mxu0 %v792
  %2904 = vmatprep.subr.bf16.mxu0 %v797
  %2905 = vmatpush1.bf16.msra.mxu0 %v796
  %2906 = vmatprep.subr.bf16.mxu0 %v801
  %2907 = vmatpush1.bf16.msra.mxu0 %v800
  %2908 = vmatprep.subr.bf16.mxu0 %v805
  %2909 = vmatpush1.bf16.msra.mxu0 %v804
  %2910 = vmatprep.subr.bf16.mxu0 %v809
  %2911 = vmatpush1.bf16.msra.mxu0 %v808
  %2912 = vmatprep.subr.bf16.mxu0 %v813
  %2913 = vmatpush1.bf16.msra.mxu0 %v812
  %2914 = vmatprep.subr.bf16.mxu0 %v817
  %2915 = vmatpush1.bf16.msra.mxu0 %v816
  %2916 = vmatprep.mubr.bf16.mxu0 %v2842
  %2917 = vmatmul.mubr.bf16.gmra.mrb[0].mxu0 %v2731
  %v2918 = vpop.f32.mrb[0].mxu0
  %v2919 = vadd.f32 %v553, %v2918
  %v2920 = vpop.f32.mrb[0].mxu0
  %v2921 = vadd.f32 %v557, %v2920
  %v2922 = vpop.f32.mrb[0].mxu0
  %v2923 = vpop.f32.mrb[0].mxu0
  %2924 = vdwg.mxu0
  %v2925 = vxor.u32 %v2878, 2147483648
  %v2926 = vxor.u32 %v2880, 2147483648
  %v2927 = vxor.u32 %v2919, 2147483648
  %v2928 = vmul.f32 %v2925, 1.442695
  %v2929 = vpow.pop %v2928
  %v2930 = vmul.f32 %v2926, 1.442695
  %v2931 = vpow.pop %v2930
  %v2932 = vmul.f32 %v2927, 1.442695
  %v2933 = vpow.pop %v2932
  %v2934 = vadd.f32 %v2929, 1.0
  %v2935 = vadd.f32 %v2931, 1.0
  %v2936 = vadd.f32 %v2933, 1.0
  %v2937 = vrcp.pop %v2934
  %v2938 = vmul.f32 1.0, %v2937
  %v2939 = vrcp.pop %v2935
  %v2940 = vmul.f32 1.0, %v2939
  %v2941 = vrcp.pop %v2936
  %v2942 = vmul.f32 1.0, %v2941
  %v2943 = vtanh.pop %v2921
  %v2944 = vmul.f32 %v2940, %v2614
  %v2945 = vmul.f32 %v2938, %v2943
  %v2946 = vadd.f32 %v2944, %v2945
  %v2947 = vtanh.pop %v2946
  %v2948 = vmul.f32 %v2942, %v2947
  %v2949 = vpack.c.bf16 %v2723, %v2723
  %2950 = vmatprep.subr.bf16.mxu0 %v1495
  %2951 = vmatpush1.bf16.msra.mxu0 %v1494
  %2952 = vmatprep.subr.bf16.mxu0 %v1499
  %2953 = vmatpush1.bf16.msra.mxu0 %v1498
  %2954 = vmatprep.subr.bf16.mxu0 %v1503
  %2955 = vmatpush1.bf16.msra.mxu0 %v1502
  %2956 = vmatprep.subr.bf16.mxu0 %v1507
  %2957 = vmatpush1.bf16.msra.mxu0 %v1506
  %2958 = vmatprep.subr.bf16.mxu0 %v1511
  %2959 = vmatpush1.bf16.msra.mxu0 %v1510
  %2960 = vmatprep.subr.bf16.mxu0 %v1515
  %2961 = vmatpush1.bf16.msra.mxu0 %v1514
  %2962 = vmatprep.subr.bf16.mxu0 %v1519
  %2963 = vmatpush1.bf16.msra.mxu0 %v1518
  %2964 = vmatprep.subr.bf16.mxu0 %v1523
  %2965 = vmatpush1.bf16.msra.mxu0 %v1522
  %2966 = vmatprep.subr.bf16.mxu0 %v1527
  %2967 = vmatpush1.bf16.msra.mxu0 %v1526
  %2968 = vmatprep.subr.bf16.mxu0 %v1531
  %2969 = vmatpush1.bf16.msra.mxu0 %v1530
  %2970 = vmatprep.subr.bf16.mxu0 %v1535
  %2971 = vmatpush1.bf16.msra.mxu0 %v1534
  %2972 = vmatprep.subr.bf16.mxu0 %v1539
  %2973 = vmatpush1.bf16.msra.mxu0 %v1538
  %2974 = vmatprep.subr.bf16.mxu0 %v1543
  %2975 = vmatpush1.bf16.msra.mxu0 %v1542
  %2976 = vmatprep.subr.bf16.mxu0 %v1547
  %2977 = vmatpush1.bf16.msra.mxu0 %v1546
  %2978 = vmatprep.subr.bf16.mxu0 %v1551
  %2979 = vmatpush1.bf16.msra.mxu0 %v1550
  %2980 = vmatprep.subr.bf16.mxu0 %v1555
  %2981 = vmatpush1.bf16.msra.mxu0 %v1554
  %2982 = vmatprep.mubr.bf16.mxu0 %v2949
  %2983 = vmatmul.mubr.bf16.gmra.mrb[0].mxu0 %v2842
  %v2984 = vpop.f32.mrb[0].mxu0
  %v2985 = vadd.f32 %v1285, %v2984
  %v2986 = vpop.f32.mrb[0].mxu0
  %v2987 = vadd.f32 %v1289, %v2986
  %v2988 = vpop.f32.mrb[0].mxu0
  %v2989 = vpop.f32.mrb[0].mxu0
  %2990 = vdwg.mxu0
  %2991 = vmatprep.subr.bf16.mxu0 %v1497
  %2992 = vmatpush1.bf16.msra.mxu0 %v1496
  %2993 = vmatprep.subr.bf16.mxu0 %v1501
  %2994 = vmatpush1.bf16.msra.mxu0 %v1500
  %2995 = vmatprep.subr.bf16.mxu0 %v1505
  %2996 = vmatpush1.bf16.msra.mxu0 %v1504
  %2997 = vmatprep.subr.bf16.mxu0 %v1509
  %2998 = vmatpush1.bf16.msra.mxu0 %v1508
  %2999 = vmatprep.subr.bf16.mxu0 %v1513
  %3000 = vmatpush1.bf16.msra.mxu0 %v1512
  %3001 = vmatprep.subr.bf16.mxu0 %v1517
  %3002 = vmatpush1.bf16.msra.mxu0 %v1516
  %3003 = vmatprep.subr.bf16.mxu0 %v1521
  %3004 = vmatpush1.bf16.msra.mxu0 %v1520
  %3005 = vmatprep.subr.bf16.mxu0 %v1525
  %3006 = vmatpush1.bf16.msra.mxu0 %v1524
  %3007 = vmatprep.subr.bf16.mxu0 %v1529
  %3008 = vmatpush1.bf16.msra.mxu0 %v1528
  %3009 = vmatprep.subr.bf16.mxu0 %v1533
  %3010 = vmatpush1.bf16.msra.mxu0 %v1532
  %3011 = vmatprep.subr.bf16.mxu0 %v1537
  %3012 = vmatpush1.bf16.msra.mxu0 %v1536
  %3013 = vmatprep.subr.bf16.mxu0 %v1541
  %3014 = vmatpush1.bf16.msra.mxu0 %v1540
  %3015 = vmatprep.subr.bf16.mxu0 %v1545
  %3016 = vmatpush1.bf16.msra.mxu0 %v1544
  %3017 = vmatprep.subr.bf16.mxu0 %v1549
  %3018 = vmatpush1.bf16.msra.mxu0 %v1548
  %3019 = vmatprep.subr.bf16.mxu0 %v1553
  %3020 = vmatpush1.bf16.msra.mxu0 %v1552
  %3021 = vmatprep.subr.bf16.mxu0 %v1557
  %3022 = vmatpush1.bf16.msra.mxu0 %v1556
  %3023 = vmatprep.mubr.bf16.mxu0 %v2949
  %3024 = vmatmul.mubr.bf16.gmra.mrb[0].mxu0 %v2842
  %v3025 = vpop.f32.mrb[0].mxu0
  %v3026 = vadd.f32 %v1293, %v3025
  %v3027 = vpop.f32.mrb[0].mxu0
  %v3028 = vadd.f32 %v1297, %v3027
  %v3029 = vpop.f32.mrb[0].mxu0
  %v3030 = vpop.f32.mrb[0].mxu0
  %3031 = vdwg.mxu0
  %v3032 = vxor.u32 %v2985, 2147483648
  %v3033 = vxor.u32 %v2987, 2147483648
  %v3034 = vxor.u32 %v3026, 2147483648
  %v3035 = vmul.f32 %v3032, 1.442695
  %v3036 = vpow.pop %v3035
  %v3037 = vmul.f32 %v3033, 1.442695
  %v3038 = vpow.pop %v3037
  %v3039 = vmul.f32 %v3034, 1.442695
  %v3040 = vpow.pop %v3039
  %v3041 = vadd.f32 %v3036, 1.0
  %v3042 = vadd.f32 %v3038, 1.0
  %v3043 = vadd.f32 %v3040, 1.0
  %v3044 = vrcp.pop %v3041
  %v3045 = vmul.f32 1.0, %v3044
  %v3046 = vrcp.pop %v3042
  %v3047 = vmul.f32 1.0, %v3046
  %v3048 = vrcp.pop %v3043
  %v3049 = vmul.f32 1.0, %v3048
  %v3050 = vtanh.pop %v3028
  %v3051 = vmul.f32 %v3047, %v2721
  %v3052 = vmul.f32 %v3045, %v3050
  %v3053 = vadd.f32 %v3051, %v3052
  %v3054 = vtanh.pop %v3053
  %v3055 = vmul.f32 %v3049, %v3054
  %s3056 = scalar_lea.vmem %s0, 112
  %v3057 = vld [vmem:[%s3056] sm:$0xff]
  %v3058 = vld [vmem:[%s3056 + $0x8] sm:$0xff]
  %v3059 = vunpack.c.l.bf16 %v3057
  %v3060 = vunpack.c.h.bf16 %v3057
  %v3061 = vunpack.c.l.bf16 %v3058
  %v3062 = vunpack.c.h.bf16 %v3058
  %v3063 = vpack.c.bf16 %v2841, %v2841
  %3064 = vmatprep.subr.bf16.mxu0 %v184
  %3065 = vmatpush1.bf16.msra.mxu0 %v183
  %3066 = vmatprep.subr.bf16.mxu0 %v188
  %3067 = vmatpush1.bf16.msra.mxu0 %v187
  %3068 = vmatprep.subr.bf16.mxu0 %v192
  %3069 = vmatpush1.bf16.msra.mxu0 %v191
  %3070 = vmatprep.subr.bf16.mxu0 %v196
  %3071 = vmatpush1.bf16.msra.mxu0 %v195
  %3072 = vmatprep.subr.bf16.mxu0 %v200
  %3073 = vmatpush1.bf16.msra.mxu0 %v199
  %3074 = vmatprep.subr.bf16.mxu0 %v204
  %3075 = vmatpush1.bf16.msra.mxu0 %v203
  %3076 = vmatprep.subr.bf16.mxu0 %v208
  %3077 = vmatpush1.bf16.msra.mxu0 %v207
  %3078 = vmatprep.subr.bf16.mxu0 %v212
  %3079 = vmatpush1.bf16.msra.mxu0 %v211
  %3080 = vmatprep.subr.bf16.mxu0 0
  %3081 = vmatpush1.bf16.msra.mxu0 0
  %3082 = vmatprep.subr.bf16.mxu0 0
  %3083 = vmatpush1.bf16.msra.mxu0 0
  %3084 = vmatprep.subr.bf16.mxu0 0
  %3085 = vmatpush1.bf16.msra.mxu0 0
  %3086 = vmatprep.subr.bf16.mxu0 0
  %3087 = vmatpush1.bf16.msra.mxu0 0
  %3088 = vmatprep.subr.bf16.mxu0 0
  %3089 = vmatpush1.bf16.msra.mxu0 0
  %3090 = vmatprep.subr.bf16.mxu0 0
  %3091 = vmatpush1.bf16.msra.mxu0 0
  %3092 = vmatprep.subr.bf16.mxu0 0
  %3093 = vmatpush1.bf16.msra.mxu0 0
  %3094 = vmatprep.subr.bf16.mxu0 0
  %3095 = vmatpush1.bf16.msra.mxu0 0
  %3096 = vmatprep.mubr.bf16.mxu0 0
  %3097 = vmatmul.mubr.bf16.gmra.mrb[0].mxu0 %v3063
  %v3098 = vpop.f32.mrb[0].mxu0
  %v3099 = vadd.f32 0.0, %v3098
  %v3100 = vpop.f32.mrb[0].mxu0
  %v3101 = vadd.f32 0.0, %v3100
  %v3102 = vpop.f32.mrb[0].mxu0
  %v3103 = vpop.f32.mrb[0].mxu0
  %3104 = vdwg.mxu0
  %3105 = vmatprep.subr.bf16.mxu0 %v186
  %3106 = vmatpush1.bf16.msra.mxu0 %v185
  %3107 = vmatprep.subr.bf16.mxu0 %v190
  %3108 = vmatpush1.bf16.msra.mxu0 %v189
  %3109 = vmatprep.subr.bf16.mxu0 %v194
  %3110 = vmatpush1.bf16.msra.mxu0 %v193
  %3111 = vmatprep.subr.bf16.mxu0 %v198
  %3112 = vmatpush1.bf16.msra.mxu0 %v197
  %3113 = vmatprep.subr.bf16.mxu0 %v202
  %3114 = vmatpush1.bf16.msra.mxu0 %v201
  %3115 = vmatprep.subr.bf16.mxu0 %v206
  %3116 = vmatpush1.bf16.msra.mxu0 %v205
  %3117 = vmatprep.subr.bf16.mxu0 %v210
  %3118 = vmatpush1.bf16.msra.mxu0 %v209
  %3119 = vmatprep.subr.bf16.mxu0 %v214
  %3120 = vmatpush1.bf16.msra.mxu0 %v213
  %3121 = vmatprep.subr.bf16.mxu0 0
  %3122 = vmatpush1.bf16.msra.mxu0 0
  %3123 = vmatprep.subr.bf16.mxu0 0
  %3124 = vmatpush1.bf16.msra.mxu0 0
  %3125 = vmatprep.subr.bf16.mxu0 0
  %3126 = vmatpush1.bf16.msra.mxu0 0
  %3127 = vmatprep.subr.bf16.mxu0 0
  %3128 = vmatpush1.bf16.msra.mxu0 0
  %3129 = vmatprep.subr.bf16.mxu0 0
  %3130 = vmatpush1.bf16.msra.mxu0 0
  %3131 = vmatprep.subr.bf16.mxu0 0
  %3132 = vmatpush1.bf16.msra.mxu0 0
  %3133 = vmatprep.subr.bf16.mxu0 0
  %3134 = vmatpush1.bf16.msra.mxu0 0
  %3135 = vmatprep.subr.bf16.mxu0 0
  %3136 = vmatpush1.bf16.msra.mxu0 0
  %3137 = vmatprep.mubr.bf16.mxu0 0
  %3138 = vmatmul.mubr.bf16.gmra.mrb[0].mxu0 %v3063
  %v3139 = vpop.f32.mrb[0].mxu0
  %v3140 = vadd.f32 0.0, %v3139
  %v3141 = vpop.f32.mrb[0].mxu0
  %v3142 = vadd.f32 0.0, %v3141
  %v3143 = vpop.f32.mrb[0].mxu0
  %v3144 = vpop.f32.mrb[0].mxu0
  %3145 = vdwg.mxu0
  %v3146 = vadd.f32 %v3059, %v3099
  %v3147 = vadd.f32 %v3060, %v3101
  %v3148 = vadd.f32 %v3061, %v3140
  %v3149 = vadd.f32 %v3062, %v3142
  %v3150 = vxor.u32 %v3146, 2147483648
  %v3151 = vxor.u32 %v3147, 2147483648
  %v3152 = vxor.u32 %v3148, 2147483648
  %v3153 = vmul.f32 %v3150, 1.442695
  %v3154 = vpow.pop %v3153
  %v3155 = vmul.f32 %v3151, 1.442695
  %v3156 = vpow.pop %v3155
  %v3157 = vmul.f32 %v3152, 1.442695
  %v3158 = vpow.pop %v3157
  %v3159 = vadd.f32 %v3154, 1.0
  %v3160 = vadd.f32 %v3156, 1.0
  %v3161 = vadd.f32 %v3158, 1.0
  %v3162 = vrcp.pop %v3159
  %v3163 = vmul.f32 1.0, %v3162
  %v3164 = vrcp.pop %v3160
  %v3165 = vmul.f32 1.0, %v3164
  %v3166 = vrcp.pop %v3161
  %v3167 = vmul.f32 1.0, %v3166
  %v3168 = vtanh.pop %v3149
  %v3169 = vmul.f32 %v3165, %v2839
  %v3170 = vmul.f32 %v3163, %v3168
  %v3171 = vadd.f32 %v3169, %v3170
  %v3172 = vtanh.pop %v3171
  %v3173 = vmul.f32 %v3167, %v3172
  %v3174 = vpack.c.bf16 %v2948, %v2948
  %3175 = vmatprep.subr.bf16.mxu0 %v755
  %3176 = vmatpush1.bf16.msra.mxu0 %v754
  %3177 = vmatprep.subr.bf16.mxu0 %v759
  %3178 = vmatpush1.bf16.msra.mxu0 %v758
  %3179 = vmatprep.subr.bf16.mxu0 %v763
  %3180 = vmatpush1.bf16.msra.mxu0 %v762
  %3181 = vmatprep.subr.bf16.mxu0 %v767
  %3182 = vmatpush1.bf16.msra.mxu0 %v766
  %3183 = vmatprep.subr.bf16.mxu0 %v771
  %3184 = vmatpush1.bf16.msra.mxu0 %v770
  %3185 = vmatprep.subr.bf16.mxu0 %v775
  %3186 = vmatpush1.bf16.msra.mxu0 %v774
  %3187 = vmatprep.subr.bf16.mxu0 %v779
  %3188 = vmatpush1.bf16.msra.mxu0 %v778
  %3189 = vmatprep.subr.bf16.mxu0 %v783
  %3190 = vmatpush1.bf16.msra.mxu0 %v782
  %3191 = vmatprep.subr.bf16.mxu0 %v787
  %3192 = vmatpush1.bf16.msra.mxu0 %v786
  %3193 = vmatprep.subr.bf16.mxu0 %v791
  %3194 = vmatpush1.bf16.msra.mxu0 %v790
  %3195 = vmatprep.subr.bf16.mxu0 %v795
  %3196 = vmatpush1.bf16.msra.mxu0 %v794
  %3197 = vmatprep.subr.bf16.mxu0 %v799
  %3198 = vmatpush1.bf16.msra.mxu0 %v798
  %3199 = vmatprep.subr.bf16.mxu0 %v803
  %3200 = vmatpush1.bf16.msra.mxu0 %v802
  %3201 = vmatprep.subr.bf16.mxu0 %v807
  %3202 = vmatpush1.bf16.msra.mxu0 %v806
  %3203 = vmatprep.subr.bf16.mxu0 %v811
  %3204 = vmatpush1.bf16.msra.mxu0 %v810
  %3205 = vmatprep.subr.bf16.mxu0 %v815
  %3206 = vmatpush1.bf16.msra.mxu0 %v814
  %3207 = vmatprep.mubr.bf16.mxu0 %v3174
  %3208 = vmatmul.mubr.bf16.gmra.mrb[0].mxu0 %v3063
  %v3209 = vpop.f32.mrb[0].mxu0
  %v3210 = vadd.f32 %v545, %v3209
  %v3211 = vpop.f32.mrb[0].mxu0
  %v3212 = vadd.f32 %v549, %v3211
  %v3213 = vpop.f32.mrb[0].mxu0
  %v3214 = vpop.f32.mrb[0].mxu0
  %3215 = vdwg.mxu0
  %3216 = vmatprep.subr.bf16.mxu0 %v757
  %3217 = vmatpush1.bf16.msra.mxu0 %v756
  %3218 = vmatprep.subr.bf16.mxu0 %v761
  %3219 = vmatpush1.bf16.msra.mxu0 %v760
  %3220 = vmatprep.subr.bf16.mxu0 %v765
  %3221 = vmatpush1.bf16.msra.mxu0 %v764
  %3222 = vmatprep.subr.bf16.mxu0 %v769
  %3223 = vmatpush1.bf16.msra.mxu0 %v768
  %3224 = vmatprep.subr.bf16.mxu0 %v773
  %3225 = vmatpush1.bf16.msra.mxu0 %v772
  %3226 = vmatprep.subr.bf16.mxu0 %v777
  %3227 = vmatpush1.bf16.msra.mxu0 %v776
  %3228 = vmatprep.subr.bf16.mxu0 %v781
  %3229 = vmatpush1.bf16.msra.mxu0 %v780
  %3230 = vmatprep.subr.bf16.mxu0 %v785
  %3231 = vmatpush1.bf16.msra.mxu0 %v784
  %3232 = vmatprep.subr.bf16.mxu0 %v789
  %3233 = vmatpush1.bf16.msra.mxu0 %v788
  %3234 = vmatprep.subr.bf16.mxu0 %v793
  %3235 = vmatpush1.bf16.msra.mxu0 %v792
  %3236 = vmatprep.subr.bf16.mxu0 %v797
  %3237 = vmatpush1.bf16.msra.mxu0 %v796
  %3238 = vmatprep.subr.bf16.mxu0 %v801
  %3239 = vmatpush1.bf16.msra.mxu0 %v800
  %3240 = vmatprep.subr.bf16.mxu0 %v805
  %3241 = vmatpush1.bf16.msra.mxu0 %v804
  %3242 = vmatprep.subr.bf16.mxu0 %v809
  %3243 = vmatpush1.bf16.msra.mxu0 %v808
  %3244 = vmatprep.subr.bf16.mxu0 %v813
  %3245 = vmatpush1.bf16.msra.mxu0 %v812
  %3246 = vmatprep.subr.bf16.mxu0 %v817
  %3247 = vmatpush1.bf16.msra.mxu0 %v816
  %3248 = vmatprep.mubr.bf16.mxu0 %v3174
  %3249 = vmatmul.mubr.bf16.gmra.mrb[0].mxu0 %v3063
  %v3250 = vpop.f32.mrb[0].mxu0
  %v3251 = vadd.f32 %v553, %v3250
  %v3252 = vpop.f32.mrb[0].mxu0
  %v3253 = vadd.f32 %v557, %v3252
  %v3254 = vpop.f32.mrb[0].mxu0
  %v3255 = vpop.f32.mrb[0].mxu0
  %3256 = vdwg.mxu0
  %v3257 = vxor.u32 %v3210, 2147483648
  %v3258 = vxor.u32 %v3212, 2147483648
  %v3259 = vxor.u32 %v3251, 2147483648
  %v3260 = vmul.f32 %v3257, 1.442695
  %v3261 = vpow.pop %v3260
  %v3262 = vmul.f32 %v3258, 1.442695
  %v3263 = vpow.pop %v3262
  %v3264 = vmul.f32 %v3259, 1.442695
  %v3265 = vpow.pop %v3264
  %v3266 = vadd.f32 %v3261, 1.0
  %v3267 = vadd.f32 %v3263, 1.0
  %v3268 = vadd.f32 %v3265, 1.0
  %v3269 = vrcp.pop %v3266
  %v3270 = vmul.f32 1.0, %v3269
  %v3271 = vrcp.pop %v3267
  %v3272 = vmul.f32 1.0, %v3271
  %v3273 = vrcp.pop %v3268
  %v3274 = vmul.f32 1.0, %v3273
  %v3275 = vtanh.pop %v3253
  %v3276 = vmul.f32 %v3272, %v2946
  %v3277 = vmul.f32 %v3270, %v3275
  %v3278 = vadd.f32 %v3276, %v3277
  %v3279 = vtanh.pop %v3278
  %v3280 = vmul.f32 %v3274, %v3279
  %v3281 = vpack.c.bf16 %v3055, %v3055
  %3282 = vmatprep.subr.bf16.mxu0 %v1495
  %3283 = vmatpush1.bf16.msra.mxu0 %v1494
  %3284 = vmatprep.subr.bf16.mxu0 %v1499
  %3285 = vmatpush1.bf16.msra.mxu0 %v1498
  %3286 = vmatprep.subr.bf16.mxu0 %v1503
  %3287 = vmatpush1.bf16.msra.mxu0 %v1502
  %3288 = vmatprep.subr.bf16.mxu0 %v1507
  %3289 = vmatpush1.bf16.msra.mxu0 %v1506
  %3290 = vmatprep.subr.bf16.mxu0 %v1511
  %3291 = vmatpush1.bf16.msra.mxu0 %v1510
  %3292 = vmatprep.subr.bf16.mxu0 %v1515
  %3293 = vmatpush1.bf16.msra.mxu0 %v1514
  %3294 = vmatprep.subr.bf16.mxu0 %v1519
  %3295 = vmatpush1.bf16.msra.mxu0 %v1518
  %3296 = vmatprep.subr.bf16.mxu0 %v1523
  %3297 = vmatpush1.bf16.msra.mxu0 %v1522
  %3298 = vmatprep.subr.bf16.mxu0 %v1527
  %3299 = vmatpush1.bf16.msra.mxu0 %v1526
  %3300 = vmatprep.subr.bf16.mxu0 %v1531
  %3301 = vmatpush1.bf16.msra.mxu0 %v1530
  %3302 = vmatprep.subr.bf16.mxu0 %v1535
  %3303 = vmatpush1.bf16.msra.mxu0 %v1534
  %3304 = vmatprep.subr.bf16.mxu0 %v1539
  %3305 = vmatpush1.bf16.msra.mxu0 %v1538
  %3306 = vmatprep.subr.bf16.mxu0 %v1543
  %3307 = vmatpush1.bf16.msra.mxu0 %v1542
  %3308 = vmatprep.subr.bf16.mxu0 %v1547
  %3309 = vmatpush1.bf16.msra.mxu0 %v1546
  %3310 = vmatprep.subr.bf16.mxu0 %v1551
  %3311 = vmatpush1.bf16.msra.mxu0 %v1550
  %3312 = vmatprep.subr.bf16.mxu0 %v1555
  %3313 = vmatpush1.bf16.msra.mxu0 %v1554
  %3314 = vmatprep.mubr.bf16.mxu0 %v3281
  %3315 = vmatmul.mubr.bf16.gmra.mrb[0].mxu0 %v3174
  %v3316 = vpop.f32.mrb[0].mxu0
  %v3317 = vadd.f32 %v1285, %v3316
  %v3318 = vpop.f32.mrb[0].mxu0
  %v3319 = vadd.f32 %v1289, %v3318
  %v3320 = vpop.f32.mrb[0].mxu0
  %v3321 = vpop.f32.mrb[0].mxu0
  %3322 = vdwg.mxu0
  %3323 = vmatprep.subr.bf16.mxu0 %v1497
  %3324 = vmatpush1.bf16.msra.mxu0 %v1496
  %3325 = vmatprep.subr.bf16.mxu0 %v1501
  %3326 = vmatpush1.bf16.msra.mxu0 %v1500
  %3327 = vmatprep.subr.bf16.mxu0 %v1505
  %3328 = vmatpush1.bf16.msra.mxu0 %v1504
  %3329 = vmatprep.subr.bf16.mxu0 %v1509
  %3330 = vmatpush1.bf16.msra.mxu0 %v1508
  %3331 = vmatprep.subr.bf16.mxu0 %v1513
  %3332 = vmatpush1.bf16.msra.mxu0 %v1512
  %3333 = vmatprep.subr.bf16.mxu0 %v1517
  %3334 = vmatpush1.bf16.msra.mxu0 %v1516
  %3335 = vmatprep.subr.bf16.mxu0 %v1521
  %3336 = vmatpush1.bf16.msra.mxu0 %v1520
  %3337 = vmatprep.subr.bf16.mxu0 %v1525
  %3338 = vmatpush1.bf16.msra.mxu0 %v1524
  %3339 = vmatprep.subr.bf16.mxu0 %v1529
  %3340 = vmatpush1.bf16.msra.mxu0 %v1528
  %3341 = vmatprep.subr.bf16.mxu0 %v1533
  %3342 = vmatpush1.bf16.msra.mxu0 %v1532
  %3343 = vmatprep.subr.bf16.mxu0 %v1537
  %3344 = vmatpush1.bf16.msra.mxu0 %v1536
  %3345 = vmatprep.subr.bf16.mxu0 %v1541
  %3346 = vmatpush1.bf16.msra.mxu0 %v1540
  %3347 = vmatprep.subr.bf16.mxu0 %v1545
  %3348 = vmatpush1.bf16.msra.mxu0 %v1544
  %3349 = vmatprep.subr.bf16.mxu0 %v1549
  %3350 = vmatpush1.bf16.msra.mxu0 %v1548
  %3351 = vmatprep.subr.bf16.mxu0 %v1553
  %3352 = vmatpush1.bf16.msra.mxu0 %v1552
  %3353 = vmatprep.subr.bf16.mxu0 %v1557
  %3354 = vmatpush1.bf16.msra.mxu0 %v1556
  %3355 = vmatprep.mubr.bf16.mxu0 %v3281
  %3356 = vmatmul.mubr.bf16.gmra.mrb[0].mxu0 %v3174
  %v3357 = vpop.f32.mrb[0].mxu0
  %v3358 = vadd.f32 %v1293, %v3357
  %v3359 = vpop.f32.mrb[0].mxu0
  %v3360 = vadd.f32 %v1297, %v3359
  %v3361 = vpop.f32.mrb[0].mxu0
  %v3362 = vpop.f32.mrb[0].mxu0
  %3363 = vdwg.mxu0
  %v3364 = vxor.u32 %v3317, 2147483648
  %v3365 = vxor.u32 %v3319, 2147483648
  %v3366 = vxor.u32 %v3358, 2147483648
  %v3367 = vmul.f32 %v3364, 1.442695
  %v3368 = vpow.pop %v3367
  %v3369 = vmul.f32 %v3365, 1.442695
  %v3370 = vpow.pop %v3369
  %v3371 = vmul.f32 %v3366, 1.442695
  %v3372 = vpow.pop %v3371
  %v3373 = vadd.f32 %v3368, 1.0
  %v3374 = vadd.f32 %v3370, 1.0
  %v3375 = vadd.f32 %v3372, 1.0
  %v3376 = vrcp.pop %v3373
  %v3377 = vmul.f32 1.0, %v3376
  %v3378 = vrcp.pop %v3374
  %v3379 = vmul.f32 1.0, %v3378
  %v3380 = vrcp.pop %v3375
  %v3381 = vmul.f32 1.0, %v3380
  %v3382 = vtanh.pop %v3360
  %v3383 = vmul.f32 %v3379, %v3053
  %v3384 = vmul.f32 %v3377, %v3382
  %v3385 = vadd.f32 %v3383, %v3384
  %v3386 = vtanh.pop %v3385
  %v3387 = vmul.f32 %v3381, %v3386
  %v3388 = vpack.c.bf16 %v3173, %v3173
  %v3389 = vpack.c.bf16 %v3280, %v3280
  %3390 = vmatprep.subr.bf16.mxu0 %v755
  %3391 = vmatpush1.bf16.msra.mxu0 %v754
  %3392 = vmatprep.subr.bf16.mxu0 %v759
  %3393 = vmatpush1.bf16.msra.mxu0 %v758
  %3394 = vmatprep.subr.bf16.mxu0 %v763
  %3395 = vmatpush1.bf16.msra.mxu0 %v762
  %3396 = vmatprep.subr.bf16.mxu0 %v767
  %3397 = vmatpush1.bf16.msra.mxu0 %v766
  %3398 = vmatprep.subr.bf16.mxu0 %v771
  %3399 = vmatpush1.bf16.msra.mxu0 %v770
  %3400 = vmatprep.subr.bf16.mxu0 %v775
  %3401 = vmatpush1.bf16.msra.mxu0 %v774
  %3402 = vmatprep.subr.bf16.mxu0 %v779
  %3403 = vmatpush1.bf16.msra.mxu0 %v778
  %3404 = vmatprep.subr.bf16.mxu0 %v783
  %3405 = vmatpush1.bf16.msra.mxu0 %v782
  %3406 = vmatprep.subr.bf16.mxu0 %v787
  %3407 = vmatpush1.bf16.msra.mxu0 %v786
  %3408 = vmatprep.subr.bf16.mxu0 %v791
  %3409 = vmatpush1.bf16.msra.mxu0 %v790
  %3410 = vmatprep.subr.bf16.mxu0 %v795
  %3411 = vmatpush1.bf16.msra.mxu0 %v794
  %3412 = vmatprep.subr.bf16.mxu0 %v799
  %3413 = vmatpush1.bf16.msra.mxu0 %v798
  %3414 = vmatprep.subr.bf16.mxu0 %v803
  %3415 = vmatpush1.bf16.msra.mxu0 %v802
  %3416 = vmatprep.subr.bf16.mxu0 %v807
  %3417 = vmatpush1.bf16.msra.mxu0 %v806
  %3418 = vmatprep.subr.bf16.mxu0 %v811
  %3419 = vmatpush1.bf16.msra.mxu0 %v810
  %3420 = vmatprep.subr.bf16.mxu0 %v815
  %3421 = vmatpush1.bf16.msra.mxu0 %v814
  %3422 = vmatprep.mubr.bf16.mxu0 %v3389
  %3423 = vmatmul.mubr.bf16.gmra.mrb[0].mxu0 %v3388
  %v3424 = vpop.f32.mrb[0].mxu0
  %v3425 = vadd.f32 %v545, %v3424
  %v3426 = vpop.f32.mrb[0].mxu0
  %v3427 = vadd.f32 %v549, %v3426
  %v3428 = vpop.f32.mrb[0].mxu0
  %v3429 = vpop.f32.mrb[0].mxu0
  %3430 = vdwg.mxu0
  %3431 = vmatprep.subr.bf16.mxu0 %v757
  %3432 = vmatpush1.bf16.msra.mxu0 %v756
  %3433 = vmatprep.subr.bf16.mxu0 %v761
  %3434 = vmatpush1.bf16.msra.mxu0 %v760
  %3435 = vmatprep.subr.bf16.mxu0 %v765
  %3436 = vmatpush1.bf16.msra.mxu0 %v764
  %3437 = vmatprep.subr.bf16.mxu0 %v769
  %3438 = vmatpush1.bf16.msra.mxu0 %v768
  %3439 = vmatprep.subr.bf16.mxu0 %v773
  %3440 = vmatpush1.bf16.msra.mxu0 %v772
  %3441 = vmatprep.subr.bf16.mxu0 %v777
  %3442 = vmatpush1.bf16.msra.mxu0 %v776
  %3443 = vmatprep.subr.bf16.mxu0 %v781
  %3444 = vmatpush1.bf16.msra.mxu0 %v780
  %3445 = vmatprep.subr.bf16.mxu0 %v785
  %3446 = vmatpush1.bf16.msra.mxu0 %v784
  %3447 = vmatprep.subr.bf16.mxu0 %v789
  %3448 = vmatpush1.bf16.msra.mxu0 %v788
  %3449 = vmatprep.subr.bf16.mxu0 %v793
  %3450 = vmatpush1.bf16.msra.mxu0 %v792
  %3451 = vmatprep.subr.bf16.mxu0 %v797
  %3452 = vmatpush1.bf16.msra.mxu0 %v796
  %3453 = vmatprep.subr.bf16.mxu0 %v801
  %3454 = vmatpush1.bf16.msra.mxu0 %v800
  %3455 = vmatprep.subr.bf16.mxu0 %v805
  %3456 = vmatpush1.bf16.msra.mxu0 %v804
  %3457 = vmatprep.subr.bf16.mxu0 %v809
  %3458 = vmatpush1.bf16.msra.mxu0 %v808
  %3459 = vmatprep.subr.bf16.mxu0 %v813
  %3460 = vmatpush1.bf16.msra.mxu0 %v812
  %3461 = vmatprep.subr.bf16.mxu0 %v817
  %3462 = vmatpush1.bf16.msra.mxu0 %v816
  %3463 = vmatprep.mubr.bf16.mxu0 %v3389
  %3464 = vmatmul.mubr.bf16.gmra.mrb[0].mxu0 %v3388
  %v3465 = vpop.f32.mrb[0].mxu0
  %v3466 = vadd.f32 %v553, %v3465
  %v3467 = vpop.f32.mrb[0].mxu0
  %v3468 = vadd.f32 %v557, %v3467
  %v3469 = vpop.f32.mrb[0].mxu0
  %v3470 = vpop.f32.mrb[0].mxu0
  %3471 = vdwg.mxu0
  %v3472 = vxor.u32 %v3425, 2147483648
  %v3473 = vxor.u32 %v3427, 2147483648
  %v3474 = vxor.u32 %v3466, 2147483648
  %v3475 = vmul.f32 %v3472, 1.442695
  %v3476 = vpow.pop %v3475
  %v3477 = vmul.f32 %v3473, 1.442695
  %v3478 = vpow.pop %v3477
  %v3479 = vmul.f32 %v3474, 1.442695
  %v3480 = vpow.pop %v3479
  %v3481 = vadd.f32 %v3476, 1.0
  %v3482 = vadd.f32 %v3478, 1.0
  %v3483 = vadd.f32 %v3480, 1.0
  %v3484 = vrcp.pop %v3481
  %v3485 = vmul.f32 1.0, %v3484
  %v3486 = vrcp.pop %v3482
  %v3487 = vmul.f32 1.0, %v3486
  %v3488 = vrcp.pop %v3483
  %v3489 = vmul.f32 1.0, %v3488
  %v3490 = vtanh.pop %v3468
  %v3491 = vmul.f32 %v3487, %v3278
  %v3492 = vmul.f32 %v3485, %v3490
  %v3493 = vadd.f32 %v3491, %v3492
  %v3494 = vtanh.pop %v3493
  %v3495 = vmul.f32 %v3489, %v3494
  %v3496 = vpack.c.bf16 %v3387, %v3387
  %3497 = vmatprep.subr.bf16.mxu0 %v1495
  %3498 = vmatpush1.bf16.msra.mxu0 %v1494
  %3499 = vmatprep.subr.bf16.mxu0 %v1499
  %3500 = vmatpush1.bf16.msra.mxu0 %v1498
  %3501 = vmatprep.subr.bf16.mxu0 %v1503
  %3502 = vmatpush1.bf16.msra.mxu0 %v1502
  %3503 = vmatprep.subr.bf16.mxu0 %v1507
  %3504 = vmatpush1.bf16.msra.mxu0 %v1506
  %3505 = vmatprep.subr.bf16.mxu0 %v1511
  %3506 = vmatpush1.bf16.msra.mxu0 %v1510
  %3507 = vmatprep.subr.bf16.mxu0 %v1515
  %3508 = vmatpush1.bf16.msra.mxu0 %v1514
  %3509 = vmatprep.subr.bf16.mxu0 %v1519
  %3510 = vmatpush1.bf16.msra.mxu0 %v1518
  %3511 = vmatprep.subr.bf16.mxu0 %v1523
  %3512 = vmatpush1.bf16.msra.mxu0 %v1522
  %3513 = vmatprep.subr.bf16.mxu0 %v1527
  %3514 = vmatpush1.bf16.msra.mxu0 %v1526
  %3515 = vmatprep.subr.bf16.mxu0 %v1531
  %3516 = vmatpush1.bf16.msra.mxu0 %v1530
  %3517 = vmatprep.subr.bf16.mxu0 %v1535
  %3518 = vmatpush1.bf16.msra.mxu0 %v1534
  %3519 = vmatprep.subr.bf16.mxu0 %v1539
  %3520 = vmatpush1.bf16.msra.mxu0 %v1538
  %3521 = vmatprep.subr.bf16.mxu0 %v1543
  %3522 = vmatpush1.bf16.msra.mxu0 %v1542
  %3523 = vmatprep.subr.bf16.mxu0 %v1547
  %3524 = vmatpush1.bf16.msra.mxu0 %v1546
  %3525 = vmatprep.subr.bf16.mxu0 %v1551
  %3526 = vmatpush1.bf16.msra.mxu0 %v1550
  %3527 = vmatprep.subr.bf16.mxu0 %v1555
  %3528 = vmatpush1.bf16.msra.mxu0 %v1554
  %3529 = vmatprep.mubr.bf16.mxu0 %v3496
  %3530 = vmatmul.mubr.bf16.gmra.mrb[0].mxu0 %v3389
  %v3531 = vpop.f32.mrb[0].mxu0
  %v3532 = vadd.f32 %v1285, %v3531
  %v3533 = vpop.f32.mrb[0].mxu0
  %v3534 = vadd.f32 %v1289, %v3533
  %v3535 = vpop.f32.mrb[0].mxu0
  %v3536 = vpop.f32.mrb[0].mxu0
  %3537 = vdwg.mxu0
  %3538 = vmatprep.subr.bf16.mxu0 %v1497
  %3539 = vmatpush1.bf16.msra.mxu0 %v1496
  %3540 = vmatprep.subr.bf16.mxu0 %v1501
  %3541 = vmatpush1.bf16.msra.mxu0 %v1500
  %3542 = vmatprep.subr.bf16.mxu0 %v1505
  %3543 = vmatpush1.bf16.msra.mxu0 %v1504
  %3544 = vmatprep.subr.bf16.mxu0 %v1509
  %3545 = vmatpush1.bf16.msra.mxu0 %v1508
  %3546 = vmatprep.subr.bf16.mxu0 %v1513
  %3547 = vmatpush1.bf16.msra.mxu0 %v1512
  %3548 = vmatprep.subr.bf16.mxu0 %v1517
  %3549 = vmatpush1.bf16.msra.mxu0 %v1516
  %3550 = vmatprep.subr.bf16.mxu0 %v1521
  %3551 = vmatpush1.bf16.msra.mxu0 %v1520
  %3552 = vmatprep.subr.bf16.mxu0 %v1525
  %3553 = vmatpush1.bf16.msra.mxu0 %v1524
  %3554 = vmatprep.subr.bf16.mxu0 %v1529
  %3555 = vmatpush1.bf16.msra.mxu0 %v1528
  %3556 = vmatprep.subr.bf16.mxu0 %v1533
  %3557 = vmatpush1.bf16.msra.mxu0 %v1532
  %3558 = vmatprep.subr.bf16.mxu0 %v1537
  %3559 = vmatpush1.bf16.msra.mxu0 %v1536
  %3560 = vmatprep.subr.bf16.mxu0 %v1541
  %3561 = vmatpush1.bf16.msra.mxu0 %v1540
  %3562 = vmatprep.subr.bf16.mxu0 %v1545
  %3563 = vmatpush1.bf16.msra.mxu0 %v1544
  %3564 = vmatprep.subr.bf16.mxu0 %v1549
  %3565 = vmatpush1.bf16.msra.mxu0 %v1548
  %3566 = vmatprep.subr.bf16.mxu0 %v1553
  %3567 = vmatpush1.bf16.msra.mxu0 %v1552
  %3568 = vmatprep.subr.bf16.mxu0 %v1557
  %3569 = vmatpush1.bf16.msra.mxu0 %v1556
  %3570 = vmatprep.mubr.bf16.mxu0 %v3496
  %3571 = vmatmul.mubr.bf16.gmra.mrb[0].mxu0 %v3389
  %v3572 = vpop.f32.mrb[0].mxu0
  %v3573 = vadd.f32 %v1293, %v3572
  %v3574 = vpop.f32.mrb[0].mxu0
  %v3575 = vadd.f32 %v1297, %v3574
  %v3576 = vpop.f32.mrb[0].mxu0
  %v3577 = vpop.f32.mrb[0].mxu0
  %3578 = vdwg.mxu0
  %v3579 = vxor.u32 %v3532, 2147483648
  %v3580 = vxor.u32 %v3534, 2147483648
  %v3581 = vxor.u32 %v3573, 2147483648
  %v3582 = vmul.f32 %v3579, 1.442695
  %v3583 = vpow.pop %v3582
  %v3584 = vmul.f32 %v3580, 1.442695
  %v3585 = vpow.pop %v3584
  %v3586 = vmul.f32 %v3581, 1.442695
  %v3587 = vpow.pop %v3586
  %v3588 = vadd.f32 %v3583, 1.0
  %v3589 = vadd.f32 %v3585, 1.0
  %v3590 = vadd.f32 %v3587, 1.0
  %v3591 = vrcp.pop %v3588
  %v3592 = vmul.f32 1.0, %v3591
  %v3593 = vrcp.pop %v3589
  %v3594 = vmul.f32 1.0, %v3593
  %v3595 = vrcp.pop %v3590
  %v3596 = vmul.f32 1.0, %v3595
  %v3597 = vtanh.pop %v3575
  %v3598 = vmul.f32 %v3594, %v3385
  %v3599 = vmul.f32 %v3592, %v3597
  %v3600 = vadd.f32 %v3598, %v3599
  %v3601 = vtanh.pop %v3600
  %v3602 = vmul.f32 %v3596, %v3601
  %v3603 = vpack.c.bf16 %v3495, %v3495
  %v3604 = vpack.c.bf16 %v3602, %v3602
  %3605 = vmatprep.subr.bf16.mxu0 %v1495
  %3606 = vmatpush1.bf16.msra.mxu0 %v1494
  %3607 = vmatprep.subr.bf16.mxu0 %v1499
  %3608 = vmatpush1.bf16.msra.mxu0 %v1498
  %3609 = vmatprep.subr.bf16.mxu0 %v1503
  %3610 = vmatpush1.bf16.msra.mxu0 %v1502
  %3611 = vmatprep.subr.bf16.mxu0 %v1507
  %3612 = vmatpush1.bf16.msra.mxu0 %v1506
  %3613 = vmatprep.subr.bf16.mxu0 %v1511
  %3614 = vmatpush1.bf16.msra.mxu0 %v1510
  %3615 = vmatprep.subr.bf16.mxu0 %v1515
  %3616 = vmatpush1.bf16.msra.mxu0 %v1514
  %3617 = vmatprep.subr.bf16.mxu0 %v1519
  %3618 = vmatpush1.bf16.msra.mxu0 %v1518
  %3619 = vmatprep.subr.bf16.mxu0 %v1523
  %3620 = vmatpush1.bf16.msra.mxu0 %v1522
  %3621 = vmatprep.subr.bf16.mxu0 %v1527
  %3622 = vmatpush1.bf16.msra.mxu0 %v1526
  %3623 = vmatprep.subr.bf16.mxu0 %v1531
  %3624 = vmatpush1.bf16.msra.mxu0 %v1530
  %3625 = vmatprep.subr.bf16.mxu0 %v1535
  %3626 = vmatpush1.bf16.msra.mxu0 %v1534
  %3627 = vmatprep.subr.bf16.mxu0 %v1539
  %3628 = vmatpush1.bf16.msra.mxu0 %v1538
  %3629 = vmatprep.subr.bf16.mxu0 %v1543
  %3630 = vmatpush1.bf16.msra.mxu0 %v1542
  %3631 = vmatprep.subr.bf16.mxu0 %v1547
  %3632 = vmatpush1.bf16.msra.mxu0 %v1546
  %3633 = vmatprep.subr.bf16.mxu0 %v1551
  %3634 = vmatpush1.bf16.msra.mxu0 %v1550
  %3635 = vmatprep.subr.bf16.mxu0 %v1555
  %3636 = vmatpush1.bf16.msra.mxu0 %v1554
  %3637 = vmatprep.mubr.bf16.mxu0 %v3604
  %3638 = vmatmul.mubr.bf16.gmra.mrb[0].mxu0 %v3603
  %v3639 = vpop.f32.mrb[0].mxu0
  %v3640 = vadd.f32 %v1285, %v3639
  %v3641 = vpop.f32.mrb[0].mxu0
  %v3642 = vadd.f32 %v1289, %v3641
  %v3643 = vpop.f32.mrb[0].mxu0
  %v3644 = vpop.f32.mrb[0].mxu0
  %3645 = vdwg.mxu0
  %3646 = vmatprep.subr.bf16.mxu0 %v1497
  %3647 = vmatpush1.bf16.msra.mxu0 %v1496
  %3648 = vmatprep.subr.bf16.mxu0 %v1501
  %3649 = vmatpush1.bf16.msra.mxu0 %v1500
  %3650 = vmatprep.subr.bf16.mxu0 %v1505
  %3651 = vmatpush1.bf16.msra.mxu0 %v1504
  %3652 = vmatprep.subr.bf16.mxu0 %v1509
  %3653 = vmatpush1.bf16.msra.mxu0 %v1508
  %3654 = vmatprep.subr.bf16.mxu0 %v1513
  %3655 = vmatpush1.bf16.msra.mxu0 %v1512
  %3656 = vmatprep.subr.bf16.mxu0 %v1517
  %3657 = vmatpush1.bf16.msra.mxu0 %v1516
  %3658 = vmatprep.subr.bf16.mxu0 %v1521
  %3659 = vmatpush1.bf16.msra.mxu0 %v1520
  %3660 = vmatprep.subr.bf16.mxu0 %v1525
  %3661 = vmatpush1.bf16.msra.mxu0 %v1524
  %3662 = vmatprep.subr.bf16.mxu0 %v1529
  %3663 = vmatpush1.bf16.msra.mxu0 %v1528
  %3664 = vmatprep.subr.bf16.mxu0 %v1533
  %3665 = vmatpush1.bf16.msra.mxu0 %v1532
  %3666 = vmatprep.subr.bf16.mxu0 %v1537
  %3667 = vmatpush1.bf16.msra.mxu0 %v1536
  %3668 = vmatprep.subr.bf16.mxu0 %v1541
  %3669 = vmatpush1.bf16.msra.mxu0 %v1540
  %3670 = vmatprep.subr.bf16.mxu0 %v1545
  %3671 = vmatpush1.bf16.msra.mxu0 %v1544
  %3672 = vmatprep.subr.bf16.mxu0 %v1549
  %3673 = vmatpush1.bf16.msra.mxu0 %v1548
  %3674 = vmatprep.subr.bf16.mxu0 %v1553
  %3675 = vmatpush1.bf16.msra.mxu0 %v1552
  %3676 = vmatprep.subr.bf16.mxu0 %v1557
  %3677 = vmatpush1.bf16.msra.mxu0 %v1556
  %3678 = vmatprep.mubr.bf16.mxu0 %v3604
  %3679 = vmatmul.mubr.bf16.gmra.mrb[0].mxu0 %v3603
  %v3680 = vpop.f32.mrb[0].mxu0
  %v3681 = vadd.f32 %v1293, %v3680
  %v3682 = vpop.f32.mrb[0].mxu0
  %v3683 = vadd.f32 %v1297, %v3682
  %v3684 = vpop.f32.mrb[0].mxu0
  %v3685 = vpop.f32.mrb[0].mxu0
  %3686 = vdwg.mxu0
  %v3687 = vxor.u32 %v3640, 2147483648
  %v3688 = vxor.u32 %v3642, 2147483648
  %v3689 = vxor.u32 %v3681, 2147483648
  %v3690 = vmul.f32 %v3687, 1.442695
  %v3691 = vpow.pop %v3690
  %v3692 = vmul.f32 %v3688, 1.442695
  %v3693 = vpow.pop %v3692
  %v3694 = vmul.f32 %v3689, 1.442695
  %v3695 = vpow.pop %v3694
  %v3696 = vadd.f32 %v3691, 1.0
  %v3697 = vadd.f32 %v3693, 1.0
  %v3698 = vadd.f32 %v3695, 1.0
  %v3699 = vrcp.pop %v3696
  %v3700 = vmul.f32 1.0, %v3699
  %v3701 = vrcp.pop %v3697
  %v3702 = vmul.f32 1.0, %v3701
  %v3703 = vrcp.pop %v3698
  %v3704 = vmul.f32 1.0, %v3703
  %v3705 = vtanh.pop %v3683
  %v3706 = vmul.f32 %v3702, %v3600
  %v3707 = vmul.f32 %v3700, %v3705
  %v3708 = vadd.f32 %v3706, %v3707
  %v3709 = vtanh.pop %v3708
  %v3710 = vmul.f32 %v3704, %v3709
  %v3711 = vld [vmem:[%s6] sm:$0xff]
  %v3712 = vld [vmem:[%s6 + $0x8] sm:$0xff]
  %v3713 = vld [vmem:[%s6 + $0x10] sm:$0xff]
  %v3714 = vld [vmem:[%s6 + $0x18] sm:$0xff]
  %v3715 = vld [vmem:[%s6 + $0x20] sm:$0xff]
  %v3716 = vld [vmem:[%s6 + $0x28] sm:$0xff]
  %v3717 = vld [vmem:[%s6 + $0x30] sm:$0xff]
  %v3718 = vld [vmem:[%s6 + $0x38] sm:$0xff]
  %v3719 = vld [vmem:[%s6 + $0x40] sm:$0xff]
  %v3720 = vld [vmem:[%s6 + $0x48] sm:$0xff]
  %v3721 = vld [vmem:[%s6 + $0x50] sm:$0xff]
  %v3722 = vld [vmem:[%s6 + $0x58] sm:$0xff]
  %v3723 = vld [vmem:[%s6 + $0x60] sm:$0xff]
  %v3724 = vld [vmem:[%s6 + $0x68] sm:$0xff]
  %v3725 = vld [vmem:[%s6 + $0x70] sm:$0xff]
  %v3726 = vld [vmem:[%s6 + $0x78] sm:$0xff]
  %v3727 = vld [vmem:[%s7] sm:$0x1]
  %v3729 = vlaneseq
  %v3730 = vshrl.u32 %v3729, 7
  %v3731 = vsub.s32 0, %v3730
  %v3732 = vrot.slane %v3727, %v3731
  %3734 = vmatprep.subr.mxu0 0.0
  %3735 = vmatpush1.msra.mxu0 %v3711
  %3736 = vmatprep.subr.mxu0 0.0
  %3737 = vmatpush1.msra.mxu0 %v3712
  %3738 = vmatprep.subr.mxu0 0.0
  %3739 = vmatpush1.msra.mxu0 %v3713
  %3740 = vmatprep.subr.mxu0 0.0
  %3741 = vmatpush1.msra.mxu0 %v3714
  %3742 = vmatprep.subr.mxu0 0.0
  %3743 = vmatpush1.msra.mxu0 %v3715
  %3744 = vmatprep.subr.mxu0 0.0
  %3745 = vmatpush1.msra.mxu0 %v3716
  %3746 = vmatprep.subr.mxu0 0.0
  %3747 = vmatpush1.msra.mxu0 %v3717
  %3748 = vmatprep.subr.mxu0 0.0
  %3749 = vmatpush1.msra.mxu0 %v3718
  %3750 = vmatprep.subr.mxu0 0.0
  %3751 = vmatpush1.msra.mxu0 %v3719
  %3752 = vmatprep.subr.mxu0 0.0
  %3753 = vmatpush1.msra.mxu0 %v3720
  %3754 = vmatprep.subr.mxu0 0.0
  %3755 = vmatpush1.msra.mxu0 %v3721
  %3756 = vmatprep.subr.mxu0 0.0
  %3757 = vmatpush1.msra.mxu0 %v3722
  %3758 = vmatprep.subr.mxu0 0.0
  %3759 = vmatpush1.msra.mxu0 %v3723
  %3760 = vmatprep.subr.mxu0 0.0
  %3761 = vmatpush1.msra.mxu0 %v3724
  %3762 = vmatprep.subr.mxu0 0.0
  %3763 = vmatpush1.msra.mxu0 %v3725
  %3764 = vmatprep.subr.mxu0 0.0
  %3765 = vmatpush1.msra.mxu0 %v3726
  %3766 = vmatprep.subr.mxu0 0.0
  %3767 = vmatpush1.msra.mxu0 0.0
  %3768 = vmatprep.subr.mxu0 0.0
  %3769 = vmatpush1.msra.mxu0 0.0
  %3770 = vmatprep.subr.mxu0 0.0
  %3771 = vmatpush1.msra.mxu0 0.0
  %3772 = vmatprep.subr.mxu0 0.0
  %3773 = vmatpush1.msra.mxu0 0.0
  %3774 = vmatprep.subr.mxu0 0.0
  %3775 = vmatpush1.msra.mxu0 0.0
  %3776 = vmatprep.subr.mxu0 0.0
  %3777 = vmatpush1.msra.mxu0 0.0
  %3778 = vmatprep.subr.mxu0 0.0
  %3779 = vmatpush1.msra.mxu0 0.0
  %3780 = vmatprep.subr.mxu0 0.0
  %3781 = vmatpush1.msra.mxu0 0.0
  %3782 = vmatprep.subr.mxu0 0.0
  %3783 = vmatpush1.msra.mxu0 0.0
  %3784 = vmatprep.subr.mxu0 0.0
  %3785 = vmatpush1.msra.mxu0 0.0
  %3786 = vmatprep.subr.mxu0 0.0
  %3787 = vmatpush1.msra.mxu0 0.0
  %3788 = vmatprep.subr.mxu0 0.0
  %3789 = vmatpush1.msra.mxu0 0.0
  %3790 = vmatprep.subr.mxu0 0.0
  %3791 = vmatpush1.msra.mxu0 0.0
  %3792 = vmatprep.subr.mxu0 0.0
  %3793 = vmatpush1.msra.mxu0 0.0
  %3794 = vmatprep.subr.mxu0 0.0
  %3795 = vmatpush1.msra.mxu0 0.0
  %3796 = vmatprep.subr.mxu0 0.0
  %3797 = vmatpush1.msra.mxu0 0.0
  %3798 = vmatprep.mubr.f32.mxu0 0.0
  %3799 = vmatmul.mubr.f32.gmra.mrb[0].mxu0 %v3710
  %v3800 = vpop.f32.mrb[0].mxu0
  %v3801 = vadd.f32 %v3732, %v3800
  %v3802 = vpop.f32.mrb[0].mxu0
  %3803 = vdwg.mxu0
  %v3804 = vmax.f32 %v3801, 0.0
  %v3805 = vld [vmem:[%s8] sm:$0xff]
  %v3806 = vld [vmem:[%s8 + $0x8] sm:$0xff]
  %v3807 = vld [vmem:[%s8 + $0x10] sm:$0xff]
  %v3808 = vld [vmem:[%s8 + $0x18] sm:$0xff]
  %v3809 = vld [vmem:[%s8 + $0x20] sm:$0xff]
  %v3810 = vld [vmem:[%s8 + $0x28] sm:$0xff]
  %v3811 = vld [vmem:[%s8 + $0x30] sm:$0xff]
  %v3812 = vld [vmem:[%s8 + $0x38] sm:$0xff]
  %v3813 = vld [vmem:[#allocation2] sm:$0x1]
  %v3815 = vlaneseq
  %v3816 = vshrl.u32 %v3815, 7
  %v3817 = vsub.s32 0, %v3816
  %v3818 = vrot.slane %v3813, %v3817
  %vm3820 = vcmask 523264
  %v3822 = vsel %vm3820, %v3804, 0
  %3824 = vmatprep.subr.mxu0 0.0
  %3825 = vmatpush1.msra.mxu0 %v3805
  %3826 = vmatprep.subr.mxu0 0.0
  %3827 = vmatpush1.msra.mxu0 %v3806
  %3828 = vmatprep.subr.mxu0 0.0
  %3829 = vmatpush1.msra.mxu0 %v3807
  %3830 = vmatprep.subr.mxu0 0.0
  %3831 = vmatpush1.msra.mxu0 %v3808
  %3832 = vmatprep.subr.mxu0 0.0
  %3833 = vmatpush1.msra.mxu0 %v3809
  %3834 = vmatprep.subr.mxu0 0.0
  %3835 = vmatpush1.msra.mxu0 %v3810
  %3836 = vmatprep.subr.mxu0 0.0
  %3837 = vmatpush1.msra.mxu0 %v3811
  %3838 = vmatprep.subr.mxu0 0.0
  %3839 = vmatpush1.msra.mxu0 %v3812
  %3840 = vmatprep.subr.mxu0 0.0
  %3841 = vmatpush1.msra.mxu0 0.0
  %3842 = vmatprep.subr.mxu0 0.0
  %3843 = vmatpush1.msra.mxu0 0.0
  %3844 = vmatprep.subr.mxu0 0.0
  %3845 = vmatpush1.msra.mxu0 0.0
  %3846 = vmatprep.subr.mxu0 0.0
  %3847 = vmatpush1.msra.mxu0 0.0
  %3848 = vmatprep.subr.mxu0 0.0
  %3849 = vmatpush1.msra.mxu0 0.0
  %3850 = vmatprep.subr.mxu0 0.0
  %3851 = vmatpush1.msra.mxu0 0.0
  %3852 = vmatprep.subr.mxu0 0.0
  %3853 = vmatpush1.msra.mxu0 0.0
  %3854 = vmatprep.subr.mxu0 0.0
  %3855 = vmatpush1.msra.mxu0 0.0
  %3856 = vmatprep.subr.mxu0 0.0
  %3857 = vmatpush1.msra.mxu0 0.0
  %3858 = vmatprep.subr.mxu0 0.0
  %3859 = vmatpush1.msra.mxu0 0.0
  %3860 = vmatprep.subr.mxu0 0.0
  %3861 = vmatpush1.msra.mxu0 0.0
  %3862 = vmatprep.subr.mxu0 0.0
  %3863 = vmatpush1.msra.mxu0 0.0
  %3864 = vmatprep.subr.mxu0 0.0
  %3865 = vmatpush1.msra.mxu0 0.0
  %3866 = vmatprep.subr.mxu0 0.0
  %3867 = vmatpush1.msra.mxu0 0.0
  %3868 = vmatprep.subr.mxu0 0.0
  %3869 = vmatpush1.msra.mxu0 0.0
  %3870 = vmatprep.subr.mxu0 0.0
  %3871 = vmatpush1.msra.mxu0 0.0
  %3872 = vmatprep.subr.mxu0 0.0
  %3873 = vmatpush1.msra.mxu0 0.0
  %3874 = vmatprep.subr.mxu0 0.0
  %3875 = vmatpush1.msra.mxu0 0.0
  %3876 = vmatprep.subr.mxu0 0.0
  %3877 = vmatpush1.msra.mxu0 0.0
  %3878 = vmatprep.subr.mxu0 0.0
  %3879 = vmatpush1.msra.mxu0 0.0
  %3880 = vmatprep.subr.mxu0 0.0
  %3881 = vmatpush1.msra.mxu0 0.0
  %3882 = vmatprep.subr.mxu0 0.0
  %3883 = vmatpush1.msra.mxu0 0.0
  %3884 = vmatprep.subr.mxu0 0.0
  %3885 = vmatpush1.msra.mxu0 0.0
  %3886 = vmatprep.subr.mxu0 0.0
  %3887 = vmatpush1.msra.mxu0 0.0
  %3888 = vmatprep.mubr.f32.mxu0 0.0
  %3889 = vmatmul.mubr.f32.gmra.mrb[0].mxu0 %v3822
  %v3890 = vpop.f32.mrb[0].mxu0
  %v3891 = vadd.f32 %v3818, %v3890
  %v3892 = vpop.f32.mrb[0].mxu0
  %3893 = vdwg.mxu0
  %vm3894 = vcmask 7168
  %3895 = vst.msk [vmem:[%s10] sm:$0xff] %vm3894, %v3891
  // Predicated region
  $region42: #{dense_lstm_forward.5} parent=0 // pred_check
    _
  $region43: #{dense_lstm_forward.5} parent=0 // pred_check_branch
    %3897 = sbr.rel (0) target = $region45
  $region44: #{dense_lstm_forward.5} parent=0 // pred_region
    _
  $region45: #{dense_lstm_forward.5} parent=0 // pred_fallthru
    _
  // Predicated region
  $region46: #{dense_lstm_forward.5} parent=0 // pred_check
    _
  $region47: #{dense_lstm_forward.5} parent=0 // pred_check_branch
    %3899 = sbr.rel (0) target = $region49
  $region48: #{dense_lstm_forward.5} parent=0 // pred_region
    _
  $region49: #{dense_lstm_forward.5} parent=0 // pred_fallthru
    _

</llo_original>
